<compile_context>
chip_gen: v5e
topology: v5e:2x2
jax: 0.10.0
libtpu: 0.0.40
codegen_flags: <defaults>
</compile_context>

<pallas_src>
import functools

import jax
import jax.numpy as jnp
from jax.experimental import pallas as pl
from jax.experimental.pallas import tpu as pltpu

EPS_BN = 4e-5     # BatchNorm eps from the PyTorch module
EPS_W = 1e-4      # BiFPN weight-normalisation epsilon
CPAD = 128        # lane-dense working channel width (fs=64 zero-padded)

VMEM = pl.BlockSpec(memory_space=pltpu.MemorySpace.VMEM)
SMEM = pl.BlockSpec(memory_space=pltpu.MemorySpace.SMEM)


def _level_geom(N, H3, W3):
    """Row geometry of the packed (sum_l N*H_l*W_l, CPAD) pyramid slab."""
    Hs = [H3 >> l for l in range(5)]
    Ws = [W3 >> l for l in range(5)]
    Ms = [N * Hs[l] * Ws[l] for l in range(5)]
    offs = [0]
    for m in Ms:
        offs.append(offs[-1] + m)
    total = offs[-1]
    padded = -(-total // 8) * 8
    return Hs, Ws, Ms, offs, total, padded


# ----------------------------- Pallas kernels -----------------------------

def _stem_kernel(x3_ref, x4_ref, x5_ref, x6c_ref,
                 w3_ref, w4_ref, w5_ref, w6_ref, w7_ref, vec_ref,
                 o_ref, *, eps, N, H3, W3):
    """Fused stem: p3/p4/p5 1x1, p6 3x3/s2 (im2col), p7 ConvBlock, all into
    the packed pyramid slab."""
    Hs, Ws, Ms, offs, total, padded = _level_geom(N, H3, W3)
    C = o_ref.shape[-1]
    bf = jnp.bfloat16

    def lin(x_ref_, w_ref_, bias_row):
        return (jnp.dot(x_ref_[...].astype(bf), w_ref_[...],
                        preferred_element_type=jnp.float32) + bias_row)

    # vec_ref rows: 0..3 = p3/p4/p5/p6 bias, 4 = p7 bias, 5 = p7 gamma, 6 = p7 beta
    o_ref[offs[0]:offs[0] + Ms[0], :] = lin(x3_ref, w3_ref, vec_ref[0:1, :])
    o_ref[offs[1]:offs[1] + Ms[1], :] = lin(x4_ref, w4_ref, vec_ref[1:2, :])
    o_ref[offs[2]:offs[2] + Ms[2], :] = lin(x5_ref, w5_ref, vec_ref[2:3, :])
    o_ref[offs[3]:offs[3] + Ms[3], :] = lin(x6c_ref, w6_ref, vec_ref[3:4, :])

    # p7 = ReLU(BN(3x3/s2 conv(p6_x))).  With p6 at 2x2 the output is 1x1 and
    # only the 4 kernel taps (kh,kw) in {1,2}x{1,2} see real (non-padded)
    # pixels; tap j multiplies p6 pixel j of each batch (batch stride = 4 rows).
    # TODO(synk): generalize the in-kernel shifted-matmul p7 conv beyond a
    # 2x2 p6 (i.e. c3 spatial != 16x16).
    HW6 = Hs[3] * Ws[3]                                     # == 4
    for n in range(N):
        acc = vec_ref[4:5, :]                               # conv bias
        for j in range(HW6):
            r = offs[3] + n * HW6 + j
            acc = acc + jnp.dot(o_ref[r:r + 1, :].astype(bf), w7_ref[j],
                                preferred_element_type=jnp.float32)
        o_ref[offs[4] + n:offs[4] + n + 1, :] = acc

    y7 = o_ref[offs[4]:offs[4] + Ms[4], :]
    inv_m = 1.0 / Ms[4]
    mean = jnp.sum(y7, axis=0, keepdims=True) * inv_m
    msq = jnp.sum(y7 * y7, axis=0, keepdims=True) * inv_m
    var = msq - mean * mean                                  # single-pass BN stats
    scale = vec_ref[5:6, :] * jax.lax.rsqrt(var + eps)       # gamma
    shift = vec_ref[6:7, :] - mean * scale                   # beta
    o_ref[offs[4]:offs[4] + Ms[4], :] = jnp.maximum(y7 * scale + shift, 0.0)

    if padded > total:                                       # keep slab padding clean
        o_ref[total:padded, :] = jnp.zeros((padded - total, C), jnp.float32)


def _bifpn_block_kernel(ws_ref, x_ref, pw_ref, gb_ref, o_ref, scr_a, scr_b,
                        *, eps, N, H3, W3):
    """Whole BiFPN block fused: fusion sums, in-kernel nearest up/down-sampling
    (pure data movement, no resample matmuls), folded depthwise+pointwise
    matmul (bf16 operands, f32 acc), single-pass BN with folded affine, ReLU."""
    Hs, Ws, Ms, offs, total, padded = _level_geom(N, H3, W3)
    C = x_ref.shape[-1]
    bf = jnp.bfloat16

    def lvl(l):
        return x_ref[offs[l]:offs[l] + Ms[l], :]

    def dwblk(s, idx):
        y = jnp.dot(s.astype(bf), pw_ref[idx], preferred_element_type=jnp.float32)
        inv_m = 1.0 / y.shape[0]
        mean = jnp.sum(y, axis=0, keepdims=True) * inv_m
        msq = jnp.sum(y * y, axis=0, keepdims=True) * inv_m
        var = msq - mean * mean                              # f32 single-pass stats
        scale = gb_ref[2 * idx:2 * idx + 1, :] * jax.lax.rsqrt(var + eps)
        shift = gb_ref[2 * idx + 1:2 * idx + 2, :] - mean * scale
        return jnp.maximum(y * scale + shift, 0.0)           # 2 full-slab passes

    def upsample(src_ref, src_base, lc):
        # nearest 2x: coarse level lc -> fine level lc-1, assembled in scr_b
        Hc, Wc, Hf, Wf = Hs[lc], Ws[lc], Hs[lc - 1], Ws[lc - 1]
        for n in range(N):
            for h in range(Hc):
                for w in range(Wc):
                    src = src_base + (n * Hc + h) * Wc + w
                    pair = jnp.broadcast_to(src_ref[src:src + 1, :], (2, C))
                    dst = n * Hf * Wf + (2 * h) * Wf + 2 * w
                    scr_b[dst:dst + 2, :] = pair
                    scr_b[dst + Wf:dst + Wf + 2, :] = pair
        return scr_b[0:Ms[lc - 1], :]

    def downsample(lf):
        # nearest 0.5x: pick every 2nd row/col of already-written output level lf
        Hf, Wf, Hc, Wc = Hs[lf], Ws[lf], Hs[lf + 1], Ws[lf + 1]
        for n in range(N):
            for hc in range(Hc):
                src = offs[lf] + (n * Hf + 2 * hc) * Wf
                dst = (n * Hc + hc) * Wc
                scr_a[dst:dst + Wc, :] = o_ref[pl.ds(src, Wc, stride=2), :]
        return scr_a[0:Ms[lf + 1], :]

    # ws_ref: flat (20,) f32 = normalised w1 (2x4, row-major) then w2 (3x4)
    def w1(r, c):
        return ws_ref[4 * r + c]

    def w2(r, c):
        return ws_ref[8 + 4 * r + c]

    # ---------------- top-down ----------------
    p7_td = lvl(4)
    p6_td = dwblk(w1(0, 0) * lvl(3) + w1(1, 0) * upsample(x_ref, offs[4], 4), 0)
    scr_a[0:Ms[3], :] = p6_td
    p5_td = dwblk(w1(0, 1) * lvl(2) + w1(1, 1) * upsample(scr_a, 0, 3), 1)
    scr_a[0:Ms[2], :] = p5_td
    p4_td = dwblk(w1(0, 2) * lvl(1) + w1(1, 2) * upsample(scr_a, 0, 2), 2)
    scr_a[0:Ms[1], :] = p4_td
    p3_td = dwblk(w1(0, 3) * lvl(0) + w1(1, 3) * upsample(scr_a, 0, 1), 3)

    # ---------------- bottom-up ----------------
    o_ref[offs[0]:offs[0] + Ms[0], :] = p3_td                              # p3_out
    p4_out = dwblk(w2(0, 0) * lvl(1) + w2(1, 0) * p4_td
                   + w2(2, 0) * downsample(0), 4)
    o_ref[offs[1]:offs[1] + Ms[1], :] = p4_out
    p5_out = dwblk(w2(0, 1) * lvl(2) + w2(1, 1) * p5_td
                   + w2(2, 1) * downsample(1), 5)
    o_ref[offs[2]:offs[2] + Ms[2], :] = p5_out
    p6_out = dwblk(w2(0, 2) * lvl(3) + w2(1, 2) * p6_td
                   + w2(2, 2) * downsample(2), 6)
    o_ref[offs[3]:offs[3] + Ms[3], :] = p6_out
    p7_out = dwblk(w2(0, 3) * lvl(4) + w2(1, 3) * p7_td
                   + w2(2, 3) * downsample(3), 7)
    o_ref[offs[4]:offs[4] + Ms[4], :] = p7_out

    if padded > total:
        o_ref[total:padded, :] = jnp.zeros((padded - total, C), jnp.float32)


# --------------------------- Pallas call wrappers --------------------------

def stem_forward(params, c3n, c4n, c5n):
    N, H3, W3, _ = c3n.shape
    Hs, Ws, Ms, offs, total, padded = _level_geom(N, H3, W3)
    x3 = c3n.reshape(-1, c3n.shape[-1])
    x4 = c4n.reshape(-1, c4n.shape[-1])
    x5 = c5n.reshape(-1, c5n.shape[-1])
    x6c, _ = im2col_3x3_s2(c5n)

    args = (x3, x4, x5, x6c,
            params["p3"]["wT"], params["p4"]["wT"], params["p5"]["wT"],
            params["p6"]["wT"], params["p7"]["wsel"], params["stem_vec"])
    flops = int(2 * CPAD * (x3.size + x4.size + x5.size + x6c.size)
                + 2 * Ms[4] * Hs[3] * Ws[3] * CPAD * CPAD)
    bytes_acc = int(sum(a.size * a.dtype.itemsize for a in args)
                    + padded * CPAD * 4)
    return pl.pallas_call(
        functools.partial(_stem_kernel, eps=EPS_BN, N=N, H3=H3, W3=W3),
        out_shape=jax.ShapeDtypeStruct((padded, CPAD), jnp.float32),
        in_specs=[VMEM] * 10,
        out_specs=VMEM,
        cost_estimate=pl.CostEstimate(flops=flops, transcendentals=CPAD,
                                      bytes_accessed=bytes_acc),
    )(*args)


def bifpn_block(slab, bp, N, H3, W3):
    Hs, Ws, Ms, offs, total, padded = _level_geom(N, H3, W3)
    # tiny fusion-weight normalisation in glue, packed flat for 1D SMEM
    ws = jnp.concatenate([norm_w(bp["w1"]).reshape(-1),
                          norm_w(bp["w2"]).reshape(-1)], axis=0)   # (20,) f32

    stage_rows = Ms[3] + Ms[2] + Ms[1] + Ms[0] + Ms[1] + Ms[2] + Ms[3] + Ms[4]
    flops = int(2 * stage_rows * CPAD * CPAD)
    bytes_acc = int(2 * padded * CPAD * 4 + bp["pw_stack"].size * 2
                    + bp["gb_stack"].size * 4 + ws.size * 4)
    return pl.pallas_call(
        functools.partial(_bifpn_block_kernel, eps=EPS_BN, N=N, H3=H3, W3=W3),
        out_shape=jax.ShapeDtypeStruct((padded, CPAD), jnp.float32),
        in_specs=[SMEM, VMEM, VMEM, VMEM],
        out_specs=VMEM,
        scratch_shapes=[pltpu.VMEM((Ms[1], CPAD), jnp.float32),   # td copies / downsample
                        pltpu.VMEM((Ms[0], CPAD), jnp.float32)],  # upsample assembly
        cost_estimate=pl.CostEstimate(flops=flops, transcendentals=8 * CPAD,
                                      bytes_accessed=bytes_acc),
    )(ws, slab, bp["pw_stack"], bp["gb_stack"])


# ------------------------------- JAX glue ----------------------------------

def nchw_to_nhwc(x):
    return jnp.transpose(x, (0, 2, 3, 1))


def nhwc_to_nchw(x):
    return jnp.transpose(x, (0, 3, 1, 2))


def norm_w(w, eps=EPS_W):
    w = jnp.maximum(w, 0.0)
    return w / (jnp.sum(w, axis=0, keepdims=True) + eps)


def im2col_3x3_s2(x):
    """3x3, stride 2, pad 1 patch extraction. x: NHWC -> (N*Ho*Wo, 9*C)."""
    # TODO(synk): at large resolutions fold this into the stem kernel as 9
    # shifted matmuls instead of materialising patches in HBM.
    N, H, W, C = x.shape
    xp = jnp.pad(x, ((0, 0), (1, 1), (1, 1), (0, 0)))
    Ho = (H + 2 - 3) // 2 + 1
    Wo = (W + 2 - 3) // 2 + 1
    cols = []
    for kh in range(3):
        for kw in range(3):
            cols.append(
                xp[:, kh:kh + 2 * (Ho - 1) + 1:2, kw:kw + 2 * (Wo - 1) + 1:2, :]
            )
    patches = jnp.stack(cols, axis=3)               # (N, Ho, Wo, 9, C)
    return patches.reshape(N * Ho * Wo, 9 * C), (N, Ho, Wo)


def bifpn_forward(params, c3, c4, c5, *, fs=64):
    # inputs are NCHW (PyTorch convention)
    c3n = nchw_to_nhwc(c3)
    c4n = nchw_to_nhwc(c4)
    c5n = nchw_to_nhwc(c5)
    N, H3, W3, _ = c3n.shape
    if H3 != 16 or W3 != 16:
        raise ValueError("stem p7 conv is specialised to a 16x16 c3 "
                         "(p6 2x2 -> p7 1x1); got %dx%d" % (H3, W3))

    slab = stem_forward(params, c3n, c4n, c5n)          # packed pyramid slab
    for bp in params["blocks"]:
        slab = bifpn_block(slab, bp, N, H3, W3)

    Hs, Ws, Ms, offs, total, padded = _level_geom(N, H3, W3)
    outs = []
    for l in range(5):
        lv = slab[offs[l]:offs[l] + Ms[l], :fs].reshape(N, Hs[l], Ws[l], fs)
        outs.append(nhwc_to_nchw(lv))
    return outs


# ------------------------- deterministic parameters ------------------------

def init_params(key, size, fs=64, num_layers=2, cpad=CPAD):
    keys = iter(jax.random.split(key, 256))

    def nrm(shape, scale):
        return jax.random.normal(next(keys), shape, jnp.float32) * scale

    def pad_cols(w):
        return jnp.pad(w, ((0, 0), (0, cpad - w.shape[1])))

    def pad_row(v):
        return jnp.pad(v, (0, cpad - v.shape[0]))

    params = {}
    stem_vec = []
    # p3/p4/p5: 1x1 conv weights (Cin, cpad) bf16 for the MXU, bias rows f32.
    for name, cin in (("p3", size[0]), ("p4", size[1]), ("p5", size[2])):
        params[name] = {"wT": pad_cols(nrm((cin, fs), 0.2)).astype(jnp.bfloat16)}
        stem_vec.append(pad_row(nrm((fs,), 0.01)))
    # p6: 3x3/s2 conv; rows ordered (kh,kw)-major / input-channel-minor to
    # match im2col patch order (real PyTorch (O,I,kh,kw) weights would be
    # permuted into this layout before flattening).
    params["p6"] = {"wT": pad_cols(nrm((9 * size[2], fs), 0.05)).astype(jnp.bfloat16)}
    stem_vec.append(pad_row(nrm((fs,), 0.01)))
    # p7 ConvBlock: only the 4 taps that see real pixels for a 2x2 -> 1x1
    # 3x3/s2/pad1 conv, ordered by p6 pixel index kk = (kh-1)*2 + (kw-1).
    w7 = jnp.zeros((4, cpad, cpad), jnp.float32)
    w7 = w7.at[:, :fs, :fs].set(nrm((4, fs, fs), 0.05))
    params["p7"] = {"wsel": w7.astype(jnp.bfloat16)}
    stem_vec.append(pad_row(nrm((fs,), 0.01)))                 # p7 conv bias
    stem_vec.append(pad_row(jnp.ones((fs,), jnp.float32)))     # p7 BN gamma
    stem_vec.append(jnp.zeros((cpad,), jnp.float32))           # p7 BN beta
    params["stem_vec"] = jnp.stack(stem_vec, axis=0)           # (7, cpad) f32

    blocks = []
    for _ in range(num_layers):
        # torch.Tensor(2,4)/(3,4) are uninitialized in the module; use
        # deterministic positive values here.
        bp = {"w1": jax.random.uniform(next(keys), (2, 4), jnp.float32, 0.1, 1.0),
              "w2": jax.random.uniform(next(keys), (3, 4), jnp.float32, 0.1, 1.0)}
        pw_stack, gb_rows = [], []
        for _stage in range(8):          # p6_td..p3_td, p4_out..p7_out
            dw = nrm((fs,), 0.5) + 1.0                    # depthwise 1x1 per-channel
            pwT = nrm((fs, fs), (1.0 / fs) ** 0.5)        # pointwise (Cin, Cout)
            folded = dw[:, None] * pwT                    # fold dw into pw (exact: 1x1)
            fw = jnp.zeros((cpad, cpad), jnp.float32).at[:fs, :fs].set(folded)
            pw_stack.append(fw)
            gb_rows.append(pad_row(jnp.ones((fs,), jnp.float32)))   # BN gamma
            gb_rows.append(jnp.zeros((cpad,), jnp.float32))         # BN beta
        bp["pw_stack"] = jnp.stack(pw_stack, 0).astype(jnp.bfloat16)  # (8,cpad,cpad)
        bp["gb_stack"] = jnp.stack(gb_rows, 0)                        # (16,cpad) f32
        blocks.append(bp)
    params["blocks"] = blocks
    return params


# ---------------------------------- main ------------------------------------

if __name__ == "__main__":
    key = jax.random.PRNGKey(0)
    k1, k2, k3, kp = jax.random.split(key, 4)

    size = [8, 16, 32]      # input channels of c3, c4, c5
    fs = 64                 # feature_size (module default)
    N = 2

    # NCHW inputs, pyramid spatial sizes 16 -> 8 -> 4
    c3 = jax.random.normal(k1, (N, size[0], 16, 16), jnp.float32)
    c4 = jax.random.normal(k2, (N, size[1], 8, 8), jnp.float32)
    c5 = jax.random.normal(k3, (N, size[2], 4, 4), jnp.float32)

    params = init_params(kp, size, fs=fs, num_layers=2)

    fwd = jax.jit(bifpn_forward)
    outs = fwd(params, c3, c4, c5)
    outs = jax.block_until_ready(outs)

    expected = [(N, fs, 16, 16), (N, fs, 8, 8), (N, fs, 4, 4),
                (N, fs, 2, 2), (N, fs, 1, 1)]
    assert [tuple(o.shape) for o in outs] == expected, \
        [tuple(o.shape) for o in outs]
    assert all(bool(jnp.all(jnp.isfinite(o))) for o in outs)

    # TODO(synk): BatchNorm running-stat buffer updates (momentum=0.9997) only
    # affect buffers, not the forward output, so they are intentionally not modeled.
    print("KERNEL_OK")
</pallas_src>

<mosaic_0001>
module attributes {stable_mosaic.version = 11 : i64} {
  func.func @_stem_kernel(%arg0: memref<512x8xf32, #tpu.memory_space<vmem>>, %arg1: memref<128x16xf32, #tpu.memory_space<vmem>>, %arg2: memref<32x32xf32, #tpu.memory_space<vmem>>, %arg3: memref<8x288xf32, #tpu.memory_space<vmem>>, %arg4: memref<8x128xbf16, #tpu.memory_space<vmem>>, %arg5: memref<16x128xbf16, #tpu.memory_space<vmem>>, %arg6: memref<32x128xbf16, #tpu.memory_space<vmem>>, %arg7: memref<288x128xbf16, #tpu.memory_space<vmem>>, %arg8: memref<4x128x128xbf16, #tpu.memory_space<vmem>>, %arg9: memref<7x128xf32, #tpu.memory_space<vmem>>, %arg10: memref<688x128xf32, #tpu.memory_space<vmem>>) attributes {dimension_semantics = [], scalar_prefetch = 0 : i64, scratch_operands = 0 : i64, tpu.core_type = #tpu.core_type<tc>} {
    %c0 = arith.constant 0 : index
    %c0_0 = arith.constant 0 : index
    %0 = vector.load %arg9[%c0, %c0_0] : memref<7x128xf32, #tpu.memory_space<vmem>>, vector<1x128xf32>
    %c0_1 = arith.constant 0 : index
    %c0_2 = arith.constant 0 : index
    %1 = vector.load %arg0[%c0_1, %c0_2] : memref<512x8xf32, #tpu.memory_space<vmem>>, vector<512x8xf32>
    %2 = arith.truncf %1 : vector<512x8xf32> to vector<512x8xbf16>
    %c0_3 = arith.constant 0 : index
    %c0_4 = arith.constant 0 : index
    %3 = vector.load %arg4[%c0_3, %c0_4] : memref<8x128xbf16, #tpu.memory_space<vmem>>, vector<8x128xbf16>
    %cst = arith.constant dense<0.000000e+00> : vector<512x128xf32>
    %4 = tpu.matmul %2, %3, %cst {dimension_numbers = #tpu.dot_dimension_numbers<[1], [0], [0], [1], [0, 0, 1, 1], [], []>} : vector<512x8xbf16>, vector<8x128xbf16>, vector<512x128xf32> -> vector<512x128xf32>
    %5 = vector.broadcast %0 : vector<1x128xf32> to vector<512x128xf32>
    %6 = arith.addf %4, %5 : vector<512x128xf32>
    %c0_5 = arith.constant 0 : index
    %c0_6 = arith.constant 0 : index
    %7 = vector.load %arg10[%c0_5, %c0_6] : memref<688x128xf32, #tpu.memory_space<vmem>>, vector<512x128xf32>
    tpu.vector_store %arg10[%c0_5, %c0_6], %6 {strides = array<i32>} : memref<688x128xf32, #tpu.memory_space<vmem>>, vector<512x128xf32>,
    %c1 = arith.constant 1 : index
    %c0_7 = arith.constant 0 : index
    %8 = vector.load %arg9[%c1, %c0_7] : memref<7x128xf32, #tpu.memory_space<vmem>>, vector<1x128xf32>
    %c0_8 = arith.constant 0 : index
    %c0_9 = arith.constant 0 : index
    %9 = vector.load %arg1[%c0_8, %c0_9] : memref<128x16xf32, #tpu.memory_space<vmem>>, vector<128x16xf32>
    %10 = arith.truncf %9 : vector<128x16xf32> to vector<128x16xbf16>
    %c0_10 = arith.constant 0 : index
    %c0_11 = arith.constant 0 : index
    %11 = vector.load %arg5[%c0_10, %c0_11] : memref<16x128xbf16, #tpu.memory_space<vmem>>, vector<16x128xbf16>
    %cst_12 = arith.constant dense<0.000000e+00> : vector<128x128xf32>
    %12 = tpu.matmul %10, %11, %cst_12 {dimension_numbers = #tpu.dot_dimension_numbers<[1], [0], [0], [1], [0, 0, 1, 1], [], []>} : vector<128x16xbf16>, vector<16x128xbf16>, vector<128x128xf32> -> vector<128x128xf32>
    %13 = vector.broadcast %8 : vector<1x128xf32> to vector<128x128xf32>
    %14 = arith.addf %12, %13 : vector<128x128xf32>
    %c512 = arith.constant 512 : index
    %c0_13 = arith.constant 0 : index
    %15 = vector.load %arg10[%c512, %c0_13] : memref<688x128xf32, #tpu.memory_space<vmem>>, vector<128x128xf32>
    tpu.vector_store %arg10[%c512, %c0_13], %14 {strides = array<i32>} : memref<688x128xf32, #tpu.memory_space<vmem>>, vector<128x128xf32>,
    %c2 = arith.constant 2 : index
    %c0_14 = arith.constant 0 : index
    %16 = vector.load %arg9[%c2, %c0_14] : memref<7x128xf32, #tpu.memory_space<vmem>>, vector<1x128xf32>
    %c0_15 = arith.constant 0 : index
    %c0_16 = arith.constant 0 : index
    %17 = vector.load %arg2[%c0_15, %c0_16] : memref<32x32xf32, #tpu.memory_space<vmem>>, vector<32x32xf32>
    %18 = arith.truncf %17 : vector<32x32xf32> to vector<32x32xbf16>
    %c0_17 = arith.constant 0 : index
    %c0_18 = arith.constant 0 : index
    %19 = vector.load %arg6[%c0_17, %c0_18] : memref<32x128xbf16, #tpu.memory_space<vmem>>, vector<32x128xbf16>
    %cst_19 = arith.constant dense<0.000000e+00> : vector<32x128xf32>
    %20 = tpu.matmul %18, %19, %cst_19 {dimension_numbers = #tpu.dot_dimension_numbers<[1], [0], [0], [1], [0, 0, 1, 1], [], []>} : vector<32x32xbf16>, vector<32x128xbf16>, vector<32x128xf32> -> vector<32x128xf32>
    %21 = vector.broadcast %16 : vector<1x128xf32> to vector<32x128xf32>
    %22 = arith.addf %20, %21 : vector<32x128xf32>
    %c640 = arith.constant 640 : index
    %c0_20 = arith.constant 0 : index
    %23 = vector.load %arg10[%c640, %c0_20] : memref<688x128xf32, #tpu.memory_space<vmem>>, vector<32x128xf32>
    tpu.vector_store %arg10[%c640, %c0_20], %22 {strides = array<i32>} : memref<688x128xf32, #tpu.memory_space<vmem>>, vector<32x128xf32>,
    %c3 = arith.constant 3 : index
    %c0_21 = arith.constant 0 : index
    %24 = vector.load %arg9[%c3, %c0_21] : memref<7x128xf32, #tpu.memory_space<vmem>>, vector<1x128xf32>
    %c0_22 = arith.constant 0 : index
    %c0_23 = arith.constant 0 : index
    %25 = vector.load %arg3[%c0_22, %c0_23] : memref<8x288xf32, #tpu.memory_space<vmem>>, vector<8x288xf32>
    %26 = arith.truncf %25 : vector<8x288xf32> to vector<8x288xbf16>
    %c0_24 = arith.constant 0 : index
    %c0_25 = arith.constant 0 : index
    %27 = vector.load %arg7[%c0_24, %c0_25] : memref<288x128xbf16, #tpu.memory_space<vmem>>, vector<288x128xbf16>
    %cst_26 = arith.constant dense<0.000000e+00> : vector<8x128xf32>
    %28 = tpu.matmul %26, %27, %cst_26 {dimension_numbers = #tpu.dot_dimension_numbers<[1], [0], [0], [1], [0, 0, 1, 1], [], []>} : vector<8x288xbf16>, vector<288x128xbf16>, vector<8x128xf32> -> vector<8x128xf32>
    %29 = vector.broadcast %24 : vector<1x128xf32> to vector<8x128xf32>
    %30 = arith.addf %28, %29 : vector<8x128xf32>
    %c672 = arith.constant 672 : index
    %c0_27 = arith.constant 0 : index
    %31 = vector.load %arg10[%c672, %c0_27] : memref<688x128xf32, #tpu.memory_space<vmem>>, vector<8x128xf32>
    tpu.vector_store %arg10[%c672, %c0_27], %30 {strides = array<i32>} : memref<688x128xf32, #tpu.memory_space<vmem>>, vector<8x128xf32>,
    %c4 = arith.constant 4 : index
    %c0_28 = arith.constant 0 : index
    %32 = vector.load %arg9[%c4, %c0_28] : memref<7x128xf32, #tpu.memory_space<vmem>>, vector<1x128xf32>
    %c672_29 = arith.constant 672 : index
    %c0_30 = arith.constant 0 : index
    %33 = vector.load %arg10[%c672_29, %c0_30] : memref<688x128xf32, #tpu.memory_space<vmem>>, vector<1x128xf32>
    %34 = arith.truncf %33 : vector<1x128xf32> to vector<1x128xbf16>
    %c0_31 = arith.constant 0 : index
    %c0_32 = arith.constant 0 : index
    %c0_33 = arith.constant 0 : index
    %35 = vector.load %arg8[%c0_31, %c0_32, %c0_33] : memref<4x128x128xbf16, #tpu.memory_space<vmem>>, vector<1x128x128xbf16>
    %36 = vector.shape_cast %35 : vector<1x128x128xbf16> to vector<128x128xbf16>
    %cst_34 = arith.constant dense<0.000000e+00> : vector<1x128xf32>
    %37 = tpu.matmul %34, %36, %cst_34 {dimension_numbers = #tpu.dot_dimension_numbers<[1], [0], [0], [1], [0, 0, 1, 1], [], []>} : vector<1x128xbf16>, vector<128x128xbf16>, vector<1x128xf32> -> vector<1x128xf32>
    %38 = arith.addf %32, %37 : vector<1x128xf32>
    %c673 = arith.constant 673 : index
    %c0_35 = arith.constant 0 : index
    %39 = vector.load %arg10[%c673, %c0_35] : memref<688x128xf32, #tpu.memory_space<vmem>>, vector<1x128xf32>
    %40 = arith.truncf %39 : vector<1x128xf32> to vector<1x128xbf16>
    %c1_36 = arith.constant 1 : index
    %c0_37 = arith.constant 0 : index
    %c0_38 = arith.constant 0 : index
    %41 = vector.load %arg8[%c1_36, %c0_37, %c0_38] : memref<4x128x128xbf16, #tpu.memory_space<vmem>>, vector<1x128x128xbf16>
    %42 = vector.shape_cast %41 : vector<1x128x128xbf16> to vector<128x128xbf16>
    %cst_39 = arith.constant dense<0.000000e+00> : vector<1x128xf32>
    %43 = tpu.matmul %40, %42, %cst_39 {dimension_numbers = #tpu.dot_dimension_numbers<[1], [0], [0], [1], [0, 0, 1, 1], [], []>} : vector<1x128xbf16>, vector<128x128xbf16>, vector<1x128xf32> -> vector<1x128xf32>
    %44 = arith.addf %38, %43 : vector<1x128xf32>
    %c674 = arith.constant 674 : index
    %c0_40 = arith.constant 0 : index
    %45 = vector.load %arg10[%c674, %c0_40] : memref<688x128xf32, #tpu.memory_space<vmem>>, vector<1x128xf32>
    %46 = arith.truncf %45 : vector<1x128xf32> to vector<1x128xbf16>
    %c2_41 = arith.constant 2 : index
    %c0_42 = arith.constant 0 : index
    %c0_43 = arith.constant 0 : index
    %47 = vector.load %arg8[%c2_41, %c0_42, %c0_43] : memref<4x128x128xbf16, #tpu.memory_space<vmem>>, vector<1x128x128xbf16>
    %48 = vector.shape_cast %47 : vector<1x128x128xbf16> to vector<128x128xbf16>
    %cst_44 = arith.constant dense<0.000000e+00> : vector<1x128xf32>
    %49 = tpu.matmul %46, %48, %cst_44 {dimension_numbers = #tpu.dot_dimension_numbers<[1], [0], [0], [1], [0, 0, 1, 1], [], []>} : vector<1x128xbf16>, vector<128x128xbf16>, vector<1x128xf32> -> vector<1x128xf32>
    %50 = arith.addf %44, %49 : vector<1x128xf32>
    %c675 = arith.constant 675 : index
    %c0_45 = arith.constant 0 : index
    %51 = vector.load %arg10[%c675, %c0_45] : memref<688x128xf32, #tpu.memory_space<vmem>>, vector<1x128xf32>
    %52 = arith.truncf %51 : vector<1x128xf32> to vector<1x128xbf16>
    %c3_46 = arith.constant 3 : index
    %c0_47 = arith.constant 0 : index
    %c0_48 = arith.constant 0 : index
    %53 = vector.load %arg8[%c3_46, %c0_47, %c0_48] : memref<4x128x128xbf16, #tpu.memory_space<vmem>>, vector<1x128x128xbf16>
    %54 = vector.shape_cast %53 : vector<1x128x128xbf16> to vector<128x128xbf16>
    %cst_49 = arith.constant dense<0.000000e+00> : vector<1x128xf32>
    %55 = tpu.matmul %52, %54, %cst_49 {dimension_numbers = #tpu.dot_dimension_numbers<[1], [0], [0], [1], [0, 0, 1, 1], [], []>} : vector<1x128xbf16>, vector<128x128xbf16>, vector<1x128xf32> -> vector<1x128xf32>
    %56 = arith.addf %50, %55 : vector<1x128xf32>
    %c680 = arith.constant 680 : index
    %c0_50 = arith.constant 0 : index
    %57 = vector.load %arg10[%c680, %c0_50] : memref<688x128xf32, #tpu.memory_space<vmem>>, vector<1x128xf32>
    tpu.vector_store %arg10[%c680, %c0_50], %56 {strides = array<i32>} : memref<688x128xf32, #tpu.memory_space<vmem>>, vector<1x128xf32>,
    %c4_51 = arith.constant 4 : index
    %c0_52 = arith.constant 0 : index
    %58 = vector.load %arg9[%c4_51, %c0_52] : memref<7x128xf32, #tpu.memory_space<vmem>>, vector<1x128xf32>
    %c676 = arith.constant 676 : index
    %c0_53 = arith.constant 0 : index
    %59 = vector.load %arg10[%c676, %c0_53] : memref<688x128xf32, #tpu.memory_space<vmem>>, vector<1x128xf32>
    %60 = arith.truncf %59 : vector<1x128xf32> to vector<1x128xbf16>
    %c0_54 = arith.constant 0 : index
    %c0_55 = arith.constant 0 : index
    %c0_56 = arith.constant 0 : index
    %61 = vector.load %arg8[%c0_54, %c0_55, %c0_56] : memref<4x128x128xbf16, #tpu.memory_space<vmem>>, vector<1x128x128xbf16>
    %62 = vector.shape_cast %61 : vector<1x128x128xbf16> to vector<128x128xbf16>
    %cst_57 = arith.constant dense<0.000000e+00> : vector<1x128xf32>
    %63 = tpu.matmul %60, %62, %cst_57 {dimension_numbers = #tpu.dot_dimension_numbers<[1], [0], [0], [1], [0, 0, 1, 1], [], []>} : vector<1x128xbf16>, vector<128x128xbf16>, vector<1x128xf32> -> vector<1x128xf32>
    %64 = arith.addf %58, %63 : vector<1x128xf32>
    %c677 = arith.constant 677 : index
    %c0_58 = arith.constant 0 : index
    %65 = vector.load %arg10[%c677, %c0_58] : memref<688x128xf32, #tpu.memory_space<vmem>>, vector<1x128xf32>
    %66 = arith.truncf %65 : vector<1x128xf32> to vector<1x128xbf16>
    %c1_59 = arith.constant 1 : index
    %c0_60 = arith.constant 0 : index
    %c0_61 = arith.constant 0 : index
    %67 = vector.load %arg8[%c1_59, %c0_60, %c0_61] : memref<4x128x128xbf16, #tpu.memory_space<vmem>>, vector<1x128x128xbf16>
    %68 = vector.shape_cast %67 : vector<1x128x128xbf16> to vector<128x128xbf16>
    %cst_62 = arith.constant dense<0.000000e+00> : vector<1x128xf32>
    %69 = tpu.matmul %66, %68, %cst_62 {dimension_numbers = #tpu.dot_dimension_numbers<[1], [0], [0], [1], [0, 0, 1, 1], [], []>} : vector<1x128xbf16>, vector<128x128xbf16>, vector<1x128xf32> -> vector<1x128xf32>
    %70 = arith.addf %64, %69 : vector<1x128xf32>
    %c678 = arith.constant 678 : index
    %c0_63 = arith.constant 0 : index
    %71 = vector.load %arg10[%c678, %c0_63] : memref<688x128xf32, #tpu.memory_space<vmem>>, vector<1x128xf32>
    %72 = arith.truncf %71 : vector<1x128xf32> to vector<1x128xbf16>
    %c2_64 = arith.constant 2 : index
    %c0_65 = arith.constant 0 : index
    %c0_66 = arith.constant 0 : index
    %73 = vector.load %arg8[%c2_64, %c0_65, %c0_66] : memref<4x128x128xbf16, #tpu.memory_space<vmem>>, vector<1x128x128xbf16>
    %74 = vector.shape_cast %73 : vector<1x128x128xbf16> to vector<128x128xbf16>
    %cst_67 = arith.constant dense<0.000000e+00> : vector<1x128xf32>
    %75 = tpu.matmul %72, %74, %cst_67 {dimension_numbers = #tpu.dot_dimension_numbers<[1], [0], [0], [1], [0, 0, 1, 1], [], []>} : vector<1x128xbf16>, vector<128x128xbf16>, vector<1x128xf32> -> vector<1x128xf32>
    %76 = arith.addf %70, %75 : vector<1x128xf32>
    %c679 = arith.constant 679 : index
    %c0_68 = arith.constant 0 : index
    %77 = vector.load %arg10[%c679, %c0_68] : memref<688x128xf32, #tpu.memory_space<vmem>>, vector<1x128xf32>
    %78 = arith.truncf %77 : vector<1x128xf32> to vector<1x128xbf16>
    %c3_69 = arith.constant 3 : index
    %c0_70 = arith.constant 0 : index
    %c0_71 = arith.constant 0 : index
    %79 = vector.load %arg8[%c3_69, %c0_70, %c0_71] : memref<4x128x128xbf16, #tpu.memory_space<vmem>>, vector<1x128x128xbf16>
    %80 = vector.shape_cast %79 : vector<1x128x128xbf16> to vector<128x128xbf16>
    %cst_72 = arith.constant dense<0.000000e+00> : vector<1x128xf32>
    %81 = tpu.matmul %78, %80, %cst_72 {dimension_numbers = #tpu.dot_dimension_numbers<[1], [0], [0], [1], [0, 0, 1, 1], [], []>} : vector<1x128xbf16>, vector<128x128xbf16>, vector<1x128xf32> -> vector<1x128xf32>
    %82 = arith.addf %76, %81 : vector<1x128xf32>
    %c681 = arith.constant 681 : index
    %c0_73 = arith.constant 0 : index
    %83 = vector.load %arg10[%c681, %c0_73] : memref<688x128xf32, #tpu.memory_space<vmem>>, vector<1x128xf32>
    tpu.vector_store %arg10[%c681, %c0_73], %82 {strides = array<i32>} : memref<688x128xf32, #tpu.memory_space<vmem>>, vector<1x128xf32>,
    %c680_74 = arith.constant 680 : index
    %c0_75 = arith.constant 0 : index
    %84 = vector.load %arg10[%c680_74, %c0_75] : memref<688x128xf32, #tpu.memory_space<vmem>>, vector<2x128xf32>
    %cst_76 = arith.constant dense<0.000000e+00> : vector<128xf32>
    %85 = vector.multi_reduction <add>, %84, %cst_76 [0] : vector<2x128xf32> to vector<128xf32>
    %86 = vector.shape_cast %85 : vector<128xf32> to vector<1x128xf32>
    %cst_77 = arith.constant 5.000000e-01 : f32
    %87 = vector.broadcast %cst_77 : f32 to vector<1x128xf32>
    %88 = arith.mulf %86, %87 : vector<1x128xf32>
    %89 = arith.mulf %84, %84 : vector<2x128xf32>
    %cst_78 = arith.constant dense<0.000000e+00> : vector<128xf32>
    %90 = vector.multi_reduction <add>, %89, %cst_78 [0] : vector<2x128xf32> to vector<128xf32>
    %91 = vector.shape_cast %90 : vector<128xf32> to vector<1x128xf32>
    %cst_79 = arith.constant 5.000000e-01 : f32
    %92 = vector.broadcast %cst_79 : f32 to vector<1x128xf32>
    %93 = arith.mulf %91, %92 : vector<1x128xf32>
    %94 = arith.mulf %88, %88 : vector<1x128xf32>
    %95 = arith.subf %93, %94 : vector<1x128xf32>
    %c5 = arith.constant 5 : index
    %c0_80 = arith.constant 0 : index
    %96 = vector.load %arg9[%c5, %c0_80] : memref<7x128xf32, #tpu.memory_space<vmem>>, vector<1x128xf32>
    %cst_81 = arith.constant 4.000000e-05 : f32
    %97 = vector.broadcast %cst_81 : f32 to vector<1x128xf32>
    %98 = arith.addf %95, %97 : vector<1x128xf32>
    %99 = math.rsqrt %98 : vector<1x128xf32>
    %100 = arith.mulf %96, %99 : vector<1x128xf32>
    %c6 = arith.constant 6 : index
    %c0_82 = arith.constant 0 : index
    %101 = vector.load %arg9[%c6, %c0_82] : memref<7x128xf32, #tpu.memory_space<vmem>>, vector<1x128xf32>
    %102 = arith.mulf %88, %100 : vector<1x128xf32>
    %103 = arith.subf %101, %102 : vector<1x128xf32>
    %104 = vector.broadcast %100 : vector<1x128xf32> to vector<2x128xf32>
    %105 = arith.mulf %84, %104 : vector<2x128xf32>
    %106 = vector.broadcast %103 : vector<1x128xf32> to vector<2x128xf32>
    %107 = arith.addf %105, %106 : vector<2x128xf32>
    %cst_83 = arith.constant 0.000000e+00 : f32
    %108 = vector.broadcast %cst_83 : f32 to vector<2x128xf32>
    %109 = arith.maximumf %107, %108 : vector<2x128xf32>
    %c680_84 = arith.constant 680 : index
    %c0_85 = arith.constant 0 : index
    %110 = vector.load %arg10[%c680_84, %c0_85] : memref<688x128xf32, #tpu.memory_space<vmem>>, vector<2x128xf32>
    tpu.vector_store %arg10[%c680_84, %c0_85], %109 {strides = array<i32>} : memref<688x128xf32, #tpu.memory_space<vmem>>, vector<2x128xf32>,
    %cst_86 = arith.constant 0.000000e+00 : f32
    %111 = vector.broadcast %cst_86 : f32 to vector<6x128xf32>
    %c682 = arith.constant 682 : index
    %c0_87 = arith.constant 0 : index
    %112 = vector.load %arg10[%c682, %c0_87] : memref<688x128xf32, #tpu.memory_space<vmem>>, vector<6x128xf32>
    tpu.vector_store %arg10[%c682, %c0_87], %111 {strides = array<i32>} : memref<688x128xf32, #tpu.memory_space<vmem>>, vector<6x128xf32>,
    return
  }
}

module attributes {stable_mosaic.version = 11 : i64} {
  func.func @_bifpn_block_kernel(%arg0: memref<20xf32, #tpu.memory_space<smem>>, %arg1: memref<688x128xf32, #tpu.memory_space<vmem>>, %arg2: memref<8x128x128xbf16, #tpu.memory_space<vmem>>, %arg3: memref<16x128xf32, #tpu.memory_space<vmem>>, %arg4: memref<688x128xf32, #tpu.memory_space<vmem>>, %arg5: memref<128x128xf32, #tpu.memory_space<vmem>>, %arg6: memref<512x128xf32, #tpu.memory_space<vmem>>) attributes {dimension_semantics = [], scalar_prefetch = 0 : i64, scratch_operands = 2 : i64, tpu.core_type = #tpu.core_type<tc>} {
    %c680 = arith.constant 680 : index
    %c0 = arith.constant 0 : index
    %0 = vector.load %arg1[%c680, %c0] : memref<688x128xf32, #tpu.memory_space<vmem>>, vector<2x128xf32>
    %c0_0 = arith.constant 0 : index
    %1 = memref.load %arg0[%c0_0] : memref<20xf32, #tpu.memory_space<smem>>
    %c672 = arith.constant 672 : index
    %c0_1 = arith.constant 0 : index
    %2 = vector.load %arg1[%c672, %c0_1] : memref<688x128xf32, #tpu.memory_space<vmem>>, vector<8x128xf32>
    %3 = vector.broadcast %1 : f32 to vector<8x128xf32>
    %4 = arith.mulf %3, %2 : vector<8x128xf32>
    %c4 = arith.constant 4 : index
    %5 = memref.load %arg0[%c4] : memref<20xf32, #tpu.memory_space<smem>>
    %c680_2 = arith.constant 680 : index
    %c0_3 = arith.constant 0 : index
    %6 = vector.load %arg1[%c680_2, %c0_3] : memref<688x128xf32, #tpu.memory_space<vmem>>, vector<1x128xf32>
    %7 = vector.shape_cast %6 : vector<1x128xf32> to vector<1x128xf32>
    %8 = vector.broadcast %7 : vector<1x128xf32> to vector<2x128xf32>
    %c0_4 = arith.constant 0 : index
    %c0_5 = arith.constant 0 : index
    %9 = vector.load %arg6[%c0_4, %c0_5] : memref<512x128xf32, #tpu.memory_space<vmem>>, vector<2x128xf32>
    tpu.vector_store %arg6[%c0_4, %c0_5], %8 {strides = array<i32>} : memref<512x128xf32, #tpu.memory_space<vmem>>, vector<2x128xf32>,
    %c2 = arith.constant 2 : index
    %c0_6 = arith.constant 0 : index
    %10 = vector.load %arg6[%c2, %c0_6] : memref<512x128xf32, #tpu.memory_space<vmem>>, vector<2x128xf32>
    tpu.vector_store %arg6[%c2, %c0_6], %8 {strides = array<i32>} : memref<512x128xf32, #tpu.memory_space<vmem>>, vector<2x128xf32>,
    %c681 = arith.constant 681 : index
    %c0_7 = arith.constant 0 : index
    %11 = vector.load %arg1[%c681, %c0_7] : memref<688x128xf32, #tpu.memory_space<vmem>>, vector<1x128xf32>
    %12 = vector.shape_cast %11 : vector<1x128xf32> to vector<1x128xf32>
    %13 = vector.broadcast %12 : vector<1x128xf32> to vector<2x128xf32>
    %c4_8 = arith.constant 4 : index
    %c0_9 = arith.constant 0 : index
    %14 = vector.load %arg6[%c4_8, %c0_9] : memref<512x128xf32, #tpu.memory_space<vmem>>, vector<2x128xf32>
    tpu.vector_store %arg6[%c4_8, %c0_9], %13 {strides = array<i32>} : memref<512x128xf32, #tpu.memory_space<vmem>>, vector<2x128xf32>,
    %c6 = arith.constant 6 : index
    %c0_10 = arith.constant 0 : index
    %15 = vector.load %arg6[%c6, %c0_10] : memref<512x128xf32, #tpu.memory_space<vmem>>, vector<2x128xf32>
    tpu.vector_store %arg6[%c6, %c0_10], %13 {strides = array<i32>} : memref<512x128xf32, #tpu.memory_space<vmem>>, vector<2x128xf32>,
    %c0_11 = arith.constant 0 : index
    %c0_12 = arith.constant 0 : index
    %16 = vector.load %arg6[%c0_11, %c0_12] : memref<512x128xf32, #tpu.memory_space<vmem>>, vector<8x128xf32>
    %17 = vector.broadcast %5 : f32 to vector<8x128xf32>
    %18 = arith.mulf %17, %16 : vector<8x128xf32>
    %19 = arith.addf %4, %18 : vector<8x128xf32>
    %20 = arith.truncf %19 : vector<8x128xf32> to vector<8x128xbf16>
    %c0_13 = arith.constant 0 : index
    %c0_14 = arith.constant 0 : index
    %c0_15 = arith.constant 0 : index
    %21 = vector.load %arg2[%c0_13, %c0_14, %c0_15] : memref<8x128x128xbf16, #tpu.memory_space<vmem>>, vector<1x128x128xbf16>
    %22 = vector.shape_cast %21 : vector<1x128x128xbf16> to vector<128x128xbf16>
    %cst = arith.constant dense<0.000000e+00> : vector<8x128xf32>
    %23 = tpu.matmul %20, %22, %cst {dimension_numbers = #tpu.dot_dimension_numbers<[1], [0], [0], [1], [0, 0, 1, 1], [], []>} : vector<8x128xbf16>, vector<128x128xbf16>, vector<8x128xf32> -> vector<8x128xf32>
    %cst_16 = arith.constant dense<0.000000e+00> : vector<128xf32>
    %24 = vector.multi_reduction <add>, %23, %cst_16 [0] : vector<8x128xf32> to vector<128xf32>
    %25 = vector.shape_cast %24 : vector<128xf32> to vector<1x128xf32>
    %cst_17 = arith.constant 1.250000e-01 : f32
    %26 = vector.broadcast %cst_17 : f32 to vector<1x128xf32>
    %27 = arith.mulf %25, %26 : vector<1x128xf32>
    %28 = arith.mulf %23, %23 : vector<8x128xf32>
    %cst_18 = arith.constant dense<0.000000e+00> : vector<128xf32>
    %29 = vector.multi_reduction <add>, %28, %cst_18 [0] : vector<8x128xf32> to vector<128xf32>
    %30 = vector.shape_cast %29 : vector<128xf32> to vector<1x128xf32>
    %cst_19 = arith.constant 1.250000e-01 : f32
    %31 = vector.broadcast %cst_19 : f32 to vector<1x128xf32>
    %32 = arith.mulf %30, %31 : vector<1x128xf32>
    %33 = arith.mulf %27, %27 : vector<1x128xf32>
    %34 = arith.subf %32, %33 : vector<1x128xf32>
    %c0_20 = arith.constant 0 : index
    %c0_21 = arith.constant 0 : index
    %35 = vector.load %arg3[%c0_20, %c0_21] : memref<16x128xf32, #tpu.memory_space<vmem>>, vector<1x128xf32>
    %cst_22 = arith.constant 4.000000e-05 : f32
    %36 = vector.broadcast %cst_22 : f32 to vector<1x128xf32>
    %37 = arith.addf %34, %36 : vector<1x128xf32>
    %38 = math.rsqrt %37 : vector<1x128xf32>
    %39 = arith.mulf %35, %38 : vector<1x128xf32>
    %c1 = arith.constant 1 : index
    %c0_23 = arith.constant 0 : index
    %40 = vector.load %arg3[%c1, %c0_23] : memref<16x128xf32, #tpu.memory_space<vmem>>, vector<1x128xf32>
    %41 = arith.mulf %27, %39 : vector<1x128xf32>
    %42 = arith.subf %40, %41 : vector<1x128xf32>
    %43 = vector.broadcast %39 : vector<1x128xf32> to vector<8x128xf32>
    %44 = arith.mulf %23, %43 : vector<8x128xf32>
    %45 = vector.broadcast %42 : vector<1x128xf32> to vector<8x128xf32>
    %46 = arith.addf %44, %45 : vector<8x128xf32>
    %cst_24 = arith.constant 0.000000e+00 : f32
    %47 = vector.broadcast %cst_24 : f32 to vector<8x128xf32>
    %48 = arith.maximumf %46, %47 : vector<8x128xf32>
    %c0_25 = arith.constant 0 : index
    %c0_26 = arith.constant 0 : index
    %49 = vector.load %arg5[%c0_25, %c0_26] : memref<128x128xf32, #tpu.memory_space<vmem>>, vector<8x128xf32>
    tpu.vector_store %arg5[%c0_25, %c0_26], %48 {strides = array<i32>} : memref<128x128xf32, #tpu.memory_space<vmem>>, vector<8x128xf32>,
    %c1_27 = arith.constant 1 : index
    %50 = memref.load %arg0[%c1_27] : memref<20xf32, #tpu.memory_space<smem>>
    %c640 = arith.constant 640 : index
    %c0_28 = arith.constant 0 : index
    %51 = vector.load %arg1[%c640, %c0_28] : memref<688x128xf32, #tpu.memory_space<vmem>>, vector<32x128xf32>
    %52 = vector.broadcast %50 : f32 to vector<32x128xf32>
    %53 = arith.mulf %52, %51 : vector<32x128xf32>
    %c5 = arith.constant 5 : index
    %54 = memref.load %arg0[%c5] : memref<20xf32, #tpu.memory_space<smem>>
    %c0_29 = arith.constant 0 : index
    %c0_30 = arith.constant 0 : index
    %55 = vector.load %arg5[%c0_29, %c0_30] : memref<128x128xf32, #tpu.memory_space<vmem>>, vector<1x128xf32>
    %56 = vector.shape_cast %55 : vector<1x128xf32> to vector<1x128xf32>
    %57 = vector.broadcast %56 : vector<1x128xf32> to vector<2x128xf32>
    %c0_31 = arith.constant 0 : index
    %c0_32 = arith.constant 0 : index
    %58 = vector.load %arg6[%c0_31, %c0_32] : memref<512x128xf32, #tpu.memory_space<vmem>>, vector<2x128xf32>
    tpu.vector_store %arg6[%c0_31, %c0_32], %57 {strides = array<i32>} : memref<512x128xf32, #tpu.memory_space<vmem>>, vector<2x128xf32>,
    %c4_33 = arith.constant 4 : index
    %c0_34 = arith.constant 0 : index
    %59 = vector.load %arg6[%c4_33, %c0_34] : memref<512x128xf32, #tpu.memory_space<vmem>>, vector<2x128xf32>
    tpu.vector_store %arg6[%c4_33, %c0_34], %57 {strides = array<i32>} : memref<512x128xf32, #tpu.memory_space<vmem>>, vector<2x128xf32>,
    %c1_35 = arith.constant 1 : index
    %c0_36 = arith.constant 0 : index
    %60 = vector.load %arg5[%c1_35, %c0_36] : memref<128x128xf32, #tpu.memory_space<vmem>>, vector<1x128xf32>
    %61 = vector.shape_cast %60 : vector<1x128xf32> to vector<1x128xf32>
    %62 = vector.broadcast %61 : vector<1x128xf32> to vector<2x128xf32>
    %c2_37 = arith.constant 2 : index
    %c0_38 = arith.constant 0 : index
    %63 = vector.load %arg6[%c2_37, %c0_38] : memref<512x128xf32, #tpu.memory_space<vmem>>, vector<2x128xf32>
    tpu.vector_store %arg6[%c2_37, %c0_38], %62 {strides = array<i32>} : memref<512x128xf32, #tpu.memory_space<vmem>>, vector<2x128xf32>,
    %c6_39 = arith.constant 6 : index
    %c0_40 = arith.constant 0 : index
    %64 = vector.load %arg6[%c6_39, %c0_40] : memref<512x128xf32, #tpu.memory_space<vmem>>, vector<2x128xf32>
    tpu.vector_store %arg6[%c6_39, %c0_40], %62 {strides = array<i32>} : memref<512x128xf32, #tpu.memory_space<vmem>>, vector<2x128xf32>,
    %c2_41 = arith.constant 2 : index
    %c0_42 = arith.constant 0 : index
    %65 = vector.load %arg5[%c2_41, %c0_42] : memref<128x128xf32, #tpu.memory_space<vmem>>, vector<1x128xf32>
    %66 = vector.shape_cast %65 : vector<1x128xf32> to vector<1x128xf32>
    %67 = vector.broadcast %66 : vector<1x128xf32> to vector<2x128xf32>
    %c8 = arith.constant 8 : index
    %c0_43 = arith.constant 0 : index
    %68 = vector.load %arg6[%c8, %c0_43] : memref<512x128xf32, #tpu.memory_space<vmem>>, vector<2x128xf32>
    tpu.vector_store %arg6[%c8, %c0_43], %67 {strides = array<i32>} : memref<512x128xf32, #tpu.memory_space<vmem>>, vector<2x128xf32>,
    %c12 = arith.constant 12 : index
    %c0_44 = arith.constant 0 : index
    %69 = vector.load %arg6[%c12, %c0_44] : memref<512x128xf32, #tpu.memory_space<vmem>>, vector<2x128xf32>
    tpu.vector_store %arg6[%c12, %c0_44], %67 {strides = array<i32>} : memref<512x128xf32, #tpu.memory_space<vmem>>, vector<2x128xf32>,
    %c3 = arith.constant 3 : index
    %c0_45 = arith.constant 0 : index
    %70 = vector.load %arg5[%c3, %c0_45] : memref<128x128xf32, #tpu.memory_space<vmem>>, vector<1x128xf32>
    %71 = vector.shape_cast %70 : vector<1x128xf32> to vector<1x128xf32>
    %72 = vector.broadcast %71 : vector<1x128xf32> to vector<2x128xf32>
    %c10 = arith.constant 10 : index
    %c0_46 = arith.constant 0 : index
    %73 = vector.load %arg6[%c10, %c0_46] : memref<512x128xf32, #tpu.memory_space<vmem>>, vector<2x128xf32>
    tpu.vector_store %arg6[%c10, %c0_46], %72 {strides = array<i32>} : memref<512x128xf32, #tpu.memory_space<vmem>>, vector<2x128xf32>,
    %c14 = arith.constant 14 : index
    %c0_47 = arith.constant 0 : index
    %74 = vector.load %arg6[%c14, %c0_47] : memref<512x128xf32, #tpu.memory_space<vmem>>, vector<2x128xf32>
    tpu.vector_store %arg6[%c14, %c0_47], %72 {strides = array<i32>} : memref<512x128xf32, #tpu.memory_space<vmem>>, vector<2x128xf32>,
    %c4_48 = arith.constant 4 : index
    %c0_49 = arith.constant 0 : index
    %75 = vector.load %arg5[%c4_48, %c0_49] : memref<128x128xf32, #tpu.memory_space<vmem>>, vector<1x128xf32>
    %76 = vector.shape_cast %75 : vector<1x128xf32> to vector<1x128xf32>
    %77 = vector.broadcast %76 : vector<1x128xf32> to vector<2x128xf32>
    %c16 = arith.constant 16 : index
    %c0_50 = arith.constant 0 : index
    %78 = vector.load %arg6[%c16, %c0_50] : memref<512x128xf32, #tpu.memory_space<vmem>>, vector<2x128xf32>
    tpu.vector_store %arg6[%c16, %c0_50], %77 {strides = array<i32>} : memref<512x128xf32, #tpu.memory_space<vmem>>, vector<2x128xf32>,
    %c20 = arith.constant 20 : index
    %c0_51 = arith.constant 0 : index
    %79 = vector.load %arg6[%c20, %c0_51] : memref<512x128xf32, #tpu.memory_space<vmem>>, vector<2x128xf32>
    tpu.vector_store %arg6[%c20, %c0_51], %77 {strides = array<i32>} : memref<512x128xf32, #tpu.memory_space<vmem>>, vector<2x128xf32>,
    %c5_52 = arith.constant 5 : index
    %c0_53 = arith.constant 0 : index
    %80 = vector.load %arg5[%c5_52, %c0_53] : memref<128x128xf32, #tpu.memory_space<vmem>>, vector<1x128xf32>
    %81 = vector.shape_cast %80 : vector<1x128xf32> to vector<1x128xf32>
    %82 = vector.broadcast %81 : vector<1x128xf32> to vector<2x128xf32>
    %c18 = arith.constant 18 : index
    %c0_54 = arith.constant 0 : index
    %83 = vector.load %arg6[%c18, %c0_54] : memref<512x128xf32, #tpu.memory_space<vmem>>, vector<2x128xf32>
    tpu.vector_store %arg6[%c18, %c0_54], %82 {strides = array<i32>} : memref<512x128xf32, #tpu.memory_space<vmem>>, vector<2x128xf32>,
    %c22 = arith.constant 22 : index
    %c0_55 = arith.constant 0 : index
    %84 = vector.load %arg6[%c22, %c0_55] : memref<512x128xf32, #tpu.memory_space<vmem>>, vector<2x128xf32>
    tpu.vector_store %arg6[%c22, %c0_55], %82 {strides = array<i32>} : memref<512x128xf32, #tpu.memory_space<vmem>>, vector<2x128xf32>,
    %c6_56 = arith.constant 6 : index
    %c0_57 = arith.constant 0 : index
    %85 = vector.load %arg5[%c6_56, %c0_57] : memref<128x128xf32, #tpu.memory_space<vmem>>, vector<1x128xf32>
    %86 = vector.shape_cast %85 : vector<1x128xf32> to vector<1x128xf32>
    %87 = vector.broadcast %86 : vector<1x128xf32> to vector<2x128xf32>
    %c24 = arith.constant 24 : index
    %c0_58 = arith.constant 0 : index
    %88 = vector.load %arg6[%c24, %c0_58] : memref<512x128xf32, #tpu.memory_space<vmem>>, vector<2x128xf32>
    tpu.vector_store %arg6[%c24, %c0_58], %87 {strides = array<i32>} : memref<512x128xf32, #tpu.memory_space<vmem>>, vector<2x128xf32>,
    %c28 = arith.constant 28 : index
    %c0_59 = arith.constant 0 : index
    %89 = vector.load %arg6[%c28, %c0_59] : memref<512x128xf32, #tpu.memory_space<vmem>>, vector<2x128xf32>
    tpu.vector_store %arg6[%c28, %c0_59], %87 {strides = array<i32>} : memref<512x128xf32, #tpu.memory_space<vmem>>, vector<2x128xf32>,
    %c7 = arith.constant 7 : index
    %c0_60 = arith.constant 0 : index
    %90 = vector.load %arg5[%c7, %c0_60] : memref<128x128xf32, #tpu.memory_space<vmem>>, vector<1x128xf32>
    %91 = vector.shape_cast %90 : vector<1x128xf32> to vector<1x128xf32>
    %92 = vector.broadcast %91 : vector<1x128xf32> to vector<2x128xf32>
    %c26 = arith.constant 26 : index
    %c0_61 = arith.constant 0 : index
    %93 = vector.load %arg6[%c26, %c0_61] : memref<512x128xf32, #tpu.memory_space<vmem>>, vector<2x128xf32>
    tpu.vector_store %arg6[%c26, %c0_61], %92 {strides = array<i32>} : memref<512x128xf32, #tpu.memory_space<vmem>>, vector<2x128xf32>,
    %c30 = arith.constant 30 : index
    %c0_62 = arith.constant 0 : index
    %94 = vector.load %arg6[%c30, %c0_62] : memref<512x128xf32, #tpu.memory_space<vmem>>, vector<2x128xf32>
    tpu.vector_store %arg6[%c30, %c0_62], %92 {strides = array<i32>} : memref<512x128xf32, #tpu.memory_space<vmem>>, vector<2x128xf32>,
    %c0_63 = arith.constant 0 : index
    %c0_64 = arith.constant 0 : index
    %95 = vector.load %arg6[%c0_63, %c0_64] : memref<512x128xf32, #tpu.memory_space<vmem>>, vector<32x128xf32>
    %96 = vector.broadcast %54 : f32 to vector<32x128xf32>
    %97 = arith.mulf %96, %95 : vector<32x128xf32>
    %98 = arith.addf %53, %97 : vector<32x128xf32>
    %99 = arith.truncf %98 : vector<32x128xf32> to vector<32x128xbf16>
    %c1_65 = arith.constant 1 : index
    %c0_66 = arith.constant 0 : index
    %c0_67 = arith.constant 0 : index
    %100 = vector.load %arg2[%c1_65, %c0_66, %c0_67] : memref<8x128x128xbf16, #tpu.memory_space<vmem>>, vector<1x128x128xbf16>
    %101 = vector.shape_cast %100 : vector<1x128x128xbf16> to vector<128x128xbf16>
    %cst_68 = arith.constant dense<0.000000e+00> : vector<32x128xf32>
    %102 = tpu.matmul %99, %101, %cst_68 {dimension_numbers = #tpu.dot_dimension_numbers<[1], [0], [0], [1], [0, 0, 1, 1], [], []>} : vector<32x128xbf16>, vector<128x128xbf16>, vector<32x128xf32> -> vector<32x128xf32>
    %cst_69 = arith.constant dense<0.000000e+00> : vector<128xf32>
    %103 = vector.multi_reduction <add>, %102, %cst_69 [0] : vector<32x128xf32> to vector<128xf32>
    %104 = vector.shape_cast %103 : vector<128xf32> to vector<1x128xf32>
    %cst_70 = arith.constant 3.125000e-02 : f32
    %105 = vector.broadcast %cst_70 : f32 to vector<1x128xf32>
    %106 = arith.mulf %104, %105 : vector<1x128xf32>
    %107 = arith.mulf %102, %102 : vector<32x128xf32>
    %cst_71 = arith.constant dense<0.000000e+00> : vector<128xf32>
    %108 = vector.multi_reduction <add>, %107, %cst_71 [0] : vector<32x128xf32> to vector<128xf32>
    %109 = vector.shape_cast %108 : vector<128xf32> to vector<1x128xf32>
    %cst_72 = arith.constant 3.125000e-02 : f32
    %110 = vector.broadcast %cst_72 : f32 to vector<1x128xf32>
    %111 = arith.mulf %109, %110 : vector<1x128xf32>
    %112 = arith.mulf %106, %106 : vector<1x128xf32>
    %113 = arith.subf %111, %112 : vector<1x128xf32>
    %c2_73 = arith.constant 2 : index
    %c0_74 = arith.constant 0 : index
    %114 = vector.load %arg3[%c2_73, %c0_74] : memref<16x128xf32, #tpu.memory_space<vmem>>, vector<1x128xf32>
    %cst_75 = arith.constant 4.000000e-05 : f32
    %115 = vector.broadcast %cst_75 : f32 to vector<1x128xf32>
    %116 = arith.addf %113, %115 : vector<1x128xf32>
    %117 = math.rsqrt %116 : vector<1x128xf32>
    %118 = arith.mulf %114, %117 : vector<1x128xf32>
    %c3_76 = arith.constant 3 : index
    %c0_77 = arith.constant 0 : index
    %119 = vector.load %arg3[%c3_76, %c0_77] : memref<16x128xf32, #tpu.memory_space<vmem>>, vector<1x128xf32>
    %120 = arith.mulf %106, %118 : vector<1x128xf32>
    %121 = arith.subf %119, %120 : vector<1x128xf32>
    %122 = vector.broadcast %118 : vector<1x128xf32> to vector<32x128xf32>
    %123 = arith.mulf %102, %122 : vector<32x128xf32>
    %124 = vector.broadcast %121 : vector<1x128xf32> to vector<32x128xf32>
    %125 = arith.addf %123, %124 : vector<32x128xf32>
    %cst_78 = arith.constant 0.000000e+00 : f32
    %126 = vector.broadcast %cst_78 : f32 to vector<32x128xf32>
    %127 = arith.maximumf %125, %126 : vector<32x128xf32>
    %c0_79 = arith.constant 0 : index
    %c0_80 = arith.constant 0 : index
    %128 = vector.load %arg5[%c0_79, %c0_80] : memref<128x128xf32, #tpu.memory_space<vmem>>, vector<32x128xf32>
    tpu.vector_store %arg5[%c0_79, %c0_80], %127 {strides = array<i32>} : memref<128x128xf32, #tpu.memory_space<vmem>>, vector<32x128xf32>,
    %c2_81 = arith.constant 2 : index
    %129 = memref.load %arg0[%c2_81] : memref<20xf32, #tpu.memory_space<smem>>
    %c512 = arith.constant 512 : index
    %c0_82 = arith.constant 0 : index
    %130 = vector.load %arg1[%c512, %c0_82] : memref<688x128xf32, #tpu.memory_space<vmem>>, vector<128x128xf32>
    %131 = vector.broadcast %129 : f32 to vector<128x128xf32>
    %132 = arith.mulf %131, %130 : vector<128x128xf32>
    %c6_83 = arith.constant 6 : index
    %133 = memref.load %arg0[%c6_83] : memref<20xf32, #tpu.memory_space<smem>>
    %c0_84 = arith.constant 0 : index
    %c0_85 = arith.constant 0 : index
    %134 = vector.load %arg5[%c0_84, %c0_85] : memref<128x128xf32, #tpu.memory_space<vmem>>, vector<1x128xf32>
    %135 = vector.shape_cast %134 : vector<1x128xf32> to vector<1x128xf32>
    %136 = vector.broadcast %135 : vector<1x128xf32> to vector<2x128xf32>
    %c0_86 = arith.constant 0 : index
    %c0_87 = arith.constant 0 : index
    %137 = vector.load %arg6[%c0_86, %c0_87] : memref<512x128xf32, #tpu.memory_space<vmem>>, vector<2x128xf32>
    tpu.vector_store %arg6[%c0_86, %c0_87], %136 {strides = array<i32>} : memref<512x128xf32, #tpu.memory_space<vmem>>, vector<2x128xf32>,
    %c8_88 = arith.constant 8 : index
    %c0_89 = arith.constant 0 : index
    %138 = vector.load %arg6[%c8_88, %c0_89] : memref<512x128xf32, #tpu.memory_space<vmem>>, vector<2x128xf32>
    tpu.vector_store %arg6[%c8_88, %c0_89], %136 {strides = array<i32>} : memref<512x128xf32, #tpu.memory_space<vmem>>, vector<2x128xf32>,
    %c1_90 = arith.constant 1 : index
    %c0_91 = arith.constant 0 : index
    %139 = vector.load %arg5[%c1_90, %c0_91] : memref<128x128xf32, #tpu.memory_space<vmem>>, vector<1x128xf32>
    %140 = vector.shape_cast %139 : vector<1x128xf32> to vector<1x128xf32>
    %141 = vector.broadcast %140 : vector<1x128xf32> to vector<2x128xf32>
    %c2_92 = arith.constant 2 : index
    %c0_93 = arith.constant 0 : index
    %142 = vector.load %arg6[%c2_92, %c0_93] : memref<512x128xf32, #tpu.memory_space<vmem>>, vector<2x128xf32>
    tpu.vector_store %arg6[%c2_92, %c0_93], %141 {strides = array<i32>} : memref<512x128xf32, #tpu.memory_space<vmem>>, vector<2x128xf32>,
    %c10_94 = arith.constant 10 : index
    %c0_95 = arith.constant 0 : index
    %143 = vector.load %arg6[%c10_94, %c0_95] : memref<512x128xf32, #tpu.memory_space<vmem>>, vector<2x128xf32>
    tpu.vector_store %arg6[%c10_94, %c0_95], %141 {strides = array<i32>} : memref<512x128xf32, #tpu.memory_space<vmem>>, vector<2x128xf32>,
    %c2_96 = arith.constant 2 : index
    %c0_97 = arith.constant 0 : index
    %144 = vector.load %arg5[%c2_96, %c0_97] : memref<128x128xf32, #tpu.memory_space<vmem>>, vector<1x128xf32>
    %145 = vector.shape_cast %144 : vector<1x128xf32> to vector<1x128xf32>
    %146 = vector.broadcast %145 : vector<1x128xf32> to vector<2x128xf32>
    %c4_98 = arith.constant 4 : index
    %c0_99 = arith.constant 0 : index
    %147 = vector.load %arg6[%c4_98, %c0_99] : memref<512x128xf32, #tpu.memory_space<vmem>>, vector<2x128xf32>
    tpu.vector_store %arg6[%c4_98, %c0_99], %146 {strides = array<i32>} : memref<512x128xf32, #tpu.memory_space<vmem>>, vector<2x128xf32>,
    %c12_100 = arith.constant 12 : index
    %c0_101 = arith.constant 0 : index
    %148 = vector.load %arg6[%c12_100, %c0_101] : memref<512x128xf32, #tpu.memory_space<vmem>>, vector<2x128xf32>
    tpu.vector_store %arg6[%c12_100, %c0_101], %146 {strides = array<i32>} : memref<512x128xf32, #tpu.memory_space<vmem>>, vector<2x128xf32>,
    %c3_102 = arith.constant 3 : index
    %c0_103 = arith.constant 0 : index
    %149 = vector.load %arg5[%c3_102, %c0_103] : memref<128x128xf32, #tpu.memory_space<vmem>>, vector<1x128xf32>
    %150 = vector.shape_cast %149 : vector<1x128xf32> to vector<1x128xf32>
    %151 = vector.broadcast %150 : vector<1x128xf32> to vector<2x128xf32>
    %c6_104 = arith.constant 6 : index
    %c0_105 = arith.constant 0 : index
    %152 = vector.load %arg6[%c6_104, %c0_105] : memref<512x128xf32, #tpu.memory_space<vmem>>, vector<2x128xf32>
    tpu.vector_store %arg6[%c6_104, %c0_105], %151 {strides = array<i32>} : memref<512x128xf32, #tpu.memory_space<vmem>>, vector<2x128xf32>,
    %c14_106 = arith.constant 14 : index
    %c0_107 = arith.constant 0 : index
    %153 = vector.load %arg6[%c14_106, %c0_107] : memref<512x128xf32, #tpu.memory_space<vmem>>, vector<2x128xf32>
    tpu.vector_store %arg6[%c14_106, %c0_107], %151 {strides = array<i32>} : memref<512x128xf32, #tpu.memory_space<vmem>>, vector<2x128xf32>,
    %c4_108 = arith.constant 4 : index
    %c0_109 = arith.constant 0 : index
    %154 = vector.load %arg5[%c4_108, %c0_109] : memref<128x128xf32, #tpu.memory_space<vmem>>, vector<1x128xf32>
    %155 = vector.shape_cast %154 : vector<1x128xf32> to vector<1x128xf32>
    %156 = vector.broadcast %155 : vector<1x128xf32> to vector<2x128xf32>
    %c16_110 = arith.constant 16 : index
    %c0_111 = arith.constant 0 : index
    %157 = vector.load %arg6[%c16_110, %c0_111] : memref<512x128xf32, #tpu.memory_space<vmem>>, vector<2x128xf32>
    tpu.vector_store %arg6[%c16_110, %c0_111], %156 {strides = array<i32>} : memref<512x128xf32, #tpu.memory_space<vmem>>, vector<2x128xf32>,
    %c24_112 = arith.constant 24 : index
    %c0_113 = arith.constant 0 : index
    %158 = vector.load %arg6[%c24_112, %c0_113] : memref<512x128xf32, #tpu.memory_space<vmem>>, vector<2x128xf32>
    tpu.vector_store %arg6[%c24_112, %c0_113], %156 {strides = array<i32>} : memref<512x128xf32, #tpu.memory_space<vmem>>, vector<2x128xf32>,
    %c5_114 = arith.constant 5 : index
    %c0_115 = arith.constant 0 : index
    %159 = vector.load %arg5[%c5_114, %c0_115] : memref<128x128xf32, #tpu.memory_space<vmem>>, vector<1x128xf32>
    %160 = vector.shape_cast %159 : vector<1x128xf32> to vector<1x128xf32>
    %161 = vector.broadcast %160 : vector<1x128xf32> to vector<2x128xf32>
    %c18_116 = arith.constant 18 : index
    %c0_117 = arith.constant 0 : index
    %162 = vector.load %arg6[%c18_116, %c0_117] : memref<512x128xf32, #tpu.memory_space<vmem>>, vector<2x128xf32>
    tpu.vector_store %arg6[%c18_116, %c0_117], %161 {strides = array<i32>} : memref<512x128xf32, #tpu.memory_space<vmem>>, vector<2x128xf32>,
    %c26_118 = arith.constant 26 : index
    %c0_119 = arith.constant 0 : index
    %163 = vector.load %arg6[%c26_118, %c0_119] : memref<512x128xf32, #tpu.memory_space<vmem>>, vector<2x128xf32>
    tpu.vector_store %arg6[%c26_118, %c0_119], %161 {strides = array<i32>} : memref<512x128xf32, #tpu.memory_space<vmem>>, vector<2x128xf32>,
    %c6_120 = arith.constant 6 : index
    %c0_121 = arith.constant 0 : index
    %164 = vector.load %arg5[%c6_120, %c0_121] : memref<128x128xf32, #tpu.memory_space<vmem>>, vector<1x128xf32>
    %165 = vector.shape_cast %164 : vector<1x128xf32> to vector<1x128xf32>
    %166 = vector.broadcast %165 : vector<1x128xf32> to vector<2x128xf32>
    %c20_122 = arith.constant 20 : index
    %c0_123 = arith.constant 0 : index
    %167 = vector.load %arg6[%c20_122, %c0_123] : memref<512x128xf32, #tpu.memory_space<vmem>>, vector<2x128xf32>
    tpu.vector_store %arg6[%c20_122, %c0_123], %166 {strides = array<i32>} : memref<512x128xf32, #tpu.memory_space<vmem>>, vector<2x128xf32>,
    %c28_124 = arith.constant 28 : index
    %c0_125 = arith.constant 0 : index
    %168 = vector.load %arg6[%c28_124, %c0_125] : memref<512x128xf32, #tpu.memory_space<vmem>>, vector<2x128xf32>
    tpu.vector_store %arg6[%c28_124, %c0_125], %166 {strides = array<i32>} : memref<512x128xf32, #tpu.memory_space<vmem>>, vector<2x128xf32>,
    %c7_126 = arith.constant 7 : index
    %c0_127 = arith.constant 0 : index
    %169 = vector.load %arg5[%c7_126, %c0_127] : memref<128x128xf32, #tpu.memory_space<vmem>>, vector<1x128xf32>
    %170 = vector.shape_cast %169 : vector<1x128xf32> to vector<1x128xf32>
    %171 = vector.broadcast %170 : vector<1x128xf32> to vector<2x128xf32>
    %c22_128 = arith.constant 22 : index
    %c0_129 = arith.constant 0 : index
    %172 = vector.load %arg6[%c22_128, %c0_129] : memref<512x128xf32, #tpu.memory_space<vmem>>, vector<2x128xf32>
    tpu.vector_store %arg6[%c22_128, %c0_129], %171 {strides = array<i32>} : memref<512x128xf32, #tpu.memory_space<vmem>>, vector<2x128xf32>,
    %c30_130 = arith.constant 30 : index
    %c0_131 = arith.constant 0 : index
    %173 = vector.load %arg6[%c30_130, %c0_131] : memref<512x128xf32, #tpu.memory_space<vmem>>, vector<2x128xf32>
    tpu.vector_store %arg6[%c30_130, %c0_131], %171 {strides = array<i32>} : memref<512x128xf32, #tpu.memory_space<vmem>>, vector<2x128xf32>,
    %c8_132 = arith.constant 8 : index
    %c0_133 = arith.constant 0 : index
    %174 = vector.load %arg5[%c8_132, %c0_133] : memref<128x128xf32, #tpu.memory_space<vmem>>, vector<1x128xf32>
    %175 = vector.shape_cast %174 : vector<1x128xf32> to vector<1x128xf32>
    %176 = vector.broadcast %175 : vector<1x128xf32> to vector<2x128xf32>
    %c32 = arith.constant 32 : index
    %c0_134 = arith.constant 0 : index
    %177 = vector.load %arg6[%c32, %c0_134] : memref<512x128xf32, #tpu.memory_space<vmem>>, vector<2x128xf32>
    tpu.vector_store %arg6[%c32, %c0_134], %176 {strides = array<i32>} : memref<512x128xf32, #tpu.memory_space<vmem>>, vector<2x128xf32>,
    %c40 = arith.constant 40 : index
    %c0_135 = arith.constant 0 : index
    %178 = vector.load %arg6[%c40, %c0_135] : memref<512x128xf32, #tpu.memory_space<vmem>>, vector<2x128xf32>
    tpu.vector_store %arg6[%c40, %c0_135], %176 {strides = array<i32>} : memref<512x128xf32, #tpu.memory_space<vmem>>, vector<2x128xf32>,
    %c9 = arith.constant 9 : index
    %c0_136 = arith.constant 0 : index
    %179 = vector.load %arg5[%c9, %c0_136] : memref<128x128xf32, #tpu.memory_space<vmem>>, vector<1x128xf32>
    %180 = vector.shape_cast %179 : vector<1x128xf32> to vector<1x128xf32>
    %181 = vector.broadcast %180 : vector<1x128xf32> to vector<2x128xf32>
    %c34 = arith.constant 34 : index
    %c0_137 = arith.constant 0 : index
    %182 = vector.load %arg6[%c34, %c0_137] : memref<512x128xf32, #tpu.memory_space<vmem>>, vector<2x128xf32>
    tpu.vector_store %arg6[%c34, %c0_137], %181 {strides = array<i32>} : memref<512x128xf32, #tpu.memory_space<vmem>>, vector<2x128xf32>,
    %c42 = arith.constant 42 : index
    %c0_138 = arith.constant 0 : index
    %183 = vector.load %arg6[%c42, %c0_138] : memref<512x128xf32, #tpu.memory_space<vmem>>, vector<2x128xf32>
    tpu.vector_store %arg6[%c42, %c0_138], %181 {strides = array<i32>} : memref<512x128xf32, #tpu.memory_space<vmem>>, vector<2x128xf32>,
    %c10_139 = arith.constant 10 : index
    %c0_140 = arith.constant 0 : index
    %184 = vector.load %arg5[%c10_139, %c0_140] : memref<128x128xf32, #tpu.memory_space<vmem>>, vector<1x128xf32>
    %185 = vector.shape_cast %184 : vector<1x128xf32> to vector<1x128xf32>
    %186 = vector.broadcast %185 : vector<1x128xf32> to vector<2x128xf32>
    %c36 = arith.constant 36 : index
    %c0_141 = arith.constant 0 : index
    %187 = vector.load %arg6[%c36, %c0_141] : memref<512x128xf32, #tpu.memory_space<vmem>>, vector<2x128xf32>
    tpu.vector_store %arg6[%c36, %c0_141], %186 {strides = array<i32>} : memref<512x128xf32, #tpu.memory_space<vmem>>, vector<2x128xf32>,
    %c44 = arith.constant 44 : index
    %c0_142 = arith.constant 0 : index
    %188 = vector.load %arg6[%c44, %c0_142] : memref<512x128xf32, #tpu.memory_space<vmem>>, vector<2x128xf32>
    tpu.vector_store %arg6[%c44, %c0_142], %186 {strides = array<i32>} : memref<512x128xf32, #tpu.memory_space<vmem>>, vector<2x128xf32>,
    %c11 = arith.constant 11 : index
    %c0_143 = arith.constant 0 : index
    %189 = vector.load %arg5[%c11, %c0_143] : memref<128x128xf32, #tpu.memory_space<vmem>>, vector<1x128xf32>
    %190 = vector.shape_cast %189 : vector<1x128xf32> to vector<1x128xf32>
    %191 = vector.broadcast %190 : vector<1x128xf32> to vector<2x128xf32>
    %c38 = arith.constant 38 : index
    %c0_144 = arith.constant 0 : index
    %192 = vector.load %arg6[%c38, %c0_144] : memref<512x128xf32, #tpu.memory_space<vmem>>, vector<2x128xf32>
    tpu.vector_store %arg6[%c38, %c0_144], %191 {strides = array<i32>} : memref<512x128xf32, #tpu.memory_space<vmem>>, vector<2x128xf32>,
    %c46 = arith.constant 46 : index
    %c0_145 = arith.constant 0 : index
    %193 = vector.load %arg6[%c46, %c0_145] : memref<512x128xf32, #tpu.memory_space<vmem>>, vector<2x128xf32>
    tpu.vector_store %arg6[%c46, %c0_145], %191 {strides = array<i32>} : memref<512x128xf32, #tpu.memory_space<vmem>>, vector<2x128xf32>,
    %c12_146 = arith.constant 12 : index
    %c0_147 = arith.constant 0 : index
    %194 = vector.load %arg5[%c12_146, %c0_147] : memref<128x128xf32, #tpu.memory_space<vmem>>, vector<1x128xf32>
    %195 = vector.shape_cast %194 : vector<1x128xf32> to vector<1x128xf32>
    %196 = vector.broadcast %195 : vector<1x128xf32> to vector<2x128xf32>
    %c48 = arith.constant 48 : index
    %c0_148 = arith.constant 0 : index
    %197 = vector.load %arg6[%c48, %c0_148] : memref<512x128xf32, #tpu.memory_space<vmem>>, vector<2x128xf32>
    tpu.vector_store %arg6[%c48, %c0_148], %196 {strides = array<i32>} : memref<512x128xf32, #tpu.memory_space<vmem>>, vector<2x128xf32>,
    %c56 = arith.constant 56 : index
    %c0_149 = arith.constant 0 : index
    %198 = vector.load %arg6[%c56, %c0_149] : memref<512x128xf32, #tpu.memory_space<vmem>>, vector<2x128xf32>
    tpu.vector_store %arg6[%c56, %c0_149], %196 {strides = array<i32>} : memref<512x128xf32, #tpu.memory_space<vmem>>, vector<2x128xf32>,
    %c13 = arith.constant 13 : index
    %c0_150 = arith.constant 0 : index
    %199 = vector.load %arg5[%c13, %c0_150] : memref<128x128xf32, #tpu.memory_space<vmem>>, vector<1x128xf32>
    %200 = vector.shape_cast %199 : vector<1x128xf32> to vector<1x128xf32>
    %201 = vector.broadcast %200 : vector<1x128xf32> to vector<2x128xf32>
    %c50 = arith.constant 50 : index
    %c0_151 = arith.constant 0 : index
    %202 = vector.load %arg6[%c50, %c0_151] : memref<512x128xf32, #tpu.memory_space<vmem>>, vector<2x128xf32>
    tpu.vector_store %arg6[%c50, %c0_151], %201 {strides = array<i32>} : memref<512x128xf32, #tpu.memory_space<vmem>>, vector<2x128xf32>,
    %c58 = arith.constant 58 : index
    %c0_152 = arith.constant 0 : index
    %203 = vector.load %arg6[%c58, %c0_152] : memref<512x128xf32, #tpu.memory_space<vmem>>, vector<2x128xf32>
    tpu.vector_store %arg6[%c58, %c0_152], %201 {strides = array<i32>} : memref<512x128xf32, #tpu.memory_space<vmem>>, vector<2x128xf32>,
    %c14_153 = arith.constant 14 : index
    %c0_154 = arith.constant 0 : index
    %204 = vector.load %arg5[%c14_153, %c0_154] : memref<128x128xf32, #tpu.memory_space<vmem>>, vector<1x128xf32>
    %205 = vector.shape_cast %204 : vector<1x128xf32> to vector<1x128xf32>
    %206 = vector.broadcast %205 : vector<1x128xf32> to vector<2x128xf32>
    %c52 = arith.constant 52 : index
    %c0_155 = arith.constant 0 : index
    %207 = vector.load %arg6[%c52, %c0_155] : memref<512x128xf32, #tpu.memory_space<vmem>>, vector<2x128xf32>
    tpu.vector_store %arg6[%c52, %c0_155], %206 {strides = array<i32>} : memref<512x128xf32, #tpu.memory_space<vmem>>, vector<2x128xf32>,
    %c60 = arith.constant 60 : index
    %c0_156 = arith.constant 0 : index
    %208 = vector.load %arg6[%c60, %c0_156] : memref<512x128xf32, #tpu.memory_space<vmem>>, vector<2x128xf32>
    tpu.vector_store %arg6[%c60, %c0_156], %206 {strides = array<i32>} : memref<512x128xf32, #tpu.memory_space<vmem>>, vector<2x128xf32>,
    %c15 = arith.constant 15 : index
    %c0_157 = arith.constant 0 : index
    %209 = vector.load %arg5[%c15, %c0_157] : memref<128x128xf32, #tpu.memory_space<vmem>>, vector<1x128xf32>
    %210 = vector.shape_cast %209 : vector<1x128xf32> to vector<1x128xf32>
    %211 = vector.broadcast %210 : vector<1x128xf32> to vector<2x128xf32>
    %c54 = arith.constant 54 : index
    %c0_158 = arith.constant 0 : index
    %212 = vector.load %arg6[%c54, %c0_158] : memref<512x128xf32, #tpu.memory_space<vmem>>, vector<2x128xf32>
    tpu.vector_store %arg6[%c54, %c0_158], %211 {strides = array<i32>} : memref<512x128xf32, #tpu.memory_space<vmem>>, vector<2x128xf32>,
    %c62 = arith.constant 62 : index
    %c0_159 = arith.constant 0 : index
    %213 = vector.load %arg6[%c62, %c0_159] : memref<512x128xf32, #tpu.memory_space<vmem>>, vector<2x128xf32>
    tpu.vector_store %arg6[%c62, %c0_159], %211 {strides = array<i32>} : memref<512x128xf32, #tpu.memory_space<vmem>>, vector<2x128xf32>,
    %c16_160 = arith.constant 16 : index
    %c0_161 = arith.constant 0 : index
    %214 = vector.load %arg5[%c16_160, %c0_161] : memref<128x128xf32, #tpu.memory_space<vmem>>, vector<1x128xf32>
    %215 = vector.shape_cast %214 : vector<1x128xf32> to vector<1x128xf32>
    %216 = vector.broadcast %215 : vector<1x128xf32> to vector<2x128xf32>
    %c64 = arith.constant 64 : index
    %c0_162 = arith.constant 0 : index
    %217 = vector.load %arg6[%c64, %c0_162] : memref<512x128xf32, #tpu.memory_space<vmem>>, vector<2x128xf32>
    tpu.vector_store %arg6[%c64, %c0_162], %216 {strides = array<i32>} : memref<512x128xf32, #tpu.memory_space<vmem>>, vector<2x128xf32>,
    %c72 = arith.constant 72 : index
    %c0_163 = arith.constant 0 : index
    %218 = vector.load %arg6[%c72, %c0_163] : memref<512x128xf32, #tpu.memory_space<vmem>>, vector<2x128xf32>
    tpu.vector_store %arg6[%c72, %c0_163], %216 {strides = array<i32>} : memref<512x128xf32, #tpu.memory_space<vmem>>, vector<2x128xf32>,
    %c17 = arith.constant 17 : index
    %c0_164 = arith.constant 0 : index
    %219 = vector.load %arg5[%c17, %c0_164] : memref<128x128xf32, #tpu.memory_space<vmem>>, vector<1x128xf32>
    %220 = vector.shape_cast %219 : vector<1x128xf32> to vector<1x128xf32>
    %221 = vector.broadcast %220 : vector<1x128xf32> to vector<2x128xf32>
    %c66 = arith.constant 66 : index
    %c0_165 = arith.constant 0 : index
    %222 = vector.load %arg6[%c66, %c0_165] : memref<512x128xf32, #tpu.memory_space<vmem>>, vector<2x128xf32>
    tpu.vector_store %arg6[%c66, %c0_165], %221 {strides = array<i32>} : memref<512x128xf32, #tpu.memory_space<vmem>>, vector<2x128xf32>,
    %c74 = arith.constant 74 : index
    %c0_166 = arith.constant 0 : index
    %223 = vector.load %arg6[%c74, %c0_166] : memref<512x128xf32, #tpu.memory_space<vmem>>, vector<2x128xf32>
    tpu.vector_store %arg6[%c74, %c0_166], %221 {strides = array<i32>} : memref<512x128xf32, #tpu.memory_space<vmem>>, vector<2x128xf32>,
    %c18_167 = arith.constant 18 : index
    %c0_168 = arith.constant 0 : index
    %224 = vector.load %arg5[%c18_167, %c0_168] : memref<128x128xf32, #tpu.memory_space<vmem>>, vector<1x128xf32>
    %225 = vector.shape_cast %224 : vector<1x128xf32> to vector<1x128xf32>
    %226 = vector.broadcast %225 : vector<1x128xf32> to vector<2x128xf32>
    %c68 = arith.constant 68 : index
    %c0_169 = arith.constant 0 : index
    %227 = vector.load %arg6[%c68, %c0_169] : memref<512x128xf32, #tpu.memory_space<vmem>>, vector<2x128xf32>
    tpu.vector_store %arg6[%c68, %c0_169], %226 {strides = array<i32>} : memref<512x128xf32, #tpu.memory_space<vmem>>, vector<2x128xf32>,
    %c76 = arith.constant 76 : index
    %c0_170 = arith.constant 0 : index
    %228 = vector.load %arg6[%c76, %c0_170] : memref<512x128xf32, #tpu.memory_space<vmem>>, vector<2x128xf32>
    tpu.vector_store %arg6[%c76, %c0_170], %226 {strides = array<i32>} : memref<512x128xf32, #tpu.memory_space<vmem>>, vector<2x128xf32>,
    %c19 = arith.constant 19 : index
    %c0_171 = arith.constant 0 : index
    %229 = vector.load %arg5[%c19, %c0_171] : memref<128x128xf32, #tpu.memory_space<vmem>>, vector<1x128xf32>
    %230 = vector.shape_cast %229 : vector<1x128xf32> to vector<1x128xf32>
    %231 = vector.broadcast %230 : vector<1x128xf32> to vector<2x128xf32>
    %c70 = arith.constant 70 : index
    %c0_172 = arith.constant 0 : index
    %232 = vector.load %arg6[%c70, %c0_172] : memref<512x128xf32, #tpu.memory_space<vmem>>, vector<2x128xf32>
    tpu.vector_store %arg6[%c70, %c0_172], %231 {strides = array<i32>} : memref<512x128xf32, #tpu.memory_space<vmem>>, vector<2x128xf32>,
    %c78 = arith.constant 78 : index
    %c0_173 = arith.constant 0 : index
    %233 = vector.load %arg6[%c78, %c0_173] : memref<512x128xf32, #tpu.memory_space<vmem>>, vector<2x128xf32>
    tpu.vector_store %arg6[%c78, %c0_173], %231 {strides = array<i32>} : memref<512x128xf32, #tpu.memory_space<vmem>>, vector<2x128xf32>,
    %c20_174 = arith.constant 20 : index
    %c0_175 = arith.constant 0 : index
    %234 = vector.load %arg5[%c20_174, %c0_175] : memref<128x128xf32, #tpu.memory_space<vmem>>, vector<1x128xf32>
    %235 = vector.shape_cast %234 : vector<1x128xf32> to vector<1x128xf32>
    %236 = vector.broadcast %235 : vector<1x128xf32> to vector<2x128xf32>
    %c80 = arith.constant 80 : index
    %c0_176 = arith.constant 0 : index
    %237 = vector.load %arg6[%c80, %c0_176] : memref<512x128xf32, #tpu.memory_space<vmem>>, vector<2x128xf32>
    tpu.vector_store %arg6[%c80, %c0_176], %236 {strides = array<i32>} : memref<512x128xf32, #tpu.memory_space<vmem>>, vector<2x128xf32>,
    %c88 = arith.constant 88 : index
    %c0_177 = arith.constant 0 : index
    %238 = vector.load %arg6[%c88, %c0_177] : memref<512x128xf32, #tpu.memory_space<vmem>>, vector<2x128xf32>
    tpu.vector_store %arg6[%c88, %c0_177], %236 {strides = array<i32>} : memref<512x128xf32, #tpu.memory_space<vmem>>, vector<2x128xf32>,
    %c21 = arith.constant 21 : index
    %c0_178 = arith.constant 0 : index
    %239 = vector.load %arg5[%c21, %c0_178] : memref<128x128xf32, #tpu.memory_space<vmem>>, vector<1x128xf32>
    %240 = vector.shape_cast %239 : vector<1x128xf32> to vector<1x128xf32>
    %241 = vector.broadcast %240 : vector<1x128xf32> to vector<2x128xf32>
    %c82 = arith.constant 82 : index
    %c0_179 = arith.constant 0 : index
    %242 = vector.load %arg6[%c82, %c0_179] : memref<512x128xf32, #tpu.memory_space<vmem>>, vector<2x128xf32>
    tpu.vector_store %arg6[%c82, %c0_179], %241 {strides = array<i32>} : memref<512x128xf32, #tpu.memory_space<vmem>>, vector<2x128xf32>,
    %c90 = arith.constant 90 : index
    %c0_180 = arith.constant 0 : index
    %243 = vector.load %arg6[%c90, %c0_180] : memref<512x128xf32, #tpu.memory_space<vmem>>, vector<2x128xf32>
    tpu.vector_store %arg6[%c90, %c0_180], %241 {strides = array<i32>} : memref<512x128xf32, #tpu.memory_space<vmem>>, vector<2x128xf32>,
    %c22_181 = arith.constant 22 : index
    %c0_182 = arith.constant 0 : index
    %244 = vector.load %arg5[%c22_181, %c0_182] : memref<128x128xf32, #tpu.memory_space<vmem>>, vector<1x128xf32>
    %245 = vector.shape_cast %244 : vector<1x128xf32> to vector<1x128xf32>
    %246 = vector.broadcast %245 : vector<1x128xf32> to vector<2x128xf32>
    %c84 = arith.constant 84 : index
    %c0_183 = arith.constant 0 : index
    %247 = vector.load %arg6[%c84, %c0_183] : memref<512x128xf32, #tpu.memory_space<vmem>>, vector<2x128xf32>
    tpu.vector_store %arg6[%c84, %c0_183], %246 {strides = array<i32>} : memref<512x128xf32, #tpu.memory_space<vmem>>, vector<2x128xf32>,
    %c92 = arith.constant 92 : index
    %c0_184 = arith.constant 0 : index
    %248 = vector.load %arg6[%c92, %c0_184] : memref<512x128xf32, #tpu.memory_space<vmem>>, vector<2x128xf32>
    tpu.vector_store %arg6[%c92, %c0_184], %246 {strides = array<i32>} : memref<512x128xf32, #tpu.memory_space<vmem>>, vector<2x128xf32>,
    %c23 = arith.constant 23 : index
    %c0_185 = arith.constant 0 : index
    %249 = vector.load %arg5[%c23, %c0_185] : memref<128x128xf32, #tpu.memory_space<vmem>>, vector<1x128xf32>
    %250 = vector.shape_cast %249 : vector<1x128xf32> to vector<1x128xf32>
    %251 = vector.broadcast %250 : vector<1x128xf32> to vector<2x128xf32>
    %c86 = arith.constant 86 : index
    %c0_186 = arith.constant 0 : index
    %252 = vector.load %arg6[%c86, %c0_186] : memref<512x128xf32, #tpu.memory_space<vmem>>, vector<2x128xf32>
    tpu.vector_store %arg6[%c86, %c0_186], %251 {strides = array<i32>} : memref<512x128xf32, #tpu.memory_space<vmem>>, vector<2x128xf32>,
    %c94 = arith.constant 94 : index
    %c0_187 = arith.constant 0 : index
    %253 = vector.load %arg6[%c94, %c0_187] : memref<512x128xf32, #tpu.memory_space<vmem>>, vector<2x128xf32>
    tpu.vector_store %arg6[%c94, %c0_187], %251 {strides = array<i32>} : memref<512x128xf32, #tpu.memory_space<vmem>>, vector<2x128xf32>,
    %c24_188 = arith.constant 24 : index
    %c0_189 = arith.constant 0 : index
    %254 = vector.load %arg5[%c24_188, %c0_189] : memref<128x128xf32, #tpu.memory_space<vmem>>, vector<1x128xf32>
    %255 = vector.shape_cast %254 : vector<1x128xf32> to vector<1x128xf32>
    %256 = vector.broadcast %255 : vector<1x128xf32> to vector<2x128xf32>
    %c96 = arith.constant 96 : index
    %c0_190 = arith.constant 0 : index
    %257 = vector.load %arg6[%c96, %c0_190] : memref<512x128xf32, #tpu.memory_space<vmem>>, vector<2x128xf32>
    tpu.vector_store %arg6[%c96, %c0_190], %256 {strides = array<i32>} : memref<512x128xf32, #tpu.memory_space<vmem>>, vector<2x128xf32>,
    %c104 = arith.constant 104 : index
    %c0_191 = arith.constant 0 : index
    %258 = vector.load %arg6[%c104, %c0_191] : memref<512x128xf32, #tpu.memory_space<vmem>>, vector<2x128xf32>
    tpu.vector_store %arg6[%c104, %c0_191], %256 {strides = array<i32>} : memref<512x128xf32, #tpu.memory_space<vmem>>, vector<2x128xf32>,
    %c25 = arith.constant 25 : index
    %c0_192 = arith.constant 0 : index
    %259 = vector.load %arg5[%c25, %c0_192] : memref<128x128xf32, #tpu.memory_space<vmem>>, vector<1x128xf32>
    %260 = vector.shape_cast %259 : vector<1x128xf32> to vector<1x128xf32>
    %261 = vector.broadcast %260 : vector<1x128xf32> to vector<2x128xf32>
    %c98 = arith.constant 98 : index
    %c0_193 = arith.constant 0 : index
    %262 = vector.load %arg6[%c98, %c0_193] : memref<512x128xf32, #tpu.memory_space<vmem>>, vector<2x128xf32>
    tpu.vector_store %arg6[%c98, %c0_193], %261 {strides = array<i32>} : memref<512x128xf32, #tpu.memory_space<vmem>>, vector<2x128xf32>,
    %c106 = arith.constant 106 : index
    %c0_194 = arith.constant 0 : index
    %263 = vector.load %arg6[%c106, %c0_194] : memref<512x128xf32, #tpu.memory_space<vmem>>, vector<2x128xf32>
    tpu.vector_store %arg6[%c106, %c0_194], %261 {strides = array<i32>} : memref<512x128xf32, #tpu.memory_space<vmem>>, vector<2x128xf32>,
    %c26_195 = arith.constant 26 : index
    %c0_196 = arith.constant 0 : index
    %264 = vector.load %arg5[%c26_195, %c0_196] : memref<128x128xf32, #tpu.memory_space<vmem>>, vector<1x128xf32>
    %265 = vector.shape_cast %264 : vector<1x128xf32> to vector<1x128xf32>
    %266 = vector.broadcast %265 : vector<1x128xf32> to vector<2x128xf32>
    %c100 = arith.constant 100 : index
    %c0_197 = arith.constant 0 : index
    %267 = vector.load %arg6[%c100, %c0_197] : memref<512x128xf32, #tpu.memory_space<vmem>>, vector<2x128xf32>
    tpu.vector_store %arg6[%c100, %c0_197], %266 {strides = array<i32>} : memref<512x128xf32, #tpu.memory_space<vmem>>, vector<2x128xf32>,
    %c108 = arith.constant 108 : index
    %c0_198 = arith.constant 0 : index
    %268 = vector.load %arg6[%c108, %c0_198] : memref<512x128xf32, #tpu.memory_space<vmem>>, vector<2x128xf32>
    tpu.vector_store %arg6[%c108, %c0_198], %266 {strides = array<i32>} : memref<512x128xf32, #tpu.memory_space<vmem>>, vector<2x128xf32>,
    %c27 = arith.constant 27 : index
    %c0_199 = arith.constant 0 : index
    %269 = vector.load %arg5[%c27, %c0_199] : memref<128x128xf32, #tpu.memory_space<vmem>>, vector<1x128xf32>
    %270 = vector.shape_cast %269 : vector<1x128xf32> to vector<1x128xf32>
    %271 = vector.broadcast %270 : vector<1x128xf32> to vector<2x128xf32>
    %c102 = arith.constant 102 : index
    %c0_200 = arith.constant 0 : index
    %272 = vector.load %arg6[%c102, %c0_200] : memref<512x128xf32, #tpu.memory_space<vmem>>, vector<2x128xf32>
    tpu.vector_store %arg6[%c102, %c0_200], %271 {strides = array<i32>} : memref<512x128xf32, #tpu.memory_space<vmem>>, vector<2x128xf32>,
    %c110 = arith.constant 110 : index
    %c0_201 = arith.constant 0 : index
    %273 = vector.load %arg6[%c110, %c0_201] : memref<512x128xf32, #tpu.memory_space<vmem>>, vector<2x128xf32>
    tpu.vector_store %arg6[%c110, %c0_201], %271 {strides = array<i32>} : memref<512x128xf32, #tpu.memory_space<vmem>>, vector<2x128xf32>,
    %c28_202 = arith.constant 28 : index
    %c0_203 = arith.constant 0 : index
    %274 = vector.load %arg5[%c28_202, %c0_203] : memref<128x128xf32, #tpu.memory_space<vmem>>, vector<1x128xf32>
    %275 = vector.shape_cast %274 : vector<1x128xf32> to vector<1x128xf32>
    %276 = vector.broadcast %275 : vector<1x128xf32> to vector<2x128xf32>
    %c112 = arith.constant 112 : index
    %c0_204 = arith.constant 0 : index
    %277 = vector.load %arg6[%c112, %c0_204] : memref<512x128xf32, #tpu.memory_space<vmem>>, vector<2x128xf32>
    tpu.vector_store %arg6[%c112, %c0_204], %276 {strides = array<i32>} : memref<512x128xf32, #tpu.memory_space<vmem>>, vector<2x128xf32>,
    %c120 = arith.constant 120 : index
    %c0_205 = arith.constant 0 : index
    %278 = vector.load %arg6[%c120, %c0_205] : memref<512x128xf32, #tpu.memory_space<vmem>>, vector<2x128xf32>
    tpu.vector_store %arg6[%c120, %c0_205], %276 {strides = array<i32>} : memref<512x128xf32, #tpu.memory_space<vmem>>, vector<2x128xf32>,
    %c29 = arith.constant 29 : index
    %c0_206 = arith.constant 0 : index
    %279 = vector.load %arg5[%c29, %c0_206] : memref<128x128xf32, #tpu.memory_space<vmem>>, vector<1x128xf32>
    %280 = vector.shape_cast %279 : vector<1x128xf32> to vector<1x128xf32>
    %281 = vector.broadcast %280 : vector<1x128xf32> to vector<2x128xf32>
    %c114 = arith.constant 114 : index
    %c0_207 = arith.constant 0 : index
    %282 = vector.load %arg6[%c114, %c0_207] : memref<512x128xf32, #tpu.memory_space<vmem>>, vector<2x128xf32>
    tpu.vector_store %arg6[%c114, %c0_207], %281 {strides = array<i32>} : memref<512x128xf32, #tpu.memory_space<vmem>>, vector<2x128xf32>,
    %c122 = arith.constant 122 : index
    %c0_208 = arith.constant 0 : index
    %283 = vector.load %arg6[%c122, %c0_208] : memref<512x128xf32, #tpu.memory_space<vmem>>, vector<2x128xf32>
    tpu.vector_store %arg6[%c122, %c0_208], %281 {strides = array<i32>} : memref<512x128xf32, #tpu.memory_space<vmem>>, vector<2x128xf32>,
    %c30_209 = arith.constant 30 : index
    %c0_210 = arith.constant 0 : index
    %284 = vector.load %arg5[%c30_209, %c0_210] : memref<128x128xf32, #tpu.memory_space<vmem>>, vector<1x128xf32>
    %285 = vector.shape_cast %284 : vector<1x128xf32> to vector<1x128xf32>
    %286 = vector.broadcast %285 : vector<1x128xf32> to vector<2x128xf32>
    %c116 = arith.constant 116 : index
    %c0_211 = arith.constant 0 : index
    %287 = vector.load %arg6[%c116, %c0_211] : memref<512x128xf32, #tpu.memory_space<vmem>>, vector<2x128xf32>
    tpu.vector_store %arg6[%c116, %c0_211], %286 {strides = array<i32>} : memref<512x128xf32, #tpu.memory_space<vmem>>, vector<2x128xf32>,
    %c124 = arith.constant 124 : index
    %c0_212 = arith.constant 0 : index
    %288 = vector.load %arg6[%c124, %c0_212] : memref<512x128xf32, #tpu.memory_space<vmem>>, vector<2x128xf32>
    tpu.vector_store %arg6[%c124, %c0_212], %286 {strides = array<i32>} : memref<512x128xf32, #tpu.memory_space<vmem>>, vector<2x128xf32>,
    %c31 = arith.constant 31 : index
    %c0_213 = arith.constant 0 : index
    %289 = vector.load %arg5[%c31, %c0_213] : memref<128x128xf32, #tpu.memory_space<vmem>>, vector<1x128xf32>
    %290 = vector.shape_cast %289 : vector<1x128xf32> to vector<1x128xf32>
    %291 = vector.broadcast %290 : vector<1x128xf32> to vector<2x128xf32>
    %c118 = arith.constant 118 : index
    %c0_214 = arith.constant 0 : index
    %292 = vector.load %arg6[%c118, %c0_214] : memref<512x128xf32, #tpu.memory_space<vmem>>, vector<2x128xf32>
    tpu.vector_store %arg6[%c118, %c0_214], %291 {strides = array<i32>} : memref<512x128xf32, #tpu.memory_space<vmem>>, vector<2x128xf32>,
    %c126 = arith.constant 126 : index
    %c0_215 = arith.constant 0 : index
    %293 = vector.load %arg6[%c126, %c0_215] : memref<512x128xf32, #tpu.memory_space<vmem>>, vector<2x128xf32>
    tpu.vector_store %arg6[%c126, %c0_215], %291 {strides = array<i32>} : memref<512x128xf32, #tpu.memory_space<vmem>>, vector<2x128xf32>,
    %c0_216 = arith.constant 0 : index
    %c0_217 = arith.constant 0 : index
    %294 = vector.load %arg6[%c0_216, %c0_217] : memref<512x128xf32, #tpu.memory_space<vmem>>, vector<128x128xf32>
    %295 = vector.broadcast %133 : f32 to vector<128x128xf32>
    %296 = arith.mulf %295, %294 : vector<128x128xf32>
    %297 = arith.addf %132, %296 : vector<128x128xf32>
    %298 = arith.truncf %297 : vector<128x128xf32> to vector<128x128xbf16>
    %c2_218 = arith.constant 2 : index
    %c0_219 = arith.constant 0 : index
    %c0_220 = arith.constant 0 : index
    %299 = vector.load %arg2[%c2_218, %c0_219, %c0_220] : memref<8x128x128xbf16, #tpu.memory_space<vmem>>, vector<1x128x128xbf16>
    %300 = vector.shape_cast %299 : vector<1x128x128xbf16> to vector<128x128xbf16>
    %cst_221 = arith.constant dense<0.000000e+00> : vector<128x128xf32>
    %301 = tpu.matmul %298, %300, %cst_221 {dimension_numbers = #tpu.dot_dimension_numbers<[1], [0], [0], [1], [0, 0, 1, 1], [], []>} : vector<128x128xbf16>, vector<128x128xbf16>, vector<128x128xf32> -> vector<128x128xf32>
    %cst_222 = arith.constant dense<0.000000e+00> : vector<128xf32>
    %302 = vector.multi_reduction <add>, %301, %cst_222 [0] : vector<128x128xf32> to vector<128xf32>
    %303 = vector.shape_cast %302 : vector<128xf32> to vector<1x128xf32>
    %cst_223 = arith.constant 7.812500e-03 : f32
    %304 = vector.broadcast %cst_223 : f32 to vector<1x128xf32>
    %305 = arith.mulf %303, %304 : vector<1x128xf32>
    %306 = arith.mulf %301, %301 : vector<128x128xf32>
    %cst_224 = arith.constant dense<0.000000e+00> : vector<128xf32>
    %307 = vector.multi_reduction <add>, %306, %cst_224 [0] : vector<128x128xf32> to vector<128xf32>
    %308 = vector.shape_cast %307 : vector<128xf32> to vector<1x128xf32>
    %cst_225 = arith.constant 7.812500e-03 : f32
    %309 = vector.broadcast %cst_225 : f32 to vector<1x128xf32>
    %310 = arith.mulf %308, %309 : vector<1x128xf32>
    %311 = arith.mulf %305, %305 : vector<1x128xf32>
    %312 = arith.subf %310, %311 : vector<1x128xf32>
    %c4_226 = arith.constant 4 : index
    %c0_227 = arith.constant 0 : index
    %313 = vector.load %arg3[%c4_226, %c0_227] : memref<16x128xf32, #tpu.memory_space<vmem>>, vector<1x128xf32>
    %cst_228 = arith.constant 4.000000e-05 : f32
    %314 = vector.broadcast %cst_228 : f32 to vector<1x128xf32>
    %315 = arith.addf %312, %314 : vector<1x128xf32>
    %316 = math.rsqrt %315 : vector<1x128xf32>
    %317 = arith.mulf %313, %316 : vector<1x128xf32>
    %c5_229 = arith.constant 5 : index
    %c0_230 = arith.constant 0 : index
    %318 = vector.load %arg3[%c5_229, %c0_230] : memref<16x128xf32, #tpu.memory_space<vmem>>, vector<1x128xf32>
    %319 = arith.mulf %305, %317 : vector<1x128xf32>
    %320 = arith.subf %318, %319 : vector<1x128xf32>
    %321 = vector.broadcast %317 : vector<1x128xf32> to vector<128x128xf32>
    %322 = arith.mulf %301, %321 : vector<128x128xf32>
    %323 = vector.broadcast %320 : vector<1x128xf32> to vector<128x128xf32>
    %324 = arith.addf %322, %323 : vector<128x128xf32>
    %cst_231 = arith.constant 0.000000e+00 : f32
    %325 = vector.broadcast %cst_231 : f32 to vector<128x128xf32>
    %326 = arith.maximumf %324, %325 : vector<128x128xf32>
    %c0_232 = arith.constant 0 : index
    %c0_233 = arith.constant 0 : index
    %327 = vector.load %arg5[%c0_232, %c0_233] : memref<128x128xf32, #tpu.memory_space<vmem>>, vector<128x128xf32>
    tpu.vector_store %arg5[%c0_232, %c0_233], %326 {strides = array<i32>} : memref<128x128xf32, #tpu.memory_space<vmem>>, vector<128x128xf32>,
    %c3_234 = arith.constant 3 : index
    %328 = memref.load %arg0[%c3_234] : memref<20xf32, #tpu.memory_space<smem>>
    %c0_235 = arith.constant 0 : index
    %c0_236 = arith.constant 0 : index
    %329 = vector.load %arg1[%c0_235, %c0_236] : memref<688x128xf32, #tpu.memory_space<vmem>>, vector<512x128xf32>
    %330 = vector.broadcast %328 : f32 to vector<512x128xf32>
    %331 = arith.mulf %330, %329 : vector<512x128xf32>
    %c7_237 = arith.constant 7 : index
    %332 = memref.load %arg0[%c7_237] : memref<20xf32, #tpu.memory_space<smem>>
    %c0_238 = arith.constant 0 : index
    %c0_239 = arith.constant 0 : index
    %333 = vector.load %arg5[%c0_238, %c0_239] : memref<128x128xf32, #tpu.memory_space<vmem>>, vector<1x128xf32>
    %334 = vector.shape_cast %333 : vector<1x128xf32> to vector<1x128xf32>
    %335 = vector.broadcast %334 : vector<1x128xf32> to vector<2x128xf32>
    %c0_240 = arith.constant 0 : index
    %c0_241 = arith.constant 0 : index
    %336 = vector.load %arg6[%c0_240, %c0_241] : memref<512x128xf32, #tpu.memory_space<vmem>>, vector<2x128xf32>
    tpu.vector_store %arg6[%c0_240, %c0_241], %335 {strides = array<i32>} : memref<512x128xf32, #tpu.memory_space<vmem>>, vector<2x128xf32>,
    %c16_242 = arith.constant 16 : index
    %c0_243 = arith.constant 0 : index
    %337 = vector.load %arg6[%c16_242, %c0_243] : memref<512x128xf32, #tpu.memory_space<vmem>>, vector<2x128xf32>
    tpu.vector_store %arg6[%c16_242, %c0_243], %335 {strides = array<i32>} : memref<512x128xf32, #tpu.memory_space<vmem>>, vector<2x128xf32>,
    %c1_244 = arith.constant 1 : index
    %c0_245 = arith.constant 0 : index
    %338 = vector.load %arg5[%c1_244, %c0_245] : memref<128x128xf32, #tpu.memory_space<vmem>>, vector<1x128xf32>
    %339 = vector.shape_cast %338 : vector<1x128xf32> to vector<1x128xf32>
    %340 = vector.broadcast %339 : vector<1x128xf32> to vector<2x128xf32>
    %c2_246 = arith.constant 2 : index
    %c0_247 = arith.constant 0 : index
    %341 = vector.load %arg6[%c2_246, %c0_247] : memref<512x128xf32, #tpu.memory_space<vmem>>, vector<2x128xf32>
    tpu.vector_store %arg6[%c2_246, %c0_247], %340 {strides = array<i32>} : memref<512x128xf32, #tpu.memory_space<vmem>>, vector<2x128xf32>,
    %c18_248 = arith.constant 18 : index
    %c0_249 = arith.constant 0 : index
    %342 = vector.load %arg6[%c18_248, %c0_249] : memref<512x128xf32, #tpu.memory_space<vmem>>, vector<2x128xf32>
    tpu.vector_store %arg6[%c18_248, %c0_249], %340 {strides = array<i32>} : memref<512x128xf32, #tpu.memory_space<vmem>>, vector<2x128xf32>,
    %c2_250 = arith.constant 2 : index
    %c0_251 = arith.constant 0 : index
    %343 = vector.load %arg5[%c2_250, %c0_251] : memref<128x128xf32, #tpu.memory_space<vmem>>, vector<1x128xf32>
    %344 = vector.shape_cast %343 : vector<1x128xf32> to vector<1x128xf32>
    %345 = vector.broadcast %344 : vector<1x128xf32> to vector<2x128xf32>
    %c4_252 = arith.constant 4 : index
    %c0_253 = arith.constant 0 : index
    %346 = vector.load %arg6[%c4_252, %c0_253] : memref<512x128xf32, #tpu.memory_space<vmem>>, vector<2x128xf32>
    tpu.vector_store %arg6[%c4_252, %c0_253], %345 {strides = array<i32>} : memref<512x128xf32, #tpu.memory_space<vmem>>, vector<2x128xf32>,
    %c20_254 = arith.constant 20 : index
    %c0_255 = arith.constant 0 : index
    %347 = vector.load %arg6[%c20_254, %c0_255] : memref<512x128xf32, #tpu.memory_space<vmem>>, vector<2x128xf32>
    tpu.vector_store %arg6[%c20_254, %c0_255], %345 {strides = array<i32>} : memref<512x128xf32, #tpu.memory_space<vmem>>, vector<2x128xf32>,
    %c3_256 = arith.constant 3 : index
    %c0_257 = arith.constant 0 : index
    %348 = vector.load %arg5[%c3_256, %c0_257] : memref<128x128xf32, #tpu.memory_space<vmem>>, vector<1x128xf32>
    %349 = vector.shape_cast %348 : vector<1x128xf32> to vector<1x128xf32>
    %350 = vector.broadcast %349 : vector<1x128xf32> to vector<2x128xf32>
    %c6_258 = arith.constant 6 : index
    %c0_259 = arith.constant 0 : index
    %351 = vector.load %arg6[%c6_258, %c0_259] : memref<512x128xf32, #tpu.memory_space<vmem>>, vector<2x128xf32>
    tpu.vector_store %arg6[%c6_258, %c0_259], %350 {strides = array<i32>} : memref<512x128xf32, #tpu.memory_space<vmem>>, vector<2x128xf32>,
    %c22_260 = arith.constant 22 : index
    %c0_261 = arith.constant 0 : index
    %352 = vector.load %arg6[%c22_260, %c0_261] : memref<512x128xf32, #tpu.memory_space<vmem>>, vector<2x128xf32>
    tpu.vector_store %arg6[%c22_260, %c0_261], %350 {strides = array<i32>} : memref<512x128xf32, #tpu.memory_space<vmem>>, vector<2x128xf32>,
    %c4_262 = arith.constant 4 : index
    %c0_263 = arith.constant 0 : index
    %353 = vector.load %arg5[%c4_262, %c0_263] : memref<128x128xf32, #tpu.memory_space<vmem>>, vector<1x128xf32>
    %354 = vector.shape_cast %353 : vector<1x128xf32> to vector<1x128xf32>
    %355 = vector.broadcast %354 : vector<1x128xf32> to vector<2x128xf32>
    %c8_264 = arith.constant 8 : index
    %c0_265 = arith.constant 0 : index
    %356 = vector.load %arg6[%c8_264, %c0_265] : memref<512x128xf32, #tpu.memory_space<vmem>>, vector<2x128xf32>
    tpu.vector_store %arg6[%c8_264, %c0_265], %355 {strides = array<i32>} : memref<512x128xf32, #tpu.memory_space<vmem>>, vector<2x128xf32>,
    %c24_266 = arith.constant 24 : index
    %c0_267 = arith.constant 0 : index
    %357 = vector.load %arg6[%c24_266, %c0_267] : memref<512x128xf32, #tpu.memory_space<vmem>>, vector<2x128xf32>
    tpu.vector_store %arg6[%c24_266, %c0_267], %355 {strides = array<i32>} : memref<512x128xf32, #tpu.memory_space<vmem>>, vector<2x128xf32>,
    %c5_268 = arith.constant 5 : index
    %c0_269 = arith.constant 0 : index
    %358 = vector.load %arg5[%c5_268, %c0_269] : memref<128x128xf32, #tpu.memory_space<vmem>>, vector<1x128xf32>
    %359 = vector.shape_cast %358 : vector<1x128xf32> to vector<1x128xf32>
    %360 = vector.broadcast %359 : vector<1x128xf32> to vector<2x128xf32>
    %c10_270 = arith.constant 10 : index
    %c0_271 = arith.constant 0 : index
    %361 = vector.load %arg6[%c10_270, %c0_271] : memref<512x128xf32, #tpu.memory_space<vmem>>, vector<2x128xf32>
    tpu.vector_store %arg6[%c10_270, %c0_271], %360 {strides = array<i32>} : memref<512x128xf32, #tpu.memory_space<vmem>>, vector<2x128xf32>,
    %c26_272 = arith.constant 26 : index
    %c0_273 = arith.constant 0 : index
    %362 = vector.load %arg6[%c26_272, %c0_273] : memref<512x128xf32, #tpu.memory_space<vmem>>, vector<2x128xf32>
    tpu.vector_store %arg6[%c26_272, %c0_273], %360 {strides = array<i32>} : memref<512x128xf32, #tpu.memory_space<vmem>>, vector<2x128xf32>,
    %c6_274 = arith.constant 6 : index
    %c0_275 = arith.constant 0 : index
    %363 = vector.load %arg5[%c6_274, %c0_275] : memref<128x128xf32, #tpu.memory_space<vmem>>, vector<1x128xf32>
    %364 = vector.shape_cast %363 : vector<1x128xf32> to vector<1x128xf32>
    %365 = vector.broadcast %364 : vector<1x128xf32> to vector<2x128xf32>
    %c12_276 = arith.constant 12 : index
    %c0_277 = arith.constant 0 : index
    %366 = vector.load %arg6[%c12_276, %c0_277] : memref<512x128xf32, #tpu.memory_space<vmem>>, vector<2x128xf32>
    tpu.vector_store %arg6[%c12_276, %c0_277], %365 {strides = array<i32>} : memref<512x128xf32, #tpu.memory_space<vmem>>, vector<2x128xf32>,
    %c28_278 = arith.constant 28 : index
    %c0_279 = arith.constant 0 : index
    %367 = vector.load %arg6[%c28_278, %c0_279] : memref<512x128xf32, #tpu.memory_space<vmem>>, vector<2x128xf32>
    tpu.vector_store %arg6[%c28_278, %c0_279], %365 {strides = array<i32>} : memref<512x128xf32, #tpu.memory_space<vmem>>, vector<2x128xf32>,
    %c7_280 = arith.constant 7 : index
    %c0_281 = arith.constant 0 : index
    %368 = vector.load %arg5[%c7_280, %c0_281] : memref<128x128xf32, #tpu.memory_space<vmem>>, vector<1x128xf32>
    %369 = vector.shape_cast %368 : vector<1x128xf32> to vector<1x128xf32>
    %370 = vector.broadcast %369 : vector<1x128xf32> to vector<2x128xf32>
    %c14_282 = arith.constant 14 : index
    %c0_283 = arith.constant 0 : index
    %371 = vector.load %arg6[%c14_282, %c0_283] : memref<512x128xf32, #tpu.memory_space<vmem>>, vector<2x128xf32>
    tpu.vector_store %arg6[%c14_282, %c0_283], %370 {strides = array<i32>} : memref<512x128xf32, #tpu.memory_space<vmem>>, vector<2x128xf32>,
    %c30_284 = arith.constant 30 : index
    %c0_285 = arith.constant 0 : index
    %372 = vector.load %arg6[%c30_284, %c0_285] : memref<512x128xf32, #tpu.memory_space<vmem>>, vector<2x128xf32>
    tpu.vector_store %arg6[%c30_284, %c0_285], %370 {strides = array<i32>} : memref<512x128xf32, #tpu.memory_space<vmem>>, vector<2x128xf32>,
    %c8_286 = arith.constant 8 : index
    %c0_287 = arith.constant 0 : index
    %373 = vector.load %arg5[%c8_286, %c0_287] : memref<128x128xf32, #tpu.memory_space<vmem>>, vector<1x128xf32>
    %374 = vector.shape_cast %373 : vector<1x128xf32> to vector<1x128xf32>
    %375 = vector.broadcast %374 : vector<1x128xf32> to vector<2x128xf32>
    %c32_288 = arith.constant 32 : index
    %c0_289 = arith.constant 0 : index
    %376 = vector.load %arg6[%c32_288, %c0_289] : memref<512x128xf32, #tpu.memory_space<vmem>>, vector<2x128xf32>
    tpu.vector_store %arg6[%c32_288, %c0_289], %375 {strides = array<i32>} : memref<512x128xf32, #tpu.memory_space<vmem>>, vector<2x128xf32>,
    %c48_290 = arith.constant 48 : index
    %c0_291 = arith.constant 0 : index
    %377 = vector.load %arg6[%c48_290, %c0_291] : memref<512x128xf32, #tpu.memory_space<vmem>>, vector<2x128xf32>
    tpu.vector_store %arg6[%c48_290, %c0_291], %375 {strides = array<i32>} : memref<512x128xf32, #tpu.memory_space<vmem>>, vector<2x128xf32>,
    %c9_292 = arith.constant 9 : index
    %c0_293 = arith.constant 0 : index
    %378 = vector.load %arg5[%c9_292, %c0_293] : memref<128x128xf32, #tpu.memory_space<vmem>>, vector<1x128xf32>
    %379 = vector.shape_cast %378 : vector<1x128xf32> to vector<1x128xf32>
    %380 = vector.broadcast %379 : vector<1x128xf32> to vector<2x128xf32>
    %c34_294 = arith.constant 34 : index
    %c0_295 = arith.constant 0 : index
    %381 = vector.load %arg6[%c34_294, %c0_295] : memref<512x128xf32, #tpu.memory_space<vmem>>, vector<2x128xf32>
    tpu.vector_store %arg6[%c34_294, %c0_295], %380 {strides = array<i32>} : memref<512x128xf32, #tpu.memory_space<vmem>>, vector<2x128xf32>,
    %c50_296 = arith.constant 50 : index
    %c0_297 = arith.constant 0 : index
    %382 = vector.load %arg6[%c50_296, %c0_297] : memref<512x128xf32, #tpu.memory_space<vmem>>, vector<2x128xf32>
    tpu.vector_store %arg6[%c50_296, %c0_297], %380 {strides = array<i32>} : memref<512x128xf32, #tpu.memory_space<vmem>>, vector<2x128xf32>,
    %c10_298 = arith.constant 10 : index
    %c0_299 = arith.constant 0 : index
    %383 = vector.load %arg5[%c10_298, %c0_299] : memref<128x128xf32, #tpu.memory_space<vmem>>, vector<1x128xf32>
    %384 = vector.shape_cast %383 : vector<1x128xf32> to vector<1x128xf32>
    %385 = vector.broadcast %384 : vector<1x128xf32> to vector<2x128xf32>
    %c36_300 = arith.constant 36 : index
    %c0_301 = arith.constant 0 : index
    %386 = vector.load %arg6[%c36_300, %c0_301] : memref<512x128xf32, #tpu.memory_space<vmem>>, vector<2x128xf32>
    tpu.vector_store %arg6[%c36_300, %c0_301], %385 {strides = array<i32>} : memref<512x128xf32, #tpu.memory_space<vmem>>, vector<2x128xf32>,
    %c52_302 = arith.constant 52 : index
    %c0_303 = arith.constant 0 : index
    %387 = vector.load %arg6[%c52_302, %c0_303] : memref<512x128xf32, #tpu.memory_space<vmem>>, vector<2x128xf32>
    tpu.vector_store %arg6[%c52_302, %c0_303], %385 {strides = array<i32>} : memref<512x128xf32, #tpu.memory_space<vmem>>, vector<2x128xf32>,
    %c11_304 = arith.constant 11 : index
    %c0_305 = arith.constant 0 : index
    %388 = vector.load %arg5[%c11_304, %c0_305] : memref<128x128xf32, #tpu.memory_space<vmem>>, vector<1x128xf32>
    %389 = vector.shape_cast %388 : vector<1x128xf32> to vector<1x128xf32>
    %390 = vector.broadcast %389 : vector<1x128xf32> to vector<2x128xf32>
    %c38_306 = arith.constant 38 : index
    %c0_307 = arith.constant 0 : index
    %391 = vector.load %arg6[%c38_306, %c0_307] : memref<512x128xf32, #tpu.memory_space<vmem>>, vector<2x128xf32>
    tpu.vector_store %arg6[%c38_306, %c0_307], %390 {strides = array<i32>} : memref<512x128xf32, #tpu.memory_space<vmem>>, vector<2x128xf32>,
    %c54_308 = arith.constant 54 : index
    %c0_309 = arith.constant 0 : index
    %392 = vector.load %arg6[%c54_308, %c0_309] : memref<512x128xf32, #tpu.memory_space<vmem>>, vector<2x128xf32>
    tpu.vector_store %arg6[%c54_308, %c0_309], %390 {strides = array<i32>} : memref<512x128xf32, #tpu.memory_space<vmem>>, vector<2x128xf32>,
    %c12_310 = arith.constant 12 : index
    %c0_311 = arith.constant 0 : index
    %393 = vector.load %arg5[%c12_310, %c0_311] : memref<128x128xf32, #tpu.memory_space<vmem>>, vector<1x128xf32>
    %394 = vector.shape_cast %393 : vector<1x128xf32> to vector<1x128xf32>
    %395 = vector.broadcast %394 : vector<1x128xf32> to vector<2x128xf32>
    %c40_312 = arith.constant 40 : index
    %c0_313 = arith.constant 0 : index
    %396 = vector.load %arg6[%c40_312, %c0_313] : memref<512x128xf32, #tpu.memory_space<vmem>>, vector<2x128xf32>
    tpu.vector_store %arg6[%c40_312, %c0_313], %395 {strides = array<i32>} : memref<512x128xf32, #tpu.memory_space<vmem>>, vector<2x128xf32>,
    %c56_314 = arith.constant 56 : index
    %c0_315 = arith.constant 0 : index
    %397 = vector.load %arg6[%c56_314, %c0_315] : memref<512x128xf32, #tpu.memory_space<vmem>>, vector<2x128xf32>
    tpu.vector_store %arg6[%c56_314, %c0_315], %395 {strides = array<i32>} : memref<512x128xf32, #tpu.memory_space<vmem>>, vector<2x128xf32>,
    %c13_316 = arith.constant 13 : index
    %c0_317 = arith.constant 0 : index
    %398 = vector.load %arg5[%c13_316, %c0_317] : memref<128x128xf32, #tpu.memory_space<vmem>>, vector<1x128xf32>
    %399 = vector.shape_cast %398 : vector<1x128xf32> to vector<1x128xf32>
    %400 = vector.broadcast %399 : vector<1x128xf32> to vector<2x128xf32>
    %c42_318 = arith.constant 42 : index
    %c0_319 = arith.constant 0 : index
    %401 = vector.load %arg6[%c42_318, %c0_319] : memref<512x128xf32, #tpu.memory_space<vmem>>, vector<2x128xf32>
    tpu.vector_store %arg6[%c42_318, %c0_319], %400 {strides = array<i32>} : memref<512x128xf32, #tpu.memory_space<vmem>>, vector<2x128xf32>,
    %c58_320 = arith.constant 58 : index
    %c0_321 = arith.constant 0 : index
    %402 = vector.load %arg6[%c58_320, %c0_321] : memref<512x128xf32, #tpu.memory_space<vmem>>, vector<2x128xf32>
    tpu.vector_store %arg6[%c58_320, %c0_321], %400 {strides = array<i32>} : memref<512x128xf32, #tpu.memory_space<vmem>>, vector<2x128xf32>,
    %c14_322 = arith.constant 14 : index
    %c0_323 = arith.constant 0 : index
    %403 = vector.load %arg5[%c14_322, %c0_323] : memref<128x128xf32, #tpu.memory_space<vmem>>, vector<1x128xf32>
    %404 = vector.shape_cast %403 : vector<1x128xf32> to vector<1x128xf32>
    %405 = vector.broadcast %404 : vector<1x128xf32> to vector<2x128xf32>
    %c44_324 = arith.constant 44 : index
    %c0_325 = arith.constant 0 : index
    %406 = vector.load %arg6[%c44_324, %c0_325] : memref<512x128xf32, #tpu.memory_space<vmem>>, vector<2x128xf32>
    tpu.vector_store %arg6[%c44_324, %c0_325], %405 {strides = array<i32>} : memref<512x128xf32, #tpu.memory_space<vmem>>, vector<2x128xf32>,
    %c60_326 = arith.constant 60 : index
    %c0_327 = arith.constant 0 : index
    %407 = vector.load %arg6[%c60_326, %c0_327] : memref<512x128xf32, #tpu.memory_space<vmem>>, vector<2x128xf32>
    tpu.vector_store %arg6[%c60_326, %c0_327], %405 {strides = array<i32>} : memref<512x128xf32, #tpu.memory_space<vmem>>, vector<2x128xf32>,
    %c15_328 = arith.constant 15 : index
    %c0_329 = arith.constant 0 : index
    %408 = vector.load %arg5[%c15_328, %c0_329] : memref<128x128xf32, #tpu.memory_space<vmem>>, vector<1x128xf32>
    %409 = vector.shape_cast %408 : vector<1x128xf32> to vector<1x128xf32>
    %410 = vector.broadcast %409 : vector<1x128xf32> to vector<2x128xf32>
    %c46_330 = arith.constant 46 : index
    %c0_331 = arith.constant 0 : index
    %411 = vector.load %arg6[%c46_330, %c0_331] : memref<512x128xf32, #tpu.memory_space<vmem>>, vector<2x128xf32>
    tpu.vector_store %arg6[%c46_330, %c0_331], %410 {strides = array<i32>} : memref<512x128xf32, #tpu.memory_space<vmem>>, vector<2x128xf32>,
    %c62_332 = arith.constant 62 : index
    %c0_333 = arith.constant 0 : index
    %412 = vector.load %arg6[%c62_332, %c0_333] : memref<512x128xf32, #tpu.memory_space<vmem>>, vector<2x128xf32>
    tpu.vector_store %arg6[%c62_332, %c0_333], %410 {strides = array<i32>} : memref<512x128xf32, #tpu.memory_space<vmem>>, vector<2x128xf32>,
    %c16_334 = arith.constant 16 : index
    %c0_335 = arith.constant 0 : index
    %413 = vector.load %arg5[%c16_334, %c0_335] : memref<128x128xf32, #tpu.memory_space<vmem>>, vector<1x128xf32>
    %414 = vector.shape_cast %413 : vector<1x128xf32> to vector<1x128xf32>
    %415 = vector.broadcast %414 : vector<1x128xf32> to vector<2x128xf32>
    %c64_336 = arith.constant 64 : index
    %c0_337 = arith.constant 0 : index
    %416 = vector.load %arg6[%c64_336, %c0_337] : memref<512x128xf32, #tpu.memory_space<vmem>>, vector<2x128xf32>
    tpu.vector_store %arg6[%c64_336, %c0_337], %415 {strides = array<i32>} : memref<512x128xf32, #tpu.memory_space<vmem>>, vector<2x128xf32>,
    %c80_338 = arith.constant 80 : index
    %c0_339 = arith.constant 0 : index
    %417 = vector.load %arg6[%c80_338, %c0_339] : memref<512x128xf32, #tpu.memory_space<vmem>>, vector<2x128xf32>
    tpu.vector_store %arg6[%c80_338, %c0_339], %415 {strides = array<i32>} : memref<512x128xf32, #tpu.memory_space<vmem>>, vector<2x128xf32>,
    %c17_340 = arith.constant 17 : index
    %c0_341 = arith.constant 0 : index
    %418 = vector.load %arg5[%c17_340, %c0_341] : memref<128x128xf32, #tpu.memory_space<vmem>>, vector<1x128xf32>
    %419 = vector.shape_cast %418 : vector<1x128xf32> to vector<1x128xf32>
    %420 = vector.broadcast %419 : vector<1x128xf32> to vector<2x128xf32>
    %c66_342 = arith.constant 66 : index
    %c0_343 = arith.constant 0 : index
    %421 = vector.load %arg6[%c66_342, %c0_343] : memref<512x128xf32, #tpu.memory_space<vmem>>, vector<2x128xf32>
    tpu.vector_store %arg6[%c66_342, %c0_343], %420 {strides = array<i32>} : memref<512x128xf32, #tpu.memory_space<vmem>>, vector<2x128xf32>,
    %c82_344 = arith.constant 82 : index
    %c0_345 = arith.constant 0 : index
    %422 = vector.load %arg6[%c82_344, %c0_345] : memref<512x128xf32, #tpu.memory_space<vmem>>, vector<2x128xf32>
    tpu.vector_store %arg6[%c82_344, %c0_345], %420 {strides = array<i32>} : memref<512x128xf32, #tpu.memory_space<vmem>>, vector<2x128xf32>,
    %c18_346 = arith.constant 18 : index
    %c0_347 = arith.constant 0 : index
    %423 = vector.load %arg5[%c18_346, %c0_347] : memref<128x128xf32, #tpu.memory_space<vmem>>, vector<1x128xf32>
    %424 = vector.shape_cast %423 : vector<1x128xf32> to vector<1x128xf32>
    %425 = vector.broadcast %424 : vector<1x128xf32> to vector<2x128xf32>
    %c68_348 = arith.constant 68 : index
    %c0_349 = arith.constant 0 : index
    %426 = vector.load %arg6[%c68_348, %c0_349] : memref<512x128xf32, #tpu.memory_space<vmem>>, vector<2x128xf32>
    tpu.vector_store %arg6[%c68_348, %c0_349], %425 {strides = array<i32>} : memref<512x128xf32, #tpu.memory_space<vmem>>, vector<2x128xf32>,
    %c84_350 = arith.constant 84 : index
    %c0_351 = arith.constant 0 : index
    %427 = vector.load %arg6[%c84_350, %c0_351] : memref<512x128xf32, #tpu.memory_space<vmem>>, vector<2x128xf32>
    tpu.vector_store %arg6[%c84_350, %c0_351], %425 {strides = array<i32>} : memref<512x128xf32, #tpu.memory_space<vmem>>, vector<2x128xf32>,
    %c19_352 = arith.constant 19 : index
    %c0_353 = arith.constant 0 : index
    %428 = vector.load %arg5[%c19_352, %c0_353] : memref<128x128xf32, #tpu.memory_space<vmem>>, vector<1x128xf32>
    %429 = vector.shape_cast %428 : vector<1x128xf32> to vector<1x128xf32>
    %430 = vector.broadcast %429 : vector<1x128xf32> to vector<2x128xf32>
    %c70_354 = arith.constant 70 : index
    %c0_355 = arith.constant 0 : index
    %431 = vector.load %arg6[%c70_354, %c0_355] : memref<512x128xf32, #tpu.memory_space<vmem>>, vector<2x128xf32>
    tpu.vector_store %arg6[%c70_354, %c0_355], %430 {strides = array<i32>} : memref<512x128xf32, #tpu.memory_space<vmem>>, vector<2x128xf32>,
    %c86_356 = arith.constant 86 : index
    %c0_357 = arith.constant 0 : index
    %432 = vector.load %arg6[%c86_356, %c0_357] : memref<512x128xf32, #tpu.memory_space<vmem>>, vector<2x128xf32>
    tpu.vector_store %arg6[%c86_356, %c0_357], %430 {strides = array<i32>} : memref<512x128xf32, #tpu.memory_space<vmem>>, vector<2x128xf32>,
    %c20_358 = arith.constant 20 : index
    %c0_359 = arith.constant 0 : index
    %433 = vector.load %arg5[%c20_358, %c0_359] : memref<128x128xf32, #tpu.memory_space<vmem>>, vector<1x128xf32>
    %434 = vector.shape_cast %433 : vector<1x128xf32> to vector<1x128xf32>
    %435 = vector.broadcast %434 : vector<1x128xf32> to vector<2x128xf32>
    %c72_360 = arith.constant 72 : index
    %c0_361 = arith.constant 0 : index
    %436 = vector.load %arg6[%c72_360, %c0_361] : memref<512x128xf32, #tpu.memory_space<vmem>>, vector<2x128xf32>
    tpu.vector_store %arg6[%c72_360, %c0_361], %435 {strides = array<i32>} : memref<512x128xf32, #tpu.memory_space<vmem>>, vector<2x128xf32>,
    %c88_362 = arith.constant 88 : index
    %c0_363 = arith.constant 0 : index
    %437 = vector.load %arg6[%c88_362, %c0_363] : memref<512x128xf32, #tpu.memory_space<vmem>>, vector<2x128xf32>
    tpu.vector_store %arg6[%c88_362, %c0_363], %435 {strides = array<i32>} : memref<512x128xf32, #tpu.memory_space<vmem>>, vector<2x128xf32>,
    %c21_364 = arith.constant 21 : index
    %c0_365 = arith.constant 0 : index
    %438 = vector.load %arg5[%c21_364, %c0_365] : memref<128x128xf32, #tpu.memory_space<vmem>>, vector<1x128xf32>
    %439 = vector.shape_cast %438 : vector<1x128xf32> to vector<1x128xf32>
    %440 = vector.broadcast %439 : vector<1x128xf32> to vector<2x128xf32>
    %c74_366 = arith.constant 74 : index
    %c0_367 = arith.constant 0 : index
    %441 = vector.load %arg6[%c74_366, %c0_367] : memref<512x128xf32, #tpu.memory_space<vmem>>, vector<2x128xf32>
    tpu.vector_store %arg6[%c74_366, %c0_367], %440 {strides = array<i32>} : memref<512x128xf32, #tpu.memory_space<vmem>>, vector<2x128xf32>,
    %c90_368 = arith.constant 90 : index
    %c0_369 = arith.constant 0 : index
    %442 = vector.load %arg6[%c90_368, %c0_369] : memref<512x128xf32, #tpu.memory_space<vmem>>, vector<2x128xf32>
    tpu.vector_store %arg6[%c90_368, %c0_369], %440 {strides = array<i32>} : memref<512x128xf32, #tpu.memory_space<vmem>>, vector<2x128xf32>,
    %c22_370 = arith.constant 22 : index
    %c0_371 = arith.constant 0 : index
    %443 = vector.load %arg5[%c22_370, %c0_371] : memref<128x128xf32, #tpu.memory_space<vmem>>, vector<1x128xf32>
    %444 = vector.shape_cast %443 : vector<1x128xf32> to vector<1x128xf32>
    %445 = vector.broadcast %444 : vector<1x128xf32> to vector<2x128xf32>
    %c76_372 = arith.constant 76 : index
    %c0_373 = arith.constant 0 : index
    %446 = vector.load %arg6[%c76_372, %c0_373] : memref<512x128xf32, #tpu.memory_space<vmem>>, vector<2x128xf32>
    tpu.vector_store %arg6[%c76_372, %c0_373], %445 {strides = array<i32>} : memref<512x128xf32, #tpu.memory_space<vmem>>, vector<2x128xf32>,
    %c92_374 = arith.constant 92 : index
    %c0_375 = arith.constant 0 : index
    %447 = vector.load %arg6[%c92_374, %c0_375] : memref<512x128xf32, #tpu.memory_space<vmem>>, vector<2x128xf32>
    tpu.vector_store %arg6[%c92_374, %c0_375], %445 {strides = array<i32>} : memref<512x128xf32, #tpu.memory_space<vmem>>, vector<2x128xf32>,
    %c23_376 = arith.constant 23 : index
    %c0_377 = arith.constant 0 : index
    %448 = vector.load %arg5[%c23_376, %c0_377] : memref<128x128xf32, #tpu.memory_space<vmem>>, vector<1x128xf32>
    %449 = vector.shape_cast %448 : vector<1x128xf32> to vector<1x128xf32>
    %450 = vector.broadcast %449 : vector<1x128xf32> to vector<2x128xf32>
    %c78_378 = arith.constant 78 : index
    %c0_379 = arith.constant 0 : index
    %451 = vector.load %arg6[%c78_378, %c0_379] : memref<512x128xf32, #tpu.memory_space<vmem>>, vector<2x128xf32>
    tpu.vector_store %arg6[%c78_378, %c0_379], %450 {strides = array<i32>} : memref<512x128xf32, #tpu.memory_space<vmem>>, vector<2x128xf32>,
    %c94_380 = arith.constant 94 : index
    %c0_381 = arith.constant 0 : index
    %452 = vector.load %arg6[%c94_380, %c0_381] : memref<512x128xf32, #tpu.memory_space<vmem>>, vector<2x128xf32>
    tpu.vector_store %arg6[%c94_380, %c0_381], %450 {strides = array<i32>} : memref<512x128xf32, #tpu.memory_space<vmem>>, vector<2x128xf32>,
    %c24_382 = arith.constant 24 : index
    %c0_383 = arith.constant 0 : index
    %453 = vector.load %arg5[%c24_382, %c0_383] : memref<128x128xf32, #tpu.memory_space<vmem>>, vector<1x128xf32>
    %454 = vector.shape_cast %453 : vector<1x128xf32> to vector<1x128xf32>
    %455 = vector.broadcast %454 : vector<1x128xf32> to vector<2x128xf32>
    %c96_384 = arith.constant 96 : index
    %c0_385 = arith.constant 0 : index
    %456 = vector.load %arg6[%c96_384, %c0_385] : memref<512x128xf32, #tpu.memory_space<vmem>>, vector<2x128xf32>
    tpu.vector_store %arg6[%c96_384, %c0_385], %455 {strides = array<i32>} : memref<512x128xf32, #tpu.memory_space<vmem>>, vector<2x128xf32>,
    %c112_386 = arith.constant 112 : index
    %c0_387 = arith.constant 0 : index
    %457 = vector.load %arg6[%c112_386, %c0_387] : memref<512x128xf32, #tpu.memory_space<vmem>>, vector<2x128xf32>
    tpu.vector_store %arg6[%c112_386, %c0_387], %455 {strides = array<i32>} : memref<512x128xf32, #tpu.memory_space<vmem>>, vector<2x128xf32>,
    %c25_388 = arith.constant 25 : index
    %c0_389 = arith.constant 0 : index
    %458 = vector.load %arg5[%c25_388, %c0_389] : memref<128x128xf32, #tpu.memory_space<vmem>>, vector<1x128xf32>
    %459 = vector.shape_cast %458 : vector<1x128xf32> to vector<1x128xf32>
    %460 = vector.broadcast %459 : vector<1x128xf32> to vector<2x128xf32>
    %c98_390 = arith.constant 98 : index
    %c0_391 = arith.constant 0 : index
    %461 = vector.load %arg6[%c98_390, %c0_391] : memref<512x128xf32, #tpu.memory_space<vmem>>, vector<2x128xf32>
    tpu.vector_store %arg6[%c98_390, %c0_391], %460 {strides = array<i32>} : memref<512x128xf32, #tpu.memory_space<vmem>>, vector<2x128xf32>,
    %c114_392 = arith.constant 114 : index
    %c0_393 = arith.constant 0 : index
    %462 = vector.load %arg6[%c114_392, %c0_393] : memref<512x128xf32, #tpu.memory_space<vmem>>, vector<2x128xf32>
    tpu.vector_store %arg6[%c114_392, %c0_393], %460 {strides = array<i32>} : memref<512x128xf32, #tpu.memory_space<vmem>>, vector<2x128xf32>,
    %c26_394 = arith.constant 26 : index
    %c0_395 = arith.constant 0 : index
    %463 = vector.load %arg5[%c26_394, %c0_395] : memref<128x128xf32, #tpu.memory_space<vmem>>, vector<1x128xf32>
    %464 = vector.shape_cast %463 : vector<1x128xf32> to vector<1x128xf32>
    %465 = vector.broadcast %464 : vector<1x128xf32> to vector<2x128xf32>
    %c100_396 = arith.constant 100 : index
    %c0_397 = arith.constant 0 : index
    %466 = vector.load %arg6[%c100_396, %c0_397] : memref<512x128xf32, #tpu.memory_space<vmem>>, vector<2x128xf32>
    tpu.vector_store %arg6[%c100_396, %c0_397], %465 {strides = array<i32>} : memref<512x128xf32, #tpu.memory_space<vmem>>, vector<2x128xf32>,
    %c116_398 = arith.constant 116 : index
    %c0_399 = arith.constant 0 : index
    %467 = vector.load %arg6[%c116_398, %c0_399] : memref<512x128xf32, #tpu.memory_space<vmem>>, vector<2x128xf32>
    tpu.vector_store %arg6[%c116_398, %c0_399], %465 {strides = array<i32>} : memref<512x128xf32, #tpu.memory_space<vmem>>, vector<2x128xf32>,
    %c27_400 = arith.constant 27 : index
    %c0_401 = arith.constant 0 : index
    %468 = vector.load %arg5[%c27_400, %c0_401] : memref<128x128xf32, #tpu.memory_space<vmem>>, vector<1x128xf32>
    %469 = vector.shape_cast %468 : vector<1x128xf32> to vector<1x128xf32>
    %470 = vector.broadcast %469 : vector<1x128xf32> to vector<2x128xf32>
    %c102_402 = arith.constant 102 : index
    %c0_403 = arith.constant 0 : index
    %471 = vector.load %arg6[%c102_402, %c0_403] : memref<512x128xf32, #tpu.memory_space<vmem>>, vector<2x128xf32>
    tpu.vector_store %arg6[%c102_402, %c0_403], %470 {strides = array<i32>} : memref<512x128xf32, #tpu.memory_space<vmem>>, vector<2x128xf32>,
    %c118_404 = arith.constant 118 : index
    %c0_405 = arith.constant 0 : index
    %472 = vector.load %arg6[%c118_404, %c0_405] : memref<512x128xf32, #tpu.memory_space<vmem>>, vector<2x128xf32>
    tpu.vector_store %arg6[%c118_404, %c0_405], %470 {strides = array<i32>} : memref<512x128xf32, #tpu.memory_space<vmem>>, vector<2x128xf32>,
    %c28_406 = arith.constant 28 : index
    %c0_407 = arith.constant 0 : index
    %473 = vector.load %arg5[%c28_406, %c0_407] : memref<128x128xf32, #tpu.memory_space<vmem>>, vector<1x128xf32>
    %474 = vector.shape_cast %473 : vector<1x128xf32> to vector<1x128xf32>
    %475 = vector.broadcast %474 : vector<1x128xf32> to vector<2x128xf32>
    %c104_408 = arith.constant 104 : index
    %c0_409 = arith.constant 0 : index
    %476 = vector.load %arg6[%c104_408, %c0_409] : memref<512x128xf32, #tpu.memory_space<vmem>>, vector<2x128xf32>
    tpu.vector_store %arg6[%c104_408, %c0_409], %475 {strides = array<i32>} : memref<512x128xf32, #tpu.memory_space<vmem>>, vector<2x128xf32>,
    %c120_410 = arith.constant 120 : index
    %c0_411 = arith.constant 0 : index
    %477 = vector.load %arg6[%c120_410, %c0_411] : memref<512x128xf32, #tpu.memory_space<vmem>>, vector<2x128xf32>
    tpu.vector_store %arg6[%c120_410, %c0_411], %475 {strides = array<i32>} : memref<512x128xf32, #tpu.memory_space<vmem>>, vector<2x128xf32>,
    %c29_412 = arith.constant 29 : index
    %c0_413 = arith.constant 0 : index
    %478 = vector.load %arg5[%c29_412, %c0_413] : memref<128x128xf32, #tpu.memory_space<vmem>>, vector<1x128xf32>
    %479 = vector.shape_cast %478 : vector<1x128xf32> to vector<1x128xf32>
    %480 = vector.broadcast %479 : vector<1x128xf32> to vector<2x128xf32>
    %c106_414 = arith.constant 106 : index
    %c0_415 = arith.constant 0 : index
    %481 = vector.load %arg6[%c106_414, %c0_415] : memref<512x128xf32, #tpu.memory_space<vmem>>, vector<2x128xf32>
    tpu.vector_store %arg6[%c106_414, %c0_415], %480 {strides = array<i32>} : memref<512x128xf32, #tpu.memory_space<vmem>>, vector<2x128xf32>,
    %c122_416 = arith.constant 122 : index
    %c0_417 = arith.constant 0 : index
    %482 = vector.load %arg6[%c122_416, %c0_417] : memref<512x128xf32, #tpu.memory_space<vmem>>, vector<2x128xf32>
    tpu.vector_store %arg6[%c122_416, %c0_417], %480 {strides = array<i32>} : memref<512x128xf32, #tpu.memory_space<vmem>>, vector<2x128xf32>,
    %c30_418 = arith.constant 30 : index
    %c0_419 = arith.constant 0 : index
    %483 = vector.load %arg5[%c30_418, %c0_419] : memref<128x128xf32, #tpu.memory_space<vmem>>, vector<1x128xf32>
    %484 = vector.shape_cast %483 : vector<1x128xf32> to vector<1x128xf32>
    %485 = vector.broadcast %484 : vector<1x128xf32> to vector<2x128xf32>
    %c108_420 = arith.constant 108 : index
    %c0_421 = arith.constant 0 : index
    %486 = vector.load %arg6[%c108_420, %c0_421] : memref<512x128xf32, #tpu.memory_space<vmem>>, vector<2x128xf32>
    tpu.vector_store %arg6[%c108_420, %c0_421], %485 {strides = array<i32>} : memref<512x128xf32, #tpu.memory_space<vmem>>, vector<2x128xf32>,
    %c124_422 = arith.constant 124 : index
    %c0_423 = arith.constant 0 : index
    %487 = vector.load %arg6[%c124_422, %c0_423] : memref<512x128xf32, #tpu.memory_space<vmem>>, vector<2x128xf32>
    tpu.vector_store %arg6[%c124_422, %c0_423], %485 {strides = array<i32>} : memref<512x128xf32, #tpu.memory_space<vmem>>, vector<2x128xf32>,
    %c31_424 = arith.constant 31 : index
    %c0_425 = arith.constant 0 : index
    %488 = vector.load %arg5[%c31_424, %c0_425] : memref<128x128xf32, #tpu.memory_space<vmem>>, vector<1x128xf32>
    %489 = vector.shape_cast %488 : vector<1x128xf32> to vector<1x128xf32>
    %490 = vector.broadcast %489 : vector<1x128xf32> to vector<2x128xf32>
    %c110_426 = arith.constant 110 : index
    %c0_427 = arith.constant 0 : index
    %491 = vector.load %arg6[%c110_426, %c0_427] : memref<512x128xf32, #tpu.memory_space<vmem>>, vector<2x128xf32>
    tpu.vector_store %arg6[%c110_426, %c0_427], %490 {strides = array<i32>} : memref<512x128xf32, #tpu.memory_space<vmem>>, vector<2x128xf32>,
    %c126_428 = arith.constant 126 : index
    %c0_429 = arith.constant 0 : index
    %492 = vector.load %arg6[%c126_428, %c0_429] : memref<512x128xf32, #tpu.memory_space<vmem>>, vector<2x128xf32>
    tpu.vector_store %arg6[%c126_428, %c0_429], %490 {strides = array<i32>} : memref<512x128xf32, #tpu.memory_space<vmem>>, vector<2x128xf32>,
    %c32_430 = arith.constant 32 : index
    %c0_431 = arith.constant 0 : index
    %493 = vector.load %arg5[%c32_430, %c0_431] : memref<128x128xf32, #tpu.memory_space<vmem>>, vector<1x128xf32>
    %494 = vector.shape_cast %493 : vector<1x128xf32> to vector<1x128xf32>
    %495 = vector.broadcast %494 : vector<1x128xf32> to vector<2x128xf32>
    %c128 = arith.constant 128 : index
    %c0_432 = arith.constant 0 : index
    %496 = vector.load %arg6[%c128, %c0_432] : memref<512x128xf32, #tpu.memory_space<vmem>>, vector<2x128xf32>
    tpu.vector_store %arg6[%c128, %c0_432], %495 {strides = array<i32>} : memref<512x128xf32, #tpu.memory_space<vmem>>, vector<2x128xf32>,
    %c144 = arith.constant 144 : index
    %c0_433 = arith.constant 0 : index
    %497 = vector.load %arg6[%c144, %c0_433] : memref<512x128xf32, #tpu.memory_space<vmem>>, vector<2x128xf32>
    tpu.vector_store %arg6[%c144, %c0_433], %495 {strides = array<i32>} : memref<512x128xf32, #tpu.memory_space<vmem>>, vector<2x128xf32>,
    %c33 = arith.constant 33 : index
    %c0_434 = arith.constant 0 : index
    %498 = vector.load %arg5[%c33, %c0_434] : memref<128x128xf32, #tpu.memory_space<vmem>>, vector<1x128xf32>
    %499 = vector.shape_cast %498 : vector<1x128xf32> to vector<1x128xf32>
    %500 = vector.broadcast %499 : vector<1x128xf32> to vector<2x128xf32>
    %c130 = arith.constant 130 : index
    %c0_435 = arith.constant 0 : index
    %501 = vector.load %arg6[%c130, %c0_435] : memref<512x128xf32, #tpu.memory_space<vmem>>, vector<2x128xf32>
    tpu.vector_store %arg6[%c130, %c0_435], %500 {strides = array<i32>} : memref<512x128xf32, #tpu.memory_space<vmem>>, vector<2x128xf32>,
    %c146 = arith.constant 146 : index
    %c0_436 = arith.constant 0 : index
    %502 = vector.load %arg6[%c146, %c0_436] : memref<512x128xf32, #tpu.memory_space<vmem>>, vector<2x128xf32>
    tpu.vector_store %arg6[%c146, %c0_436], %500 {strides = array<i32>} : memref<512x128xf32, #tpu.memory_space<vmem>>, vector<2x128xf32>,
    %c34_437 = arith.constant 34 : index
    %c0_438 = arith.constant 0 : index
    %503 = vector.load %arg5[%c34_437, %c0_438] : memref<128x128xf32, #tpu.memory_space<vmem>>, vector<1x128xf32>
    %504 = vector.shape_cast %503 : vector<1x128xf32> to vector<1x128xf32>
    %505 = vector.broadcast %504 : vector<1x128xf32> to vector<2x128xf32>
    %c132 = arith.constant 132 : index
    %c0_439 = arith.constant 0 : index
    %506 = vector.load %arg6[%c132, %c0_439] : memref<512x128xf32, #tpu.memory_space<vmem>>, vector<2x128xf32>
    tpu.vector_store %arg6[%c132, %c0_439], %505 {strides = array<i32>} : memref<512x128xf32, #tpu.memory_space<vmem>>, vector<2x128xf32>,
    %c148 = arith.constant 148 : index
    %c0_440 = arith.constant 0 : index
    %507 = vector.load %arg6[%c148, %c0_440] : memref<512x128xf32, #tpu.memory_space<vmem>>, vector<2x128xf32>
    tpu.vector_store %arg6[%c148, %c0_440], %505 {strides = array<i32>} : memref<512x128xf32, #tpu.memory_space<vmem>>, vector<2x128xf32>,
    %c35 = arith.constant 35 : index
    %c0_441 = arith.constant 0 : index
    %508 = vector.load %arg5[%c35, %c0_441] : memref<128x128xf32, #tpu.memory_space<vmem>>, vector<1x128xf32>
    %509 = vector.shape_cast %508 : vector<1x128xf32> to vector<1x128xf32>
    %510 = vector.broadcast %509 : vector<1x128xf32> to vector<2x128xf32>
    %c134 = arith.constant 134 : index
    %c0_442 = arith.constant 0 : index
    %511 = vector.load %arg6[%c134, %c0_442] : memref<512x128xf32, #tpu.memory_space<vmem>>, vector<2x128xf32>
    tpu.vector_store %arg6[%c134, %c0_442], %510 {strides = array<i32>} : memref<512x128xf32, #tpu.memory_space<vmem>>, vector<2x128xf32>,
    %c150 = arith.constant 150 : index
    %c0_443 = arith.constant 0 : index
    %512 = vector.load %arg6[%c150, %c0_443] : memref<512x128xf32, #tpu.memory_space<vmem>>, vector<2x128xf32>
    tpu.vector_store %arg6[%c150, %c0_443], %510 {strides = array<i32>} : memref<512x128xf32, #tpu.memory_space<vmem>>, vector<2x128xf32>,
    %c36_444 = arith.constant 36 : index
    %c0_445 = arith.constant 0 : index
    %513 = vector.load %arg5[%c36_444, %c0_445] : memref<128x128xf32, #tpu.memory_space<vmem>>, vector<1x128xf32>
    %514 = vector.shape_cast %513 : vector<1x128xf32> to vector<1x128xf32>
    %515 = vector.broadcast %514 : vector<1x128xf32> to vector<2x128xf32>
    %c136 = arith.constant 136 : index
    %c0_446 = arith.constant 0 : index
    %516 = vector.load %arg6[%c136, %c0_446] : memref<512x128xf32, #tpu.memory_space<vmem>>, vector<2x128xf32>
    tpu.vector_store %arg6[%c136, %c0_446], %515 {strides = array<i32>} : memref<512x128xf32, #tpu.memory_space<vmem>>, vector<2x128xf32>,
    %c152 = arith.constant 152 : index
    %c0_447 = arith.constant 0 : index
    %517 = vector.load %arg6[%c152, %c0_447] : memref<512x128xf32, #tpu.memory_space<vmem>>, vector<2x128xf32>
    tpu.vector_store %arg6[%c152, %c0_447], %515 {strides = array<i32>} : memref<512x128xf32, #tpu.memory_space<vmem>>, vector<2x128xf32>,
    %c37 = arith.constant 37 : index
    %c0_448 = arith.constant 0 : index
    %518 = vector.load %arg5[%c37, %c0_448] : memref<128x128xf32, #tpu.memory_space<vmem>>, vector<1x128xf32>
    %519 = vector.shape_cast %518 : vector<1x128xf32> to vector<1x128xf32>
    %520 = vector.broadcast %519 : vector<1x128xf32> to vector<2x128xf32>
    %c138 = arith.constant 138 : index
    %c0_449 = arith.constant 0 : index
    %521 = vector.load %arg6[%c138, %c0_449] : memref<512x128xf32, #tpu.memory_space<vmem>>, vector<2x128xf32>
    tpu.vector_store %arg6[%c138, %c0_449], %520 {strides = array<i32>} : memref<512x128xf32, #tpu.memory_space<vmem>>, vector<2x128xf32>,
    %c154 = arith.constant 154 : index
    %c0_450 = arith.constant 0 : index
    %522 = vector.load %arg6[%c154, %c0_450] : memref<512x128xf32, #tpu.memory_space<vmem>>, vector<2x128xf32>
    tpu.vector_store %arg6[%c154, %c0_450], %520 {strides = array<i32>} : memref<512x128xf32, #tpu.memory_space<vmem>>, vector<2x128xf32>,
    %c38_451 = arith.constant 38 : index
    %c0_452 = arith.constant 0 : index
    %523 = vector.load %arg5[%c38_451, %c0_452] : memref<128x128xf32, #tpu.memory_space<vmem>>, vector<1x128xf32>
    %524 = vector.shape_cast %523 : vector<1x128xf32> to vector<1x128xf32>
    %525 = vector.broadcast %524 : vector<1x128xf32> to vector<2x128xf32>
    %c140 = arith.constant 140 : index
    %c0_453 = arith.constant 0 : index
    %526 = vector.load %arg6[%c140, %c0_453] : memref<512x128xf32, #tpu.memory_space<vmem>>, vector<2x128xf32>
    tpu.vector_store %arg6[%c140, %c0_453], %525 {strides = array<i32>} : memref<512x128xf32, #tpu.memory_space<vmem>>, vector<2x128xf32>,
    %c156 = arith.constant 156 : index
    %c0_454 = arith.constant 0 : index
    %527 = vector.load %arg6[%c156, %c0_454] : memref<512x128xf32, #tpu.memory_space<vmem>>, vector<2x128xf32>
    tpu.vector_store %arg6[%c156, %c0_454], %525 {strides = array<i32>} : memref<512x128xf32, #tpu.memory_space<vmem>>, vector<2x128xf32>,
    %c39 = arith.constant 39 : index
    %c0_455 = arith.constant 0 : index
    %528 = vector.load %arg5[%c39, %c0_455] : memref<128x128xf32, #tpu.memory_space<vmem>>, vector<1x128xf32>
    %529 = vector.shape_cast %528 : vector<1x128xf32> to vector<1x128xf32>
    %530 = vector.broadcast %529 : vector<1x128xf32> to vector<2x128xf32>
    %c142 = arith.constant 142 : index
    %c0_456 = arith.constant 0 : index
    %531 = vector.load %arg6[%c142, %c0_456] : memref<512x128xf32, #tpu.memory_space<vmem>>, vector<2x128xf32>
    tpu.vector_store %arg6[%c142, %c0_456], %530 {strides = array<i32>} : memref<512x128xf32, #tpu.memory_space<vmem>>, vector<2x128xf32>,
    %c158 = arith.constant 158 : index
    %c0_457 = arith.constant 0 : index
    %532 = vector.load %arg6[%c158, %c0_457] : memref<512x128xf32, #tpu.memory_space<vmem>>, vector<2x128xf32>
    tpu.vector_store %arg6[%c158, %c0_457], %530 {strides = array<i32>} : memref<512x128xf32, #tpu.memory_space<vmem>>, vector<2x128xf32>,
    %c40_458 = arith.constant 40 : index
    %c0_459 = arith.constant 0 : index
    %533 = vector.load %arg5[%c40_458, %c0_459] : memref<128x128xf32, #tpu.memory_space<vmem>>, vector<1x128xf32>
    %534 = vector.shape_cast %533 : vector<1x128xf32> to vector<1x128xf32>
    %535 = vector.broadcast %534 : vector<1x128xf32> to vector<2x128xf32>
    %c160 = arith.constant 160 : index
    %c0_460 = arith.constant 0 : index
    %536 = vector.load %arg6[%c160, %c0_460] : memref<512x128xf32, #tpu.memory_space<vmem>>, vector<2x128xf32>
    tpu.vector_store %arg6[%c160, %c0_460], %535 {strides = array<i32>} : memref<512x128xf32, #tpu.memory_space<vmem>>, vector<2x128xf32>,
    %c176 = arith.constant 176 : index
    %c0_461 = arith.constant 0 : index
    %537 = vector.load %arg6[%c176, %c0_461] : memref<512x128xf32, #tpu.memory_space<vmem>>, vector<2x128xf32>
    tpu.vector_store %arg6[%c176, %c0_461], %535 {strides = array<i32>} : memref<512x128xf32, #tpu.memory_space<vmem>>, vector<2x128xf32>,
    %c41 = arith.constant 41 : index
    %c0_462 = arith.constant 0 : index
    %538 = vector.load %arg5[%c41, %c0_462] : memref<128x128xf32, #tpu.memory_space<vmem>>, vector<1x128xf32>
    %539 = vector.shape_cast %538 : vector<1x128xf32> to vector<1x128xf32>
    %540 = vector.broadcast %539 : vector<1x128xf32> to vector<2x128xf32>
    %c162 = arith.constant 162 : index
    %c0_463 = arith.constant 0 : index
    %541 = vector.load %arg6[%c162, %c0_463] : memref<512x128xf32, #tpu.memory_space<vmem>>, vector<2x128xf32>
    tpu.vector_store %arg6[%c162, %c0_463], %540 {strides = array<i32>} : memref<512x128xf32, #tpu.memory_space<vmem>>, vector<2x128xf32>,
    %c178 = arith.constant 178 : index
    %c0_464 = arith.constant 0 : index
    %542 = vector.load %arg6[%c178, %c0_464] : memref<512x128xf32, #tpu.memory_space<vmem>>, vector<2x128xf32>
    tpu.vector_store %arg6[%c178, %c0_464], %540 {strides = array<i32>} : memref<512x128xf32, #tpu.memory_space<vmem>>, vector<2x128xf32>,
    %c42_465 = arith.constant 42 : index
    %c0_466 = arith.constant 0 : index
    %543 = vector.load %arg5[%c42_465, %c0_466] : memref<128x128xf32, #tpu.memory_space<vmem>>, vector<1x128xf32>
    %544 = vector.shape_cast %543 : vector<1x128xf32> to vector<1x128xf32>
    %545 = vector.broadcast %544 : vector<1x128xf32> to vector<2x128xf32>
    %c164 = arith.constant 164 : index
    %c0_467 = arith.constant 0 : index
    %546 = vector.load %arg6[%c164, %c0_467] : memref<512x128xf32, #tpu.memory_space<vmem>>, vector<2x128xf32>
    tpu.vector_store %arg6[%c164, %c0_467], %545 {strides = array<i32>} : memref<512x128xf32, #tpu.memory_space<vmem>>, vector<2x128xf32>,
    %c180 = arith.constant 180 : index
    %c0_468 = arith.constant 0 : index
    %547 = vector.load %arg6[%c180, %c0_468] : memref<512x128xf32, #tpu.memory_space<vmem>>, vector<2x128xf32>
    tpu.vector_store %arg6[%c180, %c0_468], %545 {strides = array<i32>} : memref<512x128xf32, #tpu.memory_space<vmem>>, vector<2x128xf32>,
    %c43 = arith.constant 43 : index
    %c0_469 = arith.constant 0 : index
    %548 = vector.load %arg5[%c43, %c0_469] : memref<128x128xf32, #tpu.memory_space<vmem>>, vector<1x128xf32>
    %549 = vector.shape_cast %548 : vector<1x128xf32> to vector<1x128xf32>
    %550 = vector.broadcast %549 : vector<1x128xf32> to vector<2x128xf32>
    %c166 = arith.constant 166 : index
    %c0_470 = arith.constant 0 : index
    %551 = vector.load %arg6[%c166, %c0_470] : memref<512x128xf32, #tpu.memory_space<vmem>>, vector<2x128xf32>
    tpu.vector_store %arg6[%c166, %c0_470], %550 {strides = array<i32>} : memref<512x128xf32, #tpu.memory_space<vmem>>, vector<2x128xf32>,
    %c182 = arith.constant 182 : index
    %c0_471 = arith.constant 0 : index
    %552 = vector.load %arg6[%c182, %c0_471] : memref<512x128xf32, #tpu.memory_space<vmem>>, vector<2x128xf32>
    tpu.vector_store %arg6[%c182, %c0_471], %550 {strides = array<i32>} : memref<512x128xf32, #tpu.memory_space<vmem>>, vector<2x128xf32>,
    %c44_472 = arith.constant 44 : index
    %c0_473 = arith.constant 0 : index
    %553 = vector.load %arg5[%c44_472, %c0_473] : memref<128x128xf32, #tpu.memory_space<vmem>>, vector<1x128xf32>
    %554 = vector.shape_cast %553 : vector<1x128xf32> to vector<1x128xf32>
    %555 = vector.broadcast %554 : vector<1x128xf32> to vector<2x128xf32>
    %c168 = arith.constant 168 : index
    %c0_474 = arith.constant 0 : index
    %556 = vector.load %arg6[%c168, %c0_474] : memref<512x128xf32, #tpu.memory_space<vmem>>, vector<2x128xf32>
    tpu.vector_store %arg6[%c168, %c0_474], %555 {strides = array<i32>} : memref<512x128xf32, #tpu.memory_space<vmem>>, vector<2x128xf32>,
    %c184 = arith.constant 184 : index
    %c0_475 = arith.constant 0 : index
    %557 = vector.load %arg6[%c184, %c0_475] : memref<512x128xf32, #tpu.memory_space<vmem>>, vector<2x128xf32>
    tpu.vector_store %arg6[%c184, %c0_475], %555 {strides = array<i32>} : memref<512x128xf32, #tpu.memory_space<vmem>>, vector<2x128xf32>,
    %c45 = arith.constant 45 : index
    %c0_476 = arith.constant 0 : index
    %558 = vector.load %arg5[%c45, %c0_476] : memref<128x128xf32, #tpu.memory_space<vmem>>, vector<1x128xf32>
    %559 = vector.shape_cast %558 : vector<1x128xf32> to vector<1x128xf32>
    %560 = vector.broadcast %559 : vector<1x128xf32> to vector<2x128xf32>
    %c170 = arith.constant 170 : index
    %c0_477 = arith.constant 0 : index
    %561 = vector.load %arg6[%c170, %c0_477] : memref<512x128xf32, #tpu.memory_space<vmem>>, vector<2x128xf32>
    tpu.vector_store %arg6[%c170, %c0_477], %560 {strides = array<i32>} : memref<512x128xf32, #tpu.memory_space<vmem>>, vector<2x128xf32>,
    %c186 = arith.constant 186 : index
    %c0_478 = arith.constant 0 : index
    %562 = vector.load %arg6[%c186, %c0_478] : memref<512x128xf32, #tpu.memory_space<vmem>>, vector<2x128xf32>
    tpu.vector_store %arg6[%c186, %c0_478], %560 {strides = array<i32>} : memref<512x128xf32, #tpu.memory_space<vmem>>, vector<2x128xf32>,
    %c46_479 = arith.constant 46 : index
    %c0_480 = arith.constant 0 : index
    %563 = vector.load %arg5[%c46_479, %c0_480] : memref<128x128xf32, #tpu.memory_space<vmem>>, vector<1x128xf32>
    %564 = vector.shape_cast %563 : vector<1x128xf32> to vector<1x128xf32>
    %565 = vector.broadcast %564 : vector<1x128xf32> to vector<2x128xf32>
    %c172 = arith.constant 172 : index
    %c0_481 = arith.constant 0 : index
    %566 = vector.load %arg6[%c172, %c0_481] : memref<512x128xf32, #tpu.memory_space<vmem>>, vector<2x128xf32>
    tpu.vector_store %arg6[%c172, %c0_481], %565 {strides = array<i32>} : memref<512x128xf32, #tpu.memory_space<vmem>>, vector<2x128xf32>,
    %c188 = arith.constant 188 : index
    %c0_482 = arith.constant 0 : index
    %567 = vector.load %arg6[%c188, %c0_482] : memref<512x128xf32, #tpu.memory_space<vmem>>, vector<2x128xf32>
    tpu.vector_store %arg6[%c188, %c0_482], %565 {strides = array<i32>} : memref<512x128xf32, #tpu.memory_space<vmem>>, vector<2x128xf32>,
    %c47 = arith.constant 47 : index
    %c0_483 = arith.constant 0 : index
    %568 = vector.load %arg5[%c47, %c0_483] : memref<128x128xf32, #tpu.memory_space<vmem>>, vector<1x128xf32>
    %569 = vector.shape_cast %568 : vector<1x128xf32> to vector<1x128xf32>
    %570 = vector.broadcast %569 : vector<1x128xf32> to vector<2x128xf32>
    %c174 = arith.constant 174 : index
    %c0_484 = arith.constant 0 : index
    %571 = vector.load %arg6[%c174, %c0_484] : memref<512x128xf32, #tpu.memory_space<vmem>>, vector<2x128xf32>
    tpu.vector_store %arg6[%c174, %c0_484], %570 {strides = array<i32>} : memref<512x128xf32, #tpu.memory_space<vmem>>, vector<2x128xf32>,
    %c190 = arith.constant 190 : index
    %c0_485 = arith.constant 0 : index
    %572 = vector.load %arg6[%c190, %c0_485] : memref<512x128xf32, #tpu.memory_space<vmem>>, vector<2x128xf32>
    tpu.vector_store %arg6[%c190, %c0_485], %570 {strides = array<i32>} : memref<512x128xf32, #tpu.memory_space<vmem>>, vector<2x128xf32>,
    %c48_486 = arith.constant 48 : index
    %c0_487 = arith.constant 0 : index
    %573 = vector.load %arg5[%c48_486, %c0_487] : memref<128x128xf32, #tpu.memory_space<vmem>>, vector<1x128xf32>
    %574 = vector.shape_cast %573 : vector<1x128xf32> to vector<1x128xf32>
    %575 = vector.broadcast %574 : vector<1x128xf32> to vector<2x128xf32>
    %c192 = arith.constant 192 : index
    %c0_488 = arith.constant 0 : index
    %576 = vector.load %arg6[%c192, %c0_488] : memref<512x128xf32, #tpu.memory_space<vmem>>, vector<2x128xf32>
    tpu.vector_store %arg6[%c192, %c0_488], %575 {strides = array<i32>} : memref<512x128xf32, #tpu.memory_space<vmem>>, vector<2x128xf32>,
    %c208 = arith.constant 208 : index
    %c0_489 = arith.constant 0 : index
    %577 = vector.load %arg6[%c208, %c0_489] : memref<512x128xf32, #tpu.memory_space<vmem>>, vector<2x128xf32>
    tpu.vector_store %arg6[%c208, %c0_489], %575 {strides = array<i32>} : memref<512x128xf32, #tpu.memory_space<vmem>>, vector<2x128xf32>,
    %c49 = arith.constant 49 : index
    %c0_490 = arith.constant 0 : index
    %578 = vector.load %arg5[%c49, %c0_490] : memref<128x128xf32, #tpu.memory_space<vmem>>, vector<1x128xf32>
    %579 = vector.shape_cast %578 : vector<1x128xf32> to vector<1x128xf32>
    %580 = vector.broadcast %579 : vector<1x128xf32> to vector<2x128xf32>
    %c194 = arith.constant 194 : index
    %c0_491 = arith.constant 0 : index
    %581 = vector.load %arg6[%c194, %c0_491] : memref<512x128xf32, #tpu.memory_space<vmem>>, vector<2x128xf32>
    tpu.vector_store %arg6[%c194, %c0_491], %580 {strides = array<i32>} : memref<512x128xf32, #tpu.memory_space<vmem>>, vector<2x128xf32>,
    %c210 = arith.constant 210 : index
    %c0_492 = arith.constant 0 : index
    %582 = vector.load %arg6[%c210, %c0_492] : memref<512x128xf32, #tpu.memory_space<vmem>>, vector<2x128xf32>
    tpu.vector_store %arg6[%c210, %c0_492], %580 {strides = array<i32>} : memref<512x128xf32, #tpu.memory_space<vmem>>, vector<2x128xf32>,
    %c50_493 = arith.constant 50 : index
    %c0_494 = arith.constant 0 : index
    %583 = vector.load %arg5[%c50_493, %c0_494] : memref<128x128xf32, #tpu.memory_space<vmem>>, vector<1x128xf32>
    %584 = vector.shape_cast %583 : vector<1x128xf32> to vector<1x128xf32>
    %585 = vector.broadcast %584 : vector<1x128xf32> to vector<2x128xf32>
    %c196 = arith.constant 196 : index
    %c0_495 = arith.constant 0 : index
    %586 = vector.load %arg6[%c196, %c0_495] : memref<512x128xf32, #tpu.memory_space<vmem>>, vector<2x128xf32>
    tpu.vector_store %arg6[%c196, %c0_495], %585 {strides = array<i32>} : memref<512x128xf32, #tpu.memory_space<vmem>>, vector<2x128xf32>,
    %c212 = arith.constant 212 : index
    %c0_496 = arith.constant 0 : index
    %587 = vector.load %arg6[%c212, %c0_496] : memref<512x128xf32, #tpu.memory_space<vmem>>, vector<2x128xf32>
    tpu.vector_store %arg6[%c212, %c0_496], %585 {strides = array<i32>} : memref<512x128xf32, #tpu.memory_space<vmem>>, vector<2x128xf32>,
    %c51 = arith.constant 51 : index
    %c0_497 = arith.constant 0 : index
    %588 = vector.load %arg5[%c51, %c0_497] : memref<128x128xf32, #tpu.memory_space<vmem>>, vector<1x128xf32>
    %589 = vector.shape_cast %588 : vector<1x128xf32> to vector<1x128xf32>
    %590 = vector.broadcast %589 : vector<1x128xf32> to vector<2x128xf32>
    %c198 = arith.constant 198 : index
    %c0_498 = arith.constant 0 : index
    %591 = vector.load %arg6[%c198, %c0_498] : memref<512x128xf32, #tpu.memory_space<vmem>>, vector<2x128xf32>
    tpu.vector_store %arg6[%c198, %c0_498], %590 {strides = array<i32>} : memref<512x128xf32, #tpu.memory_space<vmem>>, vector<2x128xf32>,
    %c214 = arith.constant 214 : index
    %c0_499 = arith.constant 0 : index
    %592 = vector.load %arg6[%c214, %c0_499] : memref<512x128xf32, #tpu.memory_space<vmem>>, vector<2x128xf32>
    tpu.vector_store %arg6[%c214, %c0_499], %590 {strides = array<i32>} : memref<512x128xf32, #tpu.memory_space<vmem>>, vector<2x128xf32>,
    %c52_500 = arith.constant 52 : index
    %c0_501 = arith.constant 0 : index
    %593 = vector.load %arg5[%c52_500, %c0_501] : memref<128x128xf32, #tpu.memory_space<vmem>>, vector<1x128xf32>
    %594 = vector.shape_cast %593 : vector<1x128xf32> to vector<1x128xf32>
    %595 = vector.broadcast %594 : vector<1x128xf32> to vector<2x128xf32>
    %c200 = arith.constant 200 : index
    %c0_502 = arith.constant 0 : index
    %596 = vector.load %arg6[%c200, %c0_502] : memref<512x128xf32, #tpu.memory_space<vmem>>, vector<2x128xf32>
    tpu.vector_store %arg6[%c200, %c0_502], %595 {strides = array<i32>} : memref<512x128xf32, #tpu.memory_space<vmem>>, vector<2x128xf32>,
    %c216 = arith.constant 216 : index
    %c0_503 = arith.constant 0 : index
    %597 = vector.load %arg6[%c216, %c0_503] : memref<512x128xf32, #tpu.memory_space<vmem>>, vector<2x128xf32>
    tpu.vector_store %arg6[%c216, %c0_503], %595 {strides = array<i32>} : memref<512x128xf32, #tpu.memory_space<vmem>>, vector<2x128xf32>,
    %c53 = arith.constant 53 : index
    %c0_504 = arith.constant 0 : index
    %598 = vector.load %arg5[%c53, %c0_504] : memref<128x128xf32, #tpu.memory_space<vmem>>, vector<1x128xf32>
    %599 = vector.shape_cast %598 : vector<1x128xf32> to vector<1x128xf32>
    %600 = vector.broadcast %599 : vector<1x128xf32> to vector<2x128xf32>
    %c202 = arith.constant 202 : index
    %c0_505 = arith.constant 0 : index
    %601 = vector.load %arg6[%c202, %c0_505] : memref<512x128xf32, #tpu.memory_space<vmem>>, vector<2x128xf32>
    tpu.vector_store %arg6[%c202, %c0_505], %600 {strides = array<i32>} : memref<512x128xf32, #tpu.memory_space<vmem>>, vector<2x128xf32>,
    %c218 = arith.constant 218 : index
    %c0_506 = arith.constant 0 : index
    %602 = vector.load %arg6[%c218, %c0_506] : memref<512x128xf32, #tpu.memory_space<vmem>>, vector<2x128xf32>
    tpu.vector_store %arg6[%c218, %c0_506], %600 {strides = array<i32>} : memref<512x128xf32, #tpu.memory_space<vmem>>, vector<2x128xf32>,
    %c54_507 = arith.constant 54 : index
    %c0_508 = arith.constant 0 : index
    %603 = vector.load %arg5[%c54_507, %c0_508] : memref<128x128xf32, #tpu.memory_space<vmem>>, vector<1x128xf32>
    %604 = vector.shape_cast %603 : vector<1x128xf32> to vector<1x128xf32>
    %605 = vector.broadcast %604 : vector<1x128xf32> to vector<2x128xf32>
    %c204 = arith.constant 204 : index
    %c0_509 = arith.constant 0 : index
    %606 = vector.load %arg6[%c204, %c0_509] : memref<512x128xf32, #tpu.memory_space<vmem>>, vector<2x128xf32>
    tpu.vector_store %arg6[%c204, %c0_509], %605 {strides = array<i32>} : memref<512x128xf32, #tpu.memory_space<vmem>>, vector<2x128xf32>,
    %c220 = arith.constant 220 : index
    %c0_510 = arith.constant 0 : index
    %607 = vector.load %arg6[%c220, %c0_510] : memref<512x128xf32, #tpu.memory_space<vmem>>, vector<2x128xf32>
    tpu.vector_store %arg6[%c220, %c0_510], %605 {strides = array<i32>} : memref<512x128xf32, #tpu.memory_space<vmem>>, vector<2x128xf32>,
    %c55 = arith.constant 55 : index
    %c0_511 = arith.constant 0 : index
    %608 = vector.load %arg5[%c55, %c0_511] : memref<128x128xf32, #tpu.memory_space<vmem>>, vector<1x128xf32>
    %609 = vector.shape_cast %608 : vector<1x128xf32> to vector<1x128xf32>
    %610 = vector.broadcast %609 : vector<1x128xf32> to vector<2x128xf32>
    %c206 = arith.constant 206 : index
    %c0_512 = arith.constant 0 : index
    %611 = vector.load %arg6[%c206, %c0_512] : memref<512x128xf32, #tpu.memory_space<vmem>>, vector<2x128xf32>
    tpu.vector_store %arg6[%c206, %c0_512], %610 {strides = array<i32>} : memref<512x128xf32, #tpu.memory_space<vmem>>, vector<2x128xf32>,
    %c222 = arith.constant 222 : index
    %c0_513 = arith.constant 0 : index
    %612 = vector.load %arg6[%c222, %c0_513] : memref<512x128xf32, #tpu.memory_space<vmem>>, vector<2x128xf32>
    tpu.vector_store %arg6[%c222, %c0_513], %610 {strides = array<i32>} : memref<512x128xf32, #tpu.memory_space<vmem>>, vector<2x128xf32>,
    %c56_514 = arith.constant 56 : index
    %c0_515 = arith.constant 0 : index
    %613 = vector.load %arg5[%c56_514, %c0_515] : memref<128x128xf32, #tpu.memory_space<vmem>>, vector<1x128xf32>
    %614 = vector.shape_cast %613 : vector<1x128xf32> to vector<1x128xf32>
    %615 = vector.broadcast %614 : vector<1x128xf32> to vector<2x128xf32>
    %c224 = arith.constant 224 : index
    %c0_516 = arith.constant 0 : index
    %616 = vector.load %arg6[%c224, %c0_516] : memref<512x128xf32, #tpu.memory_space<vmem>>, vector<2x128xf32>
    tpu.vector_store %arg6[%c224, %c0_516], %615 {strides = array<i32>} : memref<512x128xf32, #tpu.memory_space<vmem>>, vector<2x128xf32>,
    %c240 = arith.constant 240 : index
    %c0_517 = arith.constant 0 : index
    %617 = vector.load %arg6[%c240, %c0_517] : memref<512x128xf32, #tpu.memory_space<vmem>>, vector<2x128xf32>
    tpu.vector_store %arg6[%c240, %c0_517], %615 {strides = array<i32>} : memref<512x128xf32, #tpu.memory_space<vmem>>, vector<2x128xf32>,
    %c57 = arith.constant 57 : index
    %c0_518 = arith.constant 0 : index
    %618 = vector.load %arg5[%c57, %c0_518] : memref<128x128xf32, #tpu.memory_space<vmem>>, vector<1x128xf32>
    %619 = vector.shape_cast %618 : vector<1x128xf32> to vector<1x128xf32>
    %620 = vector.broadcast %619 : vector<1x128xf32> to vector<2x128xf32>
    %c226 = arith.constant 226 : index
    %c0_519 = arith.constant 0 : index
    %621 = vector.load %arg6[%c226, %c0_519] : memref<512x128xf32, #tpu.memory_space<vmem>>, vector<2x128xf32>
    tpu.vector_store %arg6[%c226, %c0_519], %620 {strides = array<i32>} : memref<512x128xf32, #tpu.memory_space<vmem>>, vector<2x128xf32>,
    %c242 = arith.constant 242 : index
    %c0_520 = arith.constant 0 : index
    %622 = vector.load %arg6[%c242, %c0_520] : memref<512x128xf32, #tpu.memory_space<vmem>>, vector<2x128xf32>
    tpu.vector_store %arg6[%c242, %c0_520], %620 {strides = array<i32>} : memref<512x128xf32, #tpu.memory_space<vmem>>, vector<2x128xf32>,
    %c58_521 = arith.constant 58 : index
    %c0_522 = arith.constant 0 : index
    %623 = vector.load %arg5[%c58_521, %c0_522] : memref<128x128xf32, #tpu.memory_space<vmem>>, vector<1x128xf32>
    %624 = vector.shape_cast %623 : vector<1x128xf32> to vector<1x128xf32>
    %625 = vector.broadcast %624 : vector<1x128xf32> to vector<2x128xf32>
    %c228 = arith.constant 228 : index
    %c0_523 = arith.constant 0 : index
    %626 = vector.load %arg6[%c228, %c0_523] : memref<512x128xf32, #tpu.memory_space<vmem>>, vector<2x128xf32>
    tpu.vector_store %arg6[%c228, %c0_523], %625 {strides = array<i32>} : memref<512x128xf32, #tpu.memory_space<vmem>>, vector<2x128xf32>,
    %c244 = arith.constant 244 : index
    %c0_524 = arith.constant 0 : index
    %627 = vector.load %arg6[%c244, %c0_524] : memref<512x128xf32, #tpu.memory_space<vmem>>, vector<2x128xf32>
    tpu.vector_store %arg6[%c244, %c0_524], %625 {strides = array<i32>} : memref<512x128xf32, #tpu.memory_space<vmem>>, vector<2x128xf32>,
    %c59 = arith.constant 59 : index
    %c0_525 = arith.constant 0 : index
    %628 = vector.load %arg5[%c59, %c0_525] : memref<128x128xf32, #tpu.memory_space<vmem>>, vector<1x128xf32>
    %629 = vector.shape_cast %628 : vector<1x128xf32> to vector<1x128xf32>
    %630 = vector.broadcast %629 : vector<1x128xf32> to vector<2x128xf32>
    %c230 = arith.constant 230 : index
    %c0_526 = arith.constant 0 : index
    %631 = vector.load %arg6[%c230, %c0_526] : memref<512x128xf32, #tpu.memory_space<vmem>>, vector<2x128xf32>
    tpu.vector_store %arg6[%c230, %c0_526], %630 {strides = array<i32>} : memref<512x128xf32, #tpu.memory_space<vmem>>, vector<2x128xf32>,
    %c246 = arith.constant 246 : index
    %c0_527 = arith.constant 0 : index
    %632 = vector.load %arg6[%c246, %c0_527] : memref<512x128xf32, #tpu.memory_space<vmem>>, vector<2x128xf32>
    tpu.vector_store %arg6[%c246, %c0_527], %630 {strides = array<i32>} : memref<512x128xf32, #tpu.memory_space<vmem>>, vector<2x128xf32>,
    %c60_528 = arith.constant 60 : index
    %c0_529 = arith.constant 0 : index
    %633 = vector.load %arg5[%c60_528, %c0_529] : memref<128x128xf32, #tpu.memory_space<vmem>>, vector<1x128xf32>
    %634 = vector.shape_cast %633 : vector<1x128xf32> to vector<1x128xf32>
    %635 = vector.broadcast %634 : vector<1x128xf32> to vector<2x128xf32>
    %c232 = arith.constant 232 : index
    %c0_530 = arith.constant 0 : index
    %636 = vector.load %arg6[%c232, %c0_530] : memref<512x128xf32, #tpu.memory_space<vmem>>, vector<2x128xf32>
    tpu.vector_store %arg6[%c232, %c0_530], %635 {strides = array<i32>} : memref<512x128xf32, #tpu.memory_space<vmem>>, vector<2x128xf32>,
    %c248 = arith.constant 248 : index
    %c0_531 = arith.constant 0 : index
    %637 = vector.load %arg6[%c248, %c0_531] : memref<512x128xf32, #tpu.memory_space<vmem>>, vector<2x128xf32>
    tpu.vector_store %arg6[%c248, %c0_531], %635 {strides = array<i32>} : memref<512x128xf32, #tpu.memory_space<vmem>>, vector<2x128xf32>,
    %c61 = arith.constant 61 : index
    %c0_532 = arith.constant 0 : index
    %638 = vector.load %arg5[%c61, %c0_532] : memref<128x128xf32, #tpu.memory_space<vmem>>, vector<1x128xf32>
    %639 = vector.shape_cast %638 : vector<1x128xf32> to vector<1x128xf32>
    %640 = vector.broadcast %639 : vector<1x128xf32> to vector<2x128xf32>
    %c234 = arith.constant 234 : index
    %c0_533 = arith.constant 0 : index
    %641 = vector.load %arg6[%c234, %c0_533] : memref<512x128xf32, #tpu.memory_space<vmem>>, vector<2x128xf32>
    tpu.vector_store %arg6[%c234, %c0_533], %640 {strides = array<i32>} : memref<512x128xf32, #tpu.memory_space<vmem>>, vector<2x128xf32>,
    %c250 = arith.constant 250 : index
    %c0_534 = arith.constant 0 : index
    %642 = vector.load %arg6[%c250, %c0_534] : memref<512x128xf32, #tpu.memory_space<vmem>>, vector<2x128xf32>
    tpu.vector_store %arg6[%c250, %c0_534], %640 {strides = array<i32>} : memref<512x128xf32, #tpu.memory_space<vmem>>, vector<2x128xf32>,
    %c62_535 = arith.constant 62 : index
    %c0_536 = arith.constant 0 : index
    %643 = vector.load %arg5[%c62_535, %c0_536] : memref<128x128xf32, #tpu.memory_space<vmem>>, vector<1x128xf32>
    %644 = vector.shape_cast %643 : vector<1x128xf32> to vector<1x128xf32>
    %645 = vector.broadcast %644 : vector<1x128xf32> to vector<2x128xf32>
    %c236 = arith.constant 236 : index
    %c0_537 = arith.constant 0 : index
    %646 = vector.load %arg6[%c236, %c0_537] : memref<512x128xf32, #tpu.memory_space<vmem>>, vector<2x128xf32>
    tpu.vector_store %arg6[%c236, %c0_537], %645 {strides = array<i32>} : memref<512x128xf32, #tpu.memory_space<vmem>>, vector<2x128xf32>,
    %c252 = arith.constant 252 : index
    %c0_538 = arith.constant 0 : index
    %647 = vector.load %arg6[%c252, %c0_538] : memref<512x128xf32, #tpu.memory_space<vmem>>, vector<2x128xf32>
    tpu.vector_store %arg6[%c252, %c0_538], %645 {strides = array<i32>} : memref<512x128xf32, #tpu.memory_space<vmem>>, vector<2x128xf32>,
    %c63 = arith.constant 63 : index
    %c0_539 = arith.constant 0 : index
    %648 = vector.load %arg5[%c63, %c0_539] : memref<128x128xf32, #tpu.memory_space<vmem>>, vector<1x128xf32>
    %649 = vector.shape_cast %648 : vector<1x128xf32> to vector<1x128xf32>
    %650 = vector.broadcast %649 : vector<1x128xf32> to vector<2x128xf32>
    %c238 = arith.constant 238 : index
    %c0_540 = arith.constant 0 : index
    %651 = vector.load %arg6[%c238, %c0_540] : memref<512x128xf32, #tpu.memory_space<vmem>>, vector<2x128xf32>
    tpu.vector_store %arg6[%c238, %c0_540], %650 {strides = array<i32>} : memref<512x128xf32, #tpu.memory_space<vmem>>, vector<2x128xf32>,
    %c254 = arith.constant 254 : index
    %c0_541 = arith.constant 0 : index
    %652 = vector.load %arg6[%c254, %c0_541] : memref<512x128xf32, #tpu.memory_space<vmem>>, vector<2x128xf32>
    tpu.vector_store %arg6[%c254, %c0_541], %650 {strides = array<i32>} : memref<512x128xf32, #tpu.memory_space<vmem>>, vector<2x128xf32>,
    %c64_542 = arith.constant 64 : index
    %c0_543 = arith.constant 0 : index
    %653 = vector.load %arg5[%c64_542, %c0_543] : memref<128x128xf32, #tpu.memory_space<vmem>>, vector<1x128xf32>
    %654 = vector.shape_cast %653 : vector<1x128xf32> to vector<1x128xf32>
    %655 = vector.broadcast %654 : vector<1x128xf32> to vector<2x128xf32>
    %c256 = arith.constant 256 : index
    %c0_544 = arith.constant 0 : index
    %656 = vector.load %arg6[%c256, %c0_544] : memref<512x128xf32, #tpu.memory_space<vmem>>, vector<2x128xf32>
    tpu.vector_store %arg6[%c256, %c0_544], %655 {strides = array<i32>} : memref<512x128xf32, #tpu.memory_space<vmem>>, vector<2x128xf32>,
    %c272 = arith.constant 272 : index
    %c0_545 = arith.constant 0 : index
    %657 = vector.load %arg6[%c272, %c0_545] : memref<512x128xf32, #tpu.memory_space<vmem>>, vector<2x128xf32>
    tpu.vector_store %arg6[%c272, %c0_545], %655 {strides = array<i32>} : memref<512x128xf32, #tpu.memory_space<vmem>>, vector<2x128xf32>,
    %c65 = arith.constant 65 : index
    %c0_546 = arith.constant 0 : index
    %658 = vector.load %arg5[%c65, %c0_546] : memref<128x128xf32, #tpu.memory_space<vmem>>, vector<1x128xf32>
    %659 = vector.shape_cast %658 : vector<1x128xf32> to vector<1x128xf32>
    %660 = vector.broadcast %659 : vector<1x128xf32> to vector<2x128xf32>
    %c258 = arith.constant 258 : index
    %c0_547 = arith.constant 0 : index
    %661 = vector.load %arg6[%c258, %c0_547] : memref<512x128xf32, #tpu.memory_space<vmem>>, vector<2x128xf32>
    tpu.vector_store %arg6[%c258, %c0_547], %660 {strides = array<i32>} : memref<512x128xf32, #tpu.memory_space<vmem>>, vector<2x128xf32>,
    %c274 = arith.constant 274 : index
    %c0_548 = arith.constant 0 : index
    %662 = vector.load %arg6[%c274, %c0_548] : memref<512x128xf32, #tpu.memory_space<vmem>>, vector<2x128xf32>
    tpu.vector_store %arg6[%c274, %c0_548], %660 {strides = array<i32>} : memref<512x128xf32, #tpu.memory_space<vmem>>, vector<2x128xf32>,
    %c66_549 = arith.constant 66 : index
    %c0_550 = arith.constant 0 : index
    %663 = vector.load %arg5[%c66_549, %c0_550] : memref<128x128xf32, #tpu.memory_space<vmem>>, vector<1x128xf32>
    %664 = vector.shape_cast %663 : vector<1x128xf32> to vector<1x128xf32>
    %665 = vector.broadcast %664 : vector<1x128xf32> to vector<2x128xf32>
    %c260 = arith.constant 260 : index
    %c0_551 = arith.constant 0 : index
    %666 = vector.load %arg6[%c260, %c0_551] : memref<512x128xf32, #tpu.memory_space<vmem>>, vector<2x128xf32>
    tpu.vector_store %arg6[%c260, %c0_551], %665 {strides = array<i32>} : memref<512x128xf32, #tpu.memory_space<vmem>>, vector<2x128xf32>,
    %c276 = arith.constant 276 : index
    %c0_552 = arith.constant 0 : index
    %667 = vector.load %arg6[%c276, %c0_552] : memref<512x128xf32, #tpu.memory_space<vmem>>, vector<2x128xf32>
    tpu.vector_store %arg6[%c276, %c0_552], %665 {strides = array<i32>} : memref<512x128xf32, #tpu.memory_space<vmem>>, vector<2x128xf32>,
    %c67 = arith.constant 67 : index
    %c0_553 = arith.constant 0 : index
    %668 = vector.load %arg5[%c67, %c0_553] : memref<128x128xf32, #tpu.memory_space<vmem>>, vector<1x128xf32>
    %669 = vector.shape_cast %668 : vector<1x128xf32> to vector<1x128xf32>
    %670 = vector.broadcast %669 : vector<1x128xf32> to vector<2x128xf32>
    %c262 = arith.constant 262 : index
    %c0_554 = arith.constant 0 : index
    %671 = vector.load %arg6[%c262, %c0_554] : memref<512x128xf32, #tpu.memory_space<vmem>>, vector<2x128xf32>
    tpu.vector_store %arg6[%c262, %c0_554], %670 {strides = array<i32>} : memref<512x128xf32, #tpu.memory_space<vmem>>, vector<2x128xf32>,
    %c278 = arith.constant 278 : index
    %c0_555 = arith.constant 0 : index
    %672 = vector.load %arg6[%c278, %c0_555] : memref<512x128xf32, #tpu.memory_space<vmem>>, vector<2x128xf32>
    tpu.vector_store %arg6[%c278, %c0_555], %670 {strides = array<i32>} : memref<512x128xf32, #tpu.memory_space<vmem>>, vector<2x128xf32>,
    %c68_556 = arith.constant 68 : index
    %c0_557 = arith.constant 0 : index
    %673 = vector.load %arg5[%c68_556, %c0_557] : memref<128x128xf32, #tpu.memory_space<vmem>>, vector<1x128xf32>
    %674 = vector.shape_cast %673 : vector<1x128xf32> to vector<1x128xf32>
    %675 = vector.broadcast %674 : vector<1x128xf32> to vector<2x128xf32>
    %c264 = arith.constant 264 : index
    %c0_558 = arith.constant 0 : index
    %676 = vector.load %arg6[%c264, %c0_558] : memref<512x128xf32, #tpu.memory_space<vmem>>, vector<2x128xf32>
    tpu.vector_store %arg6[%c264, %c0_558], %675 {strides = array<i32>} : memref<512x128xf32, #tpu.memory_space<vmem>>, vector<2x128xf32>,
    %c280 = arith.constant 280 : index
    %c0_559 = arith.constant 0 : index
    %677 = vector.load %arg6[%c280, %c0_559] : memref<512x128xf32, #tpu.memory_space<vmem>>, vector<2x128xf32>
    tpu.vector_store %arg6[%c280, %c0_559], %675 {strides = array<i32>} : memref<512x128xf32, #tpu.memory_space<vmem>>, vector<2x128xf32>,
    %c69 = arith.constant 69 : index
    %c0_560 = arith.constant 0 : index
    %678 = vector.load %arg5[%c69, %c0_560] : memref<128x128xf32, #tpu.memory_space<vmem>>, vector<1x128xf32>
    %679 = vector.shape_cast %678 : vector<1x128xf32> to vector<1x128xf32>
    %680 = vector.broadcast %679 : vector<1x128xf32> to vector<2x128xf32>
    %c266 = arith.constant 266 : index
    %c0_561 = arith.constant 0 : index
    %681 = vector.load %arg6[%c266, %c0_561] : memref<512x128xf32, #tpu.memory_space<vmem>>, vector<2x128xf32>
    tpu.vector_store %arg6[%c266, %c0_561], %680 {strides = array<i32>} : memref<512x128xf32, #tpu.memory_space<vmem>>, vector<2x128xf32>,
    %c282 = arith.constant 282 : index
    %c0_562 = arith.constant 0 : index
    %682 = vector.load %arg6[%c282, %c0_562] : memref<512x128xf32, #tpu.memory_space<vmem>>, vector<2x128xf32>
    tpu.vector_store %arg6[%c282, %c0_562], %680 {strides = array<i32>} : memref<512x128xf32, #tpu.memory_space<vmem>>, vector<2x128xf32>,
    %c70_563 = arith.constant 70 : index
    %c0_564 = arith.constant 0 : index
    %683 = vector.load %arg5[%c70_563, %c0_564] : memref<128x128xf32, #tpu.memory_space<vmem>>, vector<1x128xf32>
    %684 = vector.shape_cast %683 : vector<1x128xf32> to vector<1x128xf32>
    %685 = vector.broadcast %684 : vector<1x128xf32> to vector<2x128xf32>
    %c268 = arith.constant 268 : index
    %c0_565 = arith.constant 0 : index
    %686 = vector.load %arg6[%c268, %c0_565] : memref<512x128xf32, #tpu.memory_space<vmem>>, vector<2x128xf32>
    tpu.vector_store %arg6[%c268, %c0_565], %685 {strides = array<i32>} : memref<512x128xf32, #tpu.memory_space<vmem>>, vector<2x128xf32>,
    %c284 = arith.constant 284 : index
    %c0_566 = arith.constant 0 : index
    %687 = vector.load %arg6[%c284, %c0_566] : memref<512x128xf32, #tpu.memory_space<vmem>>, vector<2x128xf32>
    tpu.vector_store %arg6[%c284, %c0_566], %685 {strides = array<i32>} : memref<512x128xf32, #tpu.memory_space<vmem>>, vector<2x128xf32>,
    %c71 = arith.constant 71 : index
    %c0_567 = arith.constant 0 : index
    %688 = vector.load %arg5[%c71, %c0_567] : memref<128x128xf32, #tpu.memory_space<vmem>>, vector<1x128xf32>
    %689 = vector.shape_cast %688 : vector<1x128xf32> to vector<1x128xf32>
    %690 = vector.broadcast %689 : vector<1x128xf32> to vector<2x128xf32>
    %c270 = arith.constant 270 : index
    %c0_568 = arith.constant 0 : index
    %691 = vector.load %arg6[%c270, %c0_568] : memref<512x128xf32, #tpu.memory_space<vmem>>, vector<2x128xf32>
    tpu.vector_store %arg6[%c270, %c0_568], %690 {strides = array<i32>} : memref<512x128xf32, #tpu.memory_space<vmem>>, vector<2x128xf32>,
    %c286 = arith.constant 286 : index
    %c0_569 = arith.constant 0 : index
    %692 = vector.load %arg6[%c286, %c0_569] : memref<512x128xf32, #tpu.memory_space<vmem>>, vector<2x128xf32>
    tpu.vector_store %arg6[%c286, %c0_569], %690 {strides = array<i32>} : memref<512x128xf32, #tpu.memory_space<vmem>>, vector<2x128xf32>,
    %c72_570 = arith.constant 72 : index
    %c0_571 = arith.constant 0 : index
    %693 = vector.load %arg5[%c72_570, %c0_571] : memref<128x128xf32, #tpu.memory_space<vmem>>, vector<1x128xf32>
    %694 = vector.shape_cast %693 : vector<1x128xf32> to vector<1x128xf32>
    %695 = vector.broadcast %694 : vector<1x128xf32> to vector<2x128xf32>
    %c288 = arith.constant 288 : index
    %c0_572 = arith.constant 0 : index
    %696 = vector.load %arg6[%c288, %c0_572] : memref<512x128xf32, #tpu.memory_space<vmem>>, vector<2x128xf32>
    tpu.vector_store %arg6[%c288, %c0_572], %695 {strides = array<i32>} : memref<512x128xf32, #tpu.memory_space<vmem>>, vector<2x128xf32>,
    %c304 = arith.constant 304 : index
    %c0_573 = arith.constant 0 : index
    %697 = vector.load %arg6[%c304, %c0_573] : memref<512x128xf32, #tpu.memory_space<vmem>>, vector<2x128xf32>
    tpu.vector_store %arg6[%c304, %c0_573], %695 {strides = array<i32>} : memref<512x128xf32, #tpu.memory_space<vmem>>, vector<2x128xf32>,
    %c73 = arith.constant 73 : index
    %c0_574 = arith.constant 0 : index
    %698 = vector.load %arg5[%c73, %c0_574] : memref<128x128xf32, #tpu.memory_space<vmem>>, vector<1x128xf32>
    %699 = vector.shape_cast %698 : vector<1x128xf32> to vector<1x128xf32>
    %700 = vector.broadcast %699 : vector<1x128xf32> to vector<2x128xf32>
    %c290 = arith.constant 290 : index
    %c0_575 = arith.constant 0 : index
    %701 = vector.load %arg6[%c290, %c0_575] : memref<512x128xf32, #tpu.memory_space<vmem>>, vector<2x128xf32>
    tpu.vector_store %arg6[%c290, %c0_575], %700 {strides = array<i32>} : memref<512x128xf32, #tpu.memory_space<vmem>>, vector<2x128xf32>,
    %c306 = arith.constant 306 : index
    %c0_576 = arith.constant 0 : index
    %702 = vector.load %arg6[%c306, %c0_576] : memref<512x128xf32, #tpu.memory_space<vmem>>, vector<2x128xf32>
    tpu.vector_store %arg6[%c306, %c0_576], %700 {strides = array<i32>} : memref<512x128xf32, #tpu.memory_space<vmem>>, vector<2x128xf32>,
    %c74_577 = arith.constant 74 : index
    %c0_578 = arith.constant 0 : index
    %703 = vector.load %arg5[%c74_577, %c0_578] : memref<128x128xf32, #tpu.memory_space<vmem>>, vector<1x128xf32>
    %704 = vector.shape_cast %703 : vector<1x128xf32> to vector<1x128xf32>
    %705 = vector.broadcast %704 : vector<1x128xf32> to vector<2x128xf32>
    %c292 = arith.constant 292 : index
    %c0_579 = arith.constant 0 : index
    %706 = vector.load %arg6[%c292, %c0_579] : memref<512x128xf32, #tpu.memory_space<vmem>>, vector<2x128xf32>
    tpu.vector_store %arg6[%c292, %c0_579], %705 {strides = array<i32>} : memref<512x128xf32, #tpu.memory_space<vmem>>, vector<2x128xf32>,
    %c308 = arith.constant 308 : index
    %c0_580 = arith.constant 0 : index
    %707 = vector.load %arg6[%c308, %c0_580] : memref<512x128xf32, #tpu.memory_space<vmem>>, vector<2x128xf32>
    tpu.vector_store %arg6[%c308, %c0_580], %705 {strides = array<i32>} : memref<512x128xf32, #tpu.memory_space<vmem>>, vector<2x128xf32>,
    %c75 = arith.constant 75 : index
    %c0_581 = arith.constant 0 : index
    %708 = vector.load %arg5[%c75, %c0_581] : memref<128x128xf32, #tpu.memory_space<vmem>>, vector<1x128xf32>
    %709 = vector.shape_cast %708 : vector<1x128xf32> to vector<1x128xf32>
    %710 = vector.broadcast %709 : vector<1x128xf32> to vector<2x128xf32>
    %c294 = arith.constant 294 : index
    %c0_582 = arith.constant 0 : index
    %711 = vector.load %arg6[%c294, %c0_582] : memref<512x128xf32, #tpu.memory_space<vmem>>, vector<2x128xf32>
    tpu.vector_store %arg6[%c294, %c0_582], %710 {strides = array<i32>} : memref<512x128xf32, #tpu.memory_space<vmem>>, vector<2x128xf32>,
    %c310 = arith.constant 310 : index
    %c0_583 = arith.constant 0 : index
    %712 = vector.load %arg6[%c310, %c0_583] : memref<512x128xf32, #tpu.memory_space<vmem>>, vector<2x128xf32>
    tpu.vector_store %arg6[%c310, %c0_583], %710 {strides = array<i32>} : memref<512x128xf32, #tpu.memory_space<vmem>>, vector<2x128xf32>,
    %c76_584 = arith.constant 76 : index
    %c0_585 = arith.constant 0 : index
    %713 = vector.load %arg5[%c76_584, %c0_585] : memref<128x128xf32, #tpu.memory_space<vmem>>, vector<1x128xf32>
    %714 = vector.shape_cast %713 : vector<1x128xf32> to vector<1x128xf32>
    %715 = vector.broadcast %714 : vector<1x128xf32> to vector<2x128xf32>
    %c296 = arith.constant 296 : index
    %c0_586 = arith.constant 0 : index
    %716 = vector.load %arg6[%c296, %c0_586] : memref<512x128xf32, #tpu.memory_space<vmem>>, vector<2x128xf32>
    tpu.vector_store %arg6[%c296, %c0_586], %715 {strides = array<i32>} : memref<512x128xf32, #tpu.memory_space<vmem>>, vector<2x128xf32>,
    %c312 = arith.constant 312 : index
    %c0_587 = arith.constant 0 : index
    %717 = vector.load %arg6[%c312, %c0_587] : memref<512x128xf32, #tpu.memory_space<vmem>>, vector<2x128xf32>
    tpu.vector_store %arg6[%c312, %c0_587], %715 {strides = array<i32>} : memref<512x128xf32, #tpu.memory_space<vmem>>, vector<2x128xf32>,
    %c77 = arith.constant 77 : index
    %c0_588 = arith.constant 0 : index
    %718 = vector.load %arg5[%c77, %c0_588] : memref<128x128xf32, #tpu.memory_space<vmem>>, vector<1x128xf32>
    %719 = vector.shape_cast %718 : vector<1x128xf32> to vector<1x128xf32>
    %720 = vector.broadcast %719 : vector<1x128xf32> to vector<2x128xf32>
    %c298 = arith.constant 298 : index
    %c0_589 = arith.constant 0 : index
    %721 = vector.load %arg6[%c298, %c0_589] : memref<512x128xf32, #tpu.memory_space<vmem>>, vector<2x128xf32>
    tpu.vector_store %arg6[%c298, %c0_589], %720 {strides = array<i32>} : memref<512x128xf32, #tpu.memory_space<vmem>>, vector<2x128xf32>,
    %c314 = arith.constant 314 : index
    %c0_590 = arith.constant 0 : index
    %722 = vector.load %arg6[%c314, %c0_590] : memref<512x128xf32, #tpu.memory_space<vmem>>, vector<2x128xf32>
    tpu.vector_store %arg6[%c314, %c0_590], %720 {strides = array<i32>} : memref<512x128xf32, #tpu.memory_space<vmem>>, vector<2x128xf32>,
    %c78_591 = arith.constant 78 : index
    %c0_592 = arith.constant 0 : index
    %723 = vector.load %arg5[%c78_591, %c0_592] : memref<128x128xf32, #tpu.memory_space<vmem>>, vector<1x128xf32>
    %724 = vector.shape_cast %723 : vector<1x128xf32> to vector<1x128xf32>
    %725 = vector.broadcast %724 : vector<1x128xf32> to vector<2x128xf32>
    %c300 = arith.constant 300 : index
    %c0_593 = arith.constant 0 : index
    %726 = vector.load %arg6[%c300, %c0_593] : memref<512x128xf32, #tpu.memory_space<vmem>>, vector<2x128xf32>
    tpu.vector_store %arg6[%c300, %c0_593], %725 {strides = array<i32>} : memref<512x128xf32, #tpu.memory_space<vmem>>, vector<2x128xf32>,
    %c316 = arith.constant 316 : index
    %c0_594 = arith.constant 0 : index
    %727 = vector.load %arg6[%c316, %c0_594] : memref<512x128xf32, #tpu.memory_space<vmem>>, vector<2x128xf32>
    tpu.vector_store %arg6[%c316, %c0_594], %725 {strides = array<i32>} : memref<512x128xf32, #tpu.memory_space<vmem>>, vector<2x128xf32>,
    %c79 = arith.constant 79 : index
    %c0_595 = arith.constant 0 : index
    %728 = vector.load %arg5[%c79, %c0_595] : memref<128x128xf32, #tpu.memory_space<vmem>>, vector<1x128xf32>
    %729 = vector.shape_cast %728 : vector<1x128xf32> to vector<1x128xf32>
    %730 = vector.broadcast %729 : vector<1x128xf32> to vector<2x128xf32>
    %c302 = arith.constant 302 : index
    %c0_596 = arith.constant 0 : index
    %731 = vector.load %arg6[%c302, %c0_596] : memref<512x128xf32, #tpu.memory_space<vmem>>, vector<2x128xf32>
    tpu.vector_store %arg6[%c302, %c0_596], %730 {strides = array<i32>} : memref<512x128xf32, #tpu.memory_space<vmem>>, vector<2x128xf32>,
    %c318 = arith.constant 318 : index
    %c0_597 = arith.constant 0 : index
    %732 = vector.load %arg6[%c318, %c0_597] : memref<512x128xf32, #tpu.memory_space<vmem>>, vector<2x128xf32>
    tpu.vector_store %arg6[%c318, %c0_597], %730 {strides = array<i32>} : memref<512x128xf32, #tpu.memory_space<vmem>>, vector<2x128xf32>,
    %c80_598 = arith.constant 80 : index
    %c0_599 = arith.constant 0 : index
    %733 = vector.load %arg5[%c80_598, %c0_599] : memref<128x128xf32, #tpu.memory_space<vmem>>, vector<1x128xf32>
    %734 = vector.shape_cast %733 : vector<1x128xf32> to vector<1x128xf32>
    %735 = vector.broadcast %734 : vector<1x128xf32> to vector<2x128xf32>
    %c320 = arith.constant 320 : index
    %c0_600 = arith.constant 0 : index
    %736 = vector.load %arg6[%c320, %c0_600] : memref<512x128xf32, #tpu.memory_space<vmem>>, vector<2x128xf32>
    tpu.vector_store %arg6[%c320, %c0_600], %735 {strides = array<i32>} : memref<512x128xf32, #tpu.memory_space<vmem>>, vector<2x128xf32>,
    %c336 = arith.constant 336 : index
    %c0_601 = arith.constant 0 : index
    %737 = vector.load %arg6[%c336, %c0_601] : memref<512x128xf32, #tpu.memory_space<vmem>>, vector<2x128xf32>
    tpu.vector_store %arg6[%c336, %c0_601], %735 {strides = array<i32>} : memref<512x128xf32, #tpu.memory_space<vmem>>, vector<2x128xf32>,
    %c81 = arith.constant 81 : index
    %c0_602 = arith.constant 0 : index
    %738 = vector.load %arg5[%c81, %c0_602] : memref<128x128xf32, #tpu.memory_space<vmem>>, vector<1x128xf32>
    %739 = vector.shape_cast %738 : vector<1x128xf32> to vector<1x128xf32>
    %740 = vector.broadcast %739 : vector<1x128xf32> to vector<2x128xf32>
    %c322 = arith.constant 322 : index
    %c0_603 = arith.constant 0 : index
    %741 = vector.load %arg6[%c322, %c0_603] : memref<512x128xf32, #tpu.memory_space<vmem>>, vector<2x128xf32>
    tpu.vector_store %arg6[%c322, %c0_603], %740 {strides = array<i32>} : memref<512x128xf32, #tpu.memory_space<vmem>>, vector<2x128xf32>,
    %c338 = arith.constant 338 : index
    %c0_604 = arith.constant 0 : index
    %742 = vector.load %arg6[%c338, %c0_604] : memref<512x128xf32, #tpu.memory_space<vmem>>, vector<2x128xf32>
    tpu.vector_store %arg6[%c338, %c0_604], %740 {strides = array<i32>} : memref<512x128xf32, #tpu.memory_space<vmem>>, vector<2x128xf32>,
    %c82_605 = arith.constant 82 : index
    %c0_606 = arith.constant 0 : index
    %743 = vector.load %arg5[%c82_605, %c0_606] : memref<128x128xf32, #tpu.memory_space<vmem>>, vector<1x128xf32>
    %744 = vector.shape_cast %743 : vector<1x128xf32> to vector<1x128xf32>
    %745 = vector.broadcast %744 : vector<1x128xf32> to vector<2x128xf32>
    %c324 = arith.constant 324 : index
    %c0_607 = arith.constant 0 : index
    %746 = vector.load %arg6[%c324, %c0_607] : memref<512x128xf32, #tpu.memory_space<vmem>>, vector<2x128xf32>
    tpu.vector_store %arg6[%c324, %c0_607], %745 {strides = array<i32>} : memref<512x128xf32, #tpu.memory_space<vmem>>, vector<2x128xf32>,
    %c340 = arith.constant 340 : index
    %c0_608 = arith.constant 0 : index
    %747 = vector.load %arg6[%c340, %c0_608] : memref<512x128xf32, #tpu.memory_space<vmem>>, vector<2x128xf32>
    tpu.vector_store %arg6[%c340, %c0_608], %745 {strides = array<i32>} : memref<512x128xf32, #tpu.memory_space<vmem>>, vector<2x128xf32>,
    %c83 = arith.constant 83 : index
    %c0_609 = arith.constant 0 : index
    %748 = vector.load %arg5[%c83, %c0_609] : memref<128x128xf32, #tpu.memory_space<vmem>>, vector<1x128xf32>
    %749 = vector.shape_cast %748 : vector<1x128xf32> to vector<1x128xf32>
    %750 = vector.broadcast %749 : vector<1x128xf32> to vector<2x128xf32>
    %c326 = arith.constant 326 : index
    %c0_610 = arith.constant 0 : index
    %751 = vector.load %arg6[%c326, %c0_610] : memref<512x128xf32, #tpu.memory_space<vmem>>, vector<2x128xf32>
    tpu.vector_store %arg6[%c326, %c0_610], %750 {strides = array<i32>} : memref<512x128xf32, #tpu.memory_space<vmem>>, vector<2x128xf32>,
    %c342 = arith.constant 342 : index
    %c0_611 = arith.constant 0 : index
    %752 = vector.load %arg6[%c342, %c0_611] : memref<512x128xf32, #tpu.memory_space<vmem>>, vector<2x128xf32>
    tpu.vector_store %arg6[%c342, %c0_611], %750 {strides = array<i32>} : memref<512x128xf32, #tpu.memory_space<vmem>>, vector<2x128xf32>,
    %c84_612 = arith.constant 84 : index
    %c0_613 = arith.constant 0 : index
    %753 = vector.load %arg5[%c84_612, %c0_613] : memref<128x128xf32, #tpu.memory_space<vmem>>, vector<1x128xf32>
    %754 = vector.shape_cast %753 : vector<1x128xf32> to vector<1x128xf32>
    %755 = vector.broadcast %754 : vector<1x128xf32> to vector<2x128xf32>
    %c328 = arith.constant 328 : index
    %c0_614 = arith.constant 0 : index
    %756 = vector.load %arg6[%c328, %c0_614] : memref<512x128xf32, #tpu.memory_space<vmem>>, vector<2x128xf32>
    tpu.vector_store %arg6[%c328, %c0_614], %755 {strides = array<i32>} : memref<512x128xf32, #tpu.memory_space<vmem>>, vector<2x128xf32>,
    %c344 = arith.constant 344 : index
    %c0_615 = arith.constant 0 : index
    %757 = vector.load %arg6[%c344, %c0_615] : memref<512x128xf32, #tpu.memory_space<vmem>>, vector<2x128xf32>
    tpu.vector_store %arg6[%c344, %c0_615], %755 {strides = array<i32>} : memref<512x128xf32, #tpu.memory_space<vmem>>, vector<2x128xf32>,
    %c85 = arith.constant 85 : index
    %c0_616 = arith.constant 0 : index
    %758 = vector.load %arg5[%c85, %c0_616] : memref<128x128xf32, #tpu.memory_space<vmem>>, vector<1x128xf32>
    %759 = vector.shape_cast %758 : vector<1x128xf32> to vector<1x128xf32>
    %760 = vector.broadcast %759 : vector<1x128xf32> to vector<2x128xf32>
    %c330 = arith.constant 330 : index
    %c0_617 = arith.constant 0 : index
    %761 = vector.load %arg6[%c330, %c0_617] : memref<512x128xf32, #tpu.memory_space<vmem>>, vector<2x128xf32>
    tpu.vector_store %arg6[%c330, %c0_617], %760 {strides = array<i32>} : memref<512x128xf32, #tpu.memory_space<vmem>>, vector<2x128xf32>,
    %c346 = arith.constant 346 : index
    %c0_618 = arith.constant 0 : index
    %762 = vector.load %arg6[%c346, %c0_618] : memref<512x128xf32, #tpu.memory_space<vmem>>, vector<2x128xf32>
    tpu.vector_store %arg6[%c346, %c0_618], %760 {strides = array<i32>} : memref<512x128xf32, #tpu.memory_space<vmem>>, vector<2x128xf32>,
    %c86_619 = arith.constant 86 : index
    %c0_620 = arith.constant 0 : index
    %763 = vector.load %arg5[%c86_619, %c0_620] : memref<128x128xf32, #tpu.memory_space<vmem>>, vector<1x128xf32>
    %764 = vector.shape_cast %763 : vector<1x128xf32> to vector<1x128xf32>
    %765 = vector.broadcast %764 : vector<1x128xf32> to vector<2x128xf32>
    %c332 = arith.constant 332 : index
    %c0_621 = arith.constant 0 : index
    %766 = vector.load %arg6[%c332, %c0_621] : memref<512x128xf32, #tpu.memory_space<vmem>>, vector<2x128xf32>
    tpu.vector_store %arg6[%c332, %c0_621], %765 {strides = array<i32>} : memref<512x128xf32, #tpu.memory_space<vmem>>, vector<2x128xf32>,
    %c348 = arith.constant 348 : index
    %c0_622 = arith.constant 0 : index
    %767 = vector.load %arg6[%c348, %c0_622] : memref<512x128xf32, #tpu.memory_space<vmem>>, vector<2x128xf32>
    tpu.vector_store %arg6[%c348, %c0_622], %765 {strides = array<i32>} : memref<512x128xf32, #tpu.memory_space<vmem>>, vector<2x128xf32>,
    %c87 = arith.constant 87 : index
    %c0_623 = arith.constant 0 : index
    %768 = vector.load %arg5[%c87, %c0_623] : memref<128x128xf32, #tpu.memory_space<vmem>>, vector<1x128xf32>
    %769 = vector.shape_cast %768 : vector<1x128xf32> to vector<1x128xf32>
    %770 = vector.broadcast %769 : vector<1x128xf32> to vector<2x128xf32>
    %c334 = arith.constant 334 : index
    %c0_624 = arith.constant 0 : index
    %771 = vector.load %arg6[%c334, %c0_624] : memref<512x128xf32, #tpu.memory_space<vmem>>, vector<2x128xf32>
    tpu.vector_store %arg6[%c334, %c0_624], %770 {strides = array<i32>} : memref<512x128xf32, #tpu.memory_space<vmem>>, vector<2x128xf32>,
    %c350 = arith.constant 350 : index
    %c0_625 = arith.constant 0 : index
    %772 = vector.load %arg6[%c350, %c0_625] : memref<512x128xf32, #tpu.memory_space<vmem>>, vector<2x128xf32>
    tpu.vector_store %arg6[%c350, %c0_625], %770 {strides = array<i32>} : memref<512x128xf32, #tpu.memory_space<vmem>>, vector<2x128xf32>,
    %c88_626 = arith.constant 88 : index
    %c0_627 = arith.constant 0 : index
    %773 = vector.load %arg5[%c88_626, %c0_627] : memref<128x128xf32, #tpu.memory_space<vmem>>, vector<1x128xf32>
    %774 = vector.shape_cast %773 : vector<1x128xf32> to vector<1x128xf32>
    %775 = vector.broadcast %774 : vector<1x128xf32> to vector<2x128xf32>
    %c352 = arith.constant 352 : index
    %c0_628 = arith.constant 0 : index
    %776 = vector.load %arg6[%c352, %c0_628] : memref<512x128xf32, #tpu.memory_space<vmem>>, vector<2x128xf32>
    tpu.vector_store %arg6[%c352, %c0_628], %775 {strides = array<i32>} : memref<512x128xf32, #tpu.memory_space<vmem>>, vector<2x128xf32>,
    %c368 = arith.constant 368 : index
    %c0_629 = arith.constant 0 : index
    %777 = vector.load %arg6[%c368, %c0_629] : memref<512x128xf32, #tpu.memory_space<vmem>>, vector<2x128xf32>
    tpu.vector_store %arg6[%c368, %c0_629], %775 {strides = array<i32>} : memref<512x128xf32, #tpu.memory_space<vmem>>, vector<2x128xf32>,
    %c89 = arith.constant 89 : index
    %c0_630 = arith.constant 0 : index
    %778 = vector.load %arg5[%c89, %c0_630] : memref<128x128xf32, #tpu.memory_space<vmem>>, vector<1x128xf32>
    %779 = vector.shape_cast %778 : vector<1x128xf32> to vector<1x128xf32>
    %780 = vector.broadcast %779 : vector<1x128xf32> to vector<2x128xf32>
    %c354 = arith.constant 354 : index
    %c0_631 = arith.constant 0 : index
    %781 = vector.load %arg6[%c354, %c0_631] : memref<512x128xf32, #tpu.memory_space<vmem>>, vector<2x128xf32>
    tpu.vector_store %arg6[%c354, %c0_631], %780 {strides = array<i32>} : memref<512x128xf32, #tpu.memory_space<vmem>>, vector<2x128xf32>,
    %c370 = arith.constant 370 : index
    %c0_632 = arith.constant 0 : index
    %782 = vector.load %arg6[%c370, %c0_632] : memref<512x128xf32, #tpu.memory_space<vmem>>, vector<2x128xf32>
    tpu.vector_store %arg6[%c370, %c0_632], %780 {strides = array<i32>} : memref<512x128xf32, #tpu.memory_space<vmem>>, vector<2x128xf32>,
    %c90_633 = arith.constant 90 : index
    %c0_634 = arith.constant 0 : index
    %783 = vector.load %arg5[%c90_633, %c0_634] : memref<128x128xf32, #tpu.memory_space<vmem>>, vector<1x128xf32>
    %784 = vector.shape_cast %783 : vector<1x128xf32> to vector<1x128xf32>
    %785 = vector.broadcast %784 : vector<1x128xf32> to vector<2x128xf32>
    %c356 = arith.constant 356 : index
    %c0_635 = arith.constant 0 : index
    %786 = vector.load %arg6[%c356, %c0_635] : memref<512x128xf32, #tpu.memory_space<vmem>>, vector<2x128xf32>
    tpu.vector_store %arg6[%c356, %c0_635], %785 {strides = array<i32>} : memref<512x128xf32, #tpu.memory_space<vmem>>, vector<2x128xf32>,
    %c372 = arith.constant 372 : index
    %c0_636 = arith.constant 0 : index
    %787 = vector.load %arg6[%c372, %c0_636] : memref<512x128xf32, #tpu.memory_space<vmem>>, vector<2x128xf32>
    tpu.vector_store %arg6[%c372, %c0_636], %785 {strides = array<i32>} : memref<512x128xf32, #tpu.memory_space<vmem>>, vector<2x128xf32>,
    %c91 = arith.constant 91 : index
    %c0_637 = arith.constant 0 : index
    %788 = vector.load %arg5[%c91, %c0_637] : memref<128x128xf32, #tpu.memory_space<vmem>>, vector<1x128xf32>
    %789 = vector.shape_cast %788 : vector<1x128xf32> to vector<1x128xf32>
    %790 = vector.broadcast %789 : vector<1x128xf32> to vector<2x128xf32>
    %c358 = arith.constant 358 : index
    %c0_638 = arith.constant 0 : index
    %791 = vector.load %arg6[%c358, %c0_638] : memref<512x128xf32, #tpu.memory_space<vmem>>, vector<2x128xf32>
    tpu.vector_store %arg6[%c358, %c0_638], %790 {strides = array<i32>} : memref<512x128xf32, #tpu.memory_space<vmem>>, vector<2x128xf32>,
    %c374 = arith.constant 374 : index
    %c0_639 = arith.constant 0 : index
    %792 = vector.load %arg6[%c374, %c0_639] : memref<512x128xf32, #tpu.memory_space<vmem>>, vector<2x128xf32>
    tpu.vector_store %arg6[%c374, %c0_639], %790 {strides = array<i32>} : memref<512x128xf32, #tpu.memory_space<vmem>>, vector<2x128xf32>,
    %c92_640 = arith.constant 92 : index
    %c0_641 = arith.constant 0 : index
    %793 = vector.load %arg5[%c92_640, %c0_641] : memref<128x128xf32, #tpu.memory_space<vmem>>, vector<1x128xf32>
    %794 = vector.shape_cast %793 : vector<1x128xf32> to vector<1x128xf32>
    %795 = vector.broadcast %794 : vector<1x128xf32> to vector<2x128xf32>
    %c360 = arith.constant 360 : index
    %c0_642 = arith.constant 0 : index
    %796 = vector.load %arg6[%c360, %c0_642] : memref<512x128xf32, #tpu.memory_space<vmem>>, vector<2x128xf32>
    tpu.vector_store %arg6[%c360, %c0_642], %795 {strides = array<i32>} : memref<512x128xf32, #tpu.memory_space<vmem>>, vector<2x128xf32>,
    %c376 = arith.constant 376 : index
    %c0_643 = arith.constant 0 : index
    %797 = vector.load %arg6[%c376, %c0_643] : memref<512x128xf32, #tpu.memory_space<vmem>>, vector<2x128xf32>
    tpu.vector_store %arg6[%c376, %c0_643], %795 {strides = array<i32>} : memref<512x128xf32, #tpu.memory_space<vmem>>, vector<2x128xf32>,
    %c93 = arith.constant 93 : index
    %c0_644 = arith.constant 0 : index
    %798 = vector.load %arg5[%c93, %c0_644] : memref<128x128xf32, #tpu.memory_space<vmem>>, vector<1x128xf32>
    %799 = vector.shape_cast %798 : vector<1x128xf32> to vector<1x128xf32>
    %800 = vector.broadcast %799 : vector<1x128xf32> to vector<2x128xf32>
    %c362 = arith.constant 362 : index
    %c0_645 = arith.constant 0 : index
    %801 = vector.load %arg6[%c362, %c0_645] : memref<512x128xf32, #tpu.memory_space<vmem>>, vector<2x128xf32>
    tpu.vector_store %arg6[%c362, %c0_645], %800 {strides = array<i32>} : memref<512x128xf32, #tpu.memory_space<vmem>>, vector<2x128xf32>,
    %c378 = arith.constant 378 : index
    %c0_646 = arith.constant 0 : index
    %802 = vector.load %arg6[%c378, %c0_646] : memref<512x128xf32, #tpu.memory_space<vmem>>, vector<2x128xf32>
    tpu.vector_store %arg6[%c378, %c0_646], %800 {strides = array<i32>} : memref<512x128xf32, #tpu.memory_space<vmem>>, vector<2x128xf32>,
    %c94_647 = arith.constant 94 : index
    %c0_648 = arith.constant 0 : index
    %803 = vector.load %arg5[%c94_647, %c0_648] : memref<128x128xf32, #tpu.memory_space<vmem>>, vector<1x128xf32>
    %804 = vector.shape_cast %803 : vector<1x128xf32> to vector<1x128xf32>
    %805 = vector.broadcast %804 : vector<1x128xf32> to vector<2x128xf32>
    %c364 = arith.constant 364 : index
    %c0_649 = arith.constant 0 : index
    %806 = vector.load %arg6[%c364, %c0_649] : memref<512x128xf32, #tpu.memory_space<vmem>>, vector<2x128xf32>
    tpu.vector_store %arg6[%c364, %c0_649], %805 {strides = array<i32>} : memref<512x128xf32, #tpu.memory_space<vmem>>, vector<2x128xf32>,
    %c380 = arith.constant 380 : index
    %c0_650 = arith.constant 0 : index
    %807 = vector.load %arg6[%c380, %c0_650] : memref<512x128xf32, #tpu.memory_space<vmem>>, vector<2x128xf32>
    tpu.vector_store %arg6[%c380, %c0_650], %805 {strides = array<i32>} : memref<512x128xf32, #tpu.memory_space<vmem>>, vector<2x128xf32>,
    %c95 = arith.constant 95 : index
    %c0_651 = arith.constant 0 : index
    %808 = vector.load %arg5[%c95, %c0_651] : memref<128x128xf32, #tpu.memory_space<vmem>>, vector<1x128xf32>
    %809 = vector.shape_cast %808 : vector<1x128xf32> to vector<1x128xf32>
    %810 = vector.broadcast %809 : vector<1x128xf32> to vector<2x128xf32>
    %c366 = arith.constant 366 : index
    %c0_652 = arith.constant 0 : index
    %811 = vector.load %arg6[%c366, %c0_652] : memref<512x128xf32, #tpu.memory_space<vmem>>, vector<2x128xf32>
    tpu.vector_store %arg6[%c366, %c0_652], %810 {strides = array<i32>} : memref<512x128xf32, #tpu.memory_space<vmem>>, vector<2x128xf32>,
    %c382 = arith.constant 382 : index
    %c0_653 = arith.constant 0 : index
    %812 = vector.load %arg6[%c382, %c0_653] : memref<512x128xf32, #tpu.memory_space<vmem>>, vector<2x128xf32>
    tpu.vector_store %arg6[%c382, %c0_653], %810 {strides = array<i32>} : memref<512x128xf32, #tpu.memory_space<vmem>>, vector<2x128xf32>,
    %c96_654 = arith.constant 96 : index
    %c0_655 = arith.constant 0 : index
    %813 = vector.load %arg5[%c96_654, %c0_655] : memref<128x128xf32, #tpu.memory_space<vmem>>, vector<1x128xf32>
    %814 = vector.shape_cast %813 : vector<1x128xf32> to vector<1x128xf32>
    %815 = vector.broadcast %814 : vector<1x128xf32> to vector<2x128xf32>
    %c384 = arith.constant 384 : index
    %c0_656 = arith.constant 0 : index
    %816 = vector.load %arg6[%c384, %c0_656] : memref<512x128xf32, #tpu.memory_space<vmem>>, vector<2x128xf32>
    tpu.vector_store %arg6[%c384, %c0_656], %815 {strides = array<i32>} : memref<512x128xf32, #tpu.memory_space<vmem>>, vector<2x128xf32>,
    %c400 = arith.constant 400 : index
    %c0_657 = arith.constant 0 : index
    %817 = vector.load %arg6[%c400, %c0_657] : memref<512x128xf32, #tpu.memory_space<vmem>>, vector<2x128xf32>
    tpu.vector_store %arg6[%c400, %c0_657], %815 {strides = array<i32>} : memref<512x128xf32, #tpu.memory_space<vmem>>, vector<2x128xf32>,
    %c97 = arith.constant 97 : index
    %c0_658 = arith.constant 0 : index
    %818 = vector.load %arg5[%c97, %c0_658] : memref<128x128xf32, #tpu.memory_space<vmem>>, vector<1x128xf32>
    %819 = vector.shape_cast %818 : vector<1x128xf32> to vector<1x128xf32>
    %820 = vector.broadcast %819 : vector<1x128xf32> to vector<2x128xf32>
    %c386 = arith.constant 386 : index
    %c0_659 = arith.constant 0 : index
    %821 = vector.load %arg6[%c386, %c0_659] : memref<512x128xf32, #tpu.memory_space<vmem>>, vector<2x128xf32>
    tpu.vector_store %arg6[%c386, %c0_659], %820 {strides = array<i32>} : memref<512x128xf32, #tpu.memory_space<vmem>>, vector<2x128xf32>,
    %c402 = arith.constant 402 : index
    %c0_660 = arith.constant 0 : index
    %822 = vector.load %arg6[%c402, %c0_660] : memref<512x128xf32, #tpu.memory_space<vmem>>, vector<2x128xf32>
    tpu.vector_store %arg6[%c402, %c0_660], %820 {strides = array<i32>} : memref<512x128xf32, #tpu.memory_space<vmem>>, vector<2x128xf32>,
    %c98_661 = arith.constant 98 : index
    %c0_662 = arith.constant 0 : index
    %823 = vector.load %arg5[%c98_661, %c0_662] : memref<128x128xf32, #tpu.memory_space<vmem>>, vector<1x128xf32>
    %824 = vector.shape_cast %823 : vector<1x128xf32> to vector<1x128xf32>
    %825 = vector.broadcast %824 : vector<1x128xf32> to vector<2x128xf32>
    %c388 = arith.constant 388 : index
    %c0_663 = arith.constant 0 : index
    %826 = vector.load %arg6[%c388, %c0_663] : memref<512x128xf32, #tpu.memory_space<vmem>>, vector<2x128xf32>
    tpu.vector_store %arg6[%c388, %c0_663], %825 {strides = array<i32>} : memref<512x128xf32, #tpu.memory_space<vmem>>, vector<2x128xf32>,
    %c404 = arith.constant 404 : index
    %c0_664 = arith.constant 0 : index
    %827 = vector.load %arg6[%c404, %c0_664] : memref<512x128xf32, #tpu.memory_space<vmem>>, vector<2x128xf32>
    tpu.vector_store %arg6[%c404, %c0_664], %825 {strides = array<i32>} : memref<512x128xf32, #tpu.memory_space<vmem>>, vector<2x128xf32>,
    %c99 = arith.constant 99 : index
    %c0_665 = arith.constant 0 : index
    %828 = vector.load %arg5[%c99, %c0_665] : memref<128x128xf32, #tpu.memory_space<vmem>>, vector<1x128xf32>
    %829 = vector.shape_cast %828 : vector<1x128xf32> to vector<1x128xf32>
    %830 = vector.broadcast %829 : vector<1x128xf32> to vector<2x128xf32>
    %c390 = arith.constant 390 : index
    %c0_666 = arith.constant 0 : index
    %831 = vector.load %arg6[%c390, %c0_666] : memref<512x128xf32, #tpu.memory_space<vmem>>, vector<2x128xf32>
    tpu.vector_store %arg6[%c390, %c0_666], %830 {strides = array<i32>} : memref<512x128xf32, #tpu.memory_space<vmem>>, vector<2x128xf32>,
    %c406 = arith.constant 406 : index
    %c0_667 = arith.constant 0 : index
    %832 = vector.load %arg6[%c406, %c0_667] : memref<512x128xf32, #tpu.memory_space<vmem>>, vector<2x128xf32>
    tpu.vector_store %arg6[%c406, %c0_667], %830 {strides = array<i32>} : memref<512x128xf32, #tpu.memory_space<vmem>>, vector<2x128xf32>,
    %c100_668 = arith.constant 100 : index
    %c0_669 = arith.constant 0 : index
    %833 = vector.load %arg5[%c100_668, %c0_669] : memref<128x128xf32, #tpu.memory_space<vmem>>, vector<1x128xf32>
    %834 = vector.shape_cast %833 : vector<1x128xf32> to vector<1x128xf32>
    %835 = vector.broadcast %834 : vector<1x128xf32> to vector<2x128xf32>
    %c392 = arith.constant 392 : index
    %c0_670 = arith.constant 0 : index
    %836 = vector.load %arg6[%c392, %c0_670] : memref<512x128xf32, #tpu.memory_space<vmem>>, vector<2x128xf32>
    tpu.vector_store %arg6[%c392, %c0_670], %835 {strides = array<i32>} : memref<512x128xf32, #tpu.memory_space<vmem>>, vector<2x128xf32>,
    %c408 = arith.constant 408 : index
    %c0_671 = arith.constant 0 : index
    %837 = vector.load %arg6[%c408, %c0_671] : memref<512x128xf32, #tpu.memory_space<vmem>>, vector<2x128xf32>
    tpu.vector_store %arg6[%c408, %c0_671], %835 {strides = array<i32>} : memref<512x128xf32, #tpu.memory_space<vmem>>, vector<2x128xf32>,
    %c101 = arith.constant 101 : index
    %c0_672 = arith.constant 0 : index
    %838 = vector.load %arg5[%c101, %c0_672] : memref<128x128xf32, #tpu.memory_space<vmem>>, vector<1x128xf32>
    %839 = vector.shape_cast %838 : vector<1x128xf32> to vector<1x128xf32>
    %840 = vector.broadcast %839 : vector<1x128xf32> to vector<2x128xf32>
    %c394 = arith.constant 394 : index
    %c0_673 = arith.constant 0 : index
    %841 = vector.load %arg6[%c394, %c0_673] : memref<512x128xf32, #tpu.memory_space<vmem>>, vector<2x128xf32>
    tpu.vector_store %arg6[%c394, %c0_673], %840 {strides = array<i32>} : memref<512x128xf32, #tpu.memory_space<vmem>>, vector<2x128xf32>,
    %c410 = arith.constant 410 : index
    %c0_674 = arith.constant 0 : index
    %842 = vector.load %arg6[%c410, %c0_674] : memref<512x128xf32, #tpu.memory_space<vmem>>, vector<2x128xf32>
    tpu.vector_store %arg6[%c410, %c0_674], %840 {strides = array<i32>} : memref<512x128xf32, #tpu.memory_space<vmem>>, vector<2x128xf32>,
    %c102_675 = arith.constant 102 : index
    %c0_676 = arith.constant 0 : index
    %843 = vector.load %arg5[%c102_675, %c0_676] : memref<128x128xf32, #tpu.memory_space<vmem>>, vector<1x128xf32>
    %844 = vector.shape_cast %843 : vector<1x128xf32> to vector<1x128xf32>
    %845 = vector.broadcast %844 : vector<1x128xf32> to vector<2x128xf32>
    %c396 = arith.constant 396 : index
    %c0_677 = arith.constant 0 : index
    %846 = vector.load %arg6[%c396, %c0_677] : memref<512x128xf32, #tpu.memory_space<vmem>>, vector<2x128xf32>
    tpu.vector_store %arg6[%c396, %c0_677], %845 {strides = array<i32>} : memref<512x128xf32, #tpu.memory_space<vmem>>, vector<2x128xf32>,
    %c412 = arith.constant 412 : index
    %c0_678 = arith.constant 0 : index
    %847 = vector.load %arg6[%c412, %c0_678] : memref<512x128xf32, #tpu.memory_space<vmem>>, vector<2x128xf32>
    tpu.vector_store %arg6[%c412, %c0_678], %845 {strides = array<i32>} : memref<512x128xf32, #tpu.memory_space<vmem>>, vector<2x128xf32>,
    %c103 = arith.constant 103 : index
    %c0_679 = arith.constant 0 : index
    %848 = vector.load %arg5[%c103, %c0_679] : memref<128x128xf32, #tpu.memory_space<vmem>>, vector<1x128xf32>
    %849 = vector.shape_cast %848 : vector<1x128xf32> to vector<1x128xf32>
    %850 = vector.broadcast %849 : vector<1x128xf32> to vector<2x128xf32>
    %c398 = arith.constant 398 : index
    %c0_680 = arith.constant 0 : index
    %851 = vector.load %arg6[%c398, %c0_680] : memref<512x128xf32, #tpu.memory_space<vmem>>, vector<2x128xf32>
    tpu.vector_store %arg6[%c398, %c0_680], %850 {strides = array<i32>} : memref<512x128xf32, #tpu.memory_space<vmem>>, vector<2x128xf32>,
    %c414 = arith.constant 414 : index
    %c0_681 = arith.constant 0 : index
    %852 = vector.load %arg6[%c414, %c0_681] : memref<512x128xf32, #tpu.memory_space<vmem>>, vector<2x128xf32>
    tpu.vector_store %arg6[%c414, %c0_681], %850 {strides = array<i32>} : memref<512x128xf32, #tpu.memory_space<vmem>>, vector<2x128xf32>,
    %c104_682 = arith.constant 104 : index
    %c0_683 = arith.constant 0 : index
    %853 = vector.load %arg5[%c104_682, %c0_683] : memref<128x128xf32, #tpu.memory_space<vmem>>, vector<1x128xf32>
    %854 = vector.shape_cast %853 : vector<1x128xf32> to vector<1x128xf32>
    %855 = vector.broadcast %854 : vector<1x128xf32> to vector<2x128xf32>
    %c416 = arith.constant 416 : index
    %c0_684 = arith.constant 0 : index
    %856 = vector.load %arg6[%c416, %c0_684] : memref<512x128xf32, #tpu.memory_space<vmem>>, vector<2x128xf32>
    tpu.vector_store %arg6[%c416, %c0_684], %855 {strides = array<i32>} : memref<512x128xf32, #tpu.memory_space<vmem>>, vector<2x128xf32>,
    %c432 = arith.constant 432 : index
    %c0_685 = arith.constant 0 : index
    %857 = vector.load %arg6[%c432, %c0_685] : memref<512x128xf32, #tpu.memory_space<vmem>>, vector<2x128xf32>
    tpu.vector_store %arg6[%c432, %c0_685], %855 {strides = array<i32>} : memref<512x128xf32, #tpu.memory_space<vmem>>, vector<2x128xf32>,
    %c105 = arith.constant 105 : index
    %c0_686 = arith.constant 0 : index
    %858 = vector.load %arg5[%c105, %c0_686] : memref<128x128xf32, #tpu.memory_space<vmem>>, vector<1x128xf32>
    %859 = vector.shape_cast %858 : vector<1x128xf32> to vector<1x128xf32>
    %860 = vector.broadcast %859 : vector<1x128xf32> to vector<2x128xf32>
    %c418 = arith.constant 418 : index
    %c0_687 = arith.constant 0 : index
    %861 = vector.load %arg6[%c418, %c0_687] : memref<512x128xf32, #tpu.memory_space<vmem>>, vector<2x128xf32>
    tpu.vector_store %arg6[%c418, %c0_687], %860 {strides = array<i32>} : memref<512x128xf32, #tpu.memory_space<vmem>>, vector<2x128xf32>,
    %c434 = arith.constant 434 : index
    %c0_688 = arith.constant 0 : index
    %862 = vector.load %arg6[%c434, %c0_688] : memref<512x128xf32, #tpu.memory_space<vmem>>, vector<2x128xf32>
    tpu.vector_store %arg6[%c434, %c0_688], %860 {strides = array<i32>} : memref<512x128xf32, #tpu.memory_space<vmem>>, vector<2x128xf32>,
    %c106_689 = arith.constant 106 : index
    %c0_690 = arith.constant 0 : index
    %863 = vector.load %arg5[%c106_689, %c0_690] : memref<128x128xf32, #tpu.memory_space<vmem>>, vector<1x128xf32>
    %864 = vector.shape_cast %863 : vector<1x128xf32> to vector<1x128xf32>
    %865 = vector.broadcast %864 : vector<1x128xf32> to vector<2x128xf32>
    %c420 = arith.constant 420 : index
    %c0_691 = arith.constant 0 : index
    %866 = vector.load %arg6[%c420, %c0_691] : memref<512x128xf32, #tpu.memory_space<vmem>>, vector<2x128xf32>
    tpu.vector_store %arg6[%c420, %c0_691], %865 {strides = array<i32>} : memref<512x128xf32, #tpu.memory_space<vmem>>, vector<2x128xf32>,
    %c436 = arith.constant 436 : index
    %c0_692 = arith.constant 0 : index
    %867 = vector.load %arg6[%c436, %c0_692] : memref<512x128xf32, #tpu.memory_space<vmem>>, vector<2x128xf32>
    tpu.vector_store %arg6[%c436, %c0_692], %865 {strides = array<i32>} : memref<512x128xf32, #tpu.memory_space<vmem>>, vector<2x128xf32>,
    %c107 = arith.constant 107 : index
    %c0_693 = arith.constant 0 : index
    %868 = vector.load %arg5[%c107, %c0_693] : memref<128x128xf32, #tpu.memory_space<vmem>>, vector<1x128xf32>
    %869 = vector.shape_cast %868 : vector<1x128xf32> to vector<1x128xf32>
    %870 = vector.broadcast %869 : vector<1x128xf32> to vector<2x128xf32>
    %c422 = arith.constant 422 : index
    %c0_694 = arith.constant 0 : index
    %871 = vector.load %arg6[%c422, %c0_694] : memref<512x128xf32, #tpu.memory_space<vmem>>, vector<2x128xf32>
    tpu.vector_store %arg6[%c422, %c0_694], %870 {strides = array<i32>} : memref<512x128xf32, #tpu.memory_space<vmem>>, vector<2x128xf32>,
    %c438 = arith.constant 438 : index
    %c0_695 = arith.constant 0 : index
    %872 = vector.load %arg6[%c438, %c0_695] : memref<512x128xf32, #tpu.memory_space<vmem>>, vector<2x128xf32>
    tpu.vector_store %arg6[%c438, %c0_695], %870 {strides = array<i32>} : memref<512x128xf32, #tpu.memory_space<vmem>>, vector<2x128xf32>,
    %c108_696 = arith.constant 108 : index
    %c0_697 = arith.constant 0 : index
    %873 = vector.load %arg5[%c108_696, %c0_697] : memref<128x128xf32, #tpu.memory_space<vmem>>, vector<1x128xf32>
    %874 = vector.shape_cast %873 : vector<1x128xf32> to vector<1x128xf32>
    %875 = vector.broadcast %874 : vector<1x128xf32> to vector<2x128xf32>
    %c424 = arith.constant 424 : index
    %c0_698 = arith.constant 0 : index
    %876 = vector.load %arg6[%c424, %c0_698] : memref<512x128xf32, #tpu.memory_space<vmem>>, vector<2x128xf32>
    tpu.vector_store %arg6[%c424, %c0_698], %875 {strides = array<i32>} : memref<512x128xf32, #tpu.memory_space<vmem>>, vector<2x128xf32>,
    %c440 = arith.constant 440 : index
    %c0_699 = arith.constant 0 : index
    %877 = vector.load %arg6[%c440, %c0_699] : memref<512x128xf32, #tpu.memory_space<vmem>>, vector<2x128xf32>
    tpu.vector_store %arg6[%c440, %c0_699], %875 {strides = array<i32>} : memref<512x128xf32, #tpu.memory_space<vmem>>, vector<2x128xf32>,
    %c109 = arith.constant 109 : index
    %c0_700 = arith.constant 0 : index
    %878 = vector.load %arg5[%c109, %c0_700] : memref<128x128xf32, #tpu.memory_space<vmem>>, vector<1x128xf32>
    %879 = vector.shape_cast %878 : vector<1x128xf32> to vector<1x128xf32>
    %880 = vector.broadcast %879 : vector<1x128xf32> to vector<2x128xf32>
    %c426 = arith.constant 426 : index
    %c0_701 = arith.constant 0 : index
    %881 = vector.load %arg6[%c426, %c0_701] : memref<512x128xf32, #tpu.memory_space<vmem>>, vector<2x128xf32>
    tpu.vector_store %arg6[%c426, %c0_701], %880 {strides = array<i32>} : memref<512x128xf32, #tpu.memory_space<vmem>>, vector<2x128xf32>,
    %c442 = arith.constant 442 : index
    %c0_702 = arith.constant 0 : index
    %882 = vector.load %arg6[%c442, %c0_702] : memref<512x128xf32, #tpu.memory_space<vmem>>, vector<2x128xf32>
    tpu.vector_store %arg6[%c442, %c0_702], %880 {strides = array<i32>} : memref<512x128xf32, #tpu.memory_space<vmem>>, vector<2x128xf32>,
    %c110_703 = arith.constant 110 : index
    %c0_704 = arith.constant 0 : index
    %883 = vector.load %arg5[%c110_703, %c0_704] : memref<128x128xf32, #tpu.memory_space<vmem>>, vector<1x128xf32>
    %884 = vector.shape_cast %883 : vector<1x128xf32> to vector<1x128xf32>
    %885 = vector.broadcast %884 : vector<1x128xf32> to vector<2x128xf32>
    %c428 = arith.constant 428 : index
    %c0_705 = arith.constant 0 : index
    %886 = vector.load %arg6[%c428, %c0_705] : memref<512x128xf32, #tpu.memory_space<vmem>>, vector<2x128xf32>
    tpu.vector_store %arg6[%c428, %c0_705], %885 {strides = array<i32>} : memref<512x128xf32, #tpu.memory_space<vmem>>, vector<2x128xf32>,
    %c444 = arith.constant 444 : index
    %c0_706 = arith.constant 0 : index
    %887 = vector.load %arg6[%c444, %c0_706] : memref<512x128xf32, #tpu.memory_space<vmem>>, vector<2x128xf32>
    tpu.vector_store %arg6[%c444, %c0_706], %885 {strides = array<i32>} : memref<512x128xf32, #tpu.memory_space<vmem>>, vector<2x128xf32>,
    %c111 = arith.constant 111 : index
    %c0_707 = arith.constant 0 : index
    %888 = vector.load %arg5[%c111, %c0_707] : memref<128x128xf32, #tpu.memory_space<vmem>>, vector<1x128xf32>
    %889 = vector.shape_cast %888 : vector<1x128xf32> to vector<1x128xf32>
    %890 = vector.broadcast %889 : vector<1x128xf32> to vector<2x128xf32>
    %c430 = arith.constant 430 : index
    %c0_708 = arith.constant 0 : index
    %891 = vector.load %arg6[%c430, %c0_708] : memref<512x128xf32, #tpu.memory_space<vmem>>, vector<2x128xf32>
    tpu.vector_store %arg6[%c430, %c0_708], %890 {strides = array<i32>} : memref<512x128xf32, #tpu.memory_space<vmem>>, vector<2x128xf32>,
    %c446 = arith.constant 446 : index
    %c0_709 = arith.constant 0 : index
    %892 = vector.load %arg6[%c446, %c0_709] : memref<512x128xf32, #tpu.memory_space<vmem>>, vector<2x128xf32>
    tpu.vector_store %arg6[%c446, %c0_709], %890 {strides = array<i32>} : memref<512x128xf32, #tpu.memory_space<vmem>>, vector<2x128xf32>,
    %c112_710 = arith.constant 112 : index
    %c0_711 = arith.constant 0 : index
    %893 = vector.load %arg5[%c112_710, %c0_711] : memref<128x128xf32, #tpu.memory_space<vmem>>, vector<1x128xf32>
    %894 = vector.shape_cast %893 : vector<1x128xf32> to vector<1x128xf32>
    %895 = vector.broadcast %894 : vector<1x128xf32> to vector<2x128xf32>
    %c448 = arith.constant 448 : index
    %c0_712 = arith.constant 0 : index
    %896 = vector.load %arg6[%c448, %c0_712] : memref<512x128xf32, #tpu.memory_space<vmem>>, vector<2x128xf32>
    tpu.vector_store %arg6[%c448, %c0_712], %895 {strides = array<i32>} : memref<512x128xf32, #tpu.memory_space<vmem>>, vector<2x128xf32>,
    %c464 = arith.constant 464 : index
    %c0_713 = arith.constant 0 : index
    %897 = vector.load %arg6[%c464, %c0_713] : memref<512x128xf32, #tpu.memory_space<vmem>>, vector<2x128xf32>
    tpu.vector_store %arg6[%c464, %c0_713], %895 {strides = array<i32>} : memref<512x128xf32, #tpu.memory_space<vmem>>, vector<2x128xf32>,
    %c113 = arith.constant 113 : index
    %c0_714 = arith.constant 0 : index
    %898 = vector.load %arg5[%c113, %c0_714] : memref<128x128xf32, #tpu.memory_space<vmem>>, vector<1x128xf32>
    %899 = vector.shape_cast %898 : vector<1x128xf32> to vector<1x128xf32>
    %900 = vector.broadcast %899 : vector<1x128xf32> to vector<2x128xf32>
    %c450 = arith.constant 450 : index
    %c0_715 = arith.constant 0 : index
    %901 = vector.load %arg6[%c450, %c0_715] : memref<512x128xf32, #tpu.memory_space<vmem>>, vector<2x128xf32>
    tpu.vector_store %arg6[%c450, %c0_715], %900 {strides = array<i32>} : memref<512x128xf32, #tpu.memory_space<vmem>>, vector<2x128xf32>,
    %c466 = arith.constant 466 : index
    %c0_716 = arith.constant 0 : index
    %902 = vector.load %arg6[%c466, %c0_716] : memref<512x128xf32, #tpu.memory_space<vmem>>, vector<2x128xf32>
    tpu.vector_store %arg6[%c466, %c0_716], %900 {strides = array<i32>} : memref<512x128xf32, #tpu.memory_space<vmem>>, vector<2x128xf32>,
    %c114_717 = arith.constant 114 : index
    %c0_718 = arith.constant 0 : index
    %903 = vector.load %arg5[%c114_717, %c0_718] : memref<128x128xf32, #tpu.memory_space<vmem>>, vector<1x128xf32>
    %904 = vector.shape_cast %903 : vector<1x128xf32> to vector<1x128xf32>
    %905 = vector.broadcast %904 : vector<1x128xf32> to vector<2x128xf32>
    %c452 = arith.constant 452 : index
    %c0_719 = arith.constant 0 : index
    %906 = vector.load %arg6[%c452, %c0_719] : memref<512x128xf32, #tpu.memory_space<vmem>>, vector<2x128xf32>
    tpu.vector_store %arg6[%c452, %c0_719], %905 {strides = array<i32>} : memref<512x128xf32, #tpu.memory_space<vmem>>, vector<2x128xf32>,
    %c468 = arith.constant 468 : index
    %c0_720 = arith.constant 0 : index
    %907 = vector.load %arg6[%c468, %c0_720] : memref<512x128xf32, #tpu.memory_space<vmem>>, vector<2x128xf32>
    tpu.vector_store %arg6[%c468, %c0_720], %905 {strides = array<i32>} : memref<512x128xf32, #tpu.memory_space<vmem>>, vector<2x128xf32>,
    %c115 = arith.constant 115 : index
    %c0_721 = arith.constant 0 : index
    %908 = vector.load %arg5[%c115, %c0_721] : memref<128x128xf32, #tpu.memory_space<vmem>>, vector<1x128xf32>
    %909 = vector.shape_cast %908 : vector<1x128xf32> to vector<1x128xf32>
    %910 = vector.broadcast %909 : vector<1x128xf32> to vector<2x128xf32>
    %c454 = arith.constant 454 : index
    %c0_722 = arith.constant 0 : index
    %911 = vector.load %arg6[%c454, %c0_722] : memref<512x128xf32, #tpu.memory_space<vmem>>, vector<2x128xf32>
    tpu.vector_store %arg6[%c454, %c0_722], %910 {strides = array<i32>} : memref<512x128xf32, #tpu.memory_space<vmem>>, vector<2x128xf32>,
    %c470 = arith.constant 470 : index
    %c0_723 = arith.constant 0 : index
    %912 = vector.load %arg6[%c470, %c0_723] : memref<512x128xf32, #tpu.memory_space<vmem>>, vector<2x128xf32>
    tpu.vector_store %arg6[%c470, %c0_723], %910 {strides = array<i32>} : memref<512x128xf32, #tpu.memory_space<vmem>>, vector<2x128xf32>,
    %c116_724 = arith.constant 116 : index
    %c0_725 = arith.constant 0 : index
    %913 = vector.load %arg5[%c116_724, %c0_725] : memref<128x128xf32, #tpu.memory_space<vmem>>, vector<1x128xf32>
    %914 = vector.shape_cast %913 : vector<1x128xf32> to vector<1x128xf32>
    %915 = vector.broadcast %914 : vector<1x128xf32> to vector<2x128xf32>
    %c456 = arith.constant 456 : index
    %c0_726 = arith.constant 0 : index
    %916 = vector.load %arg6[%c456, %c0_726] : memref<512x128xf32, #tpu.memory_space<vmem>>, vector<2x128xf32>
    tpu.vector_store %arg6[%c456, %c0_726], %915 {strides = array<i32>} : memref<512x128xf32, #tpu.memory_space<vmem>>, vector<2x128xf32>,
    %c472 = arith.constant 472 : index
    %c0_727 = arith.constant 0 : index
    %917 = vector.load %arg6[%c472, %c0_727] : memref<512x128xf32, #tpu.memory_space<vmem>>, vector<2x128xf32>
    tpu.vector_store %arg6[%c472, %c0_727], %915 {strides = array<i32>} : memref<512x128xf32, #tpu.memory_space<vmem>>, vector<2x128xf32>,
    %c117 = arith.constant 117 : index
    %c0_728 = arith.constant 0 : index
    %918 = vector.load %arg5[%c117, %c0_728] : memref<128x128xf32, #tpu.memory_space<vmem>>, vector<1x128xf32>
    %919 = vector.shape_cast %918 : vector<1x128xf32> to vector<1x128xf32>
    %920 = vector.broadcast %919 : vector<1x128xf32> to vector<2x128xf32>
    %c458 = arith.constant 458 : index
    %c0_729 = arith.constant 0 : index
    %921 = vector.load %arg6[%c458, %c0_729] : memref<512x128xf32, #tpu.memory_space<vmem>>, vector<2x128xf32>
    tpu.vector_store %arg6[%c458, %c0_729], %920 {strides = array<i32>} : memref<512x128xf32, #tpu.memory_space<vmem>>, vector<2x128xf32>,
    %c474 = arith.constant 474 : index
    %c0_730 = arith.constant 0 : index
    %922 = vector.load %arg6[%c474, %c0_730] : memref<512x128xf32, #tpu.memory_space<vmem>>, vector<2x128xf32>
    tpu.vector_store %arg6[%c474, %c0_730], %920 {strides = array<i32>} : memref<512x128xf32, #tpu.memory_space<vmem>>, vector<2x128xf32>,
    %c118_731 = arith.constant 118 : index
    %c0_732 = arith.constant 0 : index
    %923 = vector.load %arg5[%c118_731, %c0_732] : memref<128x128xf32, #tpu.memory_space<vmem>>, vector<1x128xf32>
    %924 = vector.shape_cast %923 : vector<1x128xf32> to vector<1x128xf32>
    %925 = vector.broadcast %924 : vector<1x128xf32> to vector<2x128xf32>
    %c460 = arith.constant 460 : index
    %c0_733 = arith.constant 0 : index
    %926 = vector.load %arg6[%c460, %c0_733] : memref<512x128xf32, #tpu.memory_space<vmem>>, vector<2x128xf32>
    tpu.vector_store %arg6[%c460, %c0_733], %925 {strides = array<i32>} : memref<512x128xf32, #tpu.memory_space<vmem>>, vector<2x128xf32>,
    %c476 = arith.constant 476 : index
    %c0_734 = arith.constant 0 : index
    %927 = vector.load %arg6[%c476, %c0_734] : memref<512x128xf32, #tpu.memory_space<vmem>>, vector<2x128xf32>
    tpu.vector_store %arg6[%c476, %c0_734], %925 {strides = array<i32>} : memref<512x128xf32, #tpu.memory_space<vmem>>, vector<2x128xf32>,
    %c119 = arith.constant 119 : index
    %c0_735 = arith.constant 0 : index
    %928 = vector.load %arg5[%c119, %c0_735] : memref<128x128xf32, #tpu.memory_space<vmem>>, vector<1x128xf32>
    %929 = vector.shape_cast %928 : vector<1x128xf32> to vector<1x128xf32>
    %930 = vector.broadcast %929 : vector<1x128xf32> to vector<2x128xf32>
    %c462 = arith.constant 462 : index
    %c0_736 = arith.constant 0 : index
    %931 = vector.load %arg6[%c462, %c0_736] : memref<512x128xf32, #tpu.memory_space<vmem>>, vector<2x128xf32>
    tpu.vector_store %arg6[%c462, %c0_736], %930 {strides = array<i32>} : memref<512x128xf32, #tpu.memory_space<vmem>>, vector<2x128xf32>,
    %c478 = arith.constant 478 : index
    %c0_737 = arith.constant 0 : index
    %932 = vector.load %arg6[%c478, %c0_737] : memref<512x128xf32, #tpu.memory_space<vmem>>, vector<2x128xf32>
    tpu.vector_store %arg6[%c478, %c0_737], %930 {strides = array<i32>} : memref<512x128xf32, #tpu.memory_space<vmem>>, vector<2x128xf32>,
    %c120_738 = arith.constant 120 : index
    %c0_739 = arith.constant 0 : index
    %933 = vector.load %arg5[%c120_738, %c0_739] : memref<128x128xf32, #tpu.memory_space<vmem>>, vector<1x128xf32>
    %934 = vector.shape_cast %933 : vector<1x128xf32> to vector<1x128xf32>
    %935 = vector.broadcast %934 : vector<1x128xf32> to vector<2x128xf32>
    %c480 = arith.constant 480 : index
    %c0_740 = arith.constant 0 : index
    %936 = vector.load %arg6[%c480, %c0_740] : memref<512x128xf32, #tpu.memory_space<vmem>>, vector<2x128xf32>
    tpu.vector_store %arg6[%c480, %c0_740], %935 {strides = array<i32>} : memref<512x128xf32, #tpu.memory_space<vmem>>, vector<2x128xf32>,
    %c496 = arith.constant 496 : index
    %c0_741 = arith.constant 0 : index
    %937 = vector.load %arg6[%c496, %c0_741] : memref<512x128xf32, #tpu.memory_space<vmem>>, vector<2x128xf32>
    tpu.vector_store %arg6[%c496, %c0_741], %935 {strides = array<i32>} : memref<512x128xf32, #tpu.memory_space<vmem>>, vector<2x128xf32>,
    %c121 = arith.constant 121 : index
    %c0_742 = arith.constant 0 : index
    %938 = vector.load %arg5[%c121, %c0_742] : memref<128x128xf32, #tpu.memory_space<vmem>>, vector<1x128xf32>
    %939 = vector.shape_cast %938 : vector<1x128xf32> to vector<1x128xf32>
    %940 = vector.broadcast %939 : vector<1x128xf32> to vector<2x128xf32>
    %c482 = arith.constant 482 : index
    %c0_743 = arith.constant 0 : index
    %941 = vector.load %arg6[%c482, %c0_743] : memref<512x128xf32, #tpu.memory_space<vmem>>, vector<2x128xf32>
    tpu.vector_store %arg6[%c482, %c0_743], %940 {strides = array<i32>} : memref<512x128xf32, #tpu.memory_space<vmem>>, vector<2x128xf32>,
    %c498 = arith.constant 498 : index
    %c0_744 = arith.constant 0 : index
    %942 = vector.load %arg6[%c498, %c0_744] : memref<512x128xf32, #tpu.memory_space<vmem>>, vector<2x128xf32>
    tpu.vector_store %arg6[%c498, %c0_744], %940 {strides = array<i32>} : memref<512x128xf32, #tpu.memory_space<vmem>>, vector<2x128xf32>,
    %c122_745 = arith.constant 122 : index
    %c0_746 = arith.constant 0 : index
    %943 = vector.load %arg5[%c122_745, %c0_746] : memref<128x128xf32, #tpu.memory_space<vmem>>, vector<1x128xf32>
    %944 = vector.shape_cast %943 : vector<1x128xf32> to vector<1x128xf32>
    %945 = vector.broadcast %944 : vector<1x128xf32> to vector<2x128xf32>
    %c484 = arith.constant 484 : index
    %c0_747 = arith.constant 0 : index
    %946 = vector.load %arg6[%c484, %c0_747] : memref<512x128xf32, #tpu.memory_space<vmem>>, vector<2x128xf32>
    tpu.vector_store %arg6[%c484, %c0_747], %945 {strides = array<i32>} : memref<512x128xf32, #tpu.memory_space<vmem>>, vector<2x128xf32>,
    %c500 = arith.constant 500 : index
    %c0_748 = arith.constant 0 : index
    %947 = vector.load %arg6[%c500, %c0_748] : memref<512x128xf32, #tpu.memory_space<vmem>>, vector<2x128xf32>
    tpu.vector_store %arg6[%c500, %c0_748], %945 {strides = array<i32>} : memref<512x128xf32, #tpu.memory_space<vmem>>, vector<2x128xf32>,
    %c123 = arith.constant 123 : index
    %c0_749 = arith.constant 0 : index
    %948 = vector.load %arg5[%c123, %c0_749] : memref<128x128xf32, #tpu.memory_space<vmem>>, vector<1x128xf32>
    %949 = vector.shape_cast %948 : vector<1x128xf32> to vector<1x128xf32>
    %950 = vector.broadcast %949 : vector<1x128xf32> to vector<2x128xf32>
    %c486 = arith.constant 486 : index
    %c0_750 = arith.constant 0 : index
    %951 = vector.load %arg6[%c486, %c0_750] : memref<512x128xf32, #tpu.memory_space<vmem>>, vector<2x128xf32>
    tpu.vector_store %arg6[%c486, %c0_750], %950 {strides = array<i32>} : memref<512x128xf32, #tpu.memory_space<vmem>>, vector<2x128xf32>,
    %c502 = arith.constant 502 : index
    %c0_751 = arith.constant 0 : index
    %952 = vector.load %arg6[%c502, %c0_751] : memref<512x128xf32, #tpu.memory_space<vmem>>, vector<2x128xf32>
    tpu.vector_store %arg6[%c502, %c0_751], %950 {strides = array<i32>} : memref<512x128xf32, #tpu.memory_space<vmem>>, vector<2x128xf32>,
    %c124_752 = arith.constant 124 : index
    %c0_753 = arith.constant 0 : index
    %953 = vector.load %arg5[%c124_752, %c0_753] : memref<128x128xf32, #tpu.memory_space<vmem>>, vector<1x128xf32>
    %954 = vector.shape_cast %953 : vector<1x128xf32> to vector<1x128xf32>
    %955 = vector.broadcast %954 : vector<1x128xf32> to vector<2x128xf32>
    %c488 = arith.constant 488 : index
    %c0_754 = arith.constant 0 : index
    %956 = vector.load %arg6[%c488, %c0_754] : memref<512x128xf32, #tpu.memory_space<vmem>>, vector<2x128xf32>
    tpu.vector_store %arg6[%c488, %c0_754], %955 {strides = array<i32>} : memref<512x128xf32, #tpu.memory_space<vmem>>, vector<2x128xf32>,
    %c504 = arith.constant 504 : index
    %c0_755 = arith.constant 0 : index
    %957 = vector.load %arg6[%c504, %c0_755] : memref<512x128xf32, #tpu.memory_space<vmem>>, vector<2x128xf32>
    tpu.vector_store %arg6[%c504, %c0_755], %955 {strides = array<i32>} : memref<512x128xf32, #tpu.memory_space<vmem>>, vector<2x128xf32>,
    %c125 = arith.constant 125 : index
    %c0_756 = arith.constant 0 : index
    %958 = vector.load %arg5[%c125, %c0_756] : memref<128x128xf32, #tpu.memory_space<vmem>>, vector<1x128xf32>
    %959 = vector.shape_cast %958 : vector<1x128xf32> to vector<1x128xf32>
    %960 = vector.broadcast %959 : vector<1x128xf32> to vector<2x128xf32>
    %c490 = arith.constant 490 : index
    %c0_757 = arith.constant 0 : index
    %961 = vector.load %arg6[%c490, %c0_757] : memref<512x128xf32, #tpu.memory_space<vmem>>, vector<2x128xf32>
    tpu.vector_store %arg6[%c490, %c0_757], %960 {strides = array<i32>} : memref<512x128xf32, #tpu.memory_space<vmem>>, vector<2x128xf32>,
    %c506 = arith.constant 506 : index
    %c0_758 = arith.constant 0 : index
    %962 = vector.load %arg6[%c506, %c0_758] : memref<512x128xf32, #tpu.memory_space<vmem>>, vector<2x128xf32>
    tpu.vector_store %arg6[%c506, %c0_758], %960 {strides = array<i32>} : memref<512x128xf32, #tpu.memory_space<vmem>>, vector<2x128xf32>,
    %c126_759 = arith.constant 126 : index
    %c0_760 = arith.constant 0 : index
    %963 = vector.load %arg5[%c126_759, %c0_760] : memref<128x128xf32, #tpu.memory_space<vmem>>, vector<1x128xf32>
    %964 = vector.shape_cast %963 : vector<1x128xf32> to vector<1x128xf32>
    %965 = vector.broadcast %964 : vector<1x128xf32> to vector<2x128xf32>
    %c492 = arith.constant 492 : index
    %c0_761 = arith.constant 0 : index
    %966 = vector.load %arg6[%c492, %c0_761] : memref<512x128xf32, #tpu.memory_space<vmem>>, vector<2x128xf32>
    tpu.vector_store %arg6[%c492, %c0_761], %965 {strides = array<i32>} : memref<512x128xf32, #tpu.memory_space<vmem>>, vector<2x128xf32>,
    %c508 = arith.constant 508 : index
    %c0_762 = arith.constant 0 : index
    %967 = vector.load %arg6[%c508, %c0_762] : memref<512x128xf32, #tpu.memory_space<vmem>>, vector<2x128xf32>
    tpu.vector_store %arg6[%c508, %c0_762], %965 {strides = array<i32>} : memref<512x128xf32, #tpu.memory_space<vmem>>, vector<2x128xf32>,
    %c127 = arith.constant 127 : index
    %c0_763 = arith.constant 0 : index
    %968 = vector.load %arg5[%c127, %c0_763] : memref<128x128xf32, #tpu.memory_space<vmem>>, vector<1x128xf32>
    %969 = vector.shape_cast %968 : vector<1x128xf32> to vector<1x128xf32>
    %970 = vector.broadcast %969 : vector<1x128xf32> to vector<2x128xf32>
    %c494 = arith.constant 494 : index
    %c0_764 = arith.constant 0 : index
    %971 = vector.load %arg6[%c494, %c0_764] : memref<512x128xf32, #tpu.memory_space<vmem>>, vector<2x128xf32>
    tpu.vector_store %arg6[%c494, %c0_764], %970 {strides = array<i32>} : memref<512x128xf32, #tpu.memory_space<vmem>>, vector<2x128xf32>,
    %c510 = arith.constant 510 : index
    %c0_765 = arith.constant 0 : index
    %972 = vector.load %arg6[%c510, %c0_765] : memref<512x128xf32, #tpu.memory_space<vmem>>, vector<2x128xf32>
    tpu.vector_store %arg6[%c510, %c0_765], %970 {strides = array<i32>} : memref<512x128xf32, #tpu.memory_space<vmem>>, vector<2x128xf32>,
    %c0_766 = arith.constant 0 : index
    %c0_767 = arith.constant 0 : index
    %973 = vector.load %arg6[%c0_766, %c0_767] : memref<512x128xf32, #tpu.memory_space<vmem>>, vector<512x128xf32>
    %974 = vector.broadcast %332 : f32 to vector<512x128xf32>
    %975 = arith.mulf %974, %973 : vector<512x128xf32>
    %976 = arith.addf %331, %975 : vector<512x128xf32>
    %977 = arith.truncf %976 : vector<512x128xf32> to vector<512x128xbf16>
    %c3_768 = arith.constant 3 : index
    %c0_769 = arith.constant 0 : index
    %c0_770 = arith.constant 0 : index
    %978 = vector.load %arg2[%c3_768, %c0_769, %c0_770] : memref<8x128x128xbf16, #tpu.memory_space<vmem>>, vector<1x128x128xbf16>
    %979 = vector.shape_cast %978 : vector<1x128x128xbf16> to vector<128x128xbf16>
    %cst_771 = arith.constant dense<0.000000e+00> : vector<512x128xf32>
    %980 = tpu.matmul %977, %979, %cst_771 {dimension_numbers = #tpu.dot_dimension_numbers<[1], [0], [0], [1], [0, 0, 1, 1], [], []>} : vector<512x128xbf16>, vector<128x128xbf16>, vector<512x128xf32> -> vector<512x128xf32>
    %cst_772 = arith.constant dense<0.000000e+00> : vector<128xf32>
    %981 = vector.multi_reduction <add>, %980, %cst_772 [0] : vector<512x128xf32> to vector<128xf32>
    %982 = vector.shape_cast %981 : vector<128xf32> to vector<1x128xf32>
    %cst_773 = arith.constant 0.001953125 : f32
    %983 = vector.broadcast %cst_773 : f32 to vector<1x128xf32>
    %984 = arith.mulf %982, %983 : vector<1x128xf32>
    %985 = arith.mulf %980, %980 : vector<512x128xf32>
    %cst_774 = arith.constant dense<0.000000e+00> : vector<128xf32>
    %986 = vector.multi_reduction <add>, %985, %cst_774 [0] : vector<512x128xf32> to vector<128xf32>
    %987 = vector.shape_cast %986 : vector<128xf32> to vector<1x128xf32>
    %cst_775 = arith.constant 0.001953125 : f32
    %988 = vector.broadcast %cst_775 : f32 to vector<1x128xf32>
    %989 = arith.mulf %987, %988 : vector<1x128xf32>
    %990 = arith.mulf %984, %984 : vector<1x128xf32>
    %991 = arith.subf %989, %990 : vector<1x128xf32>
    %c6_776 = arith.constant 6 : index
    %c0_777 = arith.constant 0 : index
    %992 = vector.load %arg3[%c6_776, %c0_777] : memref<16x128xf32, #tpu.memory_space<vmem>>, vector<1x128xf32>
    %cst_778 = arith.constant 4.000000e-05 : f32
    %993 = vector.broadcast %cst_778 : f32 to vector<1x128xf32>
    %994 = arith.addf %991, %993 : vector<1x128xf32>
    %995 = math.rsqrt %994 : vector<1x128xf32>
    %996 = arith.mulf %992, %995 : vector<1x128xf32>
    %c7_779 = arith.constant 7 : index
    %c0_780 = arith.constant 0 : index
    %997 = vector.load %arg3[%c7_779, %c0_780] : memref<16x128xf32, #tpu.memory_space<vmem>>, vector<1x128xf32>
    %998 = arith.mulf %984, %996 : vector<1x128xf32>
    %999 = arith.subf %997, %998 : vector<1x128xf32>
    %1000 = vector.broadcast %996 : vector<1x128xf32> to vector<512x128xf32>
    %1001 = arith.mulf %980, %1000 : vector<512x128xf32>
    %1002 = vector.broadcast %999 : vector<1x128xf32> to vector<512x128xf32>
    %1003 = arith.addf %1001, %1002 : vector<512x128xf32>
    %cst_781 = arith.constant 0.000000e+00 : f32
    %1004 = vector.broadcast %cst_781 : f32 to vector<512x128xf32>
    %1005 = arith.maximumf %1003, %1004 : vector<512x128xf32>
    %c0_782 = arith.constant 0 : index
    %c0_783 = arith.constant 0 : index
    %1006 = vector.load %arg4[%c0_782, %c0_783] : memref<688x128xf32, #tpu.memory_space<vmem>>, vector<512x128xf32>
    tpu.vector_store %arg4[%c0_782, %c0_783], %1005 {strides = array<i32>} : memref<688x128xf32, #tpu.memory_space<vmem>>, vector<512x128xf32>,
    %c8_784 = arith.constant 8 : index
    %1007 = memref.load %arg0[%c8_784] : memref<20xf32, #tpu.memory_space<smem>>
    %c512_785 = arith.constant 512 : index
    %c0_786 = arith.constant 0 : index
    %1008 = vector.load %arg1[%c512_785, %c0_786] : memref<688x128xf32, #tpu.memory_space<vmem>>, vector<128x128xf32>
    %1009 = vector.broadcast %1007 : f32 to vector<128x128xf32>
    %1010 = arith.mulf %1009, %1008 : vector<128x128xf32>
    %c12_787 = arith.constant 12 : index
    %1011 = memref.load %arg0[%c12_787] : memref<20xf32, #tpu.memory_space<smem>>
    %1012 = vector.broadcast %1011 : f32 to vector<128x128xf32>
    %1013 = arith.mulf %1012, %326 : vector<128x128xf32>
    %1014 = arith.addf %1010, %1013 : vector<128x128xf32>
    %c16_788 = arith.constant 16 : index
    %1015 = memref.load %arg0[%c16_788] : memref<20xf32, #tpu.memory_space<smem>>
    %c0_789 = arith.constant 0 : index
    %c0_790 = arith.constant 0 : index
    %1016 = tpu.strided_load %arg4[%c0_789, %c0_790] {strides = array<i32: 2, 1>} : memref<688x128xf32, #tpu.memory_space<vmem>>, vector<8x128xf32>
    %c0_791 = arith.constant 0 : index
    %c0_792 = arith.constant 0 : index
    %1017 = vector.load %arg5[%c0_791, %c0_792] : memref<128x128xf32, #tpu.memory_space<vmem>>, vector<8x128xf32>
    tpu.vector_store %arg5[%c0_791, %c0_792], %1016 {strides = array<i32>} : memref<128x128xf32, #tpu.memory_space<vmem>>, vector<8x128xf32>,
    %c32_793 = arith.constant 32 : index
    %c0_794 = arith.constant 0 : index
    %1018 = tpu.strided_load %arg4[%c32_793, %c0_794] {strides = array<i32: 2, 1>} : memref<688x128xf32, #tpu.memory_space<vmem>>, vector<8x128xf32>
    %c8_795 = arith.constant 8 : index
    %c0_796 = arith.constant 0 : index
    %1019 = vector.load %arg5[%c8_795, %c0_796] : memref<128x128xf32, #tpu.memory_space<vmem>>, vector<8x128xf32>
    tpu.vector_store %arg5[%c8_795, %c0_796], %1018 {strides = array<i32>} : memref<128x128xf32, #tpu.memory_space<vmem>>, vector<8x128xf32>,
    %c64_797 = arith.constant 64 : index
    %c0_798 = arith.constant 0 : index
    %1020 = tpu.strided_load %arg4[%c64_797, %c0_798] {strides = array<i32: 2, 1>} : memref<688x128xf32, #tpu.memory_space<vmem>>, vector<8x128xf32>
    %c16_799 = arith.constant 16 : index
    %c0_800 = arith.constant 0 : index
    %1021 = vector.load %arg5[%c16_799, %c0_800] : memref<128x128xf32, #tpu.memory_space<vmem>>, vector<8x128xf32>
    tpu.vector_store %arg5[%c16_799, %c0_800], %1020 {strides = array<i32>} : memref<128x128xf32, #tpu.memory_space<vmem>>, vector<8x128xf32>,
    %c96_801 = arith.constant 96 : index
    %c0_802 = arith.constant 0 : index
    %1022 = tpu.strided_load %arg4[%c96_801, %c0_802] {strides = array<i32: 2, 1>} : memref<688x128xf32, #tpu.memory_space<vmem>>, vector<8x128xf32>
    %c24_803 = arith.constant 24 : index
    %c0_804 = arith.constant 0 : index
    %1023 = vector.load %arg5[%c24_803, %c0_804] : memref<128x128xf32, #tpu.memory_space<vmem>>, vector<8x128xf32>
    tpu.vector_store %arg5[%c24_803, %c0_804], %1022 {strides = array<i32>} : memref<128x128xf32, #tpu.memory_space<vmem>>, vector<8x128xf32>,
    %c128_805 = arith.constant 128 : index
    %c0_806 = arith.constant 0 : index
    %1024 = tpu.strided_load %arg4[%c128_805, %c0_806] {strides = array<i32: 2, 1>} : memref<688x128xf32, #tpu.memory_space<vmem>>, vector<8x128xf32>
    %c32_807 = arith.constant 32 : index
    %c0_808 = arith.constant 0 : index
    %1025 = vector.load %arg5[%c32_807, %c0_808] : memref<128x128xf32, #tpu.memory_space<vmem>>, vector<8x128xf32>
    tpu.vector_store %arg5[%c32_807, %c0_808], %1024 {strides = array<i32>} : memref<128x128xf32, #tpu.memory_space<vmem>>, vector<8x128xf32>,
    %c160_809 = arith.constant 160 : index
    %c0_810 = arith.constant 0 : index
    %1026 = tpu.strided_load %arg4[%c160_809, %c0_810] {strides = array<i32: 2, 1>} : memref<688x128xf32, #tpu.memory_space<vmem>>, vector<8x128xf32>
    %c40_811 = arith.constant 40 : index
    %c0_812 = arith.constant 0 : index
    %1027 = vector.load %arg5[%c40_811, %c0_812] : memref<128x128xf32, #tpu.memory_space<vmem>>, vector<8x128xf32>
    tpu.vector_store %arg5[%c40_811, %c0_812], %1026 {strides = array<i32>} : memref<128x128xf32, #tpu.memory_space<vmem>>, vector<8x128xf32>,
    %c192_813 = arith.constant 192 : index
    %c0_814 = arith.constant 0 : index
    %1028 = tpu.strided_load %arg4[%c192_813, %c0_814] {strides = array<i32: 2, 1>} : memref<688x128xf32, #tpu.memory_space<vmem>>, vector<8x128xf32>
    %c48_815 = arith.constant 48 : index
    %c0_816 = arith.constant 0 : index
    %1029 = vector.load %arg5[%c48_815, %c0_816] : memref<128x128xf32, #tpu.memory_space<vmem>>, vector<8x128xf32>
    tpu.vector_store %arg5[%c48_815, %c0_816], %1028 {strides = array<i32>} : memref<128x128xf32, #tpu.memory_space<vmem>>, vector<8x128xf32>,
    %c224_817 = arith.constant 224 : index
    %c0_818 = arith.constant 0 : index
    %1030 = tpu.strided_load %arg4[%c224_817, %c0_818] {strides = array<i32: 2, 1>} : memref<688x128xf32, #tpu.memory_space<vmem>>, vector<8x128xf32>
    %c56_819 = arith.constant 56 : index
    %c0_820 = arith.constant 0 : index
    %1031 = vector.load %arg5[%c56_819, %c0_820] : memref<128x128xf32, #tpu.memory_space<vmem>>, vector<8x128xf32>
    tpu.vector_store %arg5[%c56_819, %c0_820], %1030 {strides = array<i32>} : memref<128x128xf32, #tpu.memory_space<vmem>>, vector<8x128xf32>,
    %c256_821 = arith.constant 256 : index
    %c0_822 = arith.constant 0 : index
    %1032 = tpu.strided_load %arg4[%c256_821, %c0_822] {strides = array<i32: 2, 1>} : memref<688x128xf32, #tpu.memory_space<vmem>>, vector<8x128xf32>
    %c64_823 = arith.constant 64 : index
    %c0_824 = arith.constant 0 : index
    %1033 = vector.load %arg5[%c64_823, %c0_824] : memref<128x128xf32, #tpu.memory_space<vmem>>, vector<8x128xf32>
    tpu.vector_store %arg5[%c64_823, %c0_824], %1032 {strides = array<i32>} : memref<128x128xf32, #tpu.memory_space<vmem>>, vector<8x128xf32>,
    %c288_825 = arith.constant 288 : index
    %c0_826 = arith.constant 0 : index
    %1034 = tpu.strided_load %arg4[%c288_825, %c0_826] {strides = array<i32: 2, 1>} : memref<688x128xf32, #tpu.memory_space<vmem>>, vector<8x128xf32>
    %c72_827 = arith.constant 72 : index
    %c0_828 = arith.constant 0 : index
    %1035 = vector.load %arg5[%c72_827, %c0_828] : memref<128x128xf32, #tpu.memory_space<vmem>>, vector<8x128xf32>
    tpu.vector_store %arg5[%c72_827, %c0_828], %1034 {strides = array<i32>} : memref<128x128xf32, #tpu.memory_space<vmem>>, vector<8x128xf32>,
    %c320_829 = arith.constant 320 : index
    %c0_830 = arith.constant 0 : index
    %1036 = tpu.strided_load %arg4[%c320_829, %c0_830] {strides = array<i32: 2, 1>} : memref<688x128xf32, #tpu.memory_space<vmem>>, vector<8x128xf32>
    %c80_831 = arith.constant 80 : index
    %c0_832 = arith.constant 0 : index
    %1037 = vector.load %arg5[%c80_831, %c0_832] : memref<128x128xf32, #tpu.memory_space<vmem>>, vector<8x128xf32>
    tpu.vector_store %arg5[%c80_831, %c0_832], %1036 {strides = array<i32>} : memref<128x128xf32, #tpu.memory_space<vmem>>, vector<8x128xf32>,
    %c352_833 = arith.constant 352 : index
    %c0_834 = arith.constant 0 : index
    %1038 = tpu.strided_load %arg4[%c352_833, %c0_834] {strides = array<i32: 2, 1>} : memref<688x128xf32, #tpu.memory_space<vmem>>, vector<8x128xf32>
    %c88_835 = arith.constant 88 : index
    %c0_836 = arith.constant 0 : index
    %1039 = vector.load %arg5[%c88_835, %c0_836] : memref<128x128xf32, #tpu.memory_space<vmem>>, vector<8x128xf32>
    tpu.vector_store %arg5[%c88_835, %c0_836], %1038 {strides = array<i32>} : memref<128x128xf32, #tpu.memory_space<vmem>>, vector<8x128xf32>,
    %c384_837 = arith.constant 384 : index
    %c0_838 = arith.constant 0 : index
    %1040 = tpu.strided_load %arg4[%c384_837, %c0_838] {strides = array<i32: 2, 1>} : memref<688x128xf32, #tpu.memory_space<vmem>>, vector<8x128xf32>
    %c96_839 = arith.constant 96 : index
    %c0_840 = arith.constant 0 : index
    %1041 = vector.load %arg5[%c96_839, %c0_840] : memref<128x128xf32, #tpu.memory_space<vmem>>, vector<8x128xf32>
    tpu.vector_store %arg5[%c96_839, %c0_840], %1040 {strides = array<i32>} : memref<128x128xf32, #tpu.memory_space<vmem>>, vector<8x128xf32>,
    %c416_841 = arith.constant 416 : index
    %c0_842 = arith.constant 0 : index
    %1042 = tpu.strided_load %arg4[%c416_841, %c0_842] {strides = array<i32: 2, 1>} : memref<688x128xf32, #tpu.memory_space<vmem>>, vector<8x128xf32>
    %c104_843 = arith.constant 104 : index
    %c0_844 = arith.constant 0 : index
    %1043 = vector.load %arg5[%c104_843, %c0_844] : memref<128x128xf32, #tpu.memory_space<vmem>>, vector<8x128xf32>
    tpu.vector_store %arg5[%c104_843, %c0_844], %1042 {strides = array<i32>} : memref<128x128xf32, #tpu.memory_space<vmem>>, vector<8x128xf32>,
    %c448_845 = arith.constant 448 : index
    %c0_846 = arith.constant 0 : index
    %1044 = tpu.strided_load %arg4[%c448_845, %c0_846] {strides = array<i32: 2, 1>} : memref<688x128xf32, #tpu.memory_space<vmem>>, vector<8x128xf32>
    %c112_847 = arith.constant 112 : index
    %c0_848 = arith.constant 0 : index
    %1045 = vector.load %arg5[%c112_847, %c0_848] : memref<128x128xf32, #tpu.memory_space<vmem>>, vector<8x128xf32>
    tpu.vector_store %arg5[%c112_847, %c0_848], %1044 {strides = array<i32>} : memref<128x128xf32, #tpu.memory_space<vmem>>, vector<8x128xf32>,
    %c480_849 = arith.constant 480 : index
    %c0_850 = arith.constant 0 : index
    %1046 = tpu.strided_load %arg4[%c480_849, %c0_850] {strides = array<i32: 2, 1>} : memref<688x128xf32, #tpu.memory_space<vmem>>, vector<8x128xf32>
    %c120_851 = arith.constant 120 : index
    %c0_852 = arith.constant 0 : index
    %1047 = vector.load %arg5[%c120_851, %c0_852] : memref<128x128xf32, #tpu.memory_space<vmem>>, vector<8x128xf32>
    tpu.vector_store %arg5[%c120_851, %c0_852], %1046 {strides = array<i32>} : memref<128x128xf32, #tpu.memory_space<vmem>>, vector<8x128xf32>,
    %c0_853 = arith.constant 0 : index
    %c0_854 = arith.constant 0 : index
    %1048 = vector.load %arg5[%c0_853, %c0_854] : memref<128x128xf32, #tpu.memory_space<vmem>>, vector<128x128xf32>
    %1049 = vector.broadcast %1015 : f32 to vector<128x128xf32>
    %1050 = arith.mulf %1049, %1048 : vector<128x128xf32>
    %1051 = arith.addf %1014, %1050 : vector<128x128xf32>
    %1052 = arith.truncf %1051 : vector<128x128xf32> to vector<128x128xbf16>
    %c4_855 = arith.constant 4 : index
    %c0_856 = arith.constant 0 : index
    %c0_857 = arith.constant 0 : index
    %1053 = vector.load %arg2[%c4_855, %c0_856, %c0_857] : memref<8x128x128xbf16, #tpu.memory_space<vmem>>, vector<1x128x128xbf16>
    %1054 = vector.shape_cast %1053 : vector<1x128x128xbf16> to vector<128x128xbf16>
    %cst_858 = arith.constant dense<0.000000e+00> : vector<128x128xf32>
    %1055 = tpu.matmul %1052, %1054, %cst_858 {dimension_numbers = #tpu.dot_dimension_numbers<[1], [0], [0], [1], [0, 0, 1, 1], [], []>} : vector<128x128xbf16>, vector<128x128xbf16>, vector<128x128xf32> -> vector<128x128xf32>
    %cst_859 = arith.constant dense<0.000000e+00> : vector<128xf32>
    %1056 = vector.multi_reduction <add>, %1055, %cst_859 [0] : vector<128x128xf32> to vector<128xf32>
    %1057 = vector.shape_cast %1056 : vector<128xf32> to vector<1x128xf32>
    %cst_860 = arith.constant 7.812500e-03 : f32
    %1058 = vector.broadcast %cst_860 : f32 to vector<1x128xf32>
    %1059 = arith.mulf %1057, %1058 : vector<1x128xf32>
    %1060 = arith.mulf %1055, %1055 : vector<128x128xf32>
    %cst_861 = arith.constant dense<0.000000e+00> : vector<128xf32>
    %1061 = vector.multi_reduction <add>, %1060, %cst_861 [0] : vector<128x128xf32> to vector<128xf32>
    %1062 = vector.shape_cast %1061 : vector<128xf32> to vector<1x128xf32>
    %cst_862 = arith.constant 7.812500e-03 : f32
    %1063 = vector.broadcast %cst_862 : f32 to vector<1x128xf32>
    %1064 = arith.mulf %1062, %1063 : vector<1x128xf32>
    %1065 = arith.mulf %1059, %1059 : vector<1x128xf32>
    %1066 = arith.subf %1064, %1065 : vector<1x128xf32>
    %c8_863 = arith.constant 8 : index
    %c0_864 = arith.constant 0 : index
    %1067 = vector.load %arg3[%c8_863, %c0_864] : memref<16x128xf32, #tpu.memory_space<vmem>>, vector<1x128xf32>
    %cst_865 = arith.constant 4.000000e-05 : f32
    %1068 = vector.broadcast %cst_865 : f32 to vector<1x128xf32>
    %1069 = arith.addf %1066, %1068 : vector<1x128xf32>
    %1070 = math.rsqrt %1069 : vector<1x128xf32>
    %1071 = arith.mulf %1067, %1070 : vector<1x128xf32>
    %c9_866 = arith.constant 9 : index
    %c0_867 = arith.constant 0 : index
    %1072 = vector.load %arg3[%c9_866, %c0_867] : memref<16x128xf32, #tpu.memory_space<vmem>>, vector<1x128xf32>
    %1073 = arith.mulf %1059, %1071 : vector<1x128xf32>
    %1074 = arith.subf %1072, %1073 : vector<1x128xf32>
    %1075 = vector.broadcast %1071 : vector<1x128xf32> to vector<128x128xf32>
    %1076 = arith.mulf %1055, %1075 : vector<128x128xf32>
    %1077 = vector.broadcast %1074 : vector<1x128xf32> to vector<128x128xf32>
    %1078 = arith.addf %1076, %1077 : vector<128x128xf32>
    %cst_868 = arith.constant 0.000000e+00 : f32
    %1079 = vector.broadcast %cst_868 : f32 to vector<128x128xf32>
    %1080 = arith.maximumf %1078, %1079 : vector<128x128xf32>
    %c512_869 = arith.constant 512 : index
    %c0_870 = arith.constant 0 : index
    %1081 = vector.load %arg4[%c512_869, %c0_870] : memref<688x128xf32, #tpu.memory_space<vmem>>, vector<128x128xf32>
    tpu.vector_store %arg4[%c512_869, %c0_870], %1080 {strides = array<i32>} : memref<688x128xf32, #tpu.memory_space<vmem>>, vector<128x128xf32>,
    %c9_871 = arith.constant 9 : index
    %1082 = memref.load %arg0[%c9_871] : memref<20xf32, #tpu.memory_space<smem>>
    %c640_872 = arith.constant 640 : index
    %c0_873 = arith.constant 0 : index
    %1083 = vector.load %arg1[%c640_872, %c0_873] : memref<688x128xf32, #tpu.memory_space<vmem>>, vector<32x128xf32>
    %1084 = vector.broadcast %1082 : f32 to vector<32x128xf32>
    %1085 = arith.mulf %1084, %1083 : vector<32x128xf32>
    %c13_874 = arith.constant 13 : index
    %1086 = memref.load %arg0[%c13_874] : memref<20xf32, #tpu.memory_space<smem>>
    %1087 = vector.broadcast %1086 : f32 to vector<32x128xf32>
    %1088 = arith.mulf %1087, %127 : vector<32x128xf32>
    %1089 = arith.addf %1085, %1088 : vector<32x128xf32>
    %c17_875 = arith.constant 17 : index
    %1090 = memref.load %arg0[%c17_875] : memref<20xf32, #tpu.memory_space<smem>>
    %c512_876 = arith.constant 512 : index
    %c0_877 = arith.constant 0 : index
    %1091 = tpu.strided_load %arg4[%c512_876, %c0_877] {strides = array<i32: 2, 1>} : memref<688x128xf32, #tpu.memory_space<vmem>>, vector<4x128xf32>
    %c0_878 = arith.constant 0 : index
    %c0_879 = arith.constant 0 : index
    %1092 = vector.load %arg5[%c0_878, %c0_879] : memref<128x128xf32, #tpu.memory_space<vmem>>, vector<4x128xf32>
    tpu.vector_store %arg5[%c0_878, %c0_879], %1091 {strides = array<i32>} : memref<128x128xf32, #tpu.memory_space<vmem>>, vector<4x128xf32>,
    %c528 = arith.constant 528 : index
    %c0_880 = arith.constant 0 : index
    %1093 = tpu.strided_load %arg4[%c528, %c0_880] {strides = array<i32: 2, 1>} : memref<688x128xf32, #tpu.memory_space<vmem>>, vector<4x128xf32>
    %c4_881 = arith.constant 4 : index
    %c0_882 = arith.constant 0 : index
    %1094 = vector.load %arg5[%c4_881, %c0_882] : memref<128x128xf32, #tpu.memory_space<vmem>>, vector<4x128xf32>
    tpu.vector_store %arg5[%c4_881, %c0_882], %1093 {strides = array<i32>} : memref<128x128xf32, #tpu.memory_space<vmem>>, vector<4x128xf32>,
    %c544 = arith.constant 544 : index
    %c0_883 = arith.constant 0 : index
    %1095 = tpu.strided_load %arg4[%c544, %c0_883] {strides = array<i32: 2, 1>} : memref<688x128xf32, #tpu.memory_space<vmem>>, vector<4x128xf32>
    %c8_884 = arith.constant 8 : index
    %c0_885 = arith.constant 0 : index
    %1096 = vector.load %arg5[%c8_884, %c0_885] : memref<128x128xf32, #tpu.memory_space<vmem>>, vector<4x128xf32>
    tpu.vector_store %arg5[%c8_884, %c0_885], %1095 {strides = array<i32>} : memref<128x128xf32, #tpu.memory_space<vmem>>, vector<4x128xf32>,
    %c560 = arith.constant 560 : index
    %c0_886 = arith.constant 0 : index
    %1097 = tpu.strided_load %arg4[%c560, %c0_886] {strides = array<i32: 2, 1>} : memref<688x128xf32, #tpu.memory_space<vmem>>, vector<4x128xf32>
    %c12_887 = arith.constant 12 : index
    %c0_888 = arith.constant 0 : index
    %1098 = vector.load %arg5[%c12_887, %c0_888] : memref<128x128xf32, #tpu.memory_space<vmem>>, vector<4x128xf32>
    tpu.vector_store %arg5[%c12_887, %c0_888], %1097 {strides = array<i32>} : memref<128x128xf32, #tpu.memory_space<vmem>>, vector<4x128xf32>,
    %c576 = arith.constant 576 : index
    %c0_889 = arith.constant 0 : index
    %1099 = tpu.strided_load %arg4[%c576, %c0_889] {strides = array<i32: 2, 1>} : memref<688x128xf32, #tpu.memory_space<vmem>>, vector<4x128xf32>
    %c16_890 = arith.constant 16 : index
    %c0_891 = arith.constant 0 : index
    %1100 = vector.load %arg5[%c16_890, %c0_891] : memref<128x128xf32, #tpu.memory_space<vmem>>, vector<4x128xf32>
    tpu.vector_store %arg5[%c16_890, %c0_891], %1099 {strides = array<i32>} : memref<128x128xf32, #tpu.memory_space<vmem>>, vector<4x128xf32>,
    %c592 = arith.constant 592 : index
    %c0_892 = arith.constant 0 : index
    %1101 = tpu.strided_load %arg4[%c592, %c0_892] {strides = array<i32: 2, 1>} : memref<688x128xf32, #tpu.memory_space<vmem>>, vector<4x128xf32>
    %c20_893 = arith.constant 20 : index
    %c0_894 = arith.constant 0 : index
    %1102 = vector.load %arg5[%c20_893, %c0_894] : memref<128x128xf32, #tpu.memory_space<vmem>>, vector<4x128xf32>
    tpu.vector_store %arg5[%c20_893, %c0_894], %1101 {strides = array<i32>} : memref<128x128xf32, #tpu.memory_space<vmem>>, vector<4x128xf32>,
    %c608 = arith.constant 608 : index
    %c0_895 = arith.constant 0 : index
    %1103 = tpu.strided_load %arg4[%c608, %c0_895] {strides = array<i32: 2, 1>} : memref<688x128xf32, #tpu.memory_space<vmem>>, vector<4x128xf32>
    %c24_896 = arith.constant 24 : index
    %c0_897 = arith.constant 0 : index
    %1104 = vector.load %arg5[%c24_896, %c0_897] : memref<128x128xf32, #tpu.memory_space<vmem>>, vector<4x128xf32>
    tpu.vector_store %arg5[%c24_896, %c0_897], %1103 {strides = array<i32>} : memref<128x128xf32, #tpu.memory_space<vmem>>, vector<4x128xf32>,
    %c624 = arith.constant 624 : index
    %c0_898 = arith.constant 0 : index
    %1105 = tpu.strided_load %arg4[%c624, %c0_898] {strides = array<i32: 2, 1>} : memref<688x128xf32, #tpu.memory_space<vmem>>, vector<4x128xf32>
    %c28_899 = arith.constant 28 : index
    %c0_900 = arith.constant 0 : index
    %1106 = vector.load %arg5[%c28_899, %c0_900] : memref<128x128xf32, #tpu.memory_space<vmem>>, vector<4x128xf32>
    tpu.vector_store %arg5[%c28_899, %c0_900], %1105 {strides = array<i32>} : memref<128x128xf32, #tpu.memory_space<vmem>>, vector<4x128xf32>,
    %c0_901 = arith.constant 0 : index
    %c0_902 = arith.constant 0 : index
    %1107 = vector.load %arg5[%c0_901, %c0_902] : memref<128x128xf32, #tpu.memory_space<vmem>>, vector<32x128xf32>
    %1108 = vector.broadcast %1090 : f32 to vector<32x128xf32>
    %1109 = arith.mulf %1108, %1107 : vector<32x128xf32>
    %1110 = arith.addf %1089, %1109 : vector<32x128xf32>
    %1111 = arith.truncf %1110 : vector<32x128xf32> to vector<32x128xbf16>
    %c5_903 = arith.constant 5 : index
    %c0_904 = arith.constant 0 : index
    %c0_905 = arith.constant 0 : index
    %1112 = vector.load %arg2[%c5_903, %c0_904, %c0_905] : memref<8x128x128xbf16, #tpu.memory_space<vmem>>, vector<1x128x128xbf16>
    %1113 = vector.shape_cast %1112 : vector<1x128x128xbf16> to vector<128x128xbf16>
    %cst_906 = arith.constant dense<0.000000e+00> : vector<32x128xf32>
    %1114 = tpu.matmul %1111, %1113, %cst_906 {dimension_numbers = #tpu.dot_dimension_numbers<[1], [0], [0], [1], [0, 0, 1, 1], [], []>} : vector<32x128xbf16>, vector<128x128xbf16>, vector<32x128xf32> -> vector<32x128xf32>
    %cst_907 = arith.constant dense<0.000000e+00> : vector<128xf32>
    %1115 = vector.multi_reduction <add>, %1114, %cst_907 [0] : vector<32x128xf32> to vector<128xf32>
    %1116 = vector.shape_cast %1115 : vector<128xf32> to vector<1x128xf32>
    %cst_908 = arith.constant 3.125000e-02 : f32
    %1117 = vector.broadcast %cst_908 : f32 to vector<1x128xf32>
    %1118 = arith.mulf %1116, %1117 : vector<1x128xf32>
    %1119 = arith.mulf %1114, %1114 : vector<32x128xf32>
    %cst_909 = arith.constant dense<0.000000e+00> : vector<128xf32>
    %1120 = vector.multi_reduction <add>, %1119, %cst_909 [0] : vector<32x128xf32> to vector<128xf32>
    %1121 = vector.shape_cast %1120 : vector<128xf32> to vector<1x128xf32>
    %cst_910 = arith.constant 3.125000e-02 : f32
    %1122 = vector.broadcast %cst_910 : f32 to vector<1x128xf32>
    %1123 = arith.mulf %1121, %1122 : vector<1x128xf32>
    %1124 = arith.mulf %1118, %1118 : vector<1x128xf32>
    %1125 = arith.subf %1123, %1124 : vector<1x128xf32>
    %c10_911 = arith.constant 10 : index
    %c0_912 = arith.constant 0 : index
    %1126 = vector.load %arg3[%c10_911, %c0_912] : memref<16x128xf32, #tpu.memory_space<vmem>>, vector<1x128xf32>
    %cst_913 = arith.constant 4.000000e-05 : f32
    %1127 = vector.broadcast %cst_913 : f32 to vector<1x128xf32>
    %1128 = arith.addf %1125, %1127 : vector<1x128xf32>
    %1129 = math.rsqrt %1128 : vector<1x128xf32>
    %1130 = arith.mulf %1126, %1129 : vector<1x128xf32>
    %c11_914 = arith.constant 11 : index
    %c0_915 = arith.constant 0 : index
    %1131 = vector.load %arg3[%c11_914, %c0_915] : memref<16x128xf32, #tpu.memory_space<vmem>>, vector<1x128xf32>
    %1132 = arith.mulf %1118, %1130 : vector<1x128xf32>
    %1133 = arith.subf %1131, %1132 : vector<1x128xf32>
    %1134 = vector.broadcast %1130 : vector<1x128xf32> to vector<32x128xf32>
    %1135 = arith.mulf %1114, %1134 : vector<32x128xf32>
    %1136 = vector.broadcast %1133 : vector<1x128xf32> to vector<32x128xf32>
    %1137 = arith.addf %1135, %1136 : vector<32x128xf32>
    %cst_916 = arith.constant 0.000000e+00 : f32
    %1138 = vector.broadcast %cst_916 : f32 to vector<32x128xf32>
    %1139 = arith.maximumf %1137, %1138 : vector<32x128xf32>
    %c640_917 = arith.constant 640 : index
    %c0_918 = arith.constant 0 : index
    %1140 = vector.load %arg4[%c640_917, %c0_918] : memref<688x128xf32, #tpu.memory_space<vmem>>, vector<32x128xf32>
    tpu.vector_store %arg4[%c640_917, %c0_918], %1139 {strides = array<i32>} : memref<688x128xf32, #tpu.memory_space<vmem>>, vector<32x128xf32>,
    %c10_919 = arith.constant 10 : index
    %1141 = memref.load %arg0[%c10_919] : memref<20xf32, #tpu.memory_space<smem>>
    %c672_920 = arith.constant 672 : index
    %c0_921 = arith.constant 0 : index
    %1142 = vector.load %arg1[%c672_920, %c0_921] : memref<688x128xf32, #tpu.memory_space<vmem>>, vector<8x128xf32>
    %1143 = vector.broadcast %1141 : f32 to vector<8x128xf32>
    %1144 = arith.mulf %1143, %1142 : vector<8x128xf32>
    %c14_922 = arith.constant 14 : index
    %1145 = memref.load %arg0[%c14_922] : memref<20xf32, #tpu.memory_space<smem>>
    %1146 = vector.broadcast %1145 : f32 to vector<8x128xf32>
    %1147 = arith.mulf %1146, %48 : vector<8x128xf32>
    %1148 = arith.addf %1144, %1147 : vector<8x128xf32>
    %c18_923 = arith.constant 18 : index
    %1149 = memref.load %arg0[%c18_923] : memref<20xf32, #tpu.memory_space<smem>>
    %c640_924 = arith.constant 640 : index
    %c0_925 = arith.constant 0 : index
    %1150 = tpu.strided_load %arg4[%c640_924, %c0_925] {strides = array<i32: 2, 1>} : memref<688x128xf32, #tpu.memory_space<vmem>>, vector<2x128xf32>
    %c0_926 = arith.constant 0 : index
    %c0_927 = arith.constant 0 : index
    %1151 = vector.load %arg5[%c0_926, %c0_927] : memref<128x128xf32, #tpu.memory_space<vmem>>, vector<2x128xf32>
    tpu.vector_store %arg5[%c0_926, %c0_927], %1150 {strides = array<i32>} : memref<128x128xf32, #tpu.memory_space<vmem>>, vector<2x128xf32>,
    %c648 = arith.constant 648 : index
    %c0_928 = arith.constant 0 : index
    %1152 = tpu.strided_load %arg4[%c648, %c0_928] {strides = array<i32: 2, 1>} : memref<688x128xf32, #tpu.memory_space<vmem>>, vector<2x128xf32>
    %c2_929 = arith.constant 2 : index
    %c0_930 = arith.constant 0 : index
    %1153 = vector.load %arg5[%c2_929, %c0_930] : memref<128x128xf32, #tpu.memory_space<vmem>>, vector<2x128xf32>
    tpu.vector_store %arg5[%c2_929, %c0_930], %1152 {strides = array<i32>} : memref<128x128xf32, #tpu.memory_space<vmem>>, vector<2x128xf32>,
    %c656 = arith.constant 656 : index
    %c0_931 = arith.constant 0 : index
    %1154 = tpu.strided_load %arg4[%c656, %c0_931] {strides = array<i32: 2, 1>} : memref<688x128xf32, #tpu.memory_space<vmem>>, vector<2x128xf32>
    %c4_932 = arith.constant 4 : index
    %c0_933 = arith.constant 0 : index
    %1155 = vector.load %arg5[%c4_932, %c0_933] : memref<128x128xf32, #tpu.memory_space<vmem>>, vector<2x128xf32>
    tpu.vector_store %arg5[%c4_932, %c0_933], %1154 {strides = array<i32>} : memref<128x128xf32, #tpu.memory_space<vmem>>, vector<2x128xf32>,
    %c664 = arith.constant 664 : index
    %c0_934 = arith.constant 0 : index
    %1156 = tpu.strided_load %arg4[%c664, %c0_934] {strides = array<i32: 2, 1>} : memref<688x128xf32, #tpu.memory_space<vmem>>, vector<2x128xf32>
    %c6_935 = arith.constant 6 : index
    %c0_936 = arith.constant 0 : index
    %1157 = vector.load %arg5[%c6_935, %c0_936] : memref<128x128xf32, #tpu.memory_space<vmem>>, vector<2x128xf32>
    tpu.vector_store %arg5[%c6_935, %c0_936], %1156 {strides = array<i32>} : memref<128x128xf32, #tpu.memory_space<vmem>>, vector<2x128xf32>,
    %c0_937 = arith.constant 0 : index
    %c0_938 = arith.constant 0 : index
    %1158 = vector.load %arg5[%c0_937, %c0_938] : memref<128x128xf32, #tpu.memory_space<vmem>>, vector<8x128xf32>
    %1159 = vector.broadcast %1149 : f32 to vector<8x128xf32>
    %1160 = arith.mulf %1159, %1158 : vector<8x128xf32>
    %1161 = arith.addf %1148, %1160 : vector<8x128xf32>
    %1162 = arith.truncf %1161 : vector<8x128xf32> to vector<8x128xbf16>
    %c6_939 = arith.constant 6 : index
    %c0_940 = arith.constant 0 : index
    %c0_941 = arith.constant 0 : index
    %1163 = vector.load %arg2[%c6_939, %c0_940, %c0_941] : memref<8x128x128xbf16, #tpu.memory_space<vmem>>, vector<1x128x128xbf16>
    %1164 = vector.shape_cast %1163 : vector<1x128x128xbf16> to vector<128x128xbf16>
    %cst_942 = arith.constant dense<0.000000e+00> : vector<8x128xf32>
    %1165 = tpu.matmul %1162, %1164, %cst_942 {dimension_numbers = #tpu.dot_dimension_numbers<[1], [0], [0], [1], [0, 0, 1, 1], [], []>} : vector<8x128xbf16>, vector<128x128xbf16>, vector<8x128xf32> -> vector<8x128xf32>
    %cst_943 = arith.constant dense<0.000000e+00> : vector<128xf32>
    %1166 = vector.multi_reduction <add>, %1165, %cst_943 [0] : vector<8x128xf32> to vector<128xf32>
    %1167 = vector.shape_cast %1166 : vector<128xf32> to vector<1x128xf32>
    %cst_944 = arith.constant 1.250000e-01 : f32
    %1168 = vector.broadcast %cst_944 : f32 to vector<1x128xf32>
    %1169 = arith.mulf %1167, %1168 : vector<1x128xf32>
    %1170 = arith.mulf %1165, %1165 : vector<8x128xf32>
    %cst_945 = arith.constant dense<0.000000e+00> : vector<128xf32>
    %1171 = vector.multi_reduction <add>, %1170, %cst_945 [0] : vector<8x128xf32> to vector<128xf32>
    %1172 = vector.shape_cast %1171 : vector<128xf32> to vector<1x128xf32>
    %cst_946 = arith.constant 1.250000e-01 : f32
    %1173 = vector.broadcast %cst_946 : f32 to vector<1x128xf32>
    %1174 = arith.mulf %1172, %1173 : vector<1x128xf32>
    %1175 = arith.mulf %1169, %1169 : vector<1x128xf32>
    %1176 = arith.subf %1174, %1175 : vector<1x128xf32>
    %c12_947 = arith.constant 12 : index
    %c0_948 = arith.constant 0 : index
    %1177 = vector.load %arg3[%c12_947, %c0_948] : memref<16x128xf32, #tpu.memory_space<vmem>>, vector<1x128xf32>
    %cst_949 = arith.constant 4.000000e-05 : f32
    %1178 = vector.broadcast %cst_949 : f32 to vector<1x128xf32>
    %1179 = arith.addf %1176, %1178 : vector<1x128xf32>
    %1180 = math.rsqrt %1179 : vector<1x128xf32>
    %1181 = arith.mulf %1177, %1180 : vector<1x128xf32>
    %c13_950 = arith.constant 13 : index
    %c0_951 = arith.constant 0 : index
    %1182 = vector.load %arg3[%c13_950, %c0_951] : memref<16x128xf32, #tpu.memory_space<vmem>>, vector<1x128xf32>
    %1183 = arith.mulf %1169, %1181 : vector<1x128xf32>
    %1184 = arith.subf %1182, %1183 : vector<1x128xf32>
    %1185 = vector.broadcast %1181 : vector<1x128xf32> to vector<8x128xf32>
    %1186 = arith.mulf %1165, %1185 : vector<8x128xf32>
    %1187 = vector.broadcast %1184 : vector<1x128xf32> to vector<8x128xf32>
    %1188 = arith.addf %1186, %1187 : vector<8x128xf32>
    %cst_952 = arith.constant 0.000000e+00 : f32
    %1189 = vector.broadcast %cst_952 : f32 to vector<8x128xf32>
    %1190 = arith.maximumf %1188, %1189 : vector<8x128xf32>
    %c672_953 = arith.constant 672 : index
    %c0_954 = arith.constant 0 : index
    %1191 = vector.load %arg4[%c672_953, %c0_954] : memref<688x128xf32, #tpu.memory_space<vmem>>, vector<8x128xf32>
    tpu.vector_store %arg4[%c672_953, %c0_954], %1190 {strides = array<i32>} : memref<688x128xf32, #tpu.memory_space<vmem>>, vector<8x128xf32>,
    %c11_955 = arith.constant 11 : index
    %1192 = memref.load %arg0[%c11_955] : memref<20xf32, #tpu.memory_space<smem>>
    %c680_956 = arith.constant 680 : index
    %c0_957 = arith.constant 0 : index
    %1193 = vector.load %arg1[%c680_956, %c0_957] : memref<688x128xf32, #tpu.memory_space<vmem>>, vector<2x128xf32>
    %1194 = vector.broadcast %1192 : f32 to vector<2x128xf32>
    %1195 = arith.mulf %1194, %1193 : vector<2x128xf32>
    %c15_958 = arith.constant 15 : index
    %1196 = memref.load %arg0[%c15_958] : memref<20xf32, #tpu.memory_space<smem>>
    %1197 = vector.broadcast %1196 : f32 to vector<2x128xf32>
    %1198 = arith.mulf %1197, %0 : vector<2x128xf32>
    %1199 = arith.addf %1195, %1198 : vector<2x128xf32>
    %c19_959 = arith.constant 19 : index
    %1200 = memref.load %arg0[%c19_959] : memref<20xf32, #tpu.memory_space<smem>>
    %c672_960 = arith.constant 672 : index
    %c0_961 = arith.constant 0 : index
    %1201 = tpu.strided_load %arg4[%c672_960, %c0_961] {strides = array<i32: 2, 1>} : memref<688x128xf32, #tpu.memory_space<vmem>>, vector<1x128xf32>
    %c0_962 = arith.constant 0 : index
    %c0_963 = arith.constant 0 : index
    %1202 = vector.load %arg5[%c0_962, %c0_963] : memref<128x128xf32, #tpu.memory_space<vmem>>, vector<1x128xf32>
    tpu.vector_store %arg5[%c0_962, %c0_963], %1201 {strides = array<i32>} : memref<128x128xf32, #tpu.memory_space<vmem>>, vector<1x128xf32>,
    %c676 = arith.constant 676 : index
    %c0_964 = arith.constant 0 : index
    %1203 = tpu.strided_load %arg4[%c676, %c0_964] {strides = array<i32: 2, 1>} : memref<688x128xf32, #tpu.memory_space<vmem>>, vector<1x128xf32>
    %c1_965 = arith.constant 1 : index
    %c0_966 = arith.constant 0 : index
    %1204 = vector.load %arg5[%c1_965, %c0_966] : memref<128x128xf32, #tpu.memory_space<vmem>>, vector<1x128xf32>
    tpu.vector_store %arg5[%c1_965, %c0_966], %1203 {strides = array<i32>} : memref<128x128xf32, #tpu.memory_space<vmem>>, vector<1x128xf32>,
    %c0_967 = arith.constant 0 : index
    %c0_968 = arith.constant 0 : index
    %1205 = vector.load %arg5[%c0_967, %c0_968] : memref<128x128xf32, #tpu.memory_space<vmem>>, vector<2x128xf32>
    %1206 = vector.broadcast %1200 : f32 to vector<2x128xf32>
    %1207 = arith.mulf %1206, %1205 : vector<2x128xf32>
    %1208 = arith.addf %1199, %1207 : vector<2x128xf32>
    %1209 = arith.truncf %1208 : vector<2x128xf32> to vector<2x128xbf16>
    %c7_969 = arith.constant 7 : index
    %c0_970 = arith.constant 0 : index
    %c0_971 = arith.constant 0 : index
    %1210 = vector.load %arg2[%c7_969, %c0_970, %c0_971] : memref<8x128x128xbf16, #tpu.memory_space<vmem>>, vector<1x128x128xbf16>
    %1211 = vector.shape_cast %1210 : vector<1x128x128xbf16> to vector<128x128xbf16>
    %cst_972 = arith.constant dense<0.000000e+00> : vector<2x128xf32>
    %1212 = tpu.matmul %1209, %1211, %cst_972 {dimension_numbers = #tpu.dot_dimension_numbers<[1], [0], [0], [1], [0, 0, 1, 1], [], []>} : vector<2x128xbf16>, vector<128x128xbf16>, vector<2x128xf32> -> vector<2x128xf32>
    %cst_973 = arith.constant dense<0.000000e+00> : vector<128xf32>
    %1213 = vector.multi_reduction <add>, %1212, %cst_973 [0] : vector<2x128xf32> to vector<128xf32>
    %1214 = vector.shape_cast %1213 : vector<128xf32> to vector<1x128xf32>
    %cst_974 = arith.constant 5.000000e-01 : f32
    %1215 = vector.broadcast %cst_974 : f32 to vector<1x128xf32>
    %1216 = arith.mulf %1214, %1215 : vector<1x128xf32>
    %1217 = arith.mulf %1212, %1212 : vector<2x128xf32>
    %cst_975 = arith.constant dense<0.000000e+00> : vector<128xf32>
    %1218 = vector.multi_reduction <add>, %1217, %cst_975 [0] : vector<2x128xf32> to vector<128xf32>
    %1219 = vector.shape_cast %1218 : vector<128xf32> to vector<1x128xf32>
    %cst_976 = arith.constant 5.000000e-01 : f32
    %1220 = vector.broadcast %cst_976 : f32 to vector<1x128xf32>
    %1221 = arith.mulf %1219, %1220 : vector<1x128xf32>
    %1222 = arith.mulf %1216, %1216 : vector<1x128xf32>
    %1223 = arith.subf %1221, %1222 : vector<1x128xf32>
    %c14_977 = arith.constant 14 : index
    %c0_978 = arith.constant 0 : index
    %1224 = vector.load %arg3[%c14_977, %c0_978] : memref<16x128xf32, #tpu.memory_space<vmem>>, vector<1x128xf32>
    %cst_979 = arith.constant 4.000000e-05 : f32
    %1225 = vector.broadcast %cst_979 : f32 to vector<1x128xf32>
    %1226 = arith.addf %1223, %1225 : vector<1x128xf32>
    %1227 = math.rsqrt %1226 : vector<1x128xf32>
    %1228 = arith.mulf %1224, %1227 : vector<1x128xf32>
    %c15_980 = arith.constant 15 : index
    %c0_981 = arith.constant 0 : index
    %1229 = vector.load %arg3[%c15_980, %c0_981] : memref<16x128xf32, #tpu.memory_space<vmem>>, vector<1x128xf32>
    %1230 = arith.mulf %1216, %1228 : vector<1x128xf32>
    %1231 = arith.subf %1229, %1230 : vector<1x128xf32>
    %1232 = vector.broadcast %1228 : vector<1x128xf32> to vector<2x128xf32>
    %1233 = arith.mulf %1212, %1232 : vector<2x128xf32>
    %1234 = vector.broadcast %1231 : vector<1x128xf32> to vector<2x128xf32>
    %1235 = arith.addf %1233, %1234 : vector<2x128xf32>
    %cst_982 = arith.constant 0.000000e+00 : f32
    %1236 = vector.broadcast %cst_982 : f32 to vector<2x128xf32>
    %1237 = arith.maximumf %1235, %1236 : vector<2x128xf32>
    %c680_983 = arith.constant 680 : index
    %c0_984 = arith.constant 0 : index
    %1238 = vector.load %arg4[%c680_983, %c0_984] : memref<688x128xf32, #tpu.memory_space<vmem>>, vector<2x128xf32>
    tpu.vector_store %arg4[%c680_983, %c0_984], %1237 {strides = array<i32>} : memref<688x128xf32, #tpu.memory_space<vmem>>, vector<2x128xf32>,
    %cst_985 = arith.constant 0.000000e+00 : f32
    %1239 = vector.broadcast %cst_985 : f32 to vector<6x128xf32>
    %c682 = arith.constant 682 : index
    %c0_986 = arith.constant 0 : index
    %1240 = vector.load %arg4[%c682, %c0_986] : memref<688x128xf32, #tpu.memory_space<vmem>>, vector<6x128xf32>
    tpu.vector_store %arg4[%c682, %c0_986], %1239 {strides = array<i32>} : memref<688x128xf32, #tpu.memory_space<vmem>>, vector<6x128xf32>,
    return
  }
}

</mosaic_0001>

<llo_original>
// kernel: bifpn_forward.3
$region0: #{bifpn_forward.3}
  #allocation0 [shape = 'u32[]', space=smem, size = 0x4, offset = 0x4, fixed_abs, tag = 'smem constant byte address 0x4 - core index']
  #allocation1 [shape = 'u32[72,128]{1,0:T(1,128)}', space=vmem, size = 0x9000, scoped, tag = 'internal scratch']
  %s0 = inlined_call_operand.vmem [shape: f32[512,8], index: 0, kind: input, shape index: {}]
  %s1 = inlined_call_operand.vmem [shape: f32[128,16], index: 1, kind: input, shape index: {}]
  %s2 = inlined_call_operand.vmem [shape: f32[32,32], index: 2, kind: input, shape index: {}]
  %s3 = inlined_call_operand.vmem [shape: f32[8,288], index: 3, kind: input, shape index: {}]
  %s4 = inlined_call_operand.vmem [shape: bf16[8,128], index: 4, kind: input, shape index: {}]
  %s5 = inlined_call_operand.vmem [shape: bf16[16,128], index: 5, kind: input, shape index: {}]
  %s6 = inlined_call_operand.vmem [shape: bf16[32,128], index: 6, kind: input, shape index: {}]
  %s7 = inlined_call_operand.vmem [shape: bf16[288,128], index: 7, kind: input, shape index: {}]
  %s8 = inlined_call_operand.vmem [shape: bf16[4,128,128], index: 8, kind: input, shape index: {}]
  %s9 = inlined_call_operand.vmem [shape: f32[7,128], index: 9, kind: input, shape index: {}]
  %s10 = inlined_call_operand.vmem [shape: f32[688,128], index: 10, kind: output, shape index: {}]
  %s11 = sld [smem:[#allocation0]]
  $region50: #{bifpn_forward.3} parent=0
    _
  %s13 = ssub.s32 1, %s11
  %s14 = scalar_select 0, %s13, %s11
  // Predicated region
  $region2: #{bifpn_forward.3} parent=0 // pred_check
    _
  $region3: #{bifpn_forward.3} parent=0 // pred_check_branch
    %16 = sbr.rel (0) target = $region5
  $region4: #{bifpn_forward.3} parent=0 // pred_region
    _
  $region5: #{bifpn_forward.3} parent=0 // pred_fallthru
    _
  // Predicated region
  $region6: #{bifpn_forward.3} parent=0 // pred_check
    _
  $region7: #{bifpn_forward.3} parent=0 // pred_check_branch
    %18 = sbr.rel (0) target = $region9
  $region8: #{bifpn_forward.3} parent=0 // pred_region
    _
  $region9: #{bifpn_forward.3} parent=0 // pred_fallthru
    _
  // Predicated region
  $region10: #{bifpn_forward.3} parent=0 // pred_check
    _
  $region11: #{bifpn_forward.3} parent=0 // pred_check_branch
    %20 = sbr.rel (0) target = $region13
  $region12: #{bifpn_forward.3} parent=0 // pred_region
    _
  $region13: #{bifpn_forward.3} parent=0 // pred_fallthru
    _
  // Predicated region
  $region14: #{bifpn_forward.3} parent=0 // pred_check
    _
  $region15: #{bifpn_forward.3} parent=0 // pred_check_branch
    %22 = sbr.rel (0) target = $region17
  $region16: #{bifpn_forward.3} parent=0 // pred_region
    _
  $region17: #{bifpn_forward.3} parent=0 // pred_fallthru
    _
  // Predicated region
  $region18: #{bifpn_forward.3} parent=0 // pred_check
    _
  $region19: #{bifpn_forward.3} parent=0 // pred_check_branch
    %24 = sbr.rel (0) target = $region21
  $region20: #{bifpn_forward.3} parent=0 // pred_region
    _
  $region21: #{bifpn_forward.3} parent=0 // pred_fallthru
    _
  // Predicated region
  $region22: #{bifpn_forward.3} parent=0 // pred_check
    _
  $region23: #{bifpn_forward.3} parent=0 // pred_check_branch
    %26 = sbr.rel (0) target = $region25
  $region24: #{bifpn_forward.3} parent=0 // pred_region
    _
  $region25: #{bifpn_forward.3} parent=0 // pred_fallthru
    _
  // Predicated region
  $region26: #{bifpn_forward.3} parent=0 // pred_check
    _
  $region27: #{bifpn_forward.3} parent=0 // pred_check_branch
    %28 = sbr.rel (0) target = $region29
  $region28: #{bifpn_forward.3} parent=0 // pred_region
    _
  $region29: #{bifpn_forward.3} parent=0 // pred_fallthru
    _
  // Predicated region
  $region30: #{bifpn_forward.3} parent=0 // pred_check
    _
  $region31: #{bifpn_forward.3} parent=0 // pred_check_branch
    %30 = sbr.rel (0) target = $region33
  $region32: #{bifpn_forward.3} parent=0 // pred_region
    _
  $region33: #{bifpn_forward.3} parent=0 // pred_fallthru
    _
  // Predicated region
  $region34: #{bifpn_forward.3} parent=0 // pred_check
    _
  $region35: #{bifpn_forward.3} parent=0 // pred_check_branch
    %32 = sbr.rel (0) target = $region37
  $region36: #{bifpn_forward.3} parent=0 // pred_region
    _
  $region37: #{bifpn_forward.3} parent=0 // pred_fallthru
    _
  // Predicated region
  $region38: #{bifpn_forward.3} parent=0 // pred_check
    _
  $region39: #{bifpn_forward.3} parent=0 // pred_check_branch
    %34 = sbr.rel (0) target = $region41
  $region40: #{bifpn_forward.3} parent=0 // pred_region
    _
  $region41: #{bifpn_forward.3} parent=0 // pred_fallthru
    _
  %v36 = vld [vmem:[%s9] sm:$0x1]
  %v37 = vld [vmem:[%s0] sm:$0xff]
  %v38 = vld [vmem:[%s0 + $0x8] sm:$0xff]
  %v39 = vld [vmem:[%s0 + $0x10] sm:$0xff]
  %v40 = vld [vmem:[%s0 + $0x18] sm:$0xff]
  %v41 = vld [vmem:[%s0 + $0x20] sm:$0xff]
  %v42 = vld [vmem:[%s0 + $0x28] sm:$0xff]
  %v43 = vld [vmem:[%s0 + $0x30] sm:$0xff]
  %v44 = vld [vmem:[%s0 + $0x38] sm:$0xff]
  %v45 = vld [vmem:[%s0 + $0x40] sm:$0xff]
  %v46 = vld [vmem:[%s0 + $0x48] sm:$0xff]
  %v47 = vld [vmem:[%s0 + $0x50] sm:$0xff]
  %v48 = vld [vmem:[%s0 + $0x58] sm:$0xff]
  %v49 = vld [vmem:[%s0 + $0x60] sm:$0xff]
  %v50 = vld [vmem:[%s0 + $0x68] sm:$0xff]
  %v51 = vld [vmem:[%s0 + $0x70] sm:$0xff]
  %v52 = vld [vmem:[%s0 + $0x78] sm:$0xff]
  %v53 = vld [vmem:[%s0 + $0x80] sm:$0xff]
  %v54 = vld [vmem:[%s0 + $0x88] sm:$0xff]
  %v55 = vld [vmem:[%s0 + $0x90] sm:$0xff]
  %v56 = vld [vmem:[%s0 + $0x98] sm:$0xff]
  %v57 = vld [vmem:[%s0 + $0xa0] sm:$0xff]
  %v58 = vld [vmem:[%s0 + $0xa8] sm:$0xff]
  %v59 = vld [vmem:[%s0 + $0xb0] sm:$0xff]
  %v60 = vld [vmem:[%s0 + $0xb8] sm:$0xff]
  %v61 = vld [vmem:[%s0 + $0xc0] sm:$0xff]
  %v62 = vld [vmem:[%s0 + $0xc8] sm:$0xff]
  %v63 = vld [vmem:[%s0 + $0xd0] sm:$0xff]
  %v64 = vld [vmem:[%s0 + $0xd8] sm:$0xff]
  %v65 = vld [vmem:[%s0 + $0xe0] sm:$0xff]
  %v66 = vld [vmem:[%s0 + $0xe8] sm:$0xff]
  %v67 = vld [vmem:[%s0 + $0xf0] sm:$0xff]
  %v68 = vld [vmem:[%s0 + $0xf8] sm:$0xff]
  %v69 = vld [vmem:[%s0 + $0x100] sm:$0xff]
  %v70 = vld [vmem:[%s0 + $0x108] sm:$0xff]
  %v71 = vld [vmem:[%s0 + $0x110] sm:$0xff]
  %v72 = vld [vmem:[%s0 + $0x118] sm:$0xff]
  %v73 = vld [vmem:[%s0 + $0x120] sm:$0xff]
  %v74 = vld [vmem:[%s0 + $0x128] sm:$0xff]
  %v75 = vld [vmem:[%s0 + $0x130] sm:$0xff]
  %v76 = vld [vmem:[%s0 + $0x138] sm:$0xff]
  %v77 = vld [vmem:[%s0 + $0x140] sm:$0xff]
  %v78 = vld [vmem:[%s0 + $0x148] sm:$0xff]
  %v79 = vld [vmem:[%s0 + $0x150] sm:$0xff]
  %v80 = vld [vmem:[%s0 + $0x158] sm:$0xff]
  %v81 = vld [vmem:[%s0 + $0x160] sm:$0xff]
  %v82 = vld [vmem:[%s0 + $0x168] sm:$0xff]
  %v83 = vld [vmem:[%s0 + $0x170] sm:$0xff]
  %v84 = vld [vmem:[%s0 + $0x178] sm:$0xff]
  %v85 = vld [vmem:[%s0 + $0x180] sm:$0xff]
  %v86 = vld [vmem:[%s0 + $0x188] sm:$0xff]
  %v87 = vld [vmem:[%s0 + $0x190] sm:$0xff]
  %v88 = vld [vmem:[%s0 + $0x198] sm:$0xff]
  %v89 = vld [vmem:[%s0 + $0x1a0] sm:$0xff]
  %v90 = vld [vmem:[%s0 + $0x1a8] sm:$0xff]
  %v91 = vld [vmem:[%s0 + $0x1b0] sm:$0xff]
  %v92 = vld [vmem:[%s0 + $0x1b8] sm:$0xff]
  %v93 = vld [vmem:[%s0 + $0x1c0] sm:$0xff]
  %v94 = vld [vmem:[%s0 + $0x1c8] sm:$0xff]
  %v95 = vld [vmem:[%s0 + $0x1d0] sm:$0xff]
  %v96 = vld [vmem:[%s0 + $0x1d8] sm:$0xff]
  %v97 = vld [vmem:[%s0 + $0x1e0] sm:$0xff]
  %v98 = vld [vmem:[%s0 + $0x1e8] sm:$0xff]
  %v99 = vld [vmem:[%s0 + $0x1f0] sm:$0xff]
  %v100 = vld [vmem:[%s0 + $0x1f8] sm:$0xff]
  %v101 = vpack.c.bf16 %v38, %v37
  %v102 = vpack.c.bf16 %v40, %v39
  %v103 = vpack.c.bf16 %v42, %v41
  %v104 = vpack.c.bf16 %v44, %v43
  %v105 = vpack.c.bf16 %v46, %v45
  %v106 = vpack.c.bf16 %v48, %v47
  %v107 = vpack.c.bf16 %v50, %v49
  %v108 = vpack.c.bf16 %v52, %v51
  %v109 = vpack.c.bf16 %v54, %v53
  %v110 = vpack.c.bf16 %v56, %v55
  %v111 = vpack.c.bf16 %v58, %v57
  %v112 = vpack.c.bf16 %v60, %v59
  %v113 = vpack.c.bf16 %v62, %v61
  %v114 = vpack.c.bf16 %v64, %v63
  %v115 = vpack.c.bf16 %v66, %v65
  %v116 = vpack.c.bf16 %v68, %v67
  %v117 = vpack.c.bf16 %v70, %v69
  %v118 = vpack.c.bf16 %v72, %v71
  %v119 = vpack.c.bf16 %v74, %v73
  %v120 = vpack.c.bf16 %v76, %v75
  %v121 = vpack.c.bf16 %v78, %v77
  %v122 = vpack.c.bf16 %v80, %v79
  %v123 = vpack.c.bf16 %v82, %v81
  %v124 = vpack.c.bf16 %v84, %v83
  %v125 = vpack.c.bf16 %v86, %v85
  %v126 = vpack.c.bf16 %v88, %v87
  %v127 = vpack.c.bf16 %v90, %v89
  %v128 = vpack.c.bf16 %v92, %v91
  %v129 = vpack.c.bf16 %v94, %v93
  %v130 = vpack.c.bf16 %v96, %v95
  %v131 = vpack.c.bf16 %v98, %v97
  %v132 = vpack.c.bf16 %v100, %v99
  %v133 = vld [vmem:[%s4] sm:$0xf]
  %v134 = vperm.slane %v36, 0
  %vm135 = vcmask 64512
  %v137 = vsel %vm135, %v101, 0
  %v140 = vsel %vm135, %v102, 0
  %v143 = vsel %vm135, %v103, 0
  %v146 = vsel %vm135, %v104, 0
  %v149 = vsel %vm135, %v105, 0
  %v152 = vsel %vm135, %v106, 0
  %v155 = vsel %vm135, %v107, 0
  %v158 = vsel %vm135, %v108, 0
  %v161 = vsel %vm135, %v109, 0
  %v164 = vsel %vm135, %v110, 0
  %v167 = vsel %vm135, %v111, 0
  %v170 = vsel %vm135, %v112, 0
  %v173 = vsel %vm135, %v113, 0
  %v176 = vsel %vm135, %v114, 0
  %v179 = vsel %vm135, %v115, 0
  %v182 = vsel %vm135, %v116, 0
  %v185 = vsel %vm135, %v117, 0
  %v188 = vsel %vm135, %v118, 0
  %v191 = vsel %vm135, %v119, 0
  %v194 = vsel %vm135, %v120, 0
  %v197 = vsel %vm135, %v121, 0
  %v200 = vsel %vm135, %v122, 0
  %v203 = vsel %vm135, %v123, 0
  %v206 = vsel %vm135, %v124, 0
  %v209 = vsel %vm135, %v125, 0
  %v212 = vsel %vm135, %v126, 0
  %v215 = vsel %vm135, %v127, 0
  %v218 = vsel %vm135, %v128, 0
  %v221 = vsel %vm135, %v129, 0
  %v224 = vsel %vm135, %v130, 0
  %v227 = vsel %vm135, %v131, 0
  %v230 = vsel %vm135, %v132, 0
  %vm232 = vcmask 1043456
  %v234 = vsel %vm232, %v133, 0
  %236 = vmatpush.bf16.msra.mxu0 0
  %237 = vmatpush.bf16.msra.mxu0 0
  %238 = vmatpush.bf16.msra.mxu0 0
  %239 = vmatpush.bf16.msra.mxu0 0
  %240 = vmatpush.bf16.msra.mxu0 0
  %241 = vmatpush.bf16.msra.mxu0 0
  %242 = vmatpush.bf16.msra.mxu0 0
  %243 = vmatpush.bf16.msra.mxu0 %v234
  %244 = vmatmul.bf16.gmra.mxu0 %v137
  %v245 = vpop.f32.mrf.mxu0
  %v246 = vadd.f32 %v134, %v245
  %v247 = vpop.f32.mrf.mxu0
  %v248 = vadd.f32 %v134, %v247
  %249 = vmatmul.bf16.gmra.mxu0 %v140
  %v250 = vpop.f32.mrf.mxu0
  %v251 = vadd.f32 %v134, %v250
  %v252 = vpop.f32.mrf.mxu0
  %v253 = vadd.f32 %v134, %v252
  %254 = vmatmul.bf16.gmra.mxu0 %v143
  %v255 = vpop.f32.mrf.mxu0
  %v256 = vadd.f32 %v134, %v255
  %v257 = vpop.f32.mrf.mxu0
  %v258 = vadd.f32 %v134, %v257
  %259 = vmatmul.bf16.gmra.mxu0 %v146
  %v260 = vpop.f32.mrf.mxu0
  %v261 = vadd.f32 %v134, %v260
  %v262 = vpop.f32.mrf.mxu0
  %v263 = vadd.f32 %v134, %v262
  %264 = vmatmul.bf16.gmra.mxu0 %v149
  %v265 = vpop.f32.mrf.mxu0
  %v266 = vadd.f32 %v134, %v265
  %v267 = vpop.f32.mrf.mxu0
  %v268 = vadd.f32 %v134, %v267
  %269 = vmatmul.bf16.gmra.mxu0 %v152
  %v270 = vpop.f32.mrf.mxu0
  %v271 = vadd.f32 %v134, %v270
  %v272 = vpop.f32.mrf.mxu0
  %v273 = vadd.f32 %v134, %v272
  %274 = vmatmul.bf16.gmra.mxu0 %v155
  %v275 = vpop.f32.mrf.mxu0
  %v276 = vadd.f32 %v134, %v275
  %v277 = vpop.f32.mrf.mxu0
  %v278 = vadd.f32 %v134, %v277
  %279 = vmatmul.bf16.gmra.mxu0 %v158
  %v280 = vpop.f32.mrf.mxu0
  %v281 = vadd.f32 %v134, %v280
  %v282 = vpop.f32.mrf.mxu0
  %v283 = vadd.f32 %v134, %v282
  %284 = vmatmul.bf16.gmra.mxu0 %v161
  %v285 = vpop.f32.mrf.mxu0
  %v286 = vadd.f32 %v134, %v285
  %v287 = vpop.f32.mrf.mxu0
  %v288 = vadd.f32 %v134, %v287
  %289 = vmatmul.bf16.gmra.mxu0 %v164
  %v290 = vpop.f32.mrf.mxu0
  %v291 = vadd.f32 %v134, %v290
  %v292 = vpop.f32.mrf.mxu0
  %v293 = vadd.f32 %v134, %v292
  %294 = vmatmul.bf16.gmra.mxu0 %v167
  %v295 = vpop.f32.mrf.mxu0
  %v296 = vadd.f32 %v134, %v295
  %v297 = vpop.f32.mrf.mxu0
  %v298 = vadd.f32 %v134, %v297
  %299 = vmatmul.bf16.gmra.mxu0 %v170
  %v300 = vpop.f32.mrf.mxu0
  %v301 = vadd.f32 %v134, %v300
  %v302 = vpop.f32.mrf.mxu0
  %v303 = vadd.f32 %v134, %v302
  %304 = vmatmul.bf16.gmra.mxu0 %v173
  %v305 = vpop.f32.mrf.mxu0
  %v306 = vadd.f32 %v134, %v305
  %v307 = vpop.f32.mrf.mxu0
  %v308 = vadd.f32 %v134, %v307
  %309 = vmatmul.bf16.gmra.mxu0 %v176
  %v310 = vpop.f32.mrf.mxu0
  %v311 = vadd.f32 %v134, %v310
  %v312 = vpop.f32.mrf.mxu0
  %v313 = vadd.f32 %v134, %v312
  %314 = vmatmul.bf16.gmra.mxu0 %v179
  %v315 = vpop.f32.mrf.mxu0
  %v316 = vadd.f32 %v134, %v315
  %v317 = vpop.f32.mrf.mxu0
  %v318 = vadd.f32 %v134, %v317
  %319 = vmatmul.bf16.gmra.mxu0 %v182
  %v320 = vpop.f32.mrf.mxu0
  %v321 = vadd.f32 %v134, %v320
  %v322 = vpop.f32.mrf.mxu0
  %v323 = vadd.f32 %v134, %v322
  %324 = vmatmul.bf16.gmra.mxu0 %v185
  %v325 = vpop.f32.mrf.mxu0
  %v326 = vadd.f32 %v134, %v325
  %v327 = vpop.f32.mrf.mxu0
  %v328 = vadd.f32 %v134, %v327
  %329 = vmatmul.bf16.gmra.mxu0 %v188
  %v330 = vpop.f32.mrf.mxu0
  %v331 = vadd.f32 %v134, %v330
  %v332 = vpop.f32.mrf.mxu0
  %v333 = vadd.f32 %v134, %v332
  %334 = vmatmul.bf16.gmra.mxu0 %v191
  %v335 = vpop.f32.mrf.mxu0
  %v336 = vadd.f32 %v134, %v335
  %v337 = vpop.f32.mrf.mxu0
  %v338 = vadd.f32 %v134, %v337
  %339 = vmatmul.bf16.gmra.mxu0 %v194
  %v340 = vpop.f32.mrf.mxu0
  %v341 = vadd.f32 %v134, %v340
  %v342 = vpop.f32.mrf.mxu0
  %v343 = vadd.f32 %v134, %v342
  %344 = vmatmul.bf16.gmra.mxu0 %v197
  %v345 = vpop.f32.mrf.mxu0
  %v346 = vadd.f32 %v134, %v345
  %v347 = vpop.f32.mrf.mxu0
  %v348 = vadd.f32 %v134, %v347
  %349 = vmatmul.bf16.gmra.mxu0 %v200
  %v350 = vpop.f32.mrf.mxu0
  %v351 = vadd.f32 %v134, %v350
  %v352 = vpop.f32.mrf.mxu0
  %v353 = vadd.f32 %v134, %v352
  %354 = vmatmul.bf16.gmra.mxu0 %v203
  %v355 = vpop.f32.mrf.mxu0
  %v356 = vadd.f32 %v134, %v355
  %v357 = vpop.f32.mrf.mxu0
  %v358 = vadd.f32 %v134, %v357
  %359 = vmatmul.bf16.gmra.mxu0 %v206
  %v360 = vpop.f32.mrf.mxu0
  %v361 = vadd.f32 %v134, %v360
  %v362 = vpop.f32.mrf.mxu0
  %v363 = vadd.f32 %v134, %v362
  %364 = vmatmul.bf16.gmra.mxu0 %v209
  %v365 = vpop.f32.mrf.mxu0
  %v366 = vadd.f32 %v134, %v365
  %v367 = vpop.f32.mrf.mxu0
  %v368 = vadd.f32 %v134, %v367
  %369 = vmatmul.bf16.gmra.mxu0 %v212
  %v370 = vpop.f32.mrf.mxu0
  %v371 = vadd.f32 %v134, %v370
  %v372 = vpop.f32.mrf.mxu0
  %v373 = vadd.f32 %v134, %v372
  %374 = vmatmul.bf16.gmra.mxu0 %v215
  %v375 = vpop.f32.mrf.mxu0
  %v376 = vadd.f32 %v134, %v375
  %v377 = vpop.f32.mrf.mxu0
  %v378 = vadd.f32 %v134, %v377
  %379 = vmatmul.bf16.gmra.mxu0 %v218
  %v380 = vpop.f32.mrf.mxu0
  %v381 = vadd.f32 %v134, %v380
  %v382 = vpop.f32.mrf.mxu0
  %v383 = vadd.f32 %v134, %v382
  %384 = vmatmul.bf16.gmra.mxu0 %v221
  %v385 = vpop.f32.mrf.mxu0
  %v386 = vadd.f32 %v134, %v385
  %v387 = vpop.f32.mrf.mxu0
  %v388 = vadd.f32 %v134, %v387
  %389 = vmatmul.bf16.gmra.mxu0 %v224
  %v390 = vpop.f32.mrf.mxu0
  %v391 = vadd.f32 %v134, %v390
  %v392 = vpop.f32.mrf.mxu0
  %v393 = vadd.f32 %v134, %v392
  %394 = vmatmul.bf16.gmra.mxu0 %v227
  %v395 = vpop.f32.mrf.mxu0
  %v396 = vadd.f32 %v134, %v395
  %v397 = vpop.f32.mrf.mxu0
  %v398 = vadd.f32 %v134, %v397
  %399 = vmatmul.bf16.gmra.mxu0 %v230
  %v400 = vpop.f32.mrf.mxu0
  %v401 = vadd.f32 %v134, %v400
  %v402 = vpop.f32.mrf.mxu0
  %v403 = vadd.f32 %v134, %v402
  %404 = vdwg.mxu0
  %405 = vst [vmem:[%s10] sm:$0xff] %v246
  %406 = vst [vmem:[%s10 + $0x8] sm:$0xff] %v248
  %407 = vst [vmem:[%s10 + $0x10] sm:$0xff] %v251
  %408 = vst [vmem:[%s10 + $0x18] sm:$0xff] %v253
  %409 = vst [vmem:[%s10 + $0x20] sm:$0xff] %v256
  %410 = vst [vmem:[%s10 + $0x28] sm:$0xff] %v258
  %411 = vst [vmem:[%s10 + $0x30] sm:$0xff] %v261
  %412 = vst [vmem:[%s10 + $0x38] sm:$0xff] %v263
  %413 = vst [vmem:[%s10 + $0x40] sm:$0xff] %v266
  %414 = vst [vmem:[%s10 + $0x48] sm:$0xff] %v268
  %415 = vst [vmem:[%s10 + $0x50] sm:$0xff] %v271
  %416 = vst [vmem:[%s10 + $0x58] sm:$0xff] %v273
  %417 = vst [vmem:[%s10 + $0x60] sm:$0xff] %v276
  %418 = vst [vmem:[%s10 + $0x68] sm:$0xff] %v278
  %419 = vst [vmem:[%s10 + $0x70] sm:$0xff] %v281
  %420 = vst [vmem:[%s10 + $0x78] sm:$0xff] %v283
  %421 = vst [vmem:[%s10 + $0x80] sm:$0xff] %v286
  %422 = vst [vmem:[%s10 + $0x88] sm:$0xff] %v288
  %423 = vst [vmem:[%s10 + $0x90] sm:$0xff] %v291
  %424 = vst [vmem:[%s10 + $0x98] sm:$0xff] %v293
  %425 = vst [vmem:[%s10 + $0xa0] sm:$0xff] %v296
  %426 = vst [vmem:[%s10 + $0xa8] sm:$0xff] %v298
  %427 = vst [vmem:[%s10 + $0xb0] sm:$0xff] %v301
  %428 = vst [vmem:[%s10 + $0xb8] sm:$0xff] %v303
  %429 = vst [vmem:[%s10 + $0xc0] sm:$0xff] %v306
  %430 = vst [vmem:[%s10 + $0xc8] sm:$0xff] %v308
  %431 = vst [vmem:[%s10 + $0xd0] sm:$0xff] %v311
  %432 = vst [vmem:[%s10 + $0xd8] sm:$0xff] %v313
  %433 = vst [vmem:[%s10 + $0xe0] sm:$0xff] %v316
  %434 = vst [vmem:[%s10 + $0xe8] sm:$0xff] %v318
  %435 = vst [vmem:[%s10 + $0xf0] sm:$0xff] %v321
  %436 = vst [vmem:[%s10 + $0xf8] sm:$0xff] %v323
  %437 = vst [vmem:[%s10 + $0x100] sm:$0xff] %v326
  %438 = vst [vmem:[%s10 + $0x108] sm:$0xff] %v328
  %439 = vst [vmem:[%s10 + $0x110] sm:$0xff] %v331
  %440 = vst [vmem:[%s10 + $0x118] sm:$0xff] %v333
  %441 = vst [vmem:[%s10 + $0x120] sm:$0xff] %v336
  %442 = vst [vmem:[%s10 + $0x128] sm:$0xff] %v338
  %443 = vst [vmem:[%s10 + $0x130] sm:$0xff] %v341
  %444 = vst [vmem:[%s10 + $0x138] sm:$0xff] %v343
  %445 = vst [vmem:[%s10 + $0x140] sm:$0xff] %v346
  %446 = vst [vmem:[%s10 + $0x148] sm:$0xff] %v348
  %447 = vst [vmem:[%s10 + $0x150] sm:$0xff] %v351
  %448 = vst [vmem:[%s10 + $0x158] sm:$0xff] %v353
  %449 = vst [vmem:[%s10 + $0x160] sm:$0xff] %v356
  %450 = vst [vmem:[%s10 + $0x168] sm:$0xff] %v358
  %451 = vst [vmem:[%s10 + $0x170] sm:$0xff] %v361
  %452 = vst [vmem:[%s10 + $0x178] sm:$0xff] %v363
  %453 = vst [vmem:[%s10 + $0x180] sm:$0xff] %v366
  %454 = vst [vmem:[%s10 + $0x188] sm:$0xff] %v368
  %455 = vst [vmem:[%s10 + $0x190] sm:$0xff] %v371
  %456 = vst [vmem:[%s10 + $0x198] sm:$0xff] %v373
  %457 = vst [vmem:[%s10 + $0x1a0] sm:$0xff] %v376
  %458 = vst [vmem:[%s10 + $0x1a8] sm:$0xff] %v378
  %459 = vst [vmem:[%s10 + $0x1b0] sm:$0xff] %v381
  %460 = vst [vmem:[%s10 + $0x1b8] sm:$0xff] %v383
  %461 = vst [vmem:[%s10 + $0x1c0] sm:$0xff] %v386
  %462 = vst [vmem:[%s10 + $0x1c8] sm:$0xff] %v388
  %463 = vst [vmem:[%s10 + $0x1d0] sm:$0xff] %v391
  %464 = vst [vmem:[%s10 + $0x1d8] sm:$0xff] %v393
  %465 = vst [vmem:[%s10 + $0x1e0] sm:$0xff] %v396
  %466 = vst [vmem:[%s10 + $0x1e8] sm:$0xff] %v398
  %467 = vst [vmem:[%s10 + $0x1f0] sm:$0xff] %v401
  %468 = vst [vmem:[%s10 + $0x1f8] sm:$0xff] %v403
  %v469 = vld [vmem:[%s9 + $0x1] sm:$0x1]
  %v470 = vld [vmem:[%s1] sm:$0xff]
  %v471 = vld [vmem:[%s1 + $0x8] sm:$0xff]
  %v472 = vld [vmem:[%s1 + $0x10] sm:$0xff]
  %v473 = vld [vmem:[%s1 + $0x18] sm:$0xff]
  %v474 = vld [vmem:[%s1 + $0x20] sm:$0xff]
  %v475 = vld [vmem:[%s1 + $0x28] sm:$0xff]
  %v476 = vld [vmem:[%s1 + $0x30] sm:$0xff]
  %v477 = vld [vmem:[%s1 + $0x38] sm:$0xff]
  %v478 = vld [vmem:[%s1 + $0x40] sm:$0xff]
  %v479 = vld [vmem:[%s1 + $0x48] sm:$0xff]
  %v480 = vld [vmem:[%s1 + $0x50] sm:$0xff]
  %v481 = vld [vmem:[%s1 + $0x58] sm:$0xff]
  %v482 = vld [vmem:[%s1 + $0x60] sm:$0xff]
  %v483 = vld [vmem:[%s1 + $0x68] sm:$0xff]
  %v484 = vld [vmem:[%s1 + $0x70] sm:$0xff]
  %v485 = vld [vmem:[%s1 + $0x78] sm:$0xff]
  %v486 = vpack.c.bf16 %v471, %v470
  %v487 = vpack.c.bf16 %v473, %v472
  %v488 = vpack.c.bf16 %v475, %v474
  %v489 = vpack.c.bf16 %v477, %v476
  %v490 = vpack.c.bf16 %v479, %v478
  %v491 = vpack.c.bf16 %v481, %v480
  %v492 = vpack.c.bf16 %v483, %v482
  %v493 = vpack.c.bf16 %v485, %v484
  %v494 = vld [vmem:[%s5] sm:$0xf]
  %v495 = vld [vmem:[%s5 + $0x4] sm:$0xf]
  %v496 = vperm.slane %v469, 0
  %v499 = vunpack.c.l.b16 %v494
  %v500 = vunpack.c.l.b16 %v495
  %v501 = vpack.c.b16 %v500, %v499
  %vm503 = vcmask 130048
  %v505 = vsel %vm503, %v486, 0
  %v508 = vsel %vm503, %v487, 0
  %v511 = vsel %vm503, %v488, 0
  %v514 = vsel %vm503, %v489, 0
  %v517 = vsel %vm503, %v490, 0
  %v520 = vsel %vm503, %v491, 0
  %v523 = vsel %vm503, %v492, 0
  %v526 = vsel %vm503, %v493, 0
  %528 = vmatpush.bf16.msra.mxu0 0
  %529 = vmatpush.bf16.msra.mxu0 0
  %530 = vmatpush.bf16.msra.mxu0 0
  %531 = vmatpush.bf16.msra.mxu0 0
  %532 = vmatpush.bf16.msra.mxu0 0
  %533 = vmatpush.bf16.msra.mxu0 0
  %534 = vmatpush.bf16.msra.mxu0 0
  %535 = vmatpush.bf16.msra.mxu0 %v501
  %536 = vmatmul.bf16.gmra.mxu0 %v505
  %v537 = vpop.f32.mrf.mxu0
  %v538 = vadd.f32 %v496, %v537
  %v539 = vpop.f32.mrf.mxu0
  %v540 = vadd.f32 %v496, %v539
  %541 = vmatmul.bf16.gmra.mxu0 %v508
  %v542 = vpop.f32.mrf.mxu0
  %v543 = vadd.f32 %v496, %v542
  %v544 = vpop.f32.mrf.mxu0
  %v545 = vadd.f32 %v496, %v544
  %546 = vmatmul.bf16.gmra.mxu0 %v511
  %v547 = vpop.f32.mrf.mxu0
  %v548 = vadd.f32 %v496, %v547
  %v549 = vpop.f32.mrf.mxu0
  %v550 = vadd.f32 %v496, %v549
  %551 = vmatmul.bf16.gmra.mxu0 %v514
  %v552 = vpop.f32.mrf.mxu0
  %v553 = vadd.f32 %v496, %v552
  %v554 = vpop.f32.mrf.mxu0
  %v555 = vadd.f32 %v496, %v554
  %556 = vmatmul.bf16.gmra.mxu0 %v517
  %v557 = vpop.f32.mrf.mxu0
  %v558 = vadd.f32 %v496, %v557
  %v559 = vpop.f32.mrf.mxu0
  %v560 = vadd.f32 %v496, %v559
  %561 = vmatmul.bf16.gmra.mxu0 %v520
  %v562 = vpop.f32.mrf.mxu0
  %v563 = vadd.f32 %v496, %v562
  %v564 = vpop.f32.mrf.mxu0
  %v565 = vadd.f32 %v496, %v564
  %566 = vmatmul.bf16.gmra.mxu0 %v523
  %v567 = vpop.f32.mrf.mxu0
  %v568 = vadd.f32 %v496, %v567
  %v569 = vpop.f32.mrf.mxu0
  %v570 = vadd.f32 %v496, %v569
  %571 = vmatmul.bf16.gmra.mxu0 %v526
  %v572 = vpop.f32.mrf.mxu0
  %v573 = vadd.f32 %v496, %v572
  %v574 = vpop.f32.mrf.mxu0
  %v575 = vadd.f32 %v496, %v574
  %576 = vdwg.mxu0
  %577 = vst [vmem:[%s10 + $0x200] sm:$0xff] %v538
  %578 = vst [vmem:[%s10 + $0x208] sm:$0xff] %v540
  %579 = vst [vmem:[%s10 + $0x210] sm:$0xff] %v543
  %580 = vst [vmem:[%s10 + $0x218] sm:$0xff] %v545
  %581 = vst [vmem:[%s10 + $0x220] sm:$0xff] %v548
  %582 = vst [vmem:[%s10 + $0x228] sm:$0xff] %v550
  %583 = vst [vmem:[%s10 + $0x230] sm:$0xff] %v553
  %584 = vst [vmem:[%s10 + $0x238] sm:$0xff] %v555
  %585 = vst [vmem:[%s10 + $0x240] sm:$0xff] %v558
  %586 = vst [vmem:[%s10 + $0x248] sm:$0xff] %v560
  %587 = vst [vmem:[%s10 + $0x250] sm:$0xff] %v563
  %588 = vst [vmem:[%s10 + $0x258] sm:$0xff] %v565
  %589 = vst [vmem:[%s10 + $0x260] sm:$0xff] %v568
  %590 = vst [vmem:[%s10 + $0x268] sm:$0xff] %v570
  %591 = vst [vmem:[%s10 + $0x270] sm:$0xff] %v573
  %592 = vst [vmem:[%s10 + $0x278] sm:$0xff] %v575
  %v593 = vld [vmem:[%s9 + $0x2] sm:$0x1]
  %v594 = vld [vmem:[%s2] sm:$0xff]
  %v595 = vld [vmem:[%s2 + $0x8] sm:$0xff]
  %v596 = vld [vmem:[%s2 + $0x10] sm:$0xff]
  %v597 = vld [vmem:[%s2 + $0x18] sm:$0xff]
  %v598 = vpack.c.bf16 %v595, %v594
  %v599 = vpack.c.bf16 %v597, %v596
  %v600 = vld [vmem:[%s6] sm:$0xf]
  %v601 = vld [vmem:[%s6 + $0x4] sm:$0xf]
  %v602 = vld [vmem:[%s6 + $0x8] sm:$0xf]
  %v603 = vld [vmem:[%s6 + $0xc] sm:$0xf]
  %v604 = vperm.slane %v593, 0
  %v609 = vunpack.c.l.b16 %v600
  %v610 = vunpack.c.l.b16 %v601
  %v611 = vunpack.c.l.b16 %v602
  %v612 = vunpack.c.l.b16 %v603
  %v613 = vpack.c.b16 %v610, %v609
  %v614 = vpack.c.b16 %v612, %v611
  %vm617 = vcmask 261120
  %v619 = vsel %vm617, %v598, 0
  %v622 = vsel %vm617, %v599, 0
  %624 = vmatpush.bf16.msra.mxu0 0
  %625 = vmatpush.bf16.msra.mxu0 0
  %626 = vmatpush.bf16.msra.mxu0 0
  %627 = vmatpush.bf16.msra.mxu0 0
  %628 = vmatpush.bf16.msra.mxu0 0
  %629 = vmatpush.bf16.msra.mxu0 0
  %630 = vmatpush.bf16.msra.mxu0 %v614
  %631 = vmatpush.bf16.msra.mxu0 %v613
  %632 = vmatmul.bf16.gmra.mxu0 %v619
  %v633 = vpop.f32.mrf.mxu0
  %v634 = vadd.f32 %v604, %v633
  %v635 = vpop.f32.mrf.mxu0
  %v636 = vadd.f32 %v604, %v635
  %637 = vmatmul.bf16.gmra.mxu0 %v622
  %v638 = vpop.f32.mrf.mxu0
  %v639 = vadd.f32 %v604, %v638
  %v640 = vpop.f32.mrf.mxu0
  %v641 = vadd.f32 %v604, %v640
  %642 = vdwg.mxu0
  %643 = vst [vmem:[%s10 + $0x280] sm:$0xff] %v634
  %644 = vst [vmem:[%s10 + $0x288] sm:$0xff] %v636
  %645 = vst [vmem:[%s10 + $0x290] sm:$0xff] %v639
  %646 = vst [vmem:[%s10 + $0x298] sm:$0xff] %v641
  %v647 = vld [vmem:[%s9 + $0x3] sm:$0x1]
  %v648 = vld [vmem:[%s3] sm:$0xff]
  %v649 = vld [vmem:[%s3 + $0x8] sm:$0xff]
  %v650 = vld [vmem:[%s3 + $0x10] sm:$0xff]
  %v651 = vpack.c.bf16 %v648, %v648
  %v652 = vpack.c.bf16 %v649, %v649
  %v653 = vpack.c.bf16 %v650, %v650
  %v654 = vld [vmem:[%s7] sm:$0xf]
  %v655 = vld [vmem:[%s7 + $0x4] sm:$0xf]
  %v656 = vld [vmem:[%s7 + $0x8] sm:$0xf]
  %v657 = vld [vmem:[%s7 + $0xc] sm:$0xf]
  %v658 = vld [vmem:[%s7 + $0x10] sm:$0xf]
  %v659 = vld [vmem:[%s7 + $0x14] sm:$0xf]
  %v660 = vld [vmem:[%s7 + $0x18] sm:$0xf]
  %v661 = vld [vmem:[%s7 + $0x1c] sm:$0xf]
  %v662 = vld [vmem:[%s7 + $0x20] sm:$0xf]
  %v663 = vld [vmem:[%s7 + $0x24] sm:$0xf]
  %v664 = vld [vmem:[%s7 + $0x28] sm:$0xf]
  %v665 = vld [vmem:[%s7 + $0x2c] sm:$0xf]
  %v666 = vld [vmem:[%s7 + $0x30] sm:$0xf]
  %v667 = vld [vmem:[%s7 + $0x34] sm:$0xf]
  %v668 = vld [vmem:[%s7 + $0x38] sm:$0xf]
  %v669 = vld [vmem:[%s7 + $0x3c] sm:$0xf]
  %v670 = vld [vmem:[%s7 + $0x40] sm:$0xf]
  %v671 = vld [vmem:[%s7 + $0x44] sm:$0xf]
  %v672 = vld [vmem:[%s7 + $0x48] sm:$0xf]
  %v673 = vld [vmem:[%s7 + $0x4c] sm:$0xf]
  %v674 = vld [vmem:[%s7 + $0x50] sm:$0xf]
  %v675 = vld [vmem:[%s7 + $0x54] sm:$0xf]
  %v676 = vld [vmem:[%s7 + $0x58] sm:$0xf]
  %v677 = vld [vmem:[%s7 + $0x5c] sm:$0xf]
  %v678 = vld [vmem:[%s7 + $0x60] sm:$0xf]
  %v679 = vld [vmem:[%s7 + $0x64] sm:$0xf]
  %v680 = vld [vmem:[%s7 + $0x68] sm:$0xf]
  %v681 = vld [vmem:[%s7 + $0x6c] sm:$0xf]
  %v682 = vld [vmem:[%s7 + $0x70] sm:$0xf]
  %v683 = vld [vmem:[%s7 + $0x74] sm:$0xf]
  %v684 = vld [vmem:[%s7 + $0x78] sm:$0xf]
  %v685 = vld [vmem:[%s7 + $0x7c] sm:$0xf]
  %v686 = vld [vmem:[%s7 + $0x80] sm:$0xf]
  %v687 = vld [vmem:[%s7 + $0x84] sm:$0xf]
  %v688 = vld [vmem:[%s7 + $0x88] sm:$0xf]
  %v689 = vld [vmem:[%s7 + $0x8c] sm:$0xf]
  %v690 = vperm.slane %v647, 0
  %v727 = vunpack.c.l.b16 %v654
  %v728 = vunpack.c.l.b16 %v655
  %v729 = vunpack.c.l.b16 %v656
  %v730 = vunpack.c.l.b16 %v657
  %v731 = vunpack.c.l.b16 %v658
  %v732 = vunpack.c.l.b16 %v659
  %v733 = vunpack.c.l.b16 %v660
  %v734 = vunpack.c.l.b16 %v661
  %v735 = vunpack.c.l.b16 %v662
  %v736 = vunpack.c.l.b16 %v663
  %v737 = vunpack.c.l.b16 %v664
  %v738 = vunpack.c.l.b16 %v665
  %v739 = vunpack.c.l.b16 %v666
  %v740 = vunpack.c.l.b16 %v667
  %v741 = vunpack.c.l.b16 %v668
  %v742 = vunpack.c.l.b16 %v669
  %v743 = vunpack.c.l.b16 %v670
  %v744 = vunpack.c.l.b16 %v671
  %v745 = vunpack.c.l.b16 %v672
  %v746 = vunpack.c.l.b16 %v673
  %v747 = vunpack.c.l.b16 %v674
  %v748 = vunpack.c.l.b16 %v675
  %v749 = vunpack.c.l.b16 %v676
  %v750 = vunpack.c.l.b16 %v677
  %v751 = vunpack.c.l.b16 %v678
  %v752 = vunpack.c.l.b16 %v679
  %v753 = vunpack.c.l.b16 %v680
  %v754 = vunpack.c.l.b16 %v681
  %v755 = vunpack.c.l.b16 %v682
  %v756 = vunpack.c.l.b16 %v683
  %v757 = vunpack.c.l.b16 %v684
  %v758 = vunpack.c.l.b16 %v685
  %v759 = vunpack.c.l.b16 %v686
  %v760 = vunpack.c.l.b16 %v687
  %v761 = vunpack.c.l.b16 %v688
  %v762 = vunpack.c.l.b16 %v689
  %v763 = vpack.c.b16 %v728, %v727
  %v764 = vpack.c.b16 %v730, %v729
  %v765 = vpack.c.b16 %v732, %v731
  %v766 = vpack.c.b16 %v734, %v733
  %v767 = vpack.c.b16 %v736, %v735
  %v768 = vpack.c.b16 %v738, %v737
  %v769 = vpack.c.b16 %v740, %v739
  %v770 = vpack.c.b16 %v742, %v741
  %v771 = vpack.c.b16 %v744, %v743
  %v772 = vpack.c.b16 %v746, %v745
  %v773 = vpack.c.b16 %v748, %v747
  %v774 = vpack.c.b16 %v750, %v749
  %v775 = vpack.c.b16 %v752, %v751
  %v776 = vpack.c.b16 %v754, %v753
  %v777 = vpack.c.b16 %v756, %v755
  %v778 = vpack.c.b16 %v758, %v757
  %v779 = vpack.c.b16 %v760, %v759
  %v780 = vpack.c.b16 %v762, %v761
  %v800 = vsel %vm617, %v653, 0
  %802 = vmatpush.bf16.msra.mxu0 %v770
  %803 = vmatpush.bf16.msra.mxu0 %v769
  %804 = vmatpush.bf16.msra.mxu0 %v768
  %805 = vmatpush.bf16.msra.mxu0 %v767
  %806 = vmatpush.bf16.msra.mxu0 %v766
  %807 = vmatpush.bf16.msra.mxu0 %v765
  %808 = vmatpush.bf16.msra.mxu0 %v764
  %809 = vmatpush.bf16.msra.mxu0 %v763
  %810 = vmatmul.bf16.gmra.mxu0 %v651
  %v811 = vpop.f32.mrf.mxu0
  %v812 = vadd.f32 %v690, %v811
  %v813 = vpop.f32.mrf.mxu0
  %814 = vdwg.mxu0
  %815 = vmatpush.bf16.msra.mxu0 %v778
  %816 = vmatpush.bf16.msra.mxu0 %v777
  %817 = vmatpush.bf16.msra.mxu0 %v776
  %818 = vmatpush.bf16.msra.mxu0 %v775
  %819 = vmatpush.bf16.msra.mxu0 %v774
  %820 = vmatpush.bf16.msra.mxu0 %v773
  %821 = vmatpush.bf16.msra.mxu0 %v772
  %822 = vmatpush.bf16.msra.mxu0 %v771
  %823 = vmatmul.bf16.gmra.mxu0 %v652
  %v824 = vpop.f32.mrf.mxu0
  %v825 = vadd.f32 %v812, %v824
  %v826 = vpop.f32.mrf.mxu0
  %827 = vdwg.mxu0
  %828 = vmatpush.bf16.msra.mxu0 0
  %829 = vmatpush.bf16.msra.mxu0 0
  %830 = vmatpush.bf16.msra.mxu0 0
  %831 = vmatpush.bf16.msra.mxu0 0
  %832 = vmatpush.bf16.msra.mxu0 0
  %833 = vmatpush.bf16.msra.mxu0 0
  %834 = vmatpush.bf16.msra.mxu0 %v780
  %835 = vmatpush.bf16.msra.mxu0 %v779
  %836 = vmatmul.bf16.gmra.mxu0 %v800
  %v837 = vpop.f32.mrf.mxu0
  %v838 = vadd.f32 %v825, %v837
  %v839 = vpop.f32.mrf.mxu0
  %840 = vdwg.mxu0
  %841 = vst [vmem:[%s10 + $0x2a0] sm:$0xff] %v838
  %v842 = vld [vmem:[%s9 + $0x4] sm:$0x1]
  %v843 = vld [vmem:[%s10 + $0x2a0] sm:$0x1]
  %v844 = vpack.c.bf16 %v843, %v843
  %v845 = vld [vmem:[%s8] sm:$0xf]
  %v846 = vld [vmem:[%s8 + $0x4] sm:$0xf]
  %v847 = vld [vmem:[%s8 + $0x8] sm:$0xf]
  %v848 = vld [vmem:[%s8 + $0xc] sm:$0xf]
  %v849 = vld [vmem:[%s8 + $0x10] sm:$0xf]
  %v850 = vld [vmem:[%s8 + $0x14] sm:$0xf]
  %v851 = vld [vmem:[%s8 + $0x18] sm:$0xf]
  %v852 = vld [vmem:[%s8 + $0x1c] sm:$0xf]
  %v853 = vld [vmem:[%s8 + $0x20] sm:$0xf]
  %v854 = vld [vmem:[%s8 + $0x24] sm:$0xf]
  %v855 = vld [vmem:[%s8 + $0x28] sm:$0xf]
  %v856 = vld [vmem:[%s8 + $0x2c] sm:$0xf]
  %v857 = vld [vmem:[%s8 + $0x30] sm:$0xf]
  %v858 = vld [vmem:[%s8 + $0x34] sm:$0xf]
  %v859 = vld [vmem:[%s8 + $0x38] sm:$0xf]
  %v860 = vld [vmem:[%s8 + $0x3c] sm:$0xf]
  %v877 = vunpack.c.l.b16 %v845
  %v878 = vunpack.c.l.b16 %v846
  %v879 = vunpack.c.l.b16 %v847
  %v880 = vunpack.c.l.b16 %v848
  %v881 = vunpack.c.l.b16 %v849
  %v882 = vunpack.c.l.b16 %v850
  %v883 = vunpack.c.l.b16 %v851
  %v884 = vunpack.c.l.b16 %v852
  %v885 = vunpack.c.l.b16 %v853
  %v886 = vunpack.c.l.b16 %v854
  %v887 = vunpack.c.l.b16 %v855
  %v888 = vunpack.c.l.b16 %v856
  %v889 = vunpack.c.l.b16 %v857
  %v890 = vunpack.c.l.b16 %v858
  %v891 = vunpack.c.l.b16 %v859
  %v892 = vunpack.c.l.b16 %v860
  %v893 = vpack.c.b16 %v878, %v877
  %v894 = vpack.c.b16 %v880, %v879
  %v895 = vpack.c.b16 %v882, %v881
  %v896 = vpack.c.b16 %v884, %v883
  %v897 = vpack.c.b16 %v886, %v885
  %v898 = vpack.c.b16 %v888, %v887
  %v899 = vpack.c.b16 %v890, %v889
  %v900 = vpack.c.b16 %v892, %v891
  %909 = vmatpush.bf16.msra.mxu0 %v900
  %910 = vmatpush.bf16.msra.mxu0 %v899
  %911 = vmatpush.bf16.msra.mxu0 %v898
  %912 = vmatpush.bf16.msra.mxu0 %v897
  %913 = vmatpush.bf16.msra.mxu0 %v896
  %914 = vmatpush.bf16.msra.mxu0 %v895
  %915 = vmatpush.bf16.msra.mxu0 %v894
  %916 = vmatpush.bf16.msra.mxu0 %v893
  %917 = vmatmul.bf16.gmra.mxu0 %v844
  %v918 = vpop.f32.mrf.mxu0
  %v919 = vadd.f32 0.0, %v918
  %v920 = vpop.f32.mrf.mxu0
  %921 = vdwg.mxu0
  %v922 = vadd.f32 %v842, %v919
  %v923 = vld [vmem:[%s10 + $0x2a1] sm:$0x1]
  %v924 = vpack.c.bf16 %v923, %v923
  %s925 = scalar_lea.vmem %s8, 64
  %v926 = vld [vmem:[%s925] sm:$0xf]
  %v927 = vld [vmem:[%s925 + $0x4] sm:$0xf]
  %v928 = vld [vmem:[%s925 + $0x8] sm:$0xf]
  %v929 = vld [vmem:[%s925 + $0xc] sm:$0xf]
  %v930 = vld [vmem:[%s925 + $0x10] sm:$0xf]
  %v931 = vld [vmem:[%s925 + $0x14] sm:$0xf]
  %v932 = vld [vmem:[%s925 + $0x18] sm:$0xf]
  %v933 = vld [vmem:[%s925 + $0x1c] sm:$0xf]
  %v934 = vld [vmem:[%s925 + $0x20] sm:$0xf]
  %v935 = vld [vmem:[%s925 + $0x24] sm:$0xf]
  %v936 = vld [vmem:[%s925 + $0x28] sm:$0xf]
  %v937 = vld [vmem:[%s925 + $0x2c] sm:$0xf]
  %v938 = vld [vmem:[%s925 + $0x30] sm:$0xf]
  %v939 = vld [vmem:[%s925 + $0x34] sm:$0xf]
  %v940 = vld [vmem:[%s925 + $0x38] sm:$0xf]
  %v941 = vld [vmem:[%s925 + $0x3c] sm:$0xf]
  %v958 = vunpack.c.l.b16 %v926
  %v959 = vunpack.c.l.b16 %v927
  %v960 = vunpack.c.l.b16 %v928
  %v961 = vunpack.c.l.b16 %v929
  %v962 = vunpack.c.l.b16 %v930
  %v963 = vunpack.c.l.b16 %v931
  %v964 = vunpack.c.l.b16 %v932
  %v965 = vunpack.c.l.b16 %v933
  %v966 = vunpack.c.l.b16 %v934
  %v967 = vunpack.c.l.b16 %v935
  %v968 = vunpack.c.l.b16 %v936
  %v969 = vunpack.c.l.b16 %v937
  %v970 = vunpack.c.l.b16 %v938
  %v971 = vunpack.c.l.b16 %v939
  %v972 = vunpack.c.l.b16 %v940
  %v973 = vunpack.c.l.b16 %v941
  %v974 = vpack.c.b16 %v959, %v958
  %v975 = vpack.c.b16 %v961, %v960
  %v976 = vpack.c.b16 %v963, %v962
  %v977 = vpack.c.b16 %v965, %v964
  %v978 = vpack.c.b16 %v967, %v966
  %v979 = vpack.c.b16 %v969, %v968
  %v980 = vpack.c.b16 %v971, %v970
  %v981 = vpack.c.b16 %v973, %v972
  %990 = vmatpush.bf16.msra.mxu0 %v981
  %991 = vmatpush.bf16.msra.mxu0 %v980
  %992 = vmatpush.bf16.msra.mxu0 %v979
  %993 = vmatpush.bf16.msra.mxu0 %v978
  %994 = vmatpush.bf16.msra.mxu0 %v977
  %995 = vmatpush.bf16.msra.mxu0 %v976
  %996 = vmatpush.bf16.msra.mxu0 %v975
  %997 = vmatpush.bf16.msra.mxu0 %v974
  %998 = vmatmul.bf16.gmra.mxu0 %v924
  %v999 = vpop.f32.mrf.mxu0
  %v1000 = vadd.f32 0.0, %v999
  %v1001 = vpop.f32.mrf.mxu0
  %1002 = vdwg.mxu0
  %v1003 = vadd.f32 %v922, %v1000
  %v1004 = vld [vmem:[%s10 + $0x2a2] sm:$0x1]
  %v1005 = vpack.c.bf16 %v1004, %v1004
  %s1006 = scalar_lea.vmem %s8, 128
  %v1007 = vld [vmem:[%s1006] sm:$0xf]
  %v1008 = vld [vmem:[%s1006 + $0x4] sm:$0xf]
  %v1009 = vld [vmem:[%s1006 + $0x8] sm:$0xf]
  %v1010 = vld [vmem:[%s1006 + $0xc] sm:$0xf]
  %v1011 = vld [vmem:[%s1006 + $0x10] sm:$0xf]
  %v1012 = vld [vmem:[%s1006 + $0x14] sm:$0xf]
  %v1013 = vld [vmem:[%s1006 + $0x18] sm:$0xf]
  %v1014 = vld [vmem:[%s1006 + $0x1c] sm:$0xf]
  %v1015 = vld [vmem:[%s1006 + $0x20] sm:$0xf]
  %v1016 = vld [vmem:[%s1006 + $0x24] sm:$0xf]
  %v1017 = vld [vmem:[%s1006 + $0x28] sm:$0xf]
  %v1018 = vld [vmem:[%s1006 + $0x2c] sm:$0xf]
  %v1019 = vld [vmem:[%s1006 + $0x30] sm:$0xf]
  %v1020 = vld [vmem:[%s1006 + $0x34] sm:$0xf]
  %v1021 = vld [vmem:[%s1006 + $0x38] sm:$0xf]
  %v1022 = vld [vmem:[%s1006 + $0x3c] sm:$0xf]
  %v1039 = vunpack.c.l.b16 %v1007
  %v1040 = vunpack.c.l.b16 %v1008
  %v1041 = vunpack.c.l.b16 %v1009
  %v1042 = vunpack.c.l.b16 %v1010
  %v1043 = vunpack.c.l.b16 %v1011
  %v1044 = vunpack.c.l.b16 %v1012
  %v1045 = vunpack.c.l.b16 %v1013
  %v1046 = vunpack.c.l.b16 %v1014
  %v1047 = vunpack.c.l.b16 %v1015
  %v1048 = vunpack.c.l.b16 %v1016
  %v1049 = vunpack.c.l.b16 %v1017
  %v1050 = vunpack.c.l.b16 %v1018
  %v1051 = vunpack.c.l.b16 %v1019
  %v1052 = vunpack.c.l.b16 %v1020
  %v1053 = vunpack.c.l.b16 %v1021
  %v1054 = vunpack.c.l.b16 %v1022
  %v1055 = vpack.c.b16 %v1040, %v1039
  %v1056 = vpack.c.b16 %v1042, %v1041
  %v1057 = vpack.c.b16 %v1044, %v1043
  %v1058 = vpack.c.b16 %v1046, %v1045
  %v1059 = vpack.c.b16 %v1048, %v1047
  %v1060 = vpack.c.b16 %v1050, %v1049
  %v1061 = vpack.c.b16 %v1052, %v1051
  %v1062 = vpack.c.b16 %v1054, %v1053
  %1071 = vmatpush.bf16.msra.mxu0 %v1062
  %1072 = vmatpush.bf16.msra.mxu0 %v1061
  %1073 = vmatpush.bf16.msra.mxu0 %v1060
  %1074 = vmatpush.bf16.msra.mxu0 %v1059
  %1075 = vmatpush.bf16.msra.mxu0 %v1058
  %1076 = vmatpush.bf16.msra.mxu0 %v1057
  %1077 = vmatpush.bf16.msra.mxu0 %v1056
  %1078 = vmatpush.bf16.msra.mxu0 %v1055
  %1079 = vmatmul.bf16.gmra.mxu0 %v1005
  %v1080 = vpop.f32.mrf.mxu0
  %v1081 = vadd.f32 0.0, %v1080
  %v1082 = vpop.f32.mrf.mxu0
  %1083 = vdwg.mxu0
  %v1084 = vadd.f32 %v1003, %v1081
  %v1085 = vld [vmem:[%s10 + $0x2a3] sm:$0x1]
  %v1086 = vpack.c.bf16 %v1085, %v1085
  %s1087 = scalar_lea.vmem %s8, 192
  %v1088 = vld [vmem:[%s1087] sm:$0xf]
  %v1089 = vld [vmem:[%s1087 + $0x4] sm:$0xf]
  %v1090 = vld [vmem:[%s1087 + $0x8] sm:$0xf]
  %v1091 = vld [vmem:[%s1087 + $0xc] sm:$0xf]
  %v1092 = vld [vmem:[%s1087 + $0x10] sm:$0xf]
  %v1093 = vld [vmem:[%s1087 + $0x14] sm:$0xf]
  %v1094 = vld [vmem:[%s1087 + $0x18] sm:$0xf]
  %v1095 = vld [vmem:[%s1087 + $0x1c] sm:$0xf]
  %v1096 = vld [vmem:[%s1087 + $0x20] sm:$0xf]
  %v1097 = vld [vmem:[%s1087 + $0x24] sm:$0xf]
  %v1098 = vld [vmem:[%s1087 + $0x28] sm:$0xf]
  %v1099 = vld [vmem:[%s1087 + $0x2c] sm:$0xf]
  %v1100 = vld [vmem:[%s1087 + $0x30] sm:$0xf]
  %v1101 = vld [vmem:[%s1087 + $0x34] sm:$0xf]
  %v1102 = vld [vmem:[%s1087 + $0x38] sm:$0xf]
  %v1103 = vld [vmem:[%s1087 + $0x3c] sm:$0xf]
  %v1120 = vunpack.c.l.b16 %v1088
  %v1121 = vunpack.c.l.b16 %v1089
  %v1122 = vunpack.c.l.b16 %v1090
  %v1123 = vunpack.c.l.b16 %v1091
  %v1124 = vunpack.c.l.b16 %v1092
  %v1125 = vunpack.c.l.b16 %v1093
  %v1126 = vunpack.c.l.b16 %v1094
  %v1127 = vunpack.c.l.b16 %v1095
  %v1128 = vunpack.c.l.b16 %v1096
  %v1129 = vunpack.c.l.b16 %v1097
  %v1130 = vunpack.c.l.b16 %v1098
  %v1131 = vunpack.c.l.b16 %v1099
  %v1132 = vunpack.c.l.b16 %v1100
  %v1133 = vunpack.c.l.b16 %v1101
  %v1134 = vunpack.c.l.b16 %v1102
  %v1135 = vunpack.c.l.b16 %v1103
  %v1136 = vpack.c.b16 %v1121, %v1120
  %v1137 = vpack.c.b16 %v1123, %v1122
  %v1138 = vpack.c.b16 %v1125, %v1124
  %v1139 = vpack.c.b16 %v1127, %v1126
  %v1140 = vpack.c.b16 %v1129, %v1128
  %v1141 = vpack.c.b16 %v1131, %v1130
  %v1142 = vpack.c.b16 %v1133, %v1132
  %v1143 = vpack.c.b16 %v1135, %v1134
  %1152 = vmatpush.bf16.msra.mxu0 %v1143
  %1153 = vmatpush.bf16.msra.mxu0 %v1142
  %1154 = vmatpush.bf16.msra.mxu0 %v1141
  %1155 = vmatpush.bf16.msra.mxu0 %v1140
  %1156 = vmatpush.bf16.msra.mxu0 %v1139
  %1157 = vmatpush.bf16.msra.mxu0 %v1138
  %1158 = vmatpush.bf16.msra.mxu0 %v1137
  %1159 = vmatpush.bf16.msra.mxu0 %v1136
  %1160 = vmatmul.bf16.gmra.mxu0 %v1086
  %v1161 = vpop.f32.mrf.mxu0
  %v1162 = vadd.f32 0.0, %v1161
  %v1163 = vpop.f32.mrf.mxu0
  %1164 = vdwg.mxu0
  %v1165 = vadd.f32 %v1084, %v1162
  %1166 = vst [vmem:[%s10 + $0x2a8] sm:$0x1] %v1165
  %v1167 = vld [vmem:[%s9 + $0x4] sm:$0x1]
  %v1168 = vld [vmem:[%s10 + $0x2a4] sm:$0x1]
  %v1169 = vpack.c.bf16 %v1168, %v1168
  %v1170 = vld [vmem:[%s8] sm:$0xf]
  %v1171 = vld [vmem:[%s8 + $0x4] sm:$0xf]
  %v1172 = vld [vmem:[%s8 + $0x8] sm:$0xf]
  %v1173 = vld [vmem:[%s8 + $0xc] sm:$0xf]
  %v1174 = vld [vmem:[%s8 + $0x10] sm:$0xf]
  %v1175 = vld [vmem:[%s8 + $0x14] sm:$0xf]
  %v1176 = vld [vmem:[%s8 + $0x18] sm:$0xf]
  %v1177 = vld [vmem:[%s8 + $0x1c] sm:$0xf]
  %v1178 = vld [vmem:[%s8 + $0x20] sm:$0xf]
  %v1179 = vld [vmem:[%s8 + $0x24] sm:$0xf]
  %v1180 = vld [vmem:[%s8 + $0x28] sm:$0xf]
  %v1181 = vld [vmem:[%s8 + $0x2c] sm:$0xf]
  %v1182 = vld [vmem:[%s8 + $0x30] sm:$0xf]
  %v1183 = vld [vmem:[%s8 + $0x34] sm:$0xf]
  %v1184 = vld [vmem:[%s8 + $0x38] sm:$0xf]
  %v1185 = vld [vmem:[%s8 + $0x3c] sm:$0xf]
  %v1202 = vunpack.c.l.b16 %v1170
  %v1203 = vunpack.c.l.b16 %v1171
  %v1204 = vunpack.c.l.b16 %v1172
  %v1205 = vunpack.c.l.b16 %v1173
  %v1206 = vunpack.c.l.b16 %v1174
  %v1207 = vunpack.c.l.b16 %v1175
  %v1208 = vunpack.c.l.b16 %v1176
  %v1209 = vunpack.c.l.b16 %v1177
  %v1210 = vunpack.c.l.b16 %v1178
  %v1211 = vunpack.c.l.b16 %v1179
  %v1212 = vunpack.c.l.b16 %v1180
  %v1213 = vunpack.c.l.b16 %v1181
  %v1214 = vunpack.c.l.b16 %v1182
  %v1215 = vunpack.c.l.b16 %v1183
  %v1216 = vunpack.c.l.b16 %v1184
  %v1217 = vunpack.c.l.b16 %v1185
  %v1218 = vpack.c.b16 %v1203, %v1202
  %v1219 = vpack.c.b16 %v1205, %v1204
  %v1220 = vpack.c.b16 %v1207, %v1206
  %v1221 = vpack.c.b16 %v1209, %v1208
  %v1222 = vpack.c.b16 %v1211, %v1210
  %v1223 = vpack.c.b16 %v1213, %v1212
  %v1224 = vpack.c.b16 %v1215, %v1214
  %v1225 = vpack.c.b16 %v1217, %v1216
  %1234 = vmatpush.bf16.msra.mxu0 %v1225
  %1235 = vmatpush.bf16.msra.mxu0 %v1224
  %1236 = vmatpush.bf16.msra.mxu0 %v1223
  %1237 = vmatpush.bf16.msra.mxu0 %v1222
  %1238 = vmatpush.bf16.msra.mxu0 %v1221
  %1239 = vmatpush.bf16.msra.mxu0 %v1220
  %1240 = vmatpush.bf16.msra.mxu0 %v1219
  %1241 = vmatpush.bf16.msra.mxu0 %v1218
  %1242 = vmatmul.bf16.gmra.mxu0 %v1169
  %v1243 = vpop.f32.mrf.mxu0
  %v1244 = vadd.f32 0.0, %v1243
  %v1245 = vpop.f32.mrf.mxu0
  %1246 = vdwg.mxu0
  %v1247 = vadd.f32 %v1167, %v1244
  %v1248 = vld [vmem:[%s10 + $0x2a5] sm:$0x1]
  %v1249 = vpack.c.bf16 %v1248, %v1248
  %v1250 = vld [vmem:[%s925] sm:$0xf]
  %v1251 = vld [vmem:[%s925 + $0x4] sm:$0xf]
  %v1252 = vld [vmem:[%s925 + $0x8] sm:$0xf]
  %v1253 = vld [vmem:[%s925 + $0xc] sm:$0xf]
  %v1254 = vld [vmem:[%s925 + $0x10] sm:$0xf]
  %v1255 = vld [vmem:[%s925 + $0x14] sm:$0xf]
  %v1256 = vld [vmem:[%s925 + $0x18] sm:$0xf]
  %v1257 = vld [vmem:[%s925 + $0x1c] sm:$0xf]
  %v1258 = vld [vmem:[%s925 + $0x20] sm:$0xf]
  %v1259 = vld [vmem:[%s925 + $0x24] sm:$0xf]
  %v1260 = vld [vmem:[%s925 + $0x28] sm:$0xf]
  %v1261 = vld [vmem:[%s925 + $0x2c] sm:$0xf]
  %v1262 = vld [vmem:[%s925 + $0x30] sm:$0xf]
  %v1263 = vld [vmem:[%s925 + $0x34] sm:$0xf]
  %v1264 = vld [vmem:[%s925 + $0x38] sm:$0xf]
  %v1265 = vld [vmem:[%s925 + $0x3c] sm:$0xf]
  %v1282 = vunpack.c.l.b16 %v1250
  %v1283 = vunpack.c.l.b16 %v1251
  %v1284 = vunpack.c.l.b16 %v1252
  %v1285 = vunpack.c.l.b16 %v1253
  %v1286 = vunpack.c.l.b16 %v1254
  %v1287 = vunpack.c.l.b16 %v1255
  %v1288 = vunpack.c.l.b16 %v1256
  %v1289 = vunpack.c.l.b16 %v1257
  %v1290 = vunpack.c.l.b16 %v1258
  %v1291 = vunpack.c.l.b16 %v1259
  %v1292 = vunpack.c.l.b16 %v1260
  %v1293 = vunpack.c.l.b16 %v1261
  %v1294 = vunpack.c.l.b16 %v1262
  %v1295 = vunpack.c.l.b16 %v1263
  %v1296 = vunpack.c.l.b16 %v1264
  %v1297 = vunpack.c.l.b16 %v1265
  %v1298 = vpack.c.b16 %v1283, %v1282
  %v1299 = vpack.c.b16 %v1285, %v1284
  %v1300 = vpack.c.b16 %v1287, %v1286
  %v1301 = vpack.c.b16 %v1289, %v1288
  %v1302 = vpack.c.b16 %v1291, %v1290
  %v1303 = vpack.c.b16 %v1293, %v1292
  %v1304 = vpack.c.b16 %v1295, %v1294
  %v1305 = vpack.c.b16 %v1297, %v1296
  %1314 = vmatpush.bf16.msra.mxu0 %v1305
  %1315 = vmatpush.bf16.msra.mxu0 %v1304
  %1316 = vmatpush.bf16.msra.mxu0 %v1303
  %1317 = vmatpush.bf16.msra.mxu0 %v1302
  %1318 = vmatpush.bf16.msra.mxu0 %v1301
  %1319 = vmatpush.bf16.msra.mxu0 %v1300
  %1320 = vmatpush.bf16.msra.mxu0 %v1299
  %1321 = vmatpush.bf16.msra.mxu0 %v1298
  %1322 = vmatmul.bf16.gmra.mxu0 %v1249
  %v1323 = vpop.f32.mrf.mxu0
  %v1324 = vadd.f32 0.0, %v1323
  %v1325 = vpop.f32.mrf.mxu0
  %1326 = vdwg.mxu0
  %v1327 = vadd.f32 %v1247, %v1324
  %v1328 = vld [vmem:[%s10 + $0x2a6] sm:$0x1]
  %v1329 = vpack.c.bf16 %v1328, %v1328
  %v1330 = vld [vmem:[%s1006] sm:$0xf]
  %v1331 = vld [vmem:[%s1006 + $0x4] sm:$0xf]
  %v1332 = vld [vmem:[%s1006 + $0x8] sm:$0xf]
  %v1333 = vld [vmem:[%s1006 + $0xc] sm:$0xf]
  %v1334 = vld [vmem:[%s1006 + $0x10] sm:$0xf]
  %v1335 = vld [vmem:[%s1006 + $0x14] sm:$0xf]
  %v1336 = vld [vmem:[%s1006 + $0x18] sm:$0xf]
  %v1337 = vld [vmem:[%s1006 + $0x1c] sm:$0xf]
  %v1338 = vld [vmem:[%s1006 + $0x20] sm:$0xf]
  %v1339 = vld [vmem:[%s1006 + $0x24] sm:$0xf]
  %v1340 = vld [vmem:[%s1006 + $0x28] sm:$0xf]
  %v1341 = vld [vmem:[%s1006 + $0x2c] sm:$0xf]
  %v1342 = vld [vmem:[%s1006 + $0x30] sm:$0xf]
  %v1343 = vld [vmem:[%s1006 + $0x34] sm:$0xf]
  %v1344 = vld [vmem:[%s1006 + $0x38] sm:$0xf]
  %v1345 = vld [vmem:[%s1006 + $0x3c] sm:$0xf]
  %v1362 = vunpack.c.l.b16 %v1330
  %v1363 = vunpack.c.l.b16 %v1331
  %v1364 = vunpack.c.l.b16 %v1332
  %v1365 = vunpack.c.l.b16 %v1333
  %v1366 = vunpack.c.l.b16 %v1334
  %v1367 = vunpack.c.l.b16 %v1335
  %v1368 = vunpack.c.l.b16 %v1336
  %v1369 = vunpack.c.l.b16 %v1337
  %v1370 = vunpack.c.l.b16 %v1338
  %v1371 = vunpack.c.l.b16 %v1339
  %v1372 = vunpack.c.l.b16 %v1340
  %v1373 = vunpack.c.l.b16 %v1341
  %v1374 = vunpack.c.l.b16 %v1342
  %v1375 = vunpack.c.l.b16 %v1343
  %v1376 = vunpack.c.l.b16 %v1344
  %v1377 = vunpack.c.l.b16 %v1345
  %v1378 = vpack.c.b16 %v1363, %v1362
  %v1379 = vpack.c.b16 %v1365, %v1364
  %v1380 = vpack.c.b16 %v1367, %v1366
  %v1381 = vpack.c.b16 %v1369, %v1368
  %v1382 = vpack.c.b16 %v1371, %v1370
  %v1383 = vpack.c.b16 %v1373, %v1372
  %v1384 = vpack.c.b16 %v1375, %v1374
  %v1385 = vpack.c.b16 %v1377, %v1376
  %1394 = vmatpush.bf16.msra.mxu0 %v1385
  %1395 = vmatpush.bf16.msra.mxu0 %v1384
  %1396 = vmatpush.bf16.msra.mxu0 %v1383
  %1397 = vmatpush.bf16.msra.mxu0 %v1382
  %1398 = vmatpush.bf16.msra.mxu0 %v1381
  %1399 = vmatpush.bf16.msra.mxu0 %v1380
  %1400 = vmatpush.bf16.msra.mxu0 %v1379
  %1401 = vmatpush.bf16.msra.mxu0 %v1378
  %1402 = vmatmul.bf16.gmra.mxu0 %v1329
  %v1403 = vpop.f32.mrf.mxu0
  %v1404 = vadd.f32 0.0, %v1403
  %v1405 = vpop.f32.mrf.mxu0
  %1406 = vdwg.mxu0
  %v1407 = vadd.f32 %v1327, %v1404
  %v1408 = vld [vmem:[%s10 + $0x2a7] sm:$0x1]
  %v1409 = vpack.c.bf16 %v1408, %v1408
  %v1410 = vld [vmem:[%s1087] sm:$0xf]
  %v1411 = vld [vmem:[%s1087 + $0x4] sm:$0xf]
  %v1412 = vld [vmem:[%s1087 + $0x8] sm:$0xf]
  %v1413 = vld [vmem:[%s1087 + $0xc] sm:$0xf]
  %v1414 = vld [vmem:[%s1087 + $0x10] sm:$0xf]
  %v1415 = vld [vmem:[%s1087 + $0x14] sm:$0xf]
  %v1416 = vld [vmem:[%s1087 + $0x18] sm:$0xf]
  %v1417 = vld [vmem:[%s1087 + $0x1c] sm:$0xf]
  %v1418 = vld [vmem:[%s1087 + $0x20] sm:$0xf]
  %v1419 = vld [vmem:[%s1087 + $0x24] sm:$0xf]
  %v1420 = vld [vmem:[%s1087 + $0x28] sm:$0xf]
  %v1421 = vld [vmem:[%s1087 + $0x2c] sm:$0xf]
  %v1422 = vld [vmem:[%s1087 + $0x30] sm:$0xf]
  %v1423 = vld [vmem:[%s1087 + $0x34] sm:$0xf]
  %v1424 = vld [vmem:[%s1087 + $0x38] sm:$0xf]
  %v1425 = vld [vmem:[%s1087 + $0x3c] sm:$0xf]
  %v1442 = vunpack.c.l.b16 %v1410
  %v1443 = vunpack.c.l.b16 %v1411
  %v1444 = vunpack.c.l.b16 %v1412
  %v1445 = vunpack.c.l.b16 %v1413
  %v1446 = vunpack.c.l.b16 %v1414
  %v1447 = vunpack.c.l.b16 %v1415
  %v1448 = vunpack.c.l.b16 %v1416
  %v1449 = vunpack.c.l.b16 %v1417
  %v1450 = vunpack.c.l.b16 %v1418
  %v1451 = vunpack.c.l.b16 %v1419
  %v1452 = vunpack.c.l.b16 %v1420
  %v1453 = vunpack.c.l.b16 %v1421
  %v1454 = vunpack.c.l.b16 %v1422
  %v1455 = vunpack.c.l.b16 %v1423
  %v1456 = vunpack.c.l.b16 %v1424
  %v1457 = vunpack.c.l.b16 %v1425
  %v1458 = vpack.c.b16 %v1443, %v1442
  %v1459 = vpack.c.b16 %v1445, %v1444
  %v1460 = vpack.c.b16 %v1447, %v1446
  %v1461 = vpack.c.b16 %v1449, %v1448
  %v1462 = vpack.c.b16 %v1451, %v1450
  %v1463 = vpack.c.b16 %v1453, %v1452
  %v1464 = vpack.c.b16 %v1455, %v1454
  %v1465 = vpack.c.b16 %v1457, %v1456
  %1474 = vmatpush.bf16.msra.mxu0 %v1465
  %1475 = vmatpush.bf16.msra.mxu0 %v1464
  %1476 = vmatpush.bf16.msra.mxu0 %v1463
  %1477 = vmatpush.bf16.msra.mxu0 %v1462
  %1478 = vmatpush.bf16.msra.mxu0 %v1461
  %1479 = vmatpush.bf16.msra.mxu0 %v1460
  %1480 = vmatpush.bf16.msra.mxu0 %v1459
  %1481 = vmatpush.bf16.msra.mxu0 %v1458
  %1482 = vmatmul.bf16.gmra.mxu0 %v1409
  %v1483 = vpop.f32.mrf.mxu0
  %v1484 = vadd.f32 0.0, %v1483
  %v1485 = vpop.f32.mrf.mxu0
  %1486 = vdwg.mxu0
  %v1487 = vadd.f32 %v1407, %v1484
  %1488 = vst [vmem:[%s10 + $0x2a9] sm:$0x1] %v1487
  %v1489 = vld [vmem:[%s10 + $0x2a8] sm:$0x3]
  %vm1490 = vcmask 1041408
  %v1491 = vsel %vm1490, %v1489, 0.0
  %v1492 = vrot.slane %v1491, 4
  %v1493 = vadd.f32 %v1491, %v1492
  %v1494 = vrot.slane %v1493, 2
  %v1495 = vadd.f32 %v1493, %v1494
  %v1496 = vrot.slane %v1495, 1
  %v1497 = vadd.f32 %v1495, %v1496
  %v1498 = vmul.f32 %v1497, 0.5
  %v1499 = vmul.f32 %v1489, %v1489
  %v1500 = vsel %vm1490, %v1499, 0.0
  %v1501 = vrot.slane %v1500, 4
  %v1502 = vadd.f32 %v1500, %v1501
  %v1503 = vrot.slane %v1502, 2
  %v1504 = vadd.f32 %v1502, %v1503
  %v1505 = vrot.slane %v1504, 1
  %v1506 = vadd.f32 %v1504, %v1505
  %v1507 = vmul.f32 %v1506, 0.5
  %v1508 = vmul.f32 %v1498, %v1498
  %v1509 = vsub.f32 %v1507, %v1508
  %v1510 = vld [vmem:[%s9 + $0x5] sm:$0x1]
  %v1511 = vadd.f32 %v1509, 4e-05
  %v1512 = vrsqrt.pop %v1511
  %v1513 = vmul.f32 %v1512, %v1511
  %v1514 = vmul.f32 %v1513, %v1512
  %v1515 = vmul.f32 0.5, %v1514
  %v1516 = vsub.f32 1.5, %v1515
  %v1517 = vmul.f32 %v1512, %v1516
  %vm1518 = vweird.f32 %v1511
  %vm1519 = vweird.f32 %v1512
  %vm1520 = vmor %vm1518, %vm1519
  %v1521 = vsel %vm1520, %v1512, %v1517
  %v1522 = vmul.f32 %v1510, %v1521
  %v1523 = vld [vmem:[%s9 + $0x6] sm:$0x1]
  %v1524 = vmul.f32 %v1498, %v1522
  %v1525 = vsub.f32 %v1523, %v1524
  %v1526 = vperm.slane %v1522, 0
  %v1527 = vmul.f32 %v1489, %v1526
  %v1528 = vperm.slane %v1525, 0
  %v1529 = vadd.f32 %v1527, %v1528
  %v1530 = vmax.f32 %v1529, 0.0
  %1531 = vst [vmem:[%s10 + $0x2a8] sm:$0x3] %v1530
  %1532 = vst [vmem:[%s10 + $0x2aa] sm:$0x3f] 0.0
  // Predicated region
  $region42: #{bifpn_forward.3} parent=0 // pred_check
    _
  $region43: #{bifpn_forward.3} parent=0 // pred_check_branch
    %1534 = sbr.rel (0) target = $region45
  $region44: #{bifpn_forward.3} parent=0 // pred_region
    _
  $region45: #{bifpn_forward.3} parent=0 // pred_fallthru
    _
  // Predicated region
  $region46: #{bifpn_forward.3} parent=0 // pred_check
    _
  $region47: #{bifpn_forward.3} parent=0 // pred_check_branch
    %1536 = sbr.rel (0) target = $region49
  $region48: #{bifpn_forward.3} parent=0 // pred_region
    _
  $region49: #{bifpn_forward.3} parent=0 // pred_fallthru
    _

// kernel: bifpn_forward.4
$region0: #{bifpn_forward.4}
  #allocation0 [shape = 'u32[]', space=smem, size = 0x4, offset = 0x4, fixed_abs, tag = 'smem constant byte address 0x4 - core index']
  #allocation1 [shape = 'u32[72,128]{1,0:T(1,128)}', space=vmem, size = 0x9000, scoped, tag = 'internal scratch']
  #allocation2 [shape = 'f32[128,128]{1,0:T(8,128)}', space=vmem, size = 0x10000, scoped, tag = 'scratch operand']
  #allocation3 [shape = 'f32[512,128]{1,0:T(8,128)}', space=vmem, size = 0x40000, scoped, tag = 'scratch operand']
  %s0 = inlined_call_operand.vmem [shape: f32[20], index: 0, kind: input, shape index: {}]
  %s1 = inlined_call_operand.vmem [shape: f32[688,128], index: 1, kind: input, shape index: {}]
  %s2 = inlined_call_operand.vmem [shape: bf16[8,128,128], index: 2, kind: input, shape index: {}]
  %s3 = inlined_call_operand.vmem [shape: f32[16,128], index: 3, kind: input, shape index: {}]
  %s4 = inlined_call_operand.vmem [shape: f32[688,128], index: 4, kind: output, shape index: {}]
  %s5 = sld [smem:[#allocation0]]
  $region30: #{bifpn_forward.4} parent=0
    _
  %s7 = ssub.s32 1, %s5
  %s8 = scalar_select 0, %s7, %s5
  $region1: #{bifpn_forward.4} parent=0
    #allocation4 [shape = 'u8[512]{0}', space=smem, size = 0x200, scoped, tag = 'input window, operand 0, single buffered']
    #allocation5 [shape = 's32[1]{0}', space=sflag, size = 0x4, scoped, tag = 'scoped memory for bifpn_forward.4']
    %9 = vsyncpa [#allocation5], 0
    // Predicated region
    $region2: #{bifpn_forward.4} parent=1 // pred_check
      _
    $region3: #{bifpn_forward.4} parent=1 // pred_check_branch
      %11 = sbr.rel (0) target = $region5
    $region4: #{bifpn_forward.4} parent=1 // pred_region
      %13 = vsyncadd [#allocation5], 0
      %s15 = sshll.u32 %s0, 4
      %s16 = int_to_ptr.vmem [resolvable:$true] %s15
      %18 = dma.vmem_to_smem %s16, 16, [#allocation4], [#allocation5]
    $region5: #{bifpn_forward.4} parent=1 // pred_fallthru
      _
    // Predicated region
    $region6: #{bifpn_forward.4} parent=1 // pred_check
      _
    $region7: #{bifpn_forward.4} parent=1 // pred_check_branch
      %20 = sbr.rel (0) target = $region9
    $region8: #{bifpn_forward.4} parent=1 // pred_region
      _
    $region9: #{bifpn_forward.4} parent=1 // pred_fallthru
      _
    // Predicated region
    $region10: #{bifpn_forward.4} parent=1 // pred_check
      _
    $region11: #{bifpn_forward.4} parent=1 // pred_check_branch
      %22 = sbr.rel (0) target = $region13
    $region12: #{bifpn_forward.4} parent=1 // pred_region
      _
    $region13: #{bifpn_forward.4} parent=1 // pred_fallthru
      _
    // Predicated region
    $region14: #{bifpn_forward.4} parent=1 // pred_check
      _
    $region15: #{bifpn_forward.4} parent=1 // pred_check_branch
      %24 = sbr.rel (0) target = $region17
    $region16: #{bifpn_forward.4} parent=1 // pred_region
      _
    $region17: #{bifpn_forward.4} parent=1 // pred_fallthru
      _
    // Predicated region
    $region18: #{bifpn_forward.4} parent=1 // pred_check
      _
    $region19: #{bifpn_forward.4} parent=1 // pred_check_branch
      %26 = sbr.rel (0) target = $region21
    $region20: #{bifpn_forward.4} parent=1 // pred_region
      %28 = dma.done [#allocation5], 16
    $region21: #{bifpn_forward.4} parent=1 // pred_fallthru
      _
    %29 = sfence
    %v30 = vld [vmem:[%s1 + $0x2a8] sm:$0x3]
    %s31 = sld [smem:[#allocation4]]
    %v32 = vld [vmem:[%s1 + $0x2a0] sm:$0xff]
    %v33 = vstv %s31
    %v34 = vmul.f32 %v33, %v32
    %s35 = sld [smem:[#allocation4 + $0x4]]
    %v36 = vld [vmem:[%s1 + $0x2a8] sm:$0x1]
    %v37 = vperm.slane %v36, 0
    %38 = vst [vmem:[#allocation3] sm:$0x3] %v37
    %39 = vst [vmem:[#allocation3 + $0x2] sm:$0x3] %v37
    %v40 = vld [vmem:[%s1 + $0x2a9] sm:$0x1]
    %v41 = vperm.slane %v40, 0
    %42 = vst [vmem:[#allocation3 + $0x4] sm:$0x3] %v41
    %43 = vst [vmem:[#allocation3 + $0x6] sm:$0x3] %v41
    %v44 = vld [vmem:[#allocation3] sm:$0xff]
    %v45 = vstv %s35
    %v46 = vmul.f32 %v45, %v44
    %v47 = vadd.f32 %v34, %v46
    %v48 = vpack.c.bf16 %v47, %v47
    %v49 = vld [vmem:[%s2] sm:$0xf]
    %v50 = vld [vmem:[%s2 + $0x4] sm:$0xf]
    %v51 = vld [vmem:[%s2 + $0x8] sm:$0xf]
    %v52 = vld [vmem:[%s2 + $0xc] sm:$0xf]
    %v53 = vld [vmem:[%s2 + $0x10] sm:$0xf]
    %v54 = vld [vmem:[%s2 + $0x14] sm:$0xf]
    %v55 = vld [vmem:[%s2 + $0x18] sm:$0xf]
    %v56 = vld [vmem:[%s2 + $0x1c] sm:$0xf]
    %v57 = vld [vmem:[%s2 + $0x20] sm:$0xf]
    %v58 = vld [vmem:[%s2 + $0x24] sm:$0xf]
    %v59 = vld [vmem:[%s2 + $0x28] sm:$0xf]
    %v60 = vld [vmem:[%s2 + $0x2c] sm:$0xf]
    %v61 = vld [vmem:[%s2 + $0x30] sm:$0xf]
    %v62 = vld [vmem:[%s2 + $0x34] sm:$0xf]
    %v63 = vld [vmem:[%s2 + $0x38] sm:$0xf]
    %v64 = vld [vmem:[%s2 + $0x3c] sm:$0xf]
    %v81 = vunpack.c.l.b16 %v49
    %v82 = vunpack.c.l.b16 %v50
    %v83 = vunpack.c.l.b16 %v51
    %v84 = vunpack.c.l.b16 %v52
    %v85 = vunpack.c.l.b16 %v53
    %v86 = vunpack.c.l.b16 %v54
    %v87 = vunpack.c.l.b16 %v55
    %v88 = vunpack.c.l.b16 %v56
    %v89 = vunpack.c.l.b16 %v57
    %v90 = vunpack.c.l.b16 %v58
    %v91 = vunpack.c.l.b16 %v59
    %v92 = vunpack.c.l.b16 %v60
    %v93 = vunpack.c.l.b16 %v61
    %v94 = vunpack.c.l.b16 %v62
    %v95 = vunpack.c.l.b16 %v63
    %v96 = vunpack.c.l.b16 %v64
    %v97 = vpack.c.b16 %v82, %v81
    %v98 = vpack.c.b16 %v84, %v83
    %v99 = vpack.c.b16 %v86, %v85
    %v100 = vpack.c.b16 %v88, %v87
    %v101 = vpack.c.b16 %v90, %v89
    %v102 = vpack.c.b16 %v92, %v91
    %v103 = vpack.c.b16 %v94, %v93
    %v104 = vpack.c.b16 %v96, %v95
    %113 = vmatpush.bf16.msra.mxu0 %v104
    %114 = vmatpush.bf16.msra.mxu0 %v103
    %115 = vmatpush.bf16.msra.mxu0 %v102
    %116 = vmatpush.bf16.msra.mxu0 %v101
    %117 = vmatpush.bf16.msra.mxu0 %v100
    %118 = vmatpush.bf16.msra.mxu0 %v99
    %119 = vmatpush.bf16.msra.mxu0 %v98
    %120 = vmatpush.bf16.msra.mxu0 %v97
    %121 = vmatmul.bf16.gmra.mxu0 %v48
    %v122 = vpop.f32.mrf.mxu0
    %v123 = vadd.f32 0.0, %v122
    %v124 = vpop.f32.mrf.mxu0
    %125 = vdwg.mxu0
    %v126 = vrot.slane %v123, 4
    %v127 = vadd.f32 %v123, %v126
    %v128 = vrot.slane %v127, 2
    %v129 = vadd.f32 %v127, %v128
    %v130 = vrot.slane %v129, 1
    %v131 = vadd.f32 %v129, %v130
    %v132 = vmul.f32 %v131, 0.125
    %v133 = vmul.f32 %v123, %v123
    %v134 = vrot.slane %v133, 4
    %v135 = vadd.f32 %v133, %v134
    %v136 = vrot.slane %v135, 2
    %v137 = vadd.f32 %v135, %v136
    %v138 = vrot.slane %v137, 1
    %v139 = vadd.f32 %v137, %v138
    %v140 = vmul.f32 %v139, 0.125
    %v141 = vmul.f32 %v132, %v132
    %v142 = vsub.f32 %v140, %v141
    %v143 = vld [vmem:[%s3] sm:$0x1]
    %v144 = vadd.f32 %v142, 4e-05
    %v145 = vrsqrt.pop %v144
    %v146 = vmul.f32 %v145, %v144
    %v147 = vmul.f32 %v146, %v145
    %v148 = vmul.f32 0.5, %v147
    %v149 = vsub.f32 1.5, %v148
    %v150 = vmul.f32 %v145, %v149
    %vm151 = vweird.f32 %v144
    %vm152 = vweird.f32 %v145
    %vm153 = vmor %vm151, %vm152
    %v154 = vsel %vm153, %v145, %v150
    %v155 = vmul.f32 %v143, %v154
    %v156 = vld [vmem:[%s3 + $0x1] sm:$0x1]
    %v157 = vmul.f32 %v132, %v155
    %v158 = vsub.f32 %v156, %v157
    %v159 = vperm.slane %v155, 0
    %v160 = vmul.f32 %v123, %v159
    %v161 = vperm.slane %v158, 0
    %v162 = vadd.f32 %v160, %v161
    %v163 = vmax.f32 %v162, 0.0
    %164 = vst [vmem:[#allocation2] sm:$0xff] %v163
    %s165 = sld [smem:[#allocation4 + $0x1]]
    %v166 = vld [vmem:[%s1 + $0x280] sm:$0xff]
    %v167 = vld [vmem:[%s1 + $0x288] sm:$0xff]
    %v168 = vld [vmem:[%s1 + $0x290] sm:$0xff]
    %v169 = vld [vmem:[%s1 + $0x298] sm:$0xff]
    %v170 = vstv %s165
    %v171 = vmul.f32 %v170, %v166
    %v172 = vmul.f32 %v170, %v167
    %v173 = vmul.f32 %v170, %v168
    %v174 = vmul.f32 %v170, %v169
    %s175 = sld [smem:[#allocation4 + $0x5]]
    %v176 = vld [vmem:[#allocation2] sm:$0x1]
    %v177 = vperm.slane %v176, 0
    %178 = vst [vmem:[#allocation3] sm:$0x3] %v177
    %179 = vst [vmem:[#allocation3 + $0x4] sm:$0x3] %v177
    %v180 = vld [vmem:[#allocation2 + $0x1] sm:$0x1]
    %v181 = vperm.slane %v180, 0
    %182 = vst [vmem:[#allocation3 + $0x2] sm:$0x3] %v181
    %183 = vst [vmem:[#allocation3 + $0x6] sm:$0x3] %v181
    %v184 = vld [vmem:[#allocation2 + $0x2] sm:$0x1]
    %v185 = vperm.slane %v184, 0
    %186 = vst [vmem:[#allocation3 + $0x8] sm:$0x3] %v185
    %187 = vst [vmem:[#allocation3 + $0xc] sm:$0x3] %v185
    %v188 = vld [vmem:[#allocation2 + $0x3] sm:$0x1]
    %v189 = vperm.slane %v188, 0
    %190 = vst [vmem:[#allocation3 + $0xa] sm:$0x3] %v189
    %191 = vst [vmem:[#allocation3 + $0xe] sm:$0x3] %v189
    %v192 = vld [vmem:[#allocation2 + $0x4] sm:$0x1]
    %v193 = vperm.slane %v192, 0
    %194 = vst [vmem:[#allocation3 + $0x10] sm:$0x3] %v193
    %195 = vst [vmem:[#allocation3 + $0x14] sm:$0x3] %v193
    %v196 = vld [vmem:[#allocation2 + $0x5] sm:$0x1]
    %v197 = vperm.slane %v196, 0
    %198 = vst [vmem:[#allocation3 + $0x12] sm:$0x3] %v197
    %199 = vst [vmem:[#allocation3 + $0x16] sm:$0x3] %v197
    %v200 = vld [vmem:[#allocation2 + $0x6] sm:$0x1]
    %v201 = vperm.slane %v200, 0
    %202 = vst [vmem:[#allocation3 + $0x18] sm:$0x3] %v201
    %203 = vst [vmem:[#allocation3 + $0x1c] sm:$0x3] %v201
    %v204 = vld [vmem:[#allocation2 + $0x7] sm:$0x1]
    %v205 = vperm.slane %v204, 0
    %206 = vst [vmem:[#allocation3 + $0x1a] sm:$0x3] %v205
    %207 = vst [vmem:[#allocation3 + $0x1e] sm:$0x3] %v205
    %v208 = vld [vmem:[#allocation3] sm:$0xff]
    %v209 = vld [vmem:[#allocation3 + $0x8] sm:$0xff]
    %v210 = vld [vmem:[#allocation3 + $0x10] sm:$0xff]
    %v211 = vld [vmem:[#allocation3 + $0x18] sm:$0xff]
    %v212 = vstv %s175
    %v213 = vmul.f32 %v212, %v208
    %v214 = vmul.f32 %v212, %v209
    %v215 = vmul.f32 %v212, %v210
    %v216 = vmul.f32 %v212, %v211
    %v217 = vadd.f32 %v171, %v213
    %v218 = vadd.f32 %v172, %v214
    %v219 = vadd.f32 %v173, %v215
    %v220 = vadd.f32 %v174, %v216
    %v221 = vpack.c.bf16 %v218, %v217
    %v222 = vpack.c.bf16 %v220, %v219
    %s223 = scalar_lea.vmem %s2, 64
    %v224 = vld [vmem:[%s223] sm:$0xf]
    %v225 = vld [vmem:[%s223 + $0x4] sm:$0xf]
    %v226 = vld [vmem:[%s223 + $0x8] sm:$0xf]
    %v227 = vld [vmem:[%s223 + $0xc] sm:$0xf]
    %v228 = vld [vmem:[%s223 + $0x10] sm:$0xf]
    %v229 = vld [vmem:[%s223 + $0x14] sm:$0xf]
    %v230 = vld [vmem:[%s223 + $0x18] sm:$0xf]
    %v231 = vld [vmem:[%s223 + $0x1c] sm:$0xf]
    %v232 = vld [vmem:[%s223 + $0x20] sm:$0xf]
    %v233 = vld [vmem:[%s223 + $0x24] sm:$0xf]
    %v234 = vld [vmem:[%s223 + $0x28] sm:$0xf]
    %v235 = vld [vmem:[%s223 + $0x2c] sm:$0xf]
    %v236 = vld [vmem:[%s223 + $0x30] sm:$0xf]
    %v237 = vld [vmem:[%s223 + $0x34] sm:$0xf]
    %v238 = vld [vmem:[%s223 + $0x38] sm:$0xf]
    %v239 = vld [vmem:[%s223 + $0x3c] sm:$0xf]
    %v256 = vunpack.c.l.b16 %v224
    %v257 = vunpack.c.l.b16 %v225
    %v258 = vunpack.c.l.b16 %v226
    %v259 = vunpack.c.l.b16 %v227
    %v260 = vunpack.c.l.b16 %v228
    %v261 = vunpack.c.l.b16 %v229
    %v262 = vunpack.c.l.b16 %v230
    %v263 = vunpack.c.l.b16 %v231
    %v264 = vunpack.c.l.b16 %v232
    %v265 = vunpack.c.l.b16 %v233
    %v266 = vunpack.c.l.b16 %v234
    %v267 = vunpack.c.l.b16 %v235
    %v268 = vunpack.c.l.b16 %v236
    %v269 = vunpack.c.l.b16 %v237
    %v270 = vunpack.c.l.b16 %v238
    %v271 = vunpack.c.l.b16 %v239
    %v272 = vpack.c.b16 %v257, %v256
    %v273 = vpack.c.b16 %v259, %v258
    %v274 = vpack.c.b16 %v261, %v260
    %v275 = vpack.c.b16 %v263, %v262
    %v276 = vpack.c.b16 %v265, %v264
    %v277 = vpack.c.b16 %v267, %v266
    %v278 = vpack.c.b16 %v269, %v268
    %v279 = vpack.c.b16 %v271, %v270
    %288 = vmatpush.bf16.msra.mxu0 %v279
    %289 = vmatpush.bf16.msra.mxu0 %v278
    %290 = vmatpush.bf16.msra.mxu0 %v277
    %291 = vmatpush.bf16.msra.mxu0 %v276
    %292 = vmatpush.bf16.msra.mxu0 %v275
    %293 = vmatpush.bf16.msra.mxu0 %v274
    %294 = vmatpush.bf16.msra.mxu0 %v273
    %295 = vmatpush.bf16.msra.mxu0 %v272
    %296 = vmatmul.bf16.gmra.mxu0 %v221
    %v297 = vpop.f32.mrf.mxu0
    %v298 = vadd.f32 0.0, %v297
    %v299 = vpop.f32.mrf.mxu0
    %v300 = vadd.f32 0.0, %v299
    %301 = vmatmul.bf16.gmra.mxu0 %v222
    %v302 = vpop.f32.mrf.mxu0
    %v303 = vadd.f32 0.0, %v302
    %v304 = vpop.f32.mrf.mxu0
    %v305 = vadd.f32 0.0, %v304
    %306 = vdwg.mxu0
    %v307 = vadd.f32 %v298, %v300
    %v308 = vadd.f32 %v307, %v303
    %v309 = vadd.f32 %v308, %v305
    %v310 = vrot.slane %v309, 4
    %v311 = vadd.f32 %v309, %v310
    %v312 = vrot.slane %v311, 2
    %v313 = vadd.f32 %v311, %v312
    %v314 = vrot.slane %v313, 1
    %v315 = vadd.f32 %v313, %v314
    %v316 = vmul.f32 %v315, 0.03125
    %v317 = vmul.f32 %v298, %v298
    %v318 = vmul.f32 %v300, %v300
    %v319 = vmul.f32 %v303, %v303
    %v320 = vmul.f32 %v305, %v305
    %v321 = vadd.f32 %v317, %v318
    %v322 = vadd.f32 %v321, %v319
    %v323 = vadd.f32 %v322, %v320
    %v324 = vrot.slane %v323, 4
    %v325 = vadd.f32 %v323, %v324
    %v326 = vrot.slane %v325, 2
    %v327 = vadd.f32 %v325, %v326
    %v328 = vrot.slane %v327, 1
    %v329 = vadd.f32 %v327, %v328
    %v330 = vmul.f32 %v329, 0.03125
    %v331 = vmul.f32 %v316, %v316
    %v332 = vsub.f32 %v330, %v331
    %v333 = vld [vmem:[%s3 + $0x2] sm:$0x1]
    %v334 = vadd.f32 %v332, 4e-05
    %v335 = vrsqrt.pop %v334
    %v336 = vmul.f32 %v335, %v334
    %v337 = vmul.f32 %v336, %v335
    %v338 = vmul.f32 0.5, %v337
    %v339 = vsub.f32 1.5, %v338
    %v340 = vmul.f32 %v335, %v339
    %vm341 = vweird.f32 %v334
    %vm342 = vweird.f32 %v335
    %vm343 = vmor %vm341, %vm342
    %v344 = vsel %vm343, %v335, %v340
    %v345 = vmul.f32 %v333, %v344
    %v346 = vld [vmem:[%s3 + $0x3] sm:$0x1]
    %v347 = vmul.f32 %v316, %v345
    %v348 = vsub.f32 %v346, %v347
    %v349 = vperm.slane %v345, 0
    %v350 = vmul.f32 %v298, %v349
    %v351 = vmul.f32 %v300, %v349
    %v352 = vmul.f32 %v303, %v349
    %v353 = vmul.f32 %v305, %v349
    %v354 = vperm.slane %v348, 0
    %v355 = vadd.f32 %v350, %v354
    %v356 = vadd.f32 %v351, %v354
    %v357 = vadd.f32 %v352, %v354
    %v358 = vadd.f32 %v353, %v354
    %v359 = vmax.f32 %v355, 0.0
    %v360 = vmax.f32 %v356, 0.0
    %v361 = vmax.f32 %v357, 0.0
    %v362 = vmax.f32 %v358, 0.0
    %363 = vst [vmem:[#allocation2] sm:$0xff] %v359
    %364 = vst [vmem:[#allocation2 + $0x8] sm:$0xff] %v360
    %365 = vst [vmem:[#allocation2 + $0x10] sm:$0xff] %v361
    %366 = vst [vmem:[#allocation2 + $0x18] sm:$0xff] %v362
    %s367 = sld [smem:[#allocation4 + $0x2]]
    %v368 = vld [vmem:[%s1 + $0x200] sm:$0xff]
    %v369 = vld [vmem:[%s1 + $0x208] sm:$0xff]
    %v370 = vld [vmem:[%s1 + $0x210] sm:$0xff]
    %v371 = vld [vmem:[%s1 + $0x218] sm:$0xff]
    %v372 = vld [vmem:[%s1 + $0x220] sm:$0xff]
    %v373 = vld [vmem:[%s1 + $0x228] sm:$0xff]
    %v374 = vld [vmem:[%s1 + $0x230] sm:$0xff]
    %v375 = vld [vmem:[%s1 + $0x238] sm:$0xff]
    %v376 = vld [vmem:[%s1 + $0x240] sm:$0xff]
    %v377 = vld [vmem:[%s1 + $0x248] sm:$0xff]
    %v378 = vld [vmem:[%s1 + $0x250] sm:$0xff]
    %v379 = vld [vmem:[%s1 + $0x258] sm:$0xff]
    %v380 = vld [vmem:[%s1 + $0x260] sm:$0xff]
    %v381 = vld [vmem:[%s1 + $0x268] sm:$0xff]
    %v382 = vld [vmem:[%s1 + $0x270] sm:$0xff]
    %v383 = vld [vmem:[%s1 + $0x278] sm:$0xff]
    %v384 = vstv %s367
    %v385 = vmul.f32 %v384, %v368
    %v386 = vmul.f32 %v384, %v369
    %v387 = vmul.f32 %v384, %v370
    %v388 = vmul.f32 %v384, %v371
    %v389 = vmul.f32 %v384, %v372
    %v390 = vmul.f32 %v384, %v373
    %v391 = vmul.f32 %v384, %v374
    %v392 = vmul.f32 %v384, %v375
    %v393 = vmul.f32 %v384, %v376
    %v394 = vmul.f32 %v384, %v377
    %v395 = vmul.f32 %v384, %v378
    %v396 = vmul.f32 %v384, %v379
    %v397 = vmul.f32 %v384, %v380
    %v398 = vmul.f32 %v384, %v381
    %v399 = vmul.f32 %v384, %v382
    %v400 = vmul.f32 %v384, %v383
    %s401 = sld [smem:[#allocation4 + $0x6]]
    %v402 = vld [vmem:[#allocation2] sm:$0x1]
    %v403 = vperm.slane %v402, 0
    %404 = vst [vmem:[#allocation3] sm:$0x3] %v403
    %405 = vst [vmem:[#allocation3 + $0x8] sm:$0x3] %v403
    %v406 = vld [vmem:[#allocation2 + $0x1] sm:$0x1]
    %v407 = vperm.slane %v406, 0
    %408 = vst [vmem:[#allocation3 + $0x2] sm:$0x3] %v407
    %409 = vst [vmem:[#allocation3 + $0xa] sm:$0x3] %v407
    %v410 = vld [vmem:[#allocation2 + $0x2] sm:$0x1]
    %v411 = vperm.slane %v410, 0
    %412 = vst [vmem:[#allocation3 + $0x4] sm:$0x3] %v411
    %413 = vst [vmem:[#allocation3 + $0xc] sm:$0x3] %v411
    %v414 = vld [vmem:[#allocation2 + $0x3] sm:$0x1]
    %v415 = vperm.slane %v414, 0
    %416 = vst [vmem:[#allocation3 + $0x6] sm:$0x3] %v415
    %417 = vst [vmem:[#allocation3 + $0xe] sm:$0x3] %v415
    %v418 = vld [vmem:[#allocation2 + $0x4] sm:$0x1]
    %v419 = vperm.slane %v418, 0
    %420 = vst [vmem:[#allocation3 + $0x10] sm:$0x3] %v419
    %421 = vst [vmem:[#allocation3 + $0x18] sm:$0x3] %v419
    %v422 = vld [vmem:[#allocation2 + $0x5] sm:$0x1]
    %v423 = vperm.slane %v422, 0
    %424 = vst [vmem:[#allocation3 + $0x12] sm:$0x3] %v423
    %425 = vst [vmem:[#allocation3 + $0x1a] sm:$0x3] %v423
    %v426 = vld [vmem:[#allocation2 + $0x6] sm:$0x1]
    %v427 = vperm.slane %v426, 0
    %428 = vst [vmem:[#allocation3 + $0x14] sm:$0x3] %v427
    %429 = vst [vmem:[#allocation3 + $0x1c] sm:$0x3] %v427
    %v430 = vld [vmem:[#allocation2 + $0x7] sm:$0x1]
    %v431 = vperm.slane %v430, 0
    %432 = vst [vmem:[#allocation3 + $0x16] sm:$0x3] %v431
    %433 = vst [vmem:[#allocation3 + $0x1e] sm:$0x3] %v431
    %v434 = vld [vmem:[#allocation2 + $0x8] sm:$0x1]
    %v435 = vperm.slane %v434, 0
    %436 = vst [vmem:[#allocation3 + $0x20] sm:$0x3] %v435
    %437 = vst [vmem:[#allocation3 + $0x28] sm:$0x3] %v435
    %v438 = vld [vmem:[#allocation2 + $0x9] sm:$0x1]
    %v439 = vperm.slane %v438, 0
    %440 = vst [vmem:[#allocation3 + $0x22] sm:$0x3] %v439
    %441 = vst [vmem:[#allocation3 + $0x2a] sm:$0x3] %v439
    %v442 = vld [vmem:[#allocation2 + $0xa] sm:$0x1]
    %v443 = vperm.slane %v442, 0
    %444 = vst [vmem:[#allocation3 + $0x24] sm:$0x3] %v443
    %445 = vst [vmem:[#allocation3 + $0x2c] sm:$0x3] %v443
    %v446 = vld [vmem:[#allocation2 + $0xb] sm:$0x1]
    %v447 = vperm.slane %v446, 0
    %448 = vst [vmem:[#allocation3 + $0x26] sm:$0x3] %v447
    %449 = vst [vmem:[#allocation3 + $0x2e] sm:$0x3] %v447
    %v450 = vld [vmem:[#allocation2 + $0xc] sm:$0x1]
    %v451 = vperm.slane %v450, 0
    %452 = vst [vmem:[#allocation3 + $0x30] sm:$0x3] %v451
    %453 = vst [vmem:[#allocation3 + $0x38] sm:$0x3] %v451
    %v454 = vld [vmem:[#allocation2 + $0xd] sm:$0x1]
    %v455 = vperm.slane %v454, 0
    %456 = vst [vmem:[#allocation3 + $0x32] sm:$0x3] %v455
    %457 = vst [vmem:[#allocation3 + $0x3a] sm:$0x3] %v455
    %v458 = vld [vmem:[#allocation2 + $0xe] sm:$0x1]
    %v459 = vperm.slane %v458, 0
    %460 = vst [vmem:[#allocation3 + $0x34] sm:$0x3] %v459
    %461 = vst [vmem:[#allocation3 + $0x3c] sm:$0x3] %v459
    %v462 = vld [vmem:[#allocation2 + $0xf] sm:$0x1]
    %v463 = vperm.slane %v462, 0
    %464 = vst [vmem:[#allocation3 + $0x36] sm:$0x3] %v463
    %465 = vst [vmem:[#allocation3 + $0x3e] sm:$0x3] %v463
    %v466 = vld [vmem:[#allocation2 + $0x10] sm:$0x1]
    %v467 = vperm.slane %v466, 0
    %468 = vst [vmem:[#allocation3 + $0x40] sm:$0x3] %v467
    %469 = vst [vmem:[#allocation3 + $0x48] sm:$0x3] %v467
    %v470 = vld [vmem:[#allocation2 + $0x11] sm:$0x1]
    %v471 = vperm.slane %v470, 0
    %472 = vst [vmem:[#allocation3 + $0x42] sm:$0x3] %v471
    %473 = vst [vmem:[#allocation3 + $0x4a] sm:$0x3] %v471
    %v474 = vld [vmem:[#allocation2 + $0x12] sm:$0x1]
    %v475 = vperm.slane %v474, 0
    %476 = vst [vmem:[#allocation3 + $0x44] sm:$0x3] %v475
    %477 = vst [vmem:[#allocation3 + $0x4c] sm:$0x3] %v475
    %v478 = vld [vmem:[#allocation2 + $0x13] sm:$0x1]
    %v479 = vperm.slane %v478, 0
    %480 = vst [vmem:[#allocation3 + $0x46] sm:$0x3] %v479
    %481 = vst [vmem:[#allocation3 + $0x4e] sm:$0x3] %v479
    %v482 = vld [vmem:[#allocation2 + $0x14] sm:$0x1]
    %v483 = vperm.slane %v482, 0
    %484 = vst [vmem:[#allocation3 + $0x50] sm:$0x3] %v483
    %485 = vst [vmem:[#allocation3 + $0x58] sm:$0x3] %v483
    %v486 = vld [vmem:[#allocation2 + $0x15] sm:$0x1]
    %v487 = vperm.slane %v486, 0
    %488 = vst [vmem:[#allocation3 + $0x52] sm:$0x3] %v487
    %489 = vst [vmem:[#allocation3 + $0x5a] sm:$0x3] %v487
    %v490 = vld [vmem:[#allocation2 + $0x16] sm:$0x1]
    %v491 = vperm.slane %v490, 0
    %492 = vst [vmem:[#allocation3 + $0x54] sm:$0x3] %v491
    %493 = vst [vmem:[#allocation3 + $0x5c] sm:$0x3] %v491
    %v494 = vld [vmem:[#allocation2 + $0x17] sm:$0x1]
    %v495 = vperm.slane %v494, 0
    %496 = vst [vmem:[#allocation3 + $0x56] sm:$0x3] %v495
    %497 = vst [vmem:[#allocation3 + $0x5e] sm:$0x3] %v495
    %v498 = vld [vmem:[#allocation2 + $0x18] sm:$0x1]
    %v499 = vperm.slane %v498, 0
    %500 = vst [vmem:[#allocation3 + $0x60] sm:$0x3] %v499
    %501 = vst [vmem:[#allocation3 + $0x68] sm:$0x3] %v499
    %v502 = vld [vmem:[#allocation2 + $0x19] sm:$0x1]
    %v503 = vperm.slane %v502, 0
    %504 = vst [vmem:[#allocation3 + $0x62] sm:$0x3] %v503
    %505 = vst [vmem:[#allocation3 + $0x6a] sm:$0x3] %v503
    %v506 = vld [vmem:[#allocation2 + $0x1a] sm:$0x1]
    %v507 = vperm.slane %v506, 0
    %508 = vst [vmem:[#allocation3 + $0x64] sm:$0x3] %v507
    %509 = vst [vmem:[#allocation3 + $0x6c] sm:$0x3] %v507
    %v510 = vld [vmem:[#allocation2 + $0x1b] sm:$0x1]
    %v511 = vperm.slane %v510, 0
    %512 = vst [vmem:[#allocation3 + $0x66] sm:$0x3] %v511
    %513 = vst [vmem:[#allocation3 + $0x6e] sm:$0x3] %v511
    %v514 = vld [vmem:[#allocation2 + $0x1c] sm:$0x1]
    %v515 = vperm.slane %v514, 0
    %516 = vst [vmem:[#allocation3 + $0x70] sm:$0x3] %v515
    %517 = vst [vmem:[#allocation3 + $0x78] sm:$0x3] %v515
    %v518 = vld [vmem:[#allocation2 + $0x1d] sm:$0x1]
    %v519 = vperm.slane %v518, 0
    %520 = vst [vmem:[#allocation3 + $0x72] sm:$0x3] %v519
    %521 = vst [vmem:[#allocation3 + $0x7a] sm:$0x3] %v519
    %v522 = vld [vmem:[#allocation2 + $0x1e] sm:$0x1]
    %v523 = vperm.slane %v522, 0
    %524 = vst [vmem:[#allocation3 + $0x74] sm:$0x3] %v523
    %525 = vst [vmem:[#allocation3 + $0x7c] sm:$0x3] %v523
    %v526 = vld [vmem:[#allocation2 + $0x1f] sm:$0x1]
    %v527 = vperm.slane %v526, 0
    %528 = vst [vmem:[#allocation3 + $0x76] sm:$0x3] %v527
    %529 = vst [vmem:[#allocation3 + $0x7e] sm:$0x3] %v527
    %v530 = vld [vmem:[#allocation3] sm:$0xff]
    %v531 = vld [vmem:[#allocation3 + $0x8] sm:$0xff]
    %v532 = vld [vmem:[#allocation3 + $0x10] sm:$0xff]
    %v533 = vld [vmem:[#allocation3 + $0x18] sm:$0xff]
    %v534 = vld [vmem:[#allocation3 + $0x20] sm:$0xff]
    %v535 = vld [vmem:[#allocation3 + $0x28] sm:$0xff]
    %v536 = vld [vmem:[#allocation3 + $0x30] sm:$0xff]
    %v537 = vld [vmem:[#allocation3 + $0x38] sm:$0xff]
    %v538 = vld [vmem:[#allocation3 + $0x40] sm:$0xff]
    %v539 = vld [vmem:[#allocation3 + $0x48] sm:$0xff]
    %v540 = vld [vmem:[#allocation3 + $0x50] sm:$0xff]
    %v541 = vld [vmem:[#allocation3 + $0x58] sm:$0xff]
    %v542 = vld [vmem:[#allocation3 + $0x60] sm:$0xff]
    %v543 = vld [vmem:[#allocation3 + $0x68] sm:$0xff]
    %v544 = vld [vmem:[#allocation3 + $0x70] sm:$0xff]
    %v545 = vld [vmem:[#allocation3 + $0x78] sm:$0xff]
    %v546 = vstv %s401
    %v547 = vmul.f32 %v546, %v530
    %v548 = vmul.f32 %v546, %v531
    %v549 = vmul.f32 %v546, %v532
    %v550 = vmul.f32 %v546, %v533
    %v551 = vmul.f32 %v546, %v534
    %v552 = vmul.f32 %v546, %v535
    %v553 = vmul.f32 %v546, %v536
    %v554 = vmul.f32 %v546, %v537
    %v555 = vmul.f32 %v546, %v538
    %v556 = vmul.f32 %v546, %v539
    %v557 = vmul.f32 %v546, %v540
    %v558 = vmul.f32 %v546, %v541
    %v559 = vmul.f32 %v546, %v542
    %v560 = vmul.f32 %v546, %v543
    %v561 = vmul.f32 %v546, %v544
    %v562 = vmul.f32 %v546, %v545
    %v563 = vadd.f32 %v385, %v547
    %v564 = vadd.f32 %v386, %v548
    %v565 = vadd.f32 %v387, %v549
    %v566 = vadd.f32 %v388, %v550
    %v567 = vadd.f32 %v389, %v551
    %v568 = vadd.f32 %v390, %v552
    %v569 = vadd.f32 %v391, %v553
    %v570 = vadd.f32 %v392, %v554
    %v571 = vadd.f32 %v393, %v555
    %v572 = vadd.f32 %v394, %v556
    %v573 = vadd.f32 %v395, %v557
    %v574 = vadd.f32 %v396, %v558
    %v575 = vadd.f32 %v397, %v559
    %v576 = vadd.f32 %v398, %v560
    %v577 = vadd.f32 %v399, %v561
    %v578 = vadd.f32 %v400, %v562
    %v579 = vpack.c.bf16 %v564, %v563
    %v580 = vpack.c.bf16 %v566, %v565
    %v581 = vpack.c.bf16 %v568, %v567
    %v582 = vpack.c.bf16 %v570, %v569
    %v583 = vpack.c.bf16 %v572, %v571
    %v584 = vpack.c.bf16 %v574, %v573
    %v585 = vpack.c.bf16 %v576, %v575
    %v586 = vpack.c.bf16 %v578, %v577
    %s587 = scalar_lea.vmem %s2, 128
    %v588 = vld [vmem:[%s587] sm:$0xf]
    %v589 = vld [vmem:[%s587 + $0x4] sm:$0xf]
    %v590 = vld [vmem:[%s587 + $0x8] sm:$0xf]
    %v591 = vld [vmem:[%s587 + $0xc] sm:$0xf]
    %v592 = vld [vmem:[%s587 + $0x10] sm:$0xf]
    %v593 = vld [vmem:[%s587 + $0x14] sm:$0xf]
    %v594 = vld [vmem:[%s587 + $0x18] sm:$0xf]
    %v595 = vld [vmem:[%s587 + $0x1c] sm:$0xf]
    %v596 = vld [vmem:[%s587 + $0x20] sm:$0xf]
    %v597 = vld [vmem:[%s587 + $0x24] sm:$0xf]
    %v598 = vld [vmem:[%s587 + $0x28] sm:$0xf]
    %v599 = vld [vmem:[%s587 + $0x2c] sm:$0xf]
    %v600 = vld [vmem:[%s587 + $0x30] sm:$0xf]
    %v601 = vld [vmem:[%s587 + $0x34] sm:$0xf]
    %v602 = vld [vmem:[%s587 + $0x38] sm:$0xf]
    %v603 = vld [vmem:[%s587 + $0x3c] sm:$0xf]
    %v620 = vunpack.c.l.b16 %v588
    %v621 = vunpack.c.l.b16 %v589
    %v622 = vunpack.c.l.b16 %v590
    %v623 = vunpack.c.l.b16 %v591
    %v624 = vunpack.c.l.b16 %v592
    %v625 = vunpack.c.l.b16 %v593
    %v626 = vunpack.c.l.b16 %v594
    %v627 = vunpack.c.l.b16 %v595
    %v628 = vunpack.c.l.b16 %v596
    %v629 = vunpack.c.l.b16 %v597
    %v630 = vunpack.c.l.b16 %v598
    %v631 = vunpack.c.l.b16 %v599
    %v632 = vunpack.c.l.b16 %v600
    %v633 = vunpack.c.l.b16 %v601
    %v634 = vunpack.c.l.b16 %v602
    %v635 = vunpack.c.l.b16 %v603
    %v636 = vpack.c.b16 %v621, %v620
    %v637 = vpack.c.b16 %v623, %v622
    %v638 = vpack.c.b16 %v625, %v624
    %v639 = vpack.c.b16 %v627, %v626
    %v640 = vpack.c.b16 %v629, %v628
    %v641 = vpack.c.b16 %v631, %v630
    %v642 = vpack.c.b16 %v633, %v632
    %v643 = vpack.c.b16 %v635, %v634
    %652 = vmatpush.bf16.msra.mxu0 %v643
    %653 = vmatpush.bf16.msra.mxu0 %v642
    %654 = vmatpush.bf16.msra.mxu0 %v641
    %655 = vmatpush.bf16.msra.mxu0 %v640
    %656 = vmatpush.bf16.msra.mxu0 %v639
    %657 = vmatpush.bf16.msra.mxu0 %v638
    %658 = vmatpush.bf16.msra.mxu0 %v637
    %659 = vmatpush.bf16.msra.mxu0 %v636
    %660 = vmatmul.bf16.gmra.mxu0 %v579
    %v661 = vpop.f32.mrf.mxu0
    %v662 = vadd.f32 0.0, %v661
    %v663 = vpop.f32.mrf.mxu0
    %v664 = vadd.f32 0.0, %v663
    %665 = vmatmul.bf16.gmra.mxu0 %v580
    %v666 = vpop.f32.mrf.mxu0
    %v667 = vadd.f32 0.0, %v666
    %v668 = vpop.f32.mrf.mxu0
    %v669 = vadd.f32 0.0, %v668
    %670 = vmatmul.bf16.gmra.mxu0 %v581
    %v671 = vpop.f32.mrf.mxu0
    %v672 = vadd.f32 0.0, %v671
    %v673 = vpop.f32.mrf.mxu0
    %v674 = vadd.f32 0.0, %v673
    %675 = vmatmul.bf16.gmra.mxu0 %v582
    %v676 = vpop.f32.mrf.mxu0
    %v677 = vadd.f32 0.0, %v676
    %v678 = vpop.f32.mrf.mxu0
    %v679 = vadd.f32 0.0, %v678
    %680 = vmatmul.bf16.gmra.mxu0 %v583
    %v681 = vpop.f32.mrf.mxu0
    %v682 = vadd.f32 0.0, %v681
    %v683 = vpop.f32.mrf.mxu0
    %v684 = vadd.f32 0.0, %v683
    %685 = vmatmul.bf16.gmra.mxu0 %v584
    %v686 = vpop.f32.mrf.mxu0
    %v687 = vadd.f32 0.0, %v686
    %v688 = vpop.f32.mrf.mxu0
    %v689 = vadd.f32 0.0, %v688
    %690 = vmatmul.bf16.gmra.mxu0 %v585
    %v691 = vpop.f32.mrf.mxu0
    %v692 = vadd.f32 0.0, %v691
    %v693 = vpop.f32.mrf.mxu0
    %v694 = vadd.f32 0.0, %v693
    %695 = vmatmul.bf16.gmra.mxu0 %v586
    %v696 = vpop.f32.mrf.mxu0
    %v697 = vadd.f32 0.0, %v696
    %v698 = vpop.f32.mrf.mxu0
    %v699 = vadd.f32 0.0, %v698
    %700 = vdwg.mxu0
    %v701 = vadd.f32 %v662, %v664
    %v702 = vadd.f32 %v701, %v667
    %v703 = vadd.f32 %v702, %v669
    %v704 = vadd.f32 %v703, %v672
    %v705 = vadd.f32 %v704, %v674
    %v706 = vadd.f32 %v705, %v677
    %v707 = vadd.f32 %v706, %v679
    %v708 = vadd.f32 %v707, %v682
    %v709 = vadd.f32 %v708, %v684
    %v710 = vadd.f32 %v709, %v687
    %v711 = vadd.f32 %v710, %v689
    %v712 = vadd.f32 %v711, %v692
    %v713 = vadd.f32 %v712, %v694
    %v714 = vadd.f32 %v713, %v697
    %v715 = vadd.f32 %v714, %v699
    %v716 = vrot.slane %v715, 4
    %v717 = vadd.f32 %v715, %v716
    %v718 = vrot.slane %v717, 2
    %v719 = vadd.f32 %v717, %v718
    %v720 = vrot.slane %v719, 1
    %v721 = vadd.f32 %v719, %v720
    %v722 = vmul.f32 %v721, 0.0078125
    %v723 = vmul.f32 %v662, %v662
    %v724 = vmul.f32 %v664, %v664
    %v725 = vmul.f32 %v667, %v667
    %v726 = vmul.f32 %v669, %v669
    %v727 = vmul.f32 %v672, %v672
    %v728 = vmul.f32 %v674, %v674
    %v729 = vmul.f32 %v677, %v677
    %v730 = vmul.f32 %v679, %v679
    %v731 = vmul.f32 %v682, %v682
    %v732 = vmul.f32 %v684, %v684
    %v733 = vmul.f32 %v687, %v687
    %v734 = vmul.f32 %v689, %v689
    %v735 = vmul.f32 %v692, %v692
    %v736 = vmul.f32 %v694, %v694
    %v737 = vmul.f32 %v697, %v697
    %v738 = vmul.f32 %v699, %v699
    %v739 = vadd.f32 %v723, %v724
    %v740 = vadd.f32 %v739, %v725
    %v741 = vadd.f32 %v740, %v726
    %v742 = vadd.f32 %v741, %v727
    %v743 = vadd.f32 %v742, %v728
    %v744 = vadd.f32 %v743, %v729
    %v745 = vadd.f32 %v744, %v730
    %v746 = vadd.f32 %v745, %v731
    %v747 = vadd.f32 %v746, %v732
    %v748 = vadd.f32 %v747, %v733
    %v749 = vadd.f32 %v748, %v734
    %v750 = vadd.f32 %v749, %v735
    %v751 = vadd.f32 %v750, %v736
    %v752 = vadd.f32 %v751, %v737
    %v753 = vadd.f32 %v752, %v738
    %v754 = vrot.slane %v753, 4
    %v755 = vadd.f32 %v753, %v754
    %v756 = vrot.slane %v755, 2
    %v757 = vadd.f32 %v755, %v756
    %v758 = vrot.slane %v757, 1
    %v759 = vadd.f32 %v757, %v758
    %v760 = vmul.f32 %v759, 0.0078125
    %v761 = vmul.f32 %v722, %v722
    %v762 = vsub.f32 %v760, %v761
    %v763 = vld [vmem:[%s3 + $0x4] sm:$0x1]
    %v764 = vadd.f32 %v762, 4e-05
    %v765 = vrsqrt.pop %v764
    %v766 = vmul.f32 %v765, %v764
    %v767 = vmul.f32 %v766, %v765
    %v768 = vmul.f32 0.5, %v767
    %v769 = vsub.f32 1.5, %v768
    %v770 = vmul.f32 %v765, %v769
    %vm771 = vweird.f32 %v764
    %vm772 = vweird.f32 %v765
    %vm773 = vmor %vm771, %vm772
    %v774 = vsel %vm773, %v765, %v770
    %v775 = vmul.f32 %v763, %v774
    %v776 = vld [vmem:[%s3 + $0x5] sm:$0x1]
    %v777 = vmul.f32 %v722, %v775
    %v778 = vsub.f32 %v776, %v777
    %v779 = vperm.slane %v775, 0
    %v780 = vmul.f32 %v662, %v779
    %v781 = vmul.f32 %v664, %v779
    %v782 = vmul.f32 %v667, %v779
    %v783 = vmul.f32 %v669, %v779
    %v784 = vmul.f32 %v672, %v779
    %v785 = vmul.f32 %v674, %v779
    %v786 = vmul.f32 %v677, %v779
    %v787 = vmul.f32 %v679, %v779
    %v788 = vmul.f32 %v682, %v779
    %v789 = vmul.f32 %v684, %v779
    %v790 = vmul.f32 %v687, %v779
    %v791 = vmul.f32 %v689, %v779
    %v792 = vmul.f32 %v692, %v779
    %v793 = vmul.f32 %v694, %v779
    %v794 = vmul.f32 %v697, %v779
    %v795 = vmul.f32 %v699, %v779
    %v796 = vperm.slane %v778, 0
    %v797 = vadd.f32 %v780, %v796
    %v798 = vadd.f32 %v781, %v796
    %v799 = vadd.f32 %v782, %v796
    %v800 = vadd.f32 %v783, %v796
    %v801 = vadd.f32 %v784, %v796
    %v802 = vadd.f32 %v785, %v796
    %v803 = vadd.f32 %v786, %v796
    %v804 = vadd.f32 %v787, %v796
    %v805 = vadd.f32 %v788, %v796
    %v806 = vadd.f32 %v789, %v796
    %v807 = vadd.f32 %v790, %v796
    %v808 = vadd.f32 %v791, %v796
    %v809 = vadd.f32 %v792, %v796
    %v810 = vadd.f32 %v793, %v796
    %v811 = vadd.f32 %v794, %v796
    %v812 = vadd.f32 %v795, %v796
    %v813 = vmax.f32 %v797, 0.0
    %v814 = vmax.f32 %v798, 0.0
    %v815 = vmax.f32 %v799, 0.0
    %v816 = vmax.f32 %v800, 0.0
    %v817 = vmax.f32 %v801, 0.0
    %v818 = vmax.f32 %v802, 0.0
    %v819 = vmax.f32 %v803, 0.0
    %v820 = vmax.f32 %v804, 0.0
    %v821 = vmax.f32 %v805, 0.0
    %v822 = vmax.f32 %v806, 0.0
    %v823 = vmax.f32 %v807, 0.0
    %v824 = vmax.f32 %v808, 0.0
    %v825 = vmax.f32 %v809, 0.0
    %v826 = vmax.f32 %v810, 0.0
    %v827 = vmax.f32 %v811, 0.0
    %v828 = vmax.f32 %v812, 0.0
    %829 = vst [vmem:[#allocation2] sm:$0xff] %v813
    %830 = vst [vmem:[#allocation2 + $0x8] sm:$0xff] %v814
    %831 = vst [vmem:[#allocation2 + $0x10] sm:$0xff] %v815
    %832 = vst [vmem:[#allocation2 + $0x18] sm:$0xff] %v816
    %833 = vst [vmem:[#allocation2 + $0x20] sm:$0xff] %v817
    %834 = vst [vmem:[#allocation2 + $0x28] sm:$0xff] %v818
    %835 = vst [vmem:[#allocation2 + $0x30] sm:$0xff] %v819
    %836 = vst [vmem:[#allocation2 + $0x38] sm:$0xff] %v820
    %837 = vst [vmem:[#allocation2 + $0x40] sm:$0xff] %v821
    %838 = vst [vmem:[#allocation2 + $0x48] sm:$0xff] %v822
    %839 = vst [vmem:[#allocation2 + $0x50] sm:$0xff] %v823
    %840 = vst [vmem:[#allocation2 + $0x58] sm:$0xff] %v824
    %841 = vst [vmem:[#allocation2 + $0x60] sm:$0xff] %v825
    %842 = vst [vmem:[#allocation2 + $0x68] sm:$0xff] %v826
    %843 = vst [vmem:[#allocation2 + $0x70] sm:$0xff] %v827
    %844 = vst [vmem:[#allocation2 + $0x78] sm:$0xff] %v828
    %s845 = sld [smem:[#allocation4 + $0x3]]
    %v846 = vld [vmem:[%s1] sm:$0xff]
    %v847 = vld [vmem:[%s1 + $0x8] sm:$0xff]
    %v848 = vld [vmem:[%s1 + $0x10] sm:$0xff]
    %v849 = vld [vmem:[%s1 + $0x18] sm:$0xff]
    %v850 = vld [vmem:[%s1 + $0x20] sm:$0xff]
    %v851 = vld [vmem:[%s1 + $0x28] sm:$0xff]
    %v852 = vld [vmem:[%s1 + $0x30] sm:$0xff]
    %v853 = vld [vmem:[%s1 + $0x38] sm:$0xff]
    %v854 = vld [vmem:[%s1 + $0x40] sm:$0xff]
    %v855 = vld [vmem:[%s1 + $0x48] sm:$0xff]
    %v856 = vld [vmem:[%s1 + $0x50] sm:$0xff]
    %v857 = vld [vmem:[%s1 + $0x58] sm:$0xff]
    %v858 = vld [vmem:[%s1 + $0x60] sm:$0xff]
    %v859 = vld [vmem:[%s1 + $0x68] sm:$0xff]
    %v860 = vld [vmem:[%s1 + $0x70] sm:$0xff]
    %v861 = vld [vmem:[%s1 + $0x78] sm:$0xff]
    %v862 = vld [vmem:[%s1 + $0x80] sm:$0xff]
    %v863 = vld [vmem:[%s1 + $0x88] sm:$0xff]
    %v864 = vld [vmem:[%s1 + $0x90] sm:$0xff]
    %v865 = vld [vmem:[%s1 + $0x98] sm:$0xff]
    %v866 = vld [vmem:[%s1 + $0xa0] sm:$0xff]
    %v867 = vld [vmem:[%s1 + $0xa8] sm:$0xff]
    %v868 = vld [vmem:[%s1 + $0xb0] sm:$0xff]
    %v869 = vld [vmem:[%s1 + $0xb8] sm:$0xff]
    %v870 = vld [vmem:[%s1 + $0xc0] sm:$0xff]
    %v871 = vld [vmem:[%s1 + $0xc8] sm:$0xff]
    %v872 = vld [vmem:[%s1 + $0xd0] sm:$0xff]
    %v873 = vld [vmem:[%s1 + $0xd8] sm:$0xff]
    %v874 = vld [vmem:[%s1 + $0xe0] sm:$0xff]
    %v875 = vld [vmem:[%s1 + $0xe8] sm:$0xff]
    %v876 = vld [vmem:[%s1 + $0xf0] sm:$0xff]
    %v877 = vld [vmem:[%s1 + $0xf8] sm:$0xff]
    %v878 = vld [vmem:[%s1 + $0x100] sm:$0xff]
    %v879 = vld [vmem:[%s1 + $0x108] sm:$0xff]
    %v880 = vld [vmem:[%s1 + $0x110] sm:$0xff]
    %v881 = vld [vmem:[%s1 + $0x118] sm:$0xff]
    %v882 = vld [vmem:[%s1 + $0x120] sm:$0xff]
    %v883 = vld [vmem:[%s1 + $0x128] sm:$0xff]
    %v884 = vld [vmem:[%s1 + $0x130] sm:$0xff]
    %v885 = vld [vmem:[%s1 + $0x138] sm:$0xff]
    %v886 = vld [vmem:[%s1 + $0x140] sm:$0xff]
    %v887 = vld [vmem:[%s1 + $0x148] sm:$0xff]
    %v888 = vld [vmem:[%s1 + $0x150] sm:$0xff]
    %v889 = vld [vmem:[%s1 + $0x158] sm:$0xff]
    %v890 = vld [vmem:[%s1 + $0x160] sm:$0xff]
    %v891 = vld [vmem:[%s1 + $0x168] sm:$0xff]
    %v892 = vld [vmem:[%s1 + $0x170] sm:$0xff]
    %v893 = vld [vmem:[%s1 + $0x178] sm:$0xff]
    %v894 = vld [vmem:[%s1 + $0x180] sm:$0xff]
    %v895 = vld [vmem:[%s1 + $0x188] sm:$0xff]
    %v896 = vld [vmem:[%s1 + $0x190] sm:$0xff]
    %v897 = vld [vmem:[%s1 + $0x198] sm:$0xff]
    %v898 = vld [vmem:[%s1 + $0x1a0] sm:$0xff]
    %v899 = vld [vmem:[%s1 + $0x1a8] sm:$0xff]
    %v900 = vld [vmem:[%s1 + $0x1b0] sm:$0xff]
    %v901 = vld [vmem:[%s1 + $0x1b8] sm:$0xff]
    %v902 = vld [vmem:[%s1 + $0x1c0] sm:$0xff]
    %v903 = vld [vmem:[%s1 + $0x1c8] sm:$0xff]
    %v904 = vld [vmem:[%s1 + $0x1d0] sm:$0xff]
    %v905 = vld [vmem:[%s1 + $0x1d8] sm:$0xff]
    %v906 = vld [vmem:[%s1 + $0x1e0] sm:$0xff]
    %v907 = vld [vmem:[%s1 + $0x1e8] sm:$0xff]
    %v908 = vld [vmem:[%s1 + $0x1f0] sm:$0xff]
    %v909 = vld [vmem:[%s1 + $0x1f8] sm:$0xff]
    %v910 = vstv %s845
    %v911 = vmul.f32 %v910, %v846
    %v912 = vmul.f32 %v910, %v847
    %v913 = vmul.f32 %v910, %v848
    %v914 = vmul.f32 %v910, %v849
    %v915 = vmul.f32 %v910, %v850
    %v916 = vmul.f32 %v910, %v851
    %v917 = vmul.f32 %v910, %v852
    %v918 = vmul.f32 %v910, %v853
    %v919 = vmul.f32 %v910, %v854
    %v920 = vmul.f32 %v910, %v855
    %v921 = vmul.f32 %v910, %v856
    %v922 = vmul.f32 %v910, %v857
    %v923 = vmul.f32 %v910, %v858
    %v924 = vmul.f32 %v910, %v859
    %v925 = vmul.f32 %v910, %v860
    %v926 = vmul.f32 %v910, %v861
    %v927 = vmul.f32 %v910, %v862
    %v928 = vmul.f32 %v910, %v863
    %v929 = vmul.f32 %v910, %v864
    %v930 = vmul.f32 %v910, %v865
    %v931 = vmul.f32 %v910, %v866
    %v932 = vmul.f32 %v910, %v867
    %v933 = vmul.f32 %v910, %v868
    %v934 = vmul.f32 %v910, %v869
    %v935 = vmul.f32 %v910, %v870
    %v936 = vmul.f32 %v910, %v871
    %v937 = vmul.f32 %v910, %v872
    %v938 = vmul.f32 %v910, %v873
    %v939 = vmul.f32 %v910, %v874
    %v940 = vmul.f32 %v910, %v875
    %v941 = vmul.f32 %v910, %v876
    %v942 = vmul.f32 %v910, %v877
    %v943 = vmul.f32 %v910, %v878
    %v944 = vmul.f32 %v910, %v879
    %v945 = vmul.f32 %v910, %v880
    %v946 = vmul.f32 %v910, %v881
    %v947 = vmul.f32 %v910, %v882
    %v948 = vmul.f32 %v910, %v883
    %v949 = vmul.f32 %v910, %v884
    %v950 = vmul.f32 %v910, %v885
    %v951 = vmul.f32 %v910, %v886
    %v952 = vmul.f32 %v910, %v887
    %v953 = vmul.f32 %v910, %v888
    %v954 = vmul.f32 %v910, %v889
    %v955 = vmul.f32 %v910, %v890
    %v956 = vmul.f32 %v910, %v891
    %v957 = vmul.f32 %v910, %v892
    %v958 = vmul.f32 %v910, %v893
    %v959 = vmul.f32 %v910, %v894
    %v960 = vmul.f32 %v910, %v895
    %v961 = vmul.f32 %v910, %v896
    %v962 = vmul.f32 %v910, %v897
    %v963 = vmul.f32 %v910, %v898
    %v964 = vmul.f32 %v910, %v899
    %v965 = vmul.f32 %v910, %v900
    %v966 = vmul.f32 %v910, %v901
    %v967 = vmul.f32 %v910, %v902
    %v968 = vmul.f32 %v910, %v903
    %v969 = vmul.f32 %v910, %v904
    %v970 = vmul.f32 %v910, %v905
    %v971 = vmul.f32 %v910, %v906
    %v972 = vmul.f32 %v910, %v907
    %v973 = vmul.f32 %v910, %v908
    %v974 = vmul.f32 %v910, %v909
    %s975 = sld [smem:[#allocation4 + $0x7]]
    %v976 = vld [vmem:[#allocation2] sm:$0x1]
    %v977 = vperm.slane %v976, 0
    %978 = vst [vmem:[#allocation3] sm:$0x3] %v977
    %979 = vst [vmem:[#allocation3 + $0x10] sm:$0x3] %v977
    %v980 = vld [vmem:[#allocation2 + $0x1] sm:$0x1]
    %v981 = vperm.slane %v980, 0
    %982 = vst [vmem:[#allocation3 + $0x2] sm:$0x3] %v981
    %983 = vst [vmem:[#allocation3 + $0x12] sm:$0x3] %v981
    %v984 = vld [vmem:[#allocation2 + $0x2] sm:$0x1]
    %v985 = vperm.slane %v984, 0
    %986 = vst [vmem:[#allocation3 + $0x4] sm:$0x3] %v985
    %987 = vst [vmem:[#allocation3 + $0x14] sm:$0x3] %v985
    %v988 = vld [vmem:[#allocation2 + $0x3] sm:$0x1]
    %v989 = vperm.slane %v988, 0
    %990 = vst [vmem:[#allocation3 + $0x6] sm:$0x3] %v989
    %991 = vst [vmem:[#allocation3 + $0x16] sm:$0x3] %v989
    %v992 = vld [vmem:[#allocation2 + $0x4] sm:$0x1]
    %v993 = vperm.slane %v992, 0
    %994 = vst [vmem:[#allocation3 + $0x8] sm:$0x3] %v993
    %995 = vst [vmem:[#allocation3 + $0x18] sm:$0x3] %v993
    %v996 = vld [vmem:[#allocation2 + $0x5] sm:$0x1]
    %v997 = vperm.slane %v996, 0
    %998 = vst [vmem:[#allocation3 + $0xa] sm:$0x3] %v997
    %999 = vst [vmem:[#allocation3 + $0x1a] sm:$0x3] %v997
    %v1000 = vld [vmem:[#allocation2 + $0x6] sm:$0x1]
    %v1001 = vperm.slane %v1000, 0
    %1002 = vst [vmem:[#allocation3 + $0xc] sm:$0x3] %v1001
    %1003 = vst [vmem:[#allocation3 + $0x1c] sm:$0x3] %v1001
    %v1004 = vld [vmem:[#allocation2 + $0x7] sm:$0x1]
    %v1005 = vperm.slane %v1004, 0
    %1006 = vst [vmem:[#allocation3 + $0xe] sm:$0x3] %v1005
    %1007 = vst [vmem:[#allocation3 + $0x1e] sm:$0x3] %v1005
    %v1008 = vld [vmem:[#allocation2 + $0x8] sm:$0x1]
    %v1009 = vperm.slane %v1008, 0
    %1010 = vst [vmem:[#allocation3 + $0x20] sm:$0x3] %v1009
    %1011 = vst [vmem:[#allocation3 + $0x30] sm:$0x3] %v1009
    %v1012 = vld [vmem:[#allocation2 + $0x9] sm:$0x1]
    %v1013 = vperm.slane %v1012, 0
    %1014 = vst [vmem:[#allocation3 + $0x22] sm:$0x3] %v1013
    %1015 = vst [vmem:[#allocation3 + $0x32] sm:$0x3] %v1013
    %v1016 = vld [vmem:[#allocation2 + $0xa] sm:$0x1]
    %v1017 = vperm.slane %v1016, 0
    %1018 = vst [vmem:[#allocation3 + $0x24] sm:$0x3] %v1017
    %1019 = vst [vmem:[#allocation3 + $0x34] sm:$0x3] %v1017
    %v1020 = vld [vmem:[#allocation2 + $0xb] sm:$0x1]
    %v1021 = vperm.slane %v1020, 0
    %1022 = vst [vmem:[#allocation3 + $0x26] sm:$0x3] %v1021
    %1023 = vst [vmem:[#allocation3 + $0x36] sm:$0x3] %v1021
    %v1024 = vld [vmem:[#allocation2 + $0xc] sm:$0x1]
    %v1025 = vperm.slane %v1024, 0
    %1026 = vst [vmem:[#allocation3 + $0x28] sm:$0x3] %v1025
    %1027 = vst [vmem:[#allocation3 + $0x38] sm:$0x3] %v1025
    %v1028 = vld [vmem:[#allocation2 + $0xd] sm:$0x1]
    %v1029 = vperm.slane %v1028, 0
    %1030 = vst [vmem:[#allocation3 + $0x2a] sm:$0x3] %v1029
    %1031 = vst [vmem:[#allocation3 + $0x3a] sm:$0x3] %v1029
    %v1032 = vld [vmem:[#allocation2 + $0xe] sm:$0x1]
    %v1033 = vperm.slane %v1032, 0
    %1034 = vst [vmem:[#allocation3 + $0x2c] sm:$0x3] %v1033
    %1035 = vst [vmem:[#allocation3 + $0x3c] sm:$0x3] %v1033
    %v1036 = vld [vmem:[#allocation2 + $0xf] sm:$0x1]
    %v1037 = vperm.slane %v1036, 0
    %1038 = vst [vmem:[#allocation3 + $0x2e] sm:$0x3] %v1037
    %1039 = vst [vmem:[#allocation3 + $0x3e] sm:$0x3] %v1037
    %v1040 = vld [vmem:[#allocation2 + $0x10] sm:$0x1]
    %v1041 = vperm.slane %v1040, 0
    %1042 = vst [vmem:[#allocation3 + $0x40] sm:$0x3] %v1041
    %1043 = vst [vmem:[#allocation3 + $0x50] sm:$0x3] %v1041
    %v1044 = vld [vmem:[#allocation2 + $0x11] sm:$0x1]
    %v1045 = vperm.slane %v1044, 0
    %1046 = vst [vmem:[#allocation3 + $0x42] sm:$0x3] %v1045
    %1047 = vst [vmem:[#allocation3 + $0x52] sm:$0x3] %v1045
    %v1048 = vld [vmem:[#allocation2 + $0x12] sm:$0x1]
    %v1049 = vperm.slane %v1048, 0
    %1050 = vst [vmem:[#allocation3 + $0x44] sm:$0x3] %v1049
    %1051 = vst [vmem:[#allocation3 + $0x54] sm:$0x3] %v1049
    %v1052 = vld [vmem:[#allocation2 + $0x13] sm:$0x1]
    %v1053 = vperm.slane %v1052, 0
    %1054 = vst [vmem:[#allocation3 + $0x46] sm:$0x3] %v1053
    %1055 = vst [vmem:[#allocation3 + $0x56] sm:$0x3] %v1053
    %v1056 = vld [vmem:[#allocation2 + $0x14] sm:$0x1]
    %v1057 = vperm.slane %v1056, 0
    %1058 = vst [vmem:[#allocation3 + $0x48] sm:$0x3] %v1057
    %1059 = vst [vmem:[#allocation3 + $0x58] sm:$0x3] %v1057
    %v1060 = vld [vmem:[#allocation2 + $0x15] sm:$0x1]
    %v1061 = vperm.slane %v1060, 0
    %1062 = vst [vmem:[#allocation3 + $0x4a] sm:$0x3] %v1061
    %1063 = vst [vmem:[#allocation3 + $0x5a] sm:$0x3] %v1061
    %v1064 = vld [vmem:[#allocation2 + $0x16] sm:$0x1]
    %v1065 = vperm.slane %v1064, 0
    %1066 = vst [vmem:[#allocation3 + $0x4c] sm:$0x3] %v1065
    %1067 = vst [vmem:[#allocation3 + $0x5c] sm:$0x3] %v1065
    %v1068 = vld [vmem:[#allocation2 + $0x17] sm:$0x1]
    %v1069 = vperm.slane %v1068, 0
    %1070 = vst [vmem:[#allocation3 + $0x4e] sm:$0x3] %v1069
    %1071 = vst [vmem:[#allocation3 + $0x5e] sm:$0x3] %v1069
    %v1072 = vld [vmem:[#allocation2 + $0x18] sm:$0x1]
    %v1073 = vperm.slane %v1072, 0
    %1074 = vst [vmem:[#allocation3 + $0x60] sm:$0x3] %v1073
    %1075 = vst [vmem:[#allocation3 + $0x70] sm:$0x3] %v1073
    %v1076 = vld [vmem:[#allocation2 + $0x19] sm:$0x1]
    %v1077 = vperm.slane %v1076, 0
    %1078 = vst [vmem:[#allocation3 + $0x62] sm:$0x3] %v1077
    %1079 = vst [vmem:[#allocation3 + $0x72] sm:$0x3] %v1077
    %v1080 = vld [vmem:[#allocation2 + $0x1a] sm:$0x1]
    %v1081 = vperm.slane %v1080, 0
    %1082 = vst [vmem:[#allocation3 + $0x64] sm:$0x3] %v1081
    %1083 = vst [vmem:[#allocation3 + $0x74] sm:$0x3] %v1081
    %v1084 = vld [vmem:[#allocation2 + $0x1b] sm:$0x1]
    %v1085 = vperm.slane %v1084, 0
    %1086 = vst [vmem:[#allocation3 + $0x66] sm:$0x3] %v1085
    %1087 = vst [vmem:[#allocation3 + $0x76] sm:$0x3] %v1085
    %v1088 = vld [vmem:[#allocation2 + $0x1c] sm:$0x1]
    %v1089 = vperm.slane %v1088, 0
    %1090 = vst [vmem:[#allocation3 + $0x68] sm:$0x3] %v1089
    %1091 = vst [vmem:[#allocation3 + $0x78] sm:$0x3] %v1089
    %v1092 = vld [vmem:[#allocation2 + $0x1d] sm:$0x1]
    %v1093 = vperm.slane %v1092, 0
    %1094 = vst [vmem:[#allocation3 + $0x6a] sm:$0x3] %v1093
    %1095 = vst [vmem:[#allocation3 + $0x7a] sm:$0x3] %v1093
    %v1096 = vld [vmem:[#allocation2 + $0x1e] sm:$0x1]
    %v1097 = vperm.slane %v1096, 0
    %1098 = vst [vmem:[#allocation3 + $0x6c] sm:$0x3] %v1097
    %1099 = vst [vmem:[#allocation3 + $0x7c] sm:$0x3] %v1097
    %v1100 = vld [vmem:[#allocation2 + $0x1f] sm:$0x1]
    %v1101 = vperm.slane %v1100, 0
    %1102 = vst [vmem:[#allocation3 + $0x6e] sm:$0x3] %v1101
    %1103 = vst [vmem:[#allocation3 + $0x7e] sm:$0x3] %v1101
    %v1104 = vld [vmem:[#allocation2 + $0x20] sm:$0x1]
    %v1105 = vperm.slane %v1104, 0
    %1106 = vst [vmem:[#allocation3 + $0x80] sm:$0x3] %v1105
    %1107 = vst [vmem:[#allocation3 + $0x90] sm:$0x3] %v1105
    %v1108 = vld [vmem:[#allocation2 + $0x21] sm:$0x1]
    %v1109 = vperm.slane %v1108, 0
    %1110 = vst [vmem:[#allocation3 + $0x82] sm:$0x3] %v1109
    %1111 = vst [vmem:[#allocation3 + $0x92] sm:$0x3] %v1109
    %v1112 = vld [vmem:[#allocation2 + $0x22] sm:$0x1]
    %v1113 = vperm.slane %v1112, 0
    %1114 = vst [vmem:[#allocation3 + $0x84] sm:$0x3] %v1113
    %1115 = vst [vmem:[#allocation3 + $0x94] sm:$0x3] %v1113
    %v1116 = vld [vmem:[#allocation2 + $0x23] sm:$0x1]
    %v1117 = vperm.slane %v1116, 0
    %1118 = vst [vmem:[#allocation3 + $0x86] sm:$0x3] %v1117
    %1119 = vst [vmem:[#allocation3 + $0x96] sm:$0x3] %v1117
    %v1120 = vld [vmem:[#allocation2 + $0x24] sm:$0x1]
    %v1121 = vperm.slane %v1120, 0
    %1122 = vst [vmem:[#allocation3 + $0x88] sm:$0x3] %v1121
    %1123 = vst [vmem:[#allocation3 + $0x98] sm:$0x3] %v1121
    %v1124 = vld [vmem:[#allocation2 + $0x25] sm:$0x1]
    %v1125 = vperm.slane %v1124, 0
    %1126 = vst [vmem:[#allocation3 + $0x8a] sm:$0x3] %v1125
    %1127 = vst [vmem:[#allocation3 + $0x9a] sm:$0x3] %v1125
    %v1128 = vld [vmem:[#allocation2 + $0x26] sm:$0x1]
    %v1129 = vperm.slane %v1128, 0
    %1130 = vst [vmem:[#allocation3 + $0x8c] sm:$0x3] %v1129
    %1131 = vst [vmem:[#allocation3 + $0x9c] sm:$0x3] %v1129
    %v1132 = vld [vmem:[#allocation2 + $0x27] sm:$0x1]
    %v1133 = vperm.slane %v1132, 0
    %1134 = vst [vmem:[#allocation3 + $0x8e] sm:$0x3] %v1133
    %1135 = vst [vmem:[#allocation3 + $0x9e] sm:$0x3] %v1133
    %v1136 = vld [vmem:[#allocation2 + $0x28] sm:$0x1]
    %v1137 = vperm.slane %v1136, 0
    %1138 = vst [vmem:[#allocation3 + $0xa0] sm:$0x3] %v1137
    %1139 = vst [vmem:[#allocation3 + $0xb0] sm:$0x3] %v1137
    %v1140 = vld [vmem:[#allocation2 + $0x29] sm:$0x1]
    %v1141 = vperm.slane %v1140, 0
    %1142 = vst [vmem:[#allocation3 + $0xa2] sm:$0x3] %v1141
    %1143 = vst [vmem:[#allocation3 + $0xb2] sm:$0x3] %v1141
    %v1144 = vld [vmem:[#allocation2 + $0x2a] sm:$0x1]
    %v1145 = vperm.slane %v1144, 0
    %1146 = vst [vmem:[#allocation3 + $0xa4] sm:$0x3] %v1145
    %1147 = vst [vmem:[#allocation3 + $0xb4] sm:$0x3] %v1145
    %v1148 = vld [vmem:[#allocation2 + $0x2b] sm:$0x1]
    %v1149 = vperm.slane %v1148, 0
    %1150 = vst [vmem:[#allocation3 + $0xa6] sm:$0x3] %v1149
    %1151 = vst [vmem:[#allocation3 + $0xb6] sm:$0x3] %v1149
    %v1152 = vld [vmem:[#allocation2 + $0x2c] sm:$0x1]
    %v1153 = vperm.slane %v1152, 0
    %1154 = vst [vmem:[#allocation3 + $0xa8] sm:$0x3] %v1153
    %1155 = vst [vmem:[#allocation3 + $0xb8] sm:$0x3] %v1153
    %v1156 = vld [vmem:[#allocation2 + $0x2d] sm:$0x1]
    %v1157 = vperm.slane %v1156, 0
    %1158 = vst [vmem:[#allocation3 + $0xaa] sm:$0x3] %v1157
    %1159 = vst [vmem:[#allocation3 + $0xba] sm:$0x3] %v1157
    %v1160 = vld [vmem:[#allocation2 + $0x2e] sm:$0x1]
    %v1161 = vperm.slane %v1160, 0
    %1162 = vst [vmem:[#allocation3 + $0xac] sm:$0x3] %v1161
    %1163 = vst [vmem:[#allocation3 + $0xbc] sm:$0x3] %v1161
    %v1164 = vld [vmem:[#allocation2 + $0x2f] sm:$0x1]
    %v1165 = vperm.slane %v1164, 0
    %1166 = vst [vmem:[#allocation3 + $0xae] sm:$0x3] %v1165
    %1167 = vst [vmem:[#allocation3 + $0xbe] sm:$0x3] %v1165
    %v1168 = vld [vmem:[#allocation2 + $0x30] sm:$0x1]
    %v1169 = vperm.slane %v1168, 0
    %1170 = vst [vmem:[#allocation3 + $0xc0] sm:$0x3] %v1169
    %1171 = vst [vmem:[#allocation3 + $0xd0] sm:$0x3] %v1169
    %v1172 = vld [vmem:[#allocation2 + $0x31] sm:$0x1]
    %v1173 = vperm.slane %v1172, 0
    %1174 = vst [vmem:[#allocation3 + $0xc2] sm:$0x3] %v1173
    %1175 = vst [vmem:[#allocation3 + $0xd2] sm:$0x3] %v1173
    %v1176 = vld [vmem:[#allocation2 + $0x32] sm:$0x1]
    %v1177 = vperm.slane %v1176, 0
    %1178 = vst [vmem:[#allocation3 + $0xc4] sm:$0x3] %v1177
    %1179 = vst [vmem:[#allocation3 + $0xd4] sm:$0x3] %v1177
    %v1180 = vld [vmem:[#allocation2 + $0x33] sm:$0x1]
    %v1181 = vperm.slane %v1180, 0
    %1182 = vst [vmem:[#allocation3 + $0xc6] sm:$0x3] %v1181
    %1183 = vst [vmem:[#allocation3 + $0xd6] sm:$0x3] %v1181
    %v1184 = vld [vmem:[#allocation2 + $0x34] sm:$0x1]
    %v1185 = vperm.slane %v1184, 0
    %1186 = vst [vmem:[#allocation3 + $0xc8] sm:$0x3] %v1185
    %1187 = vst [vmem:[#allocation3 + $0xd8] sm:$0x3] %v1185
    %v1188 = vld [vmem:[#allocation2 + $0x35] sm:$0x1]
    %v1189 = vperm.slane %v1188, 0
    %1190 = vst [vmem:[#allocation3 + $0xca] sm:$0x3] %v1189
    %1191 = vst [vmem:[#allocation3 + $0xda] sm:$0x3] %v1189
    %v1192 = vld [vmem:[#allocation2 + $0x36] sm:$0x1]
    %v1193 = vperm.slane %v1192, 0
    %1194 = vst [vmem:[#allocation3 + $0xcc] sm:$0x3] %v1193
    %1195 = vst [vmem:[#allocation3 + $0xdc] sm:$0x3] %v1193
    %v1196 = vld [vmem:[#allocation2 + $0x37] sm:$0x1]
    %v1197 = vperm.slane %v1196, 0
    %1198 = vst [vmem:[#allocation3 + $0xce] sm:$0x3] %v1197
    %1199 = vst [vmem:[#allocation3 + $0xde] sm:$0x3] %v1197
    %v1200 = vld [vmem:[#allocation2 + $0x38] sm:$0x1]
    %v1201 = vperm.slane %v1200, 0
    %1202 = vst [vmem:[#allocation3 + $0xe0] sm:$0x3] %v1201
    %1203 = vst [vmem:[#allocation3 + $0xf0] sm:$0x3] %v1201
    %v1204 = vld [vmem:[#allocation2 + $0x39] sm:$0x1]
    %v1205 = vperm.slane %v1204, 0
    %1206 = vst [vmem:[#allocation3 + $0xe2] sm:$0x3] %v1205
    %1207 = vst [vmem:[#allocation3 + $0xf2] sm:$0x3] %v1205
    %v1208 = vld [vmem:[#allocation2 + $0x3a] sm:$0x1]
    %v1209 = vperm.slane %v1208, 0
    %1210 = vst [vmem:[#allocation3 + $0xe4] sm:$0x3] %v1209
    %1211 = vst [vmem:[#allocation3 + $0xf4] sm:$0x3] %v1209
    %v1212 = vld [vmem:[#allocation2 + $0x3b] sm:$0x1]
    %v1213 = vperm.slane %v1212, 0
    %1214 = vst [vmem:[#allocation3 + $0xe6] sm:$0x3] %v1213
    %1215 = vst [vmem:[#allocation3 + $0xf6] sm:$0x3] %v1213
    %v1216 = vld [vmem:[#allocation2 + $0x3c] sm:$0x1]
    %v1217 = vperm.slane %v1216, 0
    %1218 = vst [vmem:[#allocation3 + $0xe8] sm:$0x3] %v1217
    %1219 = vst [vmem:[#allocation3 + $0xf8] sm:$0x3] %v1217
    %v1220 = vld [vmem:[#allocation2 + $0x3d] sm:$0x1]
    %v1221 = vperm.slane %v1220, 0
    %1222 = vst [vmem:[#allocation3 + $0xea] sm:$0x3] %v1221
    %1223 = vst [vmem:[#allocation3 + $0xfa] sm:$0x3] %v1221
    %v1224 = vld [vmem:[#allocation2 + $0x3e] sm:$0x1]
    %v1225 = vperm.slane %v1224, 0
    %1226 = vst [vmem:[#allocation3 + $0xec] sm:$0x3] %v1225
    %1227 = vst [vmem:[#allocation3 + $0xfc] sm:$0x3] %v1225
    %v1228 = vld [vmem:[#allocation2 + $0x3f] sm:$0x1]
    %v1229 = vperm.slane %v1228, 0
    %1230 = vst [vmem:[#allocation3 + $0xee] sm:$0x3] %v1229
    %1231 = vst [vmem:[#allocation3 + $0xfe] sm:$0x3] %v1229
    %v1232 = vld [vmem:[#allocation2 + $0x40] sm:$0x1]
    %v1233 = vperm.slane %v1232, 0
    %1234 = vst [vmem:[#allocation3 + $0x100] sm:$0x3] %v1233
    %1235 = vst [vmem:[#allocation3 + $0x110] sm:$0x3] %v1233
    %v1236 = vld [vmem:[#allocation2 + $0x41] sm:$0x1]
    %v1237 = vperm.slane %v1236, 0
    %1238 = vst [vmem:[#allocation3 + $0x102] sm:$0x3] %v1237
    %1239 = vst [vmem:[#allocation3 + $0x112] sm:$0x3] %v1237
    %v1240 = vld [vmem:[#allocation2 + $0x42] sm:$0x1]
    %v1241 = vperm.slane %v1240, 0
    %1242 = vst [vmem:[#allocation3 + $0x104] sm:$0x3] %v1241
    %1243 = vst [vmem:[#allocation3 + $0x114] sm:$0x3] %v1241
    %v1244 = vld [vmem:[#allocation2 + $0x43] sm:$0x1]
    %v1245 = vperm.slane %v1244, 0
    %1246 = vst [vmem:[#allocation3 + $0x106] sm:$0x3] %v1245
    %1247 = vst [vmem:[#allocation3 + $0x116] sm:$0x3] %v1245
    %v1248 = vld [vmem:[#allocation2 + $0x44] sm:$0x1]
    %v1249 = vperm.slane %v1248, 0
    %1250 = vst [vmem:[#allocation3 + $0x108] sm:$0x3] %v1249
    %1251 = vst [vmem:[#allocation3 + $0x118] sm:$0x3] %v1249
    %v1252 = vld [vmem:[#allocation2 + $0x45] sm:$0x1]
    %v1253 = vperm.slane %v1252, 0
    %1254 = vst [vmem:[#allocation3 + $0x10a] sm:$0x3] %v1253
    %1255 = vst [vmem:[#allocation3 + $0x11a] sm:$0x3] %v1253
    %v1256 = vld [vmem:[#allocation2 + $0x46] sm:$0x1]
    %v1257 = vperm.slane %v1256, 0
    %1258 = vst [vmem:[#allocation3 + $0x10c] sm:$0x3] %v1257
    %1259 = vst [vmem:[#allocation3 + $0x11c] sm:$0x3] %v1257
    %v1260 = vld [vmem:[#allocation2 + $0x47] sm:$0x1]
    %v1261 = vperm.slane %v1260, 0
    %1262 = vst [vmem:[#allocation3 + $0x10e] sm:$0x3] %v1261
    %1263 = vst [vmem:[#allocation3 + $0x11e] sm:$0x3] %v1261
    %v1264 = vld [vmem:[#allocation2 + $0x48] sm:$0x1]
    %v1265 = vperm.slane %v1264, 0
    %1266 = vst [vmem:[#allocation3 + $0x120] sm:$0x3] %v1265
    %1267 = vst [vmem:[#allocation3 + $0x130] sm:$0x3] %v1265
    %v1268 = vld [vmem:[#allocation2 + $0x49] sm:$0x1]
    %v1269 = vperm.slane %v1268, 0
    %1270 = vst [vmem:[#allocation3 + $0x122] sm:$0x3] %v1269
    %1271 = vst [vmem:[#allocation3 + $0x132] sm:$0x3] %v1269
    %v1272 = vld [vmem:[#allocation2 + $0x4a] sm:$0x1]
    %v1273 = vperm.slane %v1272, 0
    %1274 = vst [vmem:[#allocation3 + $0x124] sm:$0x3] %v1273
    %1275 = vst [vmem:[#allocation3 + $0x134] sm:$0x3] %v1273
    %v1276 = vld [vmem:[#allocation2 + $0x4b] sm:$0x1]
    %v1277 = vperm.slane %v1276, 0
    %1278 = vst [vmem:[#allocation3 + $0x126] sm:$0x3] %v1277
    %1279 = vst [vmem:[#allocation3 + $0x136] sm:$0x3] %v1277
    %v1280 = vld [vmem:[#allocation2 + $0x4c] sm:$0x1]
    %v1281 = vperm.slane %v1280, 0
    %1282 = vst [vmem:[#allocation3 + $0x128] sm:$0x3] %v1281
    %1283 = vst [vmem:[#allocation3 + $0x138] sm:$0x3] %v1281
    %v1284 = vld [vmem:[#allocation2 + $0x4d] sm:$0x1]
    %v1285 = vperm.slane %v1284, 0
    %1286 = vst [vmem:[#allocation3 + $0x12a] sm:$0x3] %v1285
    %1287 = vst [vmem:[#allocation3 + $0x13a] sm:$0x3] %v1285
    %v1288 = vld [vmem:[#allocation2 + $0x4e] sm:$0x1]
    %v1289 = vperm.slane %v1288, 0
    %1290 = vst [vmem:[#allocation3 + $0x12c] sm:$0x3] %v1289
    %1291 = vst [vmem:[#allocation3 + $0x13c] sm:$0x3] %v1289
    %v1292 = vld [vmem:[#allocation2 + $0x4f] sm:$0x1]
    %v1293 = vperm.slane %v1292, 0
    %1294 = vst [vmem:[#allocation3 + $0x12e] sm:$0x3] %v1293
    %1295 = vst [vmem:[#allocation3 + $0x13e] sm:$0x3] %v1293
    %v1296 = vld [vmem:[#allocation2 + $0x50] sm:$0x1]
    %v1297 = vperm.slane %v1296, 0
    %1298 = vst [vmem:[#allocation3 + $0x140] sm:$0x3] %v1297
    %1299 = vst [vmem:[#allocation3 + $0x150] sm:$0x3] %v1297
    %v1300 = vld [vmem:[#allocation2 + $0x51] sm:$0x1]
    %v1301 = vperm.slane %v1300, 0
    %1302 = vst [vmem:[#allocation3 + $0x142] sm:$0x3] %v1301
    %1303 = vst [vmem:[#allocation3 + $0x152] sm:$0x3] %v1301
    %v1304 = vld [vmem:[#allocation2 + $0x52] sm:$0x1]
    %v1305 = vperm.slane %v1304, 0
    %1306 = vst [vmem:[#allocation3 + $0x144] sm:$0x3] %v1305
    %1307 = vst [vmem:[#allocation3 + $0x154] sm:$0x3] %v1305
    %v1308 = vld [vmem:[#allocation2 + $0x53] sm:$0x1]
    %v1309 = vperm.slane %v1308, 0
    %1310 = vst [vmem:[#allocation3 + $0x146] sm:$0x3] %v1309
    %1311 = vst [vmem:[#allocation3 + $0x156] sm:$0x3] %v1309
    %v1312 = vld [vmem:[#allocation2 + $0x54] sm:$0x1]
    %v1313 = vperm.slane %v1312, 0
    %1314 = vst [vmem:[#allocation3 + $0x148] sm:$0x3] %v1313
    %1315 = vst [vmem:[#allocation3 + $0x158] sm:$0x3] %v1313
    %v1316 = vld [vmem:[#allocation2 + $0x55] sm:$0x1]
    %v1317 = vperm.slane %v1316, 0
    %1318 = vst [vmem:[#allocation3 + $0x14a] sm:$0x3] %v1317
    %1319 = vst [vmem:[#allocation3 + $0x15a] sm:$0x3] %v1317
    %v1320 = vld [vmem:[#allocation2 + $0x56] sm:$0x1]
    %v1321 = vperm.slane %v1320, 0
    %1322 = vst [vmem:[#allocation3 + $0x14c] sm:$0x3] %v1321
    %1323 = vst [vmem:[#allocation3 + $0x15c] sm:$0x3] %v1321
    %v1324 = vld [vmem:[#allocation2 + $0x57] sm:$0x1]
    %v1325 = vperm.slane %v1324, 0
    %1326 = vst [vmem:[#allocation3 + $0x14e] sm:$0x3] %v1325
    %1327 = vst [vmem:[#allocation3 + $0x15e] sm:$0x3] %v1325
    %v1328 = vld [vmem:[#allocation2 + $0x58] sm:$0x1]
    %v1329 = vperm.slane %v1328, 0
    %1330 = vst [vmem:[#allocation3 + $0x160] sm:$0x3] %v1329
    %1331 = vst [vmem:[#allocation3 + $0x170] sm:$0x3] %v1329
    %v1332 = vld [vmem:[#allocation2 + $0x59] sm:$0x1]
    %v1333 = vperm.slane %v1332, 0
    %1334 = vst [vmem:[#allocation3 + $0x162] sm:$0x3] %v1333
    %1335 = vst [vmem:[#allocation3 + $0x172] sm:$0x3] %v1333
    %v1336 = vld [vmem:[#allocation2 + $0x5a] sm:$0x1]
    %v1337 = vperm.slane %v1336, 0
    %1338 = vst [vmem:[#allocation3 + $0x164] sm:$0x3] %v1337
    %1339 = vst [vmem:[#allocation3 + $0x174] sm:$0x3] %v1337
    %v1340 = vld [vmem:[#allocation2 + $0x5b] sm:$0x1]
    %v1341 = vperm.slane %v1340, 0
    %1342 = vst [vmem:[#allocation3 + $0x166] sm:$0x3] %v1341
    %1343 = vst [vmem:[#allocation3 + $0x176] sm:$0x3] %v1341
    %v1344 = vld [vmem:[#allocation2 + $0x5c] sm:$0x1]
    %v1345 = vperm.slane %v1344, 0
    %1346 = vst [vmem:[#allocation3 + $0x168] sm:$0x3] %v1345
    %1347 = vst [vmem:[#allocation3 + $0x178] sm:$0x3] %v1345
    %v1348 = vld [vmem:[#allocation2 + $0x5d] sm:$0x1]
    %v1349 = vperm.slane %v1348, 0
    %1350 = vst [vmem:[#allocation3 + $0x16a] sm:$0x3] %v1349
    %1351 = vst [vmem:[#allocation3 + $0x17a] sm:$0x3] %v1349
    %v1352 = vld [vmem:[#allocation2 + $0x5e] sm:$0x1]
    %v1353 = vperm.slane %v1352, 0
    %1354 = vst [vmem:[#allocation3 + $0x16c] sm:$0x3] %v1353
    %1355 = vst [vmem:[#allocation3 + $0x17c] sm:$0x3] %v1353
    %v1356 = vld [vmem:[#allocation2 + $0x5f] sm:$0x1]
    %v1357 = vperm.slane %v1356, 0
    %1358 = vst [vmem:[#allocation3 + $0x16e] sm:$0x3] %v1357
    %1359 = vst [vmem:[#allocation3 + $0x17e] sm:$0x3] %v1357
    %v1360 = vld [vmem:[#allocation2 + $0x60] sm:$0x1]
    %v1361 = vperm.slane %v1360, 0
    %1362 = vst [vmem:[#allocation3 + $0x180] sm:$0x3] %v1361
    %1363 = vst [vmem:[#allocation3 + $0x190] sm:$0x3] %v1361
    %v1364 = vld [vmem:[#allocation2 + $0x61] sm:$0x1]
    %v1365 = vperm.slane %v1364, 0
    %1366 = vst [vmem:[#allocation3 + $0x182] sm:$0x3] %v1365
    %1367 = vst [vmem:[#allocation3 + $0x192] sm:$0x3] %v1365
    %v1368 = vld [vmem:[#allocation2 + $0x62] sm:$0x1]
    %v1369 = vperm.slane %v1368, 0
    %1370 = vst [vmem:[#allocation3 + $0x184] sm:$0x3] %v1369
    %1371 = vst [vmem:[#allocation3 + $0x194] sm:$0x3] %v1369
    %v1372 = vld [vmem:[#allocation2 + $0x63] sm:$0x1]
    %v1373 = vperm.slane %v1372, 0
    %1374 = vst [vmem:[#allocation3 + $0x186] sm:$0x3] %v1373
    %1375 = vst [vmem:[#allocation3 + $0x196] sm:$0x3] %v1373
    %v1376 = vld [vmem:[#allocation2 + $0x64] sm:$0x1]
    %v1377 = vperm.slane %v1376, 0
    %1378 = vst [vmem:[#allocation3 + $0x188] sm:$0x3] %v1377
    %1379 = vst [vmem:[#allocation3 + $0x198] sm:$0x3] %v1377
    %v1380 = vld [vmem:[#allocation2 + $0x65] sm:$0x1]
    %v1381 = vperm.slane %v1380, 0
    %1382 = vst [vmem:[#allocation3 + $0x18a] sm:$0x3] %v1381
    %1383 = vst [vmem:[#allocation3 + $0x19a] sm:$0x3] %v1381
    %v1384 = vld [vmem:[#allocation2 + $0x66] sm:$0x1]
    %v1385 = vperm.slane %v1384, 0
    %1386 = vst [vmem:[#allocation3 + $0x18c] sm:$0x3] %v1385
    %1387 = vst [vmem:[#allocation3 + $0x19c] sm:$0x3] %v1385
    %v1388 = vld [vmem:[#allocation2 + $0x67] sm:$0x1]
    %v1389 = vperm.slane %v1388, 0
    %1390 = vst [vmem:[#allocation3 + $0x18e] sm:$0x3] %v1389
    %1391 = vst [vmem:[#allocation3 + $0x19e] sm:$0x3] %v1389
    %v1392 = vld [vmem:[#allocation2 + $0x68] sm:$0x1]
    %v1393 = vperm.slane %v1392, 0
    %1394 = vst [vmem:[#allocation3 + $0x1a0] sm:$0x3] %v1393
    %1395 = vst [vmem:[#allocation3 + $0x1b0] sm:$0x3] %v1393
    %v1396 = vld [vmem:[#allocation2 + $0x69] sm:$0x1]
    %v1397 = vperm.slane %v1396, 0
    %1398 = vst [vmem:[#allocation3 + $0x1a2] sm:$0x3] %v1397
    %1399 = vst [vmem:[#allocation3 + $0x1b2] sm:$0x3] %v1397
    %v1400 = vld [vmem:[#allocation2 + $0x6a] sm:$0x1]
    %v1401 = vperm.slane %v1400, 0
    %1402 = vst [vmem:[#allocation3 + $0x1a4] sm:$0x3] %v1401
    %1403 = vst [vmem:[#allocation3 + $0x1b4] sm:$0x3] %v1401
    %v1404 = vld [vmem:[#allocation2 + $0x6b] sm:$0x1]
    %v1405 = vperm.slane %v1404, 0
    %1406 = vst [vmem:[#allocation3 + $0x1a6] sm:$0x3] %v1405
    %1407 = vst [vmem:[#allocation3 + $0x1b6] sm:$0x3] %v1405
    %v1408 = vld [vmem:[#allocation2 + $0x6c] sm:$0x1]
    %v1409 = vperm.slane %v1408, 0
    %1410 = vst [vmem:[#allocation3 + $0x1a8] sm:$0x3] %v1409
    %1411 = vst [vmem:[#allocation3 + $0x1b8] sm:$0x3] %v1409
    %v1412 = vld [vmem:[#allocation2 + $0x6d] sm:$0x1]
    %v1413 = vperm.slane %v1412, 0
    %1414 = vst [vmem:[#allocation3 + $0x1aa] sm:$0x3] %v1413
    %1415 = vst [vmem:[#allocation3 + $0x1ba] sm:$0x3] %v1413
    %v1416 = vld [vmem:[#allocation2 + $0x6e] sm:$0x1]
    %v1417 = vperm.slane %v1416, 0
    %1418 = vst [vmem:[#allocation3 + $0x1ac] sm:$0x3] %v1417
    %1419 = vst [vmem:[#allocation3 + $0x1bc] sm:$0x3] %v1417
    %v1420 = vld [vmem:[#allocation2 + $0x6f] sm:$0x1]
    %v1421 = vperm.slane %v1420, 0
    %1422 = vst [vmem:[#allocation3 + $0x1ae] sm:$0x3] %v1421
    %1423 = vst [vmem:[#allocation3 + $0x1be] sm:$0x3] %v1421
    %v1424 = vld [vmem:[#allocation2 + $0x70] sm:$0x1]
    %v1425 = vperm.slane %v1424, 0
    %1426 = vst [vmem:[#allocation3 + $0x1c0] sm:$0x3] %v1425
    %1427 = vst [vmem:[#allocation3 + $0x1d0] sm:$0x3] %v1425
    %v1428 = vld [vmem:[#allocation2 + $0x71] sm:$0x1]
    %v1429 = vperm.slane %v1428, 0
    %1430 = vst [vmem:[#allocation3 + $0x1c2] sm:$0x3] %v1429
    %1431 = vst [vmem:[#allocation3 + $0x1d2] sm:$0x3] %v1429
    %v1432 = vld [vmem:[#allocation2 + $0x72] sm:$0x1]
    %v1433 = vperm.slane %v1432, 0
    %1434 = vst [vmem:[#allocation3 + $0x1c4] sm:$0x3] %v1433
    %1435 = vst [vmem:[#allocation3 + $0x1d4] sm:$0x3] %v1433
    %v1436 = vld [vmem:[#allocation2 + $0x73] sm:$0x1]
    %v1437 = vperm.slane %v1436, 0
    %1438 = vst [vmem:[#allocation3 + $0x1c6] sm:$0x3] %v1437
    %1439 = vst [vmem:[#allocation3 + $0x1d6] sm:$0x3] %v1437
    %v1440 = vld [vmem:[#allocation2 + $0x74] sm:$0x1]
    %v1441 = vperm.slane %v1440, 0
    %1442 = vst [vmem:[#allocation3 + $0x1c8] sm:$0x3] %v1441
    %1443 = vst [vmem:[#allocation3 + $0x1d8] sm:$0x3] %v1441
    %v1444 = vld [vmem:[#allocation2 + $0x75] sm:$0x1]
    %v1445 = vperm.slane %v1444, 0
    %1446 = vst [vmem:[#allocation3 + $0x1ca] sm:$0x3] %v1445
    %1447 = vst [vmem:[#allocation3 + $0x1da] sm:$0x3] %v1445
    %v1448 = vld [vmem:[#allocation2 + $0x76] sm:$0x1]
    %v1449 = vperm.slane %v1448, 0
    %1450 = vst [vmem:[#allocation3 + $0x1cc] sm:$0x3] %v1449
    %1451 = vst [vmem:[#allocation3 + $0x1dc] sm:$0x3] %v1449
    %v1452 = vld [vmem:[#allocation2 + $0x77] sm:$0x1]
    %v1453 = vperm.slane %v1452, 0
    %1454 = vst [vmem:[#allocation3 + $0x1ce] sm:$0x3] %v1453
    %1455 = vst [vmem:[#allocation3 + $0x1de] sm:$0x3] %v1453
    %v1456 = vld [vmem:[#allocation2 + $0x78] sm:$0x1]
    %v1457 = vperm.slane %v1456, 0
    %1458 = vst [vmem:[#allocation3 + $0x1e0] sm:$0x3] %v1457
    %1459 = vst [vmem:[#allocation3 + $0x1f0] sm:$0x3] %v1457
    %v1460 = vld [vmem:[#allocation2 + $0x79] sm:$0x1]
    %v1461 = vperm.slane %v1460, 0
    %1462 = vst [vmem:[#allocation3 + $0x1e2] sm:$0x3] %v1461
    %1463 = vst [vmem:[#allocation3 + $0x1f2] sm:$0x3] %v1461
    %v1464 = vld [vmem:[#allocation2 + $0x7a] sm:$0x1]
    %v1465 = vperm.slane %v1464, 0
    %1466 = vst [vmem:[#allocation3 + $0x1e4] sm:$0x3] %v1465
    %1467 = vst [vmem:[#allocation3 + $0x1f4] sm:$0x3] %v1465
    %v1468 = vld [vmem:[#allocation2 + $0x7b] sm:$0x1]
    %v1469 = vperm.slane %v1468, 0
    %1470 = vst [vmem:[#allocation3 + $0x1e6] sm:$0x3] %v1469
    %1471 = vst [vmem:[#allocation3 + $0x1f6] sm:$0x3] %v1469
    %v1472 = vld [vmem:[#allocation2 + $0x7c] sm:$0x1]
    %v1473 = vperm.slane %v1472, 0
    %1474 = vst [vmem:[#allocation3 + $0x1e8] sm:$0x3] %v1473
    %1475 = vst [vmem:[#allocation3 + $0x1f8] sm:$0x3] %v1473
    %v1476 = vld [vmem:[#allocation2 + $0x7d] sm:$0x1]
    %v1477 = vperm.slane %v1476, 0
    %1478 = vst [vmem:[#allocation3 + $0x1ea] sm:$0x3] %v1477
    %1479 = vst [vmem:[#allocation3 + $0x1fa] sm:$0x3] %v1477
    %v1480 = vld [vmem:[#allocation2 + $0x7e] sm:$0x1]
    %v1481 = vperm.slane %v1480, 0
    %1482 = vst [vmem:[#allocation3 + $0x1ec] sm:$0x3] %v1481
    %1483 = vst [vmem:[#allocation3 + $0x1fc] sm:$0x3] %v1481
    %v1484 = vld [vmem:[#allocation2 + $0x7f] sm:$0x1]
    %v1485 = vperm.slane %v1484, 0
    %1486 = vst [vmem:[#allocation3 + $0x1ee] sm:$0x3] %v1485
    %1487 = vst [vmem:[#allocation3 + $0x1fe] sm:$0x3] %v1485
    %v1488 = vld [vmem:[#allocation3] sm:$0xff]
    %v1489 = vld [vmem:[#allocation3 + $0x8] sm:$0xff]
    %v1490 = vld [vmem:[#allocation3 + $0x10] sm:$0xff]
    %v1491 = vld [vmem:[#allocation3 + $0x18] sm:$0xff]
    %v1492 = vld [vmem:[#allocation3 + $0x20] sm:$0xff]
    %v1493 = vld [vmem:[#allocation3 + $0x28] sm:$0xff]
    %v1494 = vld [vmem:[#allocation3 + $0x30] sm:$0xff]
    %v1495 = vld [vmem:[#allocation3 + $0x38] sm:$0xff]
    %v1496 = vld [vmem:[#allocation3 + $0x40] sm:$0xff]
    %v1497 = vld [vmem:[#allocation3 + $0x48] sm:$0xff]
    %v1498 = vld [vmem:[#allocation3 + $0x50] sm:$0xff]
    %v1499 = vld [vmem:[#allocation3 + $0x58] sm:$0xff]
    %v1500 = vld [vmem:[#allocation3 + $0x60] sm:$0xff]
    %v1501 = vld [vmem:[#allocation3 + $0x68] sm:$0xff]
    %v1502 = vld [vmem:[#allocation3 + $0x70] sm:$0xff]
    %v1503 = vld [vmem:[#allocation3 + $0x78] sm:$0xff]
    %v1504 = vld [vmem:[#allocation3 + $0x80] sm:$0xff]
    %v1505 = vld [vmem:[#allocation3 + $0x88] sm:$0xff]
    %v1506 = vld [vmem:[#allocation3 + $0x90] sm:$0xff]
    %v1507 = vld [vmem:[#allocation3 + $0x98] sm:$0xff]
    %v1508 = vld [vmem:[#allocation3 + $0xa0] sm:$0xff]
    %v1509 = vld [vmem:[#allocation3 + $0xa8] sm:$0xff]
    %v1510 = vld [vmem:[#allocation3 + $0xb0] sm:$0xff]
    %v1511 = vld [vmem:[#allocation3 + $0xb8] sm:$0xff]
    %v1512 = vld [vmem:[#allocation3 + $0xc0] sm:$0xff]
    %v1513 = vld [vmem:[#allocation3 + $0xc8] sm:$0xff]
    %v1514 = vld [vmem:[#allocation3 + $0xd0] sm:$0xff]
    %v1515 = vld [vmem:[#allocation3 + $0xd8] sm:$0xff]
    %v1516 = vld [vmem:[#allocation3 + $0xe0] sm:$0xff]
    %v1517 = vld [vmem:[#allocation3 + $0xe8] sm:$0xff]
    %v1518 = vld [vmem:[#allocation3 + $0xf0] sm:$0xff]
    %v1519 = vld [vmem:[#allocation3 + $0xf8] sm:$0xff]
    %v1520 = vld [vmem:[#allocation3 + $0x100] sm:$0xff]
    %v1521 = vld [vmem:[#allocation3 + $0x108] sm:$0xff]
    %v1522 = vld [vmem:[#allocation3 + $0x110] sm:$0xff]
    %v1523 = vld [vmem:[#allocation3 + $0x118] sm:$0xff]
    %v1524 = vld [vmem:[#allocation3 + $0x120] sm:$0xff]
    %v1525 = vld [vmem:[#allocation3 + $0x128] sm:$0xff]
    %v1526 = vld [vmem:[#allocation3 + $0x130] sm:$0xff]
    %v1527 = vld [vmem:[#allocation3 + $0x138] sm:$0xff]
    %v1528 = vld [vmem:[#allocation3 + $0x140] sm:$0xff]
    %v1529 = vld [vmem:[#allocation3 + $0x148] sm:$0xff]
    %v1530 = vld [vmem:[#allocation3 + $0x150] sm:$0xff]
    %v1531 = vld [vmem:[#allocation3 + $0x158] sm:$0xff]
    %v1532 = vld [vmem:[#allocation3 + $0x160] sm:$0xff]
    %v1533 = vld [vmem:[#allocation3 + $0x168] sm:$0xff]
    %v1534 = vld [vmem:[#allocation3 + $0x170] sm:$0xff]
    %v1535 = vld [vmem:[#allocation3 + $0x178] sm:$0xff]
    %v1536 = vld [vmem:[#allocation3 + $0x180] sm:$0xff]
    %v1537 = vld [vmem:[#allocation3 + $0x188] sm:$0xff]
    %v1538 = vld [vmem:[#allocation3 + $0x190] sm:$0xff]
    %v1539 = vld [vmem:[#allocation3 + $0x198] sm:$0xff]
    %v1540 = vld [vmem:[#allocation3 + $0x1a0] sm:$0xff]
    %v1541 = vld [vmem:[#allocation3 + $0x1a8] sm:$0xff]
    %v1542 = vld [vmem:[#allocation3 + $0x1b0] sm:$0xff]
    %v1543 = vld [vmem:[#allocation3 + $0x1b8] sm:$0xff]
    %v1544 = vld [vmem:[#allocation3 + $0x1c0] sm:$0xff]
    %v1545 = vld [vmem:[#allocation3 + $0x1c8] sm:$0xff]
    %v1546 = vld [vmem:[#allocation3 + $0x1d0] sm:$0xff]
    %v1547 = vld [vmem:[#allocation3 + $0x1d8] sm:$0xff]
    %v1548 = vld [vmem:[#allocation3 + $0x1e0] sm:$0xff]
    %v1549 = vld [vmem:[#allocation3 + $0x1e8] sm:$0xff]
    %v1550 = vld [vmem:[#allocation3 + $0x1f0] sm:$0xff]
    %v1551 = vld [vmem:[#allocation3 + $0x1f8] sm:$0xff]
    %v1552 = vstv %s975
    %v1553 = vmul.f32 %v1552, %v1488
    %v1554 = vmul.f32 %v1552, %v1489
    %v1555 = vmul.f32 %v1552, %v1490
    %v1556 = vmul.f32 %v1552, %v1491
    %v1557 = vmul.f32 %v1552, %v1492
    %v1558 = vmul.f32 %v1552, %v1493
    %v1559 = vmul.f32 %v1552, %v1494
    %v1560 = vmul.f32 %v1552, %v1495
    %v1561 = vmul.f32 %v1552, %v1496
    %v1562 = vmul.f32 %v1552, %v1497
    %v1563 = vmul.f32 %v1552, %v1498
    %v1564 = vmul.f32 %v1552, %v1499
    %v1565 = vmul.f32 %v1552, %v1500
    %v1566 = vmul.f32 %v1552, %v1501
    %v1567 = vmul.f32 %v1552, %v1502
    %v1568 = vmul.f32 %v1552, %v1503
    %v1569 = vmul.f32 %v1552, %v1504
    %v1570 = vmul.f32 %v1552, %v1505
    %v1571 = vmul.f32 %v1552, %v1506
    %v1572 = vmul.f32 %v1552, %v1507
    %v1573 = vmul.f32 %v1552, %v1508
    %v1574 = vmul.f32 %v1552, %v1509
    %v1575 = vmul.f32 %v1552, %v1510
    %v1576 = vmul.f32 %v1552, %v1511
    %v1577 = vmul.f32 %v1552, %v1512
    %v1578 = vmul.f32 %v1552, %v1513
    %v1579 = vmul.f32 %v1552, %v1514
    %v1580 = vmul.f32 %v1552, %v1515
    %v1581 = vmul.f32 %v1552, %v1516
    %v1582 = vmul.f32 %v1552, %v1517
    %v1583 = vmul.f32 %v1552, %v1518
    %v1584 = vmul.f32 %v1552, %v1519
    %v1585 = vmul.f32 %v1552, %v1520
    %v1586 = vmul.f32 %v1552, %v1521
    %v1587 = vmul.f32 %v1552, %v1522
    %v1588 = vmul.f32 %v1552, %v1523
    %v1589 = vmul.f32 %v1552, %v1524
    %v1590 = vmul.f32 %v1552, %v1525
    %v1591 = vmul.f32 %v1552, %v1526
    %v1592 = vmul.f32 %v1552, %v1527
    %v1593 = vmul.f32 %v1552, %v1528
    %v1594 = vmul.f32 %v1552, %v1529
    %v1595 = vmul.f32 %v1552, %v1530
    %v1596 = vmul.f32 %v1552, %v1531
    %v1597 = vmul.f32 %v1552, %v1532
    %v1598 = vmul.f32 %v1552, %v1533
    %v1599 = vmul.f32 %v1552, %v1534
    %v1600 = vmul.f32 %v1552, %v1535
    %v1601 = vmul.f32 %v1552, %v1536
    %v1602 = vmul.f32 %v1552, %v1537
    %v1603 = vmul.f32 %v1552, %v1538
    %v1604 = vmul.f32 %v1552, %v1539
    %v1605 = vmul.f32 %v1552, %v1540
    %v1606 = vmul.f32 %v1552, %v1541
    %v1607 = vmul.f32 %v1552, %v1542
    %v1608 = vmul.f32 %v1552, %v1543
    %v1609 = vmul.f32 %v1552, %v1544
    %v1610 = vmul.f32 %v1552, %v1545
    %v1611 = vmul.f32 %v1552, %v1546
    %v1612 = vmul.f32 %v1552, %v1547
    %v1613 = vmul.f32 %v1552, %v1548
    %v1614 = vmul.f32 %v1552, %v1549
    %v1615 = vmul.f32 %v1552, %v1550
    %v1616 = vmul.f32 %v1552, %v1551
    %v1617 = vadd.f32 %v911, %v1553
    %v1618 = vadd.f32 %v912, %v1554
    %v1619 = vadd.f32 %v913, %v1555
    %v1620 = vadd.f32 %v914, %v1556
    %v1621 = vadd.f32 %v915, %v1557
    %v1622 = vadd.f32 %v916, %v1558
    %v1623 = vadd.f32 %v917, %v1559
    %v1624 = vadd.f32 %v918, %v1560
    %v1625 = vadd.f32 %v919, %v1561
    %v1626 = vadd.f32 %v920, %v1562
    %v1627 = vadd.f32 %v921, %v1563
    %v1628 = vadd.f32 %v922, %v1564
    %v1629 = vadd.f32 %v923, %v1565
    %v1630 = vadd.f32 %v924, %v1566
    %v1631 = vadd.f32 %v925, %v1567
    %v1632 = vadd.f32 %v926, %v1568
    %v1633 = vadd.f32 %v927, %v1569
    %v1634 = vadd.f32 %v928, %v1570
    %v1635 = vadd.f32 %v929, %v1571
    %v1636 = vadd.f32 %v930, %v1572
    %v1637 = vadd.f32 %v931, %v1573
    %v1638 = vadd.f32 %v932, %v1574
    %v1639 = vadd.f32 %v933, %v1575
    %v1640 = vadd.f32 %v934, %v1576
    %v1641 = vadd.f32 %v935, %v1577
    %v1642 = vadd.f32 %v936, %v1578
    %v1643 = vadd.f32 %v937, %v1579
    %v1644 = vadd.f32 %v938, %v1580
    %v1645 = vadd.f32 %v939, %v1581
    %v1646 = vadd.f32 %v940, %v1582
    %v1647 = vadd.f32 %v941, %v1583
    %v1648 = vadd.f32 %v942, %v1584
    %v1649 = vadd.f32 %v943, %v1585
    %v1650 = vadd.f32 %v944, %v1586
    %v1651 = vadd.f32 %v945, %v1587
    %v1652 = vadd.f32 %v946, %v1588
    %v1653 = vadd.f32 %v947, %v1589
    %v1654 = vadd.f32 %v948, %v1590
    %v1655 = vadd.f32 %v949, %v1591
    %v1656 = vadd.f32 %v950, %v1592
    %v1657 = vadd.f32 %v951, %v1593
    %v1658 = vadd.f32 %v952, %v1594
    %v1659 = vadd.f32 %v953, %v1595
    %v1660 = vadd.f32 %v954, %v1596
    %v1661 = vadd.f32 %v955, %v1597
    %v1662 = vadd.f32 %v956, %v1598
    %v1663 = vadd.f32 %v957, %v1599
    %v1664 = vadd.f32 %v958, %v1600
    %v1665 = vadd.f32 %v959, %v1601
    %v1666 = vadd.f32 %v960, %v1602
    %v1667 = vadd.f32 %v961, %v1603
    %v1668 = vadd.f32 %v962, %v1604
    %v1669 = vadd.f32 %v963, %v1605
    %v1670 = vadd.f32 %v964, %v1606
    %v1671 = vadd.f32 %v965, %v1607
    %v1672 = vadd.f32 %v966, %v1608
    %v1673 = vadd.f32 %v967, %v1609
    %v1674 = vadd.f32 %v968, %v1610
    %v1675 = vadd.f32 %v969, %v1611
    %v1676 = vadd.f32 %v970, %v1612
    %v1677 = vadd.f32 %v971, %v1613
    %v1678 = vadd.f32 %v972, %v1614
    %v1679 = vadd.f32 %v973, %v1615
    %v1680 = vadd.f32 %v974, %v1616
    %v1681 = vpack.c.bf16 %v1618, %v1617
    %v1682 = vpack.c.bf16 %v1620, %v1619
    %v1683 = vpack.c.bf16 %v1622, %v1621
    %v1684 = vpack.c.bf16 %v1624, %v1623
    %v1685 = vpack.c.bf16 %v1626, %v1625
    %v1686 = vpack.c.bf16 %v1628, %v1627
    %v1687 = vpack.c.bf16 %v1630, %v1629
    %v1688 = vpack.c.bf16 %v1632, %v1631
    %v1689 = vpack.c.bf16 %v1634, %v1633
    %v1690 = vpack.c.bf16 %v1636, %v1635
    %v1691 = vpack.c.bf16 %v1638, %v1637
    %v1692 = vpack.c.bf16 %v1640, %v1639
    %v1693 = vpack.c.bf16 %v1642, %v1641
    %v1694 = vpack.c.bf16 %v1644, %v1643
    %v1695 = vpack.c.bf16 %v1646, %v1645
    %v1696 = vpack.c.bf16 %v1648, %v1647
    %v1697 = vpack.c.bf16 %v1650, %v1649
    %v1698 = vpack.c.bf16 %v1652, %v1651
    %v1699 = vpack.c.bf16 %v1654, %v1653
    %v1700 = vpack.c.bf16 %v1656, %v1655
    %v1701 = vpack.c.bf16 %v1658, %v1657
    %v1702 = vpack.c.bf16 %v1660, %v1659
    %v1703 = vpack.c.bf16 %v1662, %v1661
    %v1704 = vpack.c.bf16 %v1664, %v1663
    %v1705 = vpack.c.bf16 %v1666, %v1665
    %v1706 = vpack.c.bf16 %v1668, %v1667
    %v1707 = vpack.c.bf16 %v1670, %v1669
    %v1708 = vpack.c.bf16 %v1672, %v1671
    %v1709 = vpack.c.bf16 %v1674, %v1673
    %v1710 = vpack.c.bf16 %v1676, %v1675
    %v1711 = vpack.c.bf16 %v1678, %v1677
    %v1712 = vpack.c.bf16 %v1680, %v1679
    %s1713 = scalar_lea.vmem %s2, 192
    %v1714 = vld [vmem:[%s1713] sm:$0xf]
    %v1715 = vld [vmem:[%s1713 + $0x4] sm:$0xf]
    %v1716 = vld [vmem:[%s1713 + $0x8] sm:$0xf]
    %v1717 = vld [vmem:[%s1713 + $0xc] sm:$0xf]
    %v1718 = vld [vmem:[%s1713 + $0x10] sm:$0xf]
    %v1719 = vld [vmem:[%s1713 + $0x14] sm:$0xf]
    %v1720 = vld [vmem:[%s1713 + $0x18] sm:$0xf]
    %v1721 = vld [vmem:[%s1713 + $0x1c] sm:$0xf]
    %v1722 = vld [vmem:[%s1713 + $0x20] sm:$0xf]
    %v1723 = vld [vmem:[%s1713 + $0x24] sm:$0xf]
    %v1724 = vld [vmem:[%s1713 + $0x28] sm:$0xf]
    %v1725 = vld [vmem:[%s1713 + $0x2c] sm:$0xf]
    %v1726 = vld [vmem:[%s1713 + $0x30] sm:$0xf]
    %v1727 = vld [vmem:[%s1713 + $0x34] sm:$0xf]
    %v1728 = vld [vmem:[%s1713 + $0x38] sm:$0xf]
    %v1729 = vld [vmem:[%s1713 + $0x3c] sm:$0xf]
    %v1746 = vunpack.c.l.b16 %v1714
    %v1747 = vunpack.c.l.b16 %v1715
    %v1748 = vunpack.c.l.b16 %v1716
    %v1749 = vunpack.c.l.b16 %v1717
    %v1750 = vunpack.c.l.b16 %v1718
    %v1751 = vunpack.c.l.b16 %v1719
    %v1752 = vunpack.c.l.b16 %v1720
    %v1753 = vunpack.c.l.b16 %v1721
    %v1754 = vunpack.c.l.b16 %v1722
    %v1755 = vunpack.c.l.b16 %v1723
    %v1756 = vunpack.c.l.b16 %v1724
    %v1757 = vunpack.c.l.b16 %v1725
    %v1758 = vunpack.c.l.b16 %v1726
    %v1759 = vunpack.c.l.b16 %v1727
    %v1760 = vunpack.c.l.b16 %v1728
    %v1761 = vunpack.c.l.b16 %v1729
    %v1762 = vpack.c.b16 %v1747, %v1746
    %v1763 = vpack.c.b16 %v1749, %v1748
    %v1764 = vpack.c.b16 %v1751, %v1750
    %v1765 = vpack.c.b16 %v1753, %v1752
    %v1766 = vpack.c.b16 %v1755, %v1754
    %v1767 = vpack.c.b16 %v1757, %v1756
    %v1768 = vpack.c.b16 %v1759, %v1758
    %v1769 = vpack.c.b16 %v1761, %v1760
    %1778 = vmatpush.bf16.msra.mxu0 %v1769
    %1779 = vmatpush.bf16.msra.mxu0 %v1768
    %1780 = vmatpush.bf16.msra.mxu0 %v1767
    %1781 = vmatpush.bf16.msra.mxu0 %v1766
    %1782 = vmatpush.bf16.msra.mxu0 %v1765
    %1783 = vmatpush.bf16.msra.mxu0 %v1764
    %1784 = vmatpush.bf16.msra.mxu0 %v1763
    %1785 = vmatpush.bf16.msra.mxu0 %v1762
    %1786 = vmatmul.bf16.gmra.mxu0 %v1681
    %v1787 = vpop.f32.mrf.mxu0
    %v1788 = vadd.f32 0.0, %v1787
    %v1789 = vpop.f32.mrf.mxu0
    %v1790 = vadd.f32 0.0, %v1789
    %1791 = vmatmul.bf16.gmra.mxu0 %v1682
    %v1792 = vpop.f32.mrf.mxu0
    %v1793 = vadd.f32 0.0, %v1792
    %v1794 = vpop.f32.mrf.mxu0
    %v1795 = vadd.f32 0.0, %v1794
    %1796 = vmatmul.bf16.gmra.mxu0 %v1683
    %v1797 = vpop.f32.mrf.mxu0
    %v1798 = vadd.f32 0.0, %v1797
    %v1799 = vpop.f32.mrf.mxu0
    %v1800 = vadd.f32 0.0, %v1799
    %1801 = vmatmul.bf16.gmra.mxu0 %v1684
    %v1802 = vpop.f32.mrf.mxu0
    %v1803 = vadd.f32 0.0, %v1802
    %v1804 = vpop.f32.mrf.mxu0
    %v1805 = vadd.f32 0.0, %v1804
    %1806 = vmatmul.bf16.gmra.mxu0 %v1685
    %v1807 = vpop.f32.mrf.mxu0
    %v1808 = vadd.f32 0.0, %v1807
    %v1809 = vpop.f32.mrf.mxu0
    %v1810 = vadd.f32 0.0, %v1809
    %1811 = vmatmul.bf16.gmra.mxu0 %v1686
    %v1812 = vpop.f32.mrf.mxu0
    %v1813 = vadd.f32 0.0, %v1812
    %v1814 = vpop.f32.mrf.mxu0
    %v1815 = vadd.f32 0.0, %v1814
    %1816 = vmatmul.bf16.gmra.mxu0 %v1687
    %v1817 = vpop.f32.mrf.mxu0
    %v1818 = vadd.f32 0.0, %v1817
    %v1819 = vpop.f32.mrf.mxu0
    %v1820 = vadd.f32 0.0, %v1819
    %1821 = vmatmul.bf16.gmra.mxu0 %v1688
    %v1822 = vpop.f32.mrf.mxu0
    %v1823 = vadd.f32 0.0, %v1822
    %v1824 = vpop.f32.mrf.mxu0
    %v1825 = vadd.f32 0.0, %v1824
    %1826 = vmatmul.bf16.gmra.mxu0 %v1689
    %v1827 = vpop.f32.mrf.mxu0
    %v1828 = vadd.f32 0.0, %v1827
    %v1829 = vpop.f32.mrf.mxu0
    %v1830 = vadd.f32 0.0, %v1829
    %1831 = vmatmul.bf16.gmra.mxu0 %v1690
    %v1832 = vpop.f32.mrf.mxu0
    %v1833 = vadd.f32 0.0, %v1832
    %v1834 = vpop.f32.mrf.mxu0
    %v1835 = vadd.f32 0.0, %v1834
    %1836 = vmatmul.bf16.gmra.mxu0 %v1691
    %v1837 = vpop.f32.mrf.mxu0
    %v1838 = vadd.f32 0.0, %v1837
    %v1839 = vpop.f32.mrf.mxu0
    %v1840 = vadd.f32 0.0, %v1839
    %1841 = vmatmul.bf16.gmra.mxu0 %v1692
    %v1842 = vpop.f32.mrf.mxu0
    %v1843 = vadd.f32 0.0, %v1842
    %v1844 = vpop.f32.mrf.mxu0
    %v1845 = vadd.f32 0.0, %v1844
    %1846 = vmatmul.bf16.gmra.mxu0 %v1693
    %v1847 = vpop.f32.mrf.mxu0
    %v1848 = vadd.f32 0.0, %v1847
    %v1849 = vpop.f32.mrf.mxu0
    %v1850 = vadd.f32 0.0, %v1849
    %1851 = vmatmul.bf16.gmra.mxu0 %v1694
    %v1852 = vpop.f32.mrf.mxu0
    %v1853 = vadd.f32 0.0, %v1852
    %v1854 = vpop.f32.mrf.mxu0
    %v1855 = vadd.f32 0.0, %v1854
    %1856 = vmatmul.bf16.gmra.mxu0 %v1695
    %v1857 = vpop.f32.mrf.mxu0
    %v1858 = vadd.f32 0.0, %v1857
    %v1859 = vpop.f32.mrf.mxu0
    %v1860 = vadd.f32 0.0, %v1859
    %1861 = vmatmul.bf16.gmra.mxu0 %v1696
    %v1862 = vpop.f32.mrf.mxu0
    %v1863 = vadd.f32 0.0, %v1862
    %v1864 = vpop.f32.mrf.mxu0
    %v1865 = vadd.f32 0.0, %v1864
    %1866 = vmatmul.bf16.gmra.mxu0 %v1697
    %v1867 = vpop.f32.mrf.mxu0
    %v1868 = vadd.f32 0.0, %v1867
    %v1869 = vpop.f32.mrf.mxu0
    %v1870 = vadd.f32 0.0, %v1869
    %1871 = vmatmul.bf16.gmra.mxu0 %v1698
    %v1872 = vpop.f32.mrf.mxu0
    %v1873 = vadd.f32 0.0, %v1872
    %v1874 = vpop.f32.mrf.mxu0
    %v1875 = vadd.f32 0.0, %v1874
    %1876 = vmatmul.bf16.gmra.mxu0 %v1699
    %v1877 = vpop.f32.mrf.mxu0
    %v1878 = vadd.f32 0.0, %v1877
    %v1879 = vpop.f32.mrf.mxu0
    %v1880 = vadd.f32 0.0, %v1879
    %1881 = vmatmul.bf16.gmra.mxu0 %v1700
    %v1882 = vpop.f32.mrf.mxu0
    %v1883 = vadd.f32 0.0, %v1882
    %v1884 = vpop.f32.mrf.mxu0
    %v1885 = vadd.f32 0.0, %v1884
    %1886 = vmatmul.bf16.gmra.mxu0 %v1701
    %v1887 = vpop.f32.mrf.mxu0
    %v1888 = vadd.f32 0.0, %v1887
    %v1889 = vpop.f32.mrf.mxu0
    %v1890 = vadd.f32 0.0, %v1889
    %1891 = vmatmul.bf16.gmra.mxu0 %v1702
    %v1892 = vpop.f32.mrf.mxu0
    %v1893 = vadd.f32 0.0, %v1892
    %v1894 = vpop.f32.mrf.mxu0
    %v1895 = vadd.f32 0.0, %v1894
    %1896 = vmatmul.bf16.gmra.mxu0 %v1703
    %v1897 = vpop.f32.mrf.mxu0
    %v1898 = vadd.f32 0.0, %v1897
    %v1899 = vpop.f32.mrf.mxu0
    %v1900 = vadd.f32 0.0, %v1899
    %1901 = vmatmul.bf16.gmra.mxu0 %v1704
    %v1902 = vpop.f32.mrf.mxu0
    %v1903 = vadd.f32 0.0, %v1902
    %v1904 = vpop.f32.mrf.mxu0
    %v1905 = vadd.f32 0.0, %v1904
    %1906 = vmatmul.bf16.gmra.mxu0 %v1705
    %v1907 = vpop.f32.mrf.mxu0
    %v1908 = vadd.f32 0.0, %v1907
    %v1909 = vpop.f32.mrf.mxu0
    %v1910 = vadd.f32 0.0, %v1909
    %1911 = vmatmul.bf16.gmra.mxu0 %v1706
    %v1912 = vpop.f32.mrf.mxu0
    %v1913 = vadd.f32 0.0, %v1912
    %v1914 = vpop.f32.mrf.mxu0
    %v1915 = vadd.f32 0.0, %v1914
    %1916 = vmatmul.bf16.gmra.mxu0 %v1707
    %v1917 = vpop.f32.mrf.mxu0
    %v1918 = vadd.f32 0.0, %v1917
    %v1919 = vpop.f32.mrf.mxu0
    %v1920 = vadd.f32 0.0, %v1919
    %1921 = vmatmul.bf16.gmra.mxu0 %v1708
    %v1922 = vpop.f32.mrf.mxu0
    %v1923 = vadd.f32 0.0, %v1922
    %v1924 = vpop.f32.mrf.mxu0
    %v1925 = vadd.f32 0.0, %v1924
    %1926 = vmatmul.bf16.gmra.mxu0 %v1709
    %v1927 = vpop.f32.mrf.mxu0
    %v1928 = vadd.f32 0.0, %v1927
    %v1929 = vpop.f32.mrf.mxu0
    %v1930 = vadd.f32 0.0, %v1929
    %1931 = vmatmul.bf16.gmra.mxu0 %v1710
    %v1932 = vpop.f32.mrf.mxu0
    %v1933 = vadd.f32 0.0, %v1932
    %v1934 = vpop.f32.mrf.mxu0
    %v1935 = vadd.f32 0.0, %v1934
    %1936 = vmatmul.bf16.gmra.mxu0 %v1711
    %v1937 = vpop.f32.mrf.mxu0
    %v1938 = vadd.f32 0.0, %v1937
    %v1939 = vpop.f32.mrf.mxu0
    %v1940 = vadd.f32 0.0, %v1939
    %1941 = vmatmul.bf16.gmra.mxu0 %v1712
    %v1942 = vpop.f32.mrf.mxu0
    %v1943 = vadd.f32 0.0, %v1942
    %v1944 = vpop.f32.mrf.mxu0
    %v1945 = vadd.f32 0.0, %v1944
    %1946 = vdwg.mxu0
    %v1947 = vadd.f32 %v1788, %v1790
    %v1948 = vadd.f32 %v1947, %v1793
    %v1949 = vadd.f32 %v1948, %v1795
    %v1950 = vadd.f32 %v1949, %v1798
    %v1951 = vadd.f32 %v1950, %v1800
    %v1952 = vadd.f32 %v1951, %v1803
    %v1953 = vadd.f32 %v1952, %v1805
    %v1954 = vadd.f32 %v1953, %v1808
    %v1955 = vadd.f32 %v1954, %v1810
    %v1956 = vadd.f32 %v1955, %v1813
    %v1957 = vadd.f32 %v1956, %v1815
    %v1958 = vadd.f32 %v1957, %v1818
    %v1959 = vadd.f32 %v1958, %v1820
    %v1960 = vadd.f32 %v1959, %v1823
    %v1961 = vadd.f32 %v1960, %v1825
    %v1962 = vadd.f32 %v1961, %v1828
    %v1963 = vadd.f32 %v1962, %v1830
    %v1964 = vadd.f32 %v1963, %v1833
    %v1965 = vadd.f32 %v1964, %v1835
    %v1966 = vadd.f32 %v1965, %v1838
    %v1967 = vadd.f32 %v1966, %v1840
    %v1968 = vadd.f32 %v1967, %v1843
    %v1969 = vadd.f32 %v1968, %v1845
    %v1970 = vadd.f32 %v1969, %v1848
    %v1971 = vadd.f32 %v1970, %v1850
    %v1972 = vadd.f32 %v1971, %v1853
    %v1973 = vadd.f32 %v1972, %v1855
    %v1974 = vadd.f32 %v1973, %v1858
    %v1975 = vadd.f32 %v1974, %v1860
    %v1976 = vadd.f32 %v1975, %v1863
    %v1977 = vadd.f32 %v1976, %v1865
    %v1978 = vadd.f32 %v1977, %v1868
    %v1979 = vadd.f32 %v1978, %v1870
    %v1980 = vadd.f32 %v1979, %v1873
    %v1981 = vadd.f32 %v1980, %v1875
    %v1982 = vadd.f32 %v1981, %v1878
    %v1983 = vadd.f32 %v1982, %v1880
    %v1984 = vadd.f32 %v1983, %v1883
    %v1985 = vadd.f32 %v1984, %v1885
    %v1986 = vadd.f32 %v1985, %v1888
    %v1987 = vadd.f32 %v1986, %v1890
    %v1988 = vadd.f32 %v1987, %v1893
    %v1989 = vadd.f32 %v1988, %v1895
    %v1990 = vadd.f32 %v1989, %v1898
    %v1991 = vadd.f32 %v1990, %v1900
    %v1992 = vadd.f32 %v1991, %v1903
    %v1993 = vadd.f32 %v1992, %v1905
    %v1994 = vadd.f32 %v1993, %v1908
    %v1995 = vadd.f32 %v1994, %v1910
    %v1996 = vadd.f32 %v1995, %v1913
    %v1997 = vadd.f32 %v1996, %v1915
    %v1998 = vadd.f32 %v1997, %v1918
    %v1999 = vadd.f32 %v1998, %v1920
    %v2000 = vadd.f32 %v1999, %v1923
    %v2001 = vadd.f32 %v2000, %v1925
    %v2002 = vadd.f32 %v2001, %v1928
    %v2003 = vadd.f32 %v2002, %v1930
    %v2004 = vadd.f32 %v2003, %v1933
    %v2005 = vadd.f32 %v2004, %v1935
    %v2006 = vadd.f32 %v2005, %v1938
    %v2007 = vadd.f32 %v2006, %v1940
    %v2008 = vadd.f32 %v2007, %v1943
    %v2009 = vadd.f32 %v2008, %v1945
    %v2010 = vrot.slane %v2009, 4
    %v2011 = vadd.f32 %v2009, %v2010
    %v2012 = vrot.slane %v2011, 2
    %v2013 = vadd.f32 %v2011, %v2012
    %v2014 = vrot.slane %v2013, 1
    %v2015 = vadd.f32 %v2013, %v2014
    %v2016 = vmul.f32 %v2015, 0.001953125
    %v2017 = vmul.f32 %v1788, %v1788
    %v2018 = vmul.f32 %v1790, %v1790
    %v2019 = vmul.f32 %v1793, %v1793
    %v2020 = vmul.f32 %v1795, %v1795
    %v2021 = vmul.f32 %v1798, %v1798
    %v2022 = vmul.f32 %v1800, %v1800
    %v2023 = vmul.f32 %v1803, %v1803
    %v2024 = vmul.f32 %v1805, %v1805
    %v2025 = vmul.f32 %v1808, %v1808
    %v2026 = vmul.f32 %v1810, %v1810
    %v2027 = vmul.f32 %v1813, %v1813
    %v2028 = vmul.f32 %v1815, %v1815
    %v2029 = vmul.f32 %v1818, %v1818
    %v2030 = vmul.f32 %v1820, %v1820
    %v2031 = vmul.f32 %v1823, %v1823
    %v2032 = vmul.f32 %v1825, %v1825
    %v2033 = vmul.f32 %v1828, %v1828
    %v2034 = vmul.f32 %v1830, %v1830
    %v2035 = vmul.f32 %v1833, %v1833
    %v2036 = vmul.f32 %v1835, %v1835
    %v2037 = vmul.f32 %v1838, %v1838
    %v2038 = vmul.f32 %v1840, %v1840
    %v2039 = vmul.f32 %v1843, %v1843
    %v2040 = vmul.f32 %v1845, %v1845
    %v2041 = vmul.f32 %v1848, %v1848
    %v2042 = vmul.f32 %v1850, %v1850
    %v2043 = vmul.f32 %v1853, %v1853
    %v2044 = vmul.f32 %v1855, %v1855
    %v2045 = vmul.f32 %v1858, %v1858
    %v2046 = vmul.f32 %v1860, %v1860
    %v2047 = vmul.f32 %v1863, %v1863
    %v2048 = vmul.f32 %v1865, %v1865
    %v2049 = vmul.f32 %v1868, %v1868
    %v2050 = vmul.f32 %v1870, %v1870
    %v2051 = vmul.f32 %v1873, %v1873
    %v2052 = vmul.f32 %v1875, %v1875
    %v2053 = vmul.f32 %v1878, %v1878
    %v2054 = vmul.f32 %v1880, %v1880
    %v2055 = vmul.f32 %v1883, %v1883
    %v2056 = vmul.f32 %v1885, %v1885
    %v2057 = vmul.f32 %v1888, %v1888
    %v2058 = vmul.f32 %v1890, %v1890
    %v2059 = vmul.f32 %v1893, %v1893
    %v2060 = vmul.f32 %v1895, %v1895
    %v2061 = vmul.f32 %v1898, %v1898
    %v2062 = vmul.f32 %v1900, %v1900
    %v2063 = vmul.f32 %v1903, %v1903
    %v2064 = vmul.f32 %v1905, %v1905
    %v2065 = vmul.f32 %v1908, %v1908
    %v2066 = vmul.f32 %v1910, %v1910
    %v2067 = vmul.f32 %v1913, %v1913
    %v2068 = vmul.f32 %v1915, %v1915
    %v2069 = vmul.f32 %v1918, %v1918
    %v2070 = vmul.f32 %v1920, %v1920
    %v2071 = vmul.f32 %v1923, %v1923
    %v2072 = vmul.f32 %v1925, %v1925
    %v2073 = vmul.f32 %v1928, %v1928
    %v2074 = vmul.f32 %v1930, %v1930
    %v2075 = vmul.f32 %v1933, %v1933
    %v2076 = vmul.f32 %v1935, %v1935
    %v2077 = vmul.f32 %v1938, %v1938
    %v2078 = vmul.f32 %v1940, %v1940
    %v2079 = vmul.f32 %v1943, %v1943
    %v2080 = vmul.f32 %v1945, %v1945
    %v2081 = vadd.f32 %v2017, %v2018
    %v2082 = vadd.f32 %v2081, %v2019
    %v2083 = vadd.f32 %v2082, %v2020
    %v2084 = vadd.f32 %v2083, %v2021
    %v2085 = vadd.f32 %v2084, %v2022
    %v2086 = vadd.f32 %v2085, %v2023
    %v2087 = vadd.f32 %v2086, %v2024
    %v2088 = vadd.f32 %v2087, %v2025
    %v2089 = vadd.f32 %v2088, %v2026
    %v2090 = vadd.f32 %v2089, %v2027
    %v2091 = vadd.f32 %v2090, %v2028
    %v2092 = vadd.f32 %v2091, %v2029
    %v2093 = vadd.f32 %v2092, %v2030
    %v2094 = vadd.f32 %v2093, %v2031
    %v2095 = vadd.f32 %v2094, %v2032
    %v2096 = vadd.f32 %v2095, %v2033
    %v2097 = vadd.f32 %v2096, %v2034
    %v2098 = vadd.f32 %v2097, %v2035
    %v2099 = vadd.f32 %v2098, %v2036
    %v2100 = vadd.f32 %v2099, %v2037
    %v2101 = vadd.f32 %v2100, %v2038
    %v2102 = vadd.f32 %v2101, %v2039
    %v2103 = vadd.f32 %v2102, %v2040
    %v2104 = vadd.f32 %v2103, %v2041
    %v2105 = vadd.f32 %v2104, %v2042
    %v2106 = vadd.f32 %v2105, %v2043
    %v2107 = vadd.f32 %v2106, %v2044
    %v2108 = vadd.f32 %v2107, %v2045
    %v2109 = vadd.f32 %v2108, %v2046
    %v2110 = vadd.f32 %v2109, %v2047
    %v2111 = vadd.f32 %v2110, %v2048
    %v2112 = vadd.f32 %v2111, %v2049
    %v2113 = vadd.f32 %v2112, %v2050
    %v2114 = vadd.f32 %v2113, %v2051
    %v2115 = vadd.f32 %v2114, %v2052
    %v2116 = vadd.f32 %v2115, %v2053
    %v2117 = vadd.f32 %v2116, %v2054
    %v2118 = vadd.f32 %v2117, %v2055
    %v2119 = vadd.f32 %v2118, %v2056
    %v2120 = vadd.f32 %v2119, %v2057
    %v2121 = vadd.f32 %v2120, %v2058
    %v2122 = vadd.f32 %v2121, %v2059
    %v2123 = vadd.f32 %v2122, %v2060
    %v2124 = vadd.f32 %v2123, %v2061
    %v2125 = vadd.f32 %v2124, %v2062
    %v2126 = vadd.f32 %v2125, %v2063
    %v2127 = vadd.f32 %v2126, %v2064
    %v2128 = vadd.f32 %v2127, %v2065
    %v2129 = vadd.f32 %v2128, %v2066
    %v2130 = vadd.f32 %v2129, %v2067
    %v2131 = vadd.f32 %v2130, %v2068
    %v2132 = vadd.f32 %v2131, %v2069
    %v2133 = vadd.f32 %v2132, %v2070
    %v2134 = vadd.f32 %v2133, %v2071
    %v2135 = vadd.f32 %v2134, %v2072
    %v2136 = vadd.f32 %v2135, %v2073
    %v2137 = vadd.f32 %v2136, %v2074
    %v2138 = vadd.f32 %v2137, %v2075
    %v2139 = vadd.f32 %v2138, %v2076
    %v2140 = vadd.f32 %v2139, %v2077
    %v2141 = vadd.f32 %v2140, %v2078
    %v2142 = vadd.f32 %v2141, %v2079
    %v2143 = vadd.f32 %v2142, %v2080
    %v2144 = vrot.slane %v2143, 4
    %v2145 = vadd.f32 %v2143, %v2144
    %v2146 = vrot.slane %v2145, 2
    %v2147 = vadd.f32 %v2145, %v2146
    %v2148 = vrot.slane %v2147, 1
    %v2149 = vadd.f32 %v2147, %v2148
    %v2150 = vmul.f32 %v2149, 0.001953125
    %v2151 = vmul.f32 %v2016, %v2016
    %v2152 = vsub.f32 %v2150, %v2151
    %v2153 = vld [vmem:[%s3 + $0x6] sm:$0x1]
    %v2154 = vadd.f32 %v2152, 4e-05
    %v2155 = vrsqrt.pop %v2154
    %v2156 = vmul.f32 %v2155, %v2154
    %v2157 = vmul.f32 %v2156, %v2155
    %v2158 = vmul.f32 0.5, %v2157
    %v2159 = vsub.f32 1.5, %v2158
    %v2160 = vmul.f32 %v2155, %v2159
    %vm2161 = vweird.f32 %v2154
    %vm2162 = vweird.f32 %v2155
    %vm2163 = vmor %vm2161, %vm2162
    %v2164 = vsel %vm2163, %v2155, %v2160
    %v2165 = vmul.f32 %v2153, %v2164
    %v2166 = vld [vmem:[%s3 + $0x7] sm:$0x1]
    %v2167 = vmul.f32 %v2016, %v2165
    %v2168 = vsub.f32 %v2166, %v2167
    %v2169 = vperm.slane %v2165, 0
    %v2170 = vmul.f32 %v1788, %v2169
    %v2171 = vmul.f32 %v1790, %v2169
    %v2172 = vmul.f32 %v1793, %v2169
    %v2173 = vmul.f32 %v1795, %v2169
    %v2174 = vmul.f32 %v1798, %v2169
    %v2175 = vmul.f32 %v1800, %v2169
    %v2176 = vmul.f32 %v1803, %v2169
    %v2177 = vmul.f32 %v1805, %v2169
    %v2178 = vmul.f32 %v1808, %v2169
    %v2179 = vmul.f32 %v1810, %v2169
    %v2180 = vmul.f32 %v1813, %v2169
    %v2181 = vmul.f32 %v1815, %v2169
    %v2182 = vmul.f32 %v1818, %v2169
    %v2183 = vmul.f32 %v1820, %v2169
    %v2184 = vmul.f32 %v1823, %v2169
    %v2185 = vmul.f32 %v1825, %v2169
    %v2186 = vmul.f32 %v1828, %v2169
    %v2187 = vmul.f32 %v1830, %v2169
    %v2188 = vmul.f32 %v1833, %v2169
    %v2189 = vmul.f32 %v1835, %v2169
    %v2190 = vmul.f32 %v1838, %v2169
    %v2191 = vmul.f32 %v1840, %v2169
    %v2192 = vmul.f32 %v1843, %v2169
    %v2193 = vmul.f32 %v1845, %v2169
    %v2194 = vmul.f32 %v1848, %v2169
    %v2195 = vmul.f32 %v1850, %v2169
    %v2196 = vmul.f32 %v1853, %v2169
    %v2197 = vmul.f32 %v1855, %v2169
    %v2198 = vmul.f32 %v1858, %v2169
    %v2199 = vmul.f32 %v1860, %v2169
    %v2200 = vmul.f32 %v1863, %v2169
    %v2201 = vmul.f32 %v1865, %v2169
    %v2202 = vmul.f32 %v1868, %v2169
    %v2203 = vmul.f32 %v1870, %v2169
    %v2204 = vmul.f32 %v1873, %v2169
    %v2205 = vmul.f32 %v1875, %v2169
    %v2206 = vmul.f32 %v1878, %v2169
    %v2207 = vmul.f32 %v1880, %v2169
    %v2208 = vmul.f32 %v1883, %v2169
    %v2209 = vmul.f32 %v1885, %v2169
    %v2210 = vmul.f32 %v1888, %v2169
    %v2211 = vmul.f32 %v1890, %v2169
    %v2212 = vmul.f32 %v1893, %v2169
    %v2213 = vmul.f32 %v1895, %v2169
    %v2214 = vmul.f32 %v1898, %v2169
    %v2215 = vmul.f32 %v1900, %v2169
    %v2216 = vmul.f32 %v1903, %v2169
    %v2217 = vmul.f32 %v1905, %v2169
    %v2218 = vmul.f32 %v1908, %v2169
    %v2219 = vmul.f32 %v1910, %v2169
    %v2220 = vmul.f32 %v1913, %v2169
    %v2221 = vmul.f32 %v1915, %v2169
    %v2222 = vmul.f32 %v1918, %v2169
    %v2223 = vmul.f32 %v1920, %v2169
    %v2224 = vmul.f32 %v1923, %v2169
    %v2225 = vmul.f32 %v1925, %v2169
    %v2226 = vmul.f32 %v1928, %v2169
    %v2227 = vmul.f32 %v1930, %v2169
    %v2228 = vmul.f32 %v1933, %v2169
    %v2229 = vmul.f32 %v1935, %v2169
    %v2230 = vmul.f32 %v1938, %v2169
    %v2231 = vmul.f32 %v1940, %v2169
    %v2232 = vmul.f32 %v1943, %v2169
    %v2233 = vmul.f32 %v1945, %v2169
    %v2234 = vperm.slane %v2168, 0
    %v2235 = vadd.f32 %v2170, %v2234
    %v2236 = vadd.f32 %v2171, %v2234
    %v2237 = vadd.f32 %v2172, %v2234
    %v2238 = vadd.f32 %v2173, %v2234
    %v2239 = vadd.f32 %v2174, %v2234
    %v2240 = vadd.f32 %v2175, %v2234
    %v2241 = vadd.f32 %v2176, %v2234
    %v2242 = vadd.f32 %v2177, %v2234
    %v2243 = vadd.f32 %v2178, %v2234
    %v2244 = vadd.f32 %v2179, %v2234
    %v2245 = vadd.f32 %v2180, %v2234
    %v2246 = vadd.f32 %v2181, %v2234
    %v2247 = vadd.f32 %v2182, %v2234
    %v2248 = vadd.f32 %v2183, %v2234
    %v2249 = vadd.f32 %v2184, %v2234
    %v2250 = vadd.f32 %v2185, %v2234
    %v2251 = vadd.f32 %v2186, %v2234
    %v2252 = vadd.f32 %v2187, %v2234
    %v2253 = vadd.f32 %v2188, %v2234
    %v2254 = vadd.f32 %v2189, %v2234
    %v2255 = vadd.f32 %v2190, %v2234
    %v2256 = vadd.f32 %v2191, %v2234
    %v2257 = vadd.f32 %v2192, %v2234
    %v2258 = vadd.f32 %v2193, %v2234
    %v2259 = vadd.f32 %v2194, %v2234
    %v2260 = vadd.f32 %v2195, %v2234
    %v2261 = vadd.f32 %v2196, %v2234
    %v2262 = vadd.f32 %v2197, %v2234
    %v2263 = vadd.f32 %v2198, %v2234
    %v2264 = vadd.f32 %v2199, %v2234
    %v2265 = vadd.f32 %v2200, %v2234
    %v2266 = vadd.f32 %v2201, %v2234
    %v2267 = vadd.f32 %v2202, %v2234
    %v2268 = vadd.f32 %v2203, %v2234
    %v2269 = vadd.f32 %v2204, %v2234
    %v2270 = vadd.f32 %v2205, %v2234
    %v2271 = vadd.f32 %v2206, %v2234
    %v2272 = vadd.f32 %v2207, %v2234
    %v2273 = vadd.f32 %v2208, %v2234
    %v2274 = vadd.f32 %v2209, %v2234
    %v2275 = vadd.f32 %v2210, %v2234
    %v2276 = vadd.f32 %v2211, %v2234
    %v2277 = vadd.f32 %v2212, %v2234
    %v2278 = vadd.f32 %v2213, %v2234
    %v2279 = vadd.f32 %v2214, %v2234
    %v2280 = vadd.f32 %v2215, %v2234
    %v2281 = vadd.f32 %v2216, %v2234
    %v2282 = vadd.f32 %v2217, %v2234
    %v2283 = vadd.f32 %v2218, %v2234
    %v2284 = vadd.f32 %v2219, %v2234
    %v2285 = vadd.f32 %v2220, %v2234
    %v2286 = vadd.f32 %v2221, %v2234
    %v2287 = vadd.f32 %v2222, %v2234
    %v2288 = vadd.f32 %v2223, %v2234
    %v2289 = vadd.f32 %v2224, %v2234
    %v2290 = vadd.f32 %v2225, %v2234
    %v2291 = vadd.f32 %v2226, %v2234
    %v2292 = vadd.f32 %v2227, %v2234
    %v2293 = vadd.f32 %v2228, %v2234
    %v2294 = vadd.f32 %v2229, %v2234
    %v2295 = vadd.f32 %v2230, %v2234
    %v2296 = vadd.f32 %v2231, %v2234
    %v2297 = vadd.f32 %v2232, %v2234
    %v2298 = vadd.f32 %v2233, %v2234
    %v2299 = vmax.f32 %v2235, 0.0
    %v2300 = vmax.f32 %v2236, 0.0
    %v2301 = vmax.f32 %v2237, 0.0
    %v2302 = vmax.f32 %v2238, 0.0
    %v2303 = vmax.f32 %v2239, 0.0
    %v2304 = vmax.f32 %v2240, 0.0
    %v2305 = vmax.f32 %v2241, 0.0
    %v2306 = vmax.f32 %v2242, 0.0
    %v2307 = vmax.f32 %v2243, 0.0
    %v2308 = vmax.f32 %v2244, 0.0
    %v2309 = vmax.f32 %v2245, 0.0
    %v2310 = vmax.f32 %v2246, 0.0
    %v2311 = vmax.f32 %v2247, 0.0
    %v2312 = vmax.f32 %v2248, 0.0
    %v2313 = vmax.f32 %v2249, 0.0
    %v2314 = vmax.f32 %v2250, 0.0
    %v2315 = vmax.f32 %v2251, 0.0
    %v2316 = vmax.f32 %v2252, 0.0
    %v2317 = vmax.f32 %v2253, 0.0
    %v2318 = vmax.f32 %v2254, 0.0
    %v2319 = vmax.f32 %v2255, 0.0
    %v2320 = vmax.f32 %v2256, 0.0
    %v2321 = vmax.f32 %v2257, 0.0
    %v2322 = vmax.f32 %v2258, 0.0
    %v2323 = vmax.f32 %v2259, 0.0
    %v2324 = vmax.f32 %v2260, 0.0
    %v2325 = vmax.f32 %v2261, 0.0
    %v2326 = vmax.f32 %v2262, 0.0
    %v2327 = vmax.f32 %v2263, 0.0
    %v2328 = vmax.f32 %v2264, 0.0
    %v2329 = vmax.f32 %v2265, 0.0
    %v2330 = vmax.f32 %v2266, 0.0
    %v2331 = vmax.f32 %v2267, 0.0
    %v2332 = vmax.f32 %v2268, 0.0
    %v2333 = vmax.f32 %v2269, 0.0
    %v2334 = vmax.f32 %v2270, 0.0
    %v2335 = vmax.f32 %v2271, 0.0
    %v2336 = vmax.f32 %v2272, 0.0
    %v2337 = vmax.f32 %v2273, 0.0
    %v2338 = vmax.f32 %v2274, 0.0
    %v2339 = vmax.f32 %v2275, 0.0
    %v2340 = vmax.f32 %v2276, 0.0
    %v2341 = vmax.f32 %v2277, 0.0
    %v2342 = vmax.f32 %v2278, 0.0
    %v2343 = vmax.f32 %v2279, 0.0
    %v2344 = vmax.f32 %v2280, 0.0
    %v2345 = vmax.f32 %v2281, 0.0
    %v2346 = vmax.f32 %v2282, 0.0
    %v2347 = vmax.f32 %v2283, 0.0
    %v2348 = vmax.f32 %v2284, 0.0
    %v2349 = vmax.f32 %v2285, 0.0
    %v2350 = vmax.f32 %v2286, 0.0
    %v2351 = vmax.f32 %v2287, 0.0
    %v2352 = vmax.f32 %v2288, 0.0
    %v2353 = vmax.f32 %v2289, 0.0
    %v2354 = vmax.f32 %v2290, 0.0
    %v2355 = vmax.f32 %v2291, 0.0
    %v2356 = vmax.f32 %v2292, 0.0
    %v2357 = vmax.f32 %v2293, 0.0
    %v2358 = vmax.f32 %v2294, 0.0
    %v2359 = vmax.f32 %v2295, 0.0
    %v2360 = vmax.f32 %v2296, 0.0
    %v2361 = vmax.f32 %v2297, 0.0
    %v2362 = vmax.f32 %v2298, 0.0
    %2363 = vst [vmem:[%s4] sm:$0xff] %v2299
    %2364 = vst [vmem:[%s4 + $0x8] sm:$0xff] %v2300
    %2365 = vst [vmem:[%s4 + $0x10] sm:$0xff] %v2301
    %2366 = vst [vmem:[%s4 + $0x18] sm:$0xff] %v2302
    %2367 = vst [vmem:[%s4 + $0x20] sm:$0xff] %v2303
    %2368 = vst [vmem:[%s4 + $0x28] sm:$0xff] %v2304
    %2369 = vst [vmem:[%s4 + $0x30] sm:$0xff] %v2305
    %2370 = vst [vmem:[%s4 + $0x38] sm:$0xff] %v2306
    %2371 = vst [vmem:[%s4 + $0x40] sm:$0xff] %v2307
    %2372 = vst [vmem:[%s4 + $0x48] sm:$0xff] %v2308
    %2373 = vst [vmem:[%s4 + $0x50] sm:$0xff] %v2309
    %2374 = vst [vmem:[%s4 + $0x58] sm:$0xff] %v2310
    %2375 = vst [vmem:[%s4 + $0x60] sm:$0xff] %v2311
    %2376 = vst [vmem:[%s4 + $0x68] sm:$0xff] %v2312
    %2377 = vst [vmem:[%s4 + $0x70] sm:$0xff] %v2313
    %2378 = vst [vmem:[%s4 + $0x78] sm:$0xff] %v2314
    %2379 = vst [vmem:[%s4 + $0x80] sm:$0xff] %v2315
    %2380 = vst [vmem:[%s4 + $0x88] sm:$0xff] %v2316
    %2381 = vst [vmem:[%s4 + $0x90] sm:$0xff] %v2317
    %2382 = vst [vmem:[%s4 + $0x98] sm:$0xff] %v2318
    %2383 = vst [vmem:[%s4 + $0xa0] sm:$0xff] %v2319
    %2384 = vst [vmem:[%s4 + $0xa8] sm:$0xff] %v2320
    %2385 = vst [vmem:[%s4 + $0xb0] sm:$0xff] %v2321
    %2386 = vst [vmem:[%s4 + $0xb8] sm:$0xff] %v2322
    %2387 = vst [vmem:[%s4 + $0xc0] sm:$0xff] %v2323
    %2388 = vst [vmem:[%s4 + $0xc8] sm:$0xff] %v2324
    %2389 = vst [vmem:[%s4 + $0xd0] sm:$0xff] %v2325
    %2390 = vst [vmem:[%s4 + $0xd8] sm:$0xff] %v2326
    %2391 = vst [vmem:[%s4 + $0xe0] sm:$0xff] %v2327
    %2392 = vst [vmem:[%s4 + $0xe8] sm:$0xff] %v2328
    %2393 = vst [vmem:[%s4 + $0xf0] sm:$0xff] %v2329
    %2394 = vst [vmem:[%s4 + $0xf8] sm:$0xff] %v2330
    %2395 = vst [vmem:[%s4 + $0x100] sm:$0xff] %v2331
    %2396 = vst [vmem:[%s4 + $0x108] sm:$0xff] %v2332
    %2397 = vst [vmem:[%s4 + $0x110] sm:$0xff] %v2333
    %2398 = vst [vmem:[%s4 + $0x118] sm:$0xff] %v2334
    %2399 = vst [vmem:[%s4 + $0x120] sm:$0xff] %v2335
    %2400 = vst [vmem:[%s4 + $0x128] sm:$0xff] %v2336
    %2401 = vst [vmem:[%s4 + $0x130] sm:$0xff] %v2337
    %2402 = vst [vmem:[%s4 + $0x138] sm:$0xff] %v2338
    %2403 = vst [vmem:[%s4 + $0x140] sm:$0xff] %v2339
    %2404 = vst [vmem:[%s4 + $0x148] sm:$0xff] %v2340
    %2405 = vst [vmem:[%s4 + $0x150] sm:$0xff] %v2341
    %2406 = vst [vmem:[%s4 + $0x158] sm:$0xff] %v2342
    %2407 = vst [vmem:[%s4 + $0x160] sm:$0xff] %v2343
    %2408 = vst [vmem:[%s4 + $0x168] sm:$0xff] %v2344
    %2409 = vst [vmem:[%s4 + $0x170] sm:$0xff] %v2345
    %2410 = vst [vmem:[%s4 + $0x178] sm:$0xff] %v2346
    %2411 = vst [vmem:[%s4 + $0x180] sm:$0xff] %v2347
    %2412 = vst [vmem:[%s4 + $0x188] sm:$0xff] %v2348
    %2413 = vst [vmem:[%s4 + $0x190] sm:$0xff] %v2349
    %2414 = vst [vmem:[%s4 + $0x198] sm:$0xff] %v2350
    %2415 = vst [vmem:[%s4 + $0x1a0] sm:$0xff] %v2351
    %2416 = vst [vmem:[%s4 + $0x1a8] sm:$0xff] %v2352
    %2417 = vst [vmem:[%s4 + $0x1b0] sm:$0xff] %v2353
    %2418 = vst [vmem:[%s4 + $0x1b8] sm:$0xff] %v2354
    %2419 = vst [vmem:[%s4 + $0x1c0] sm:$0xff] %v2355
    %2420 = vst [vmem:[%s4 + $0x1c8] sm:$0xff] %v2356
    %2421 = vst [vmem:[%s4 + $0x1d0] sm:$0xff] %v2357
    %2422 = vst [vmem:[%s4 + $0x1d8] sm:$0xff] %v2358
    %2423 = vst [vmem:[%s4 + $0x1e0] sm:$0xff] %v2359
    %2424 = vst [vmem:[%s4 + $0x1e8] sm:$0xff] %v2360
    %2425 = vst [vmem:[%s4 + $0x1f0] sm:$0xff] %v2361
    %2426 = vst [vmem:[%s4 + $0x1f8] sm:$0xff] %v2362
    %s2427 = sld [smem:[#allocation4 + $0x8]]
    %v2428 = vld [vmem:[%s1 + $0x200] sm:$0xff]
    %v2429 = vld [vmem:[%s1 + $0x208] sm:$0xff]
    %v2430 = vld [vmem:[%s1 + $0x210] sm:$0xff]
    %v2431 = vld [vmem:[%s1 + $0x218] sm:$0xff]
    %v2432 = vld [vmem:[%s1 + $0x220] sm:$0xff]
    %v2433 = vld [vmem:[%s1 + $0x228] sm:$0xff]
    %v2434 = vld [vmem:[%s1 + $0x230] sm:$0xff]
    %v2435 = vld [vmem:[%s1 + $0x238] sm:$0xff]
    %v2436 = vld [vmem:[%s1 + $0x240] sm:$0xff]
    %v2437 = vld [vmem:[%s1 + $0x248] sm:$0xff]
    %v2438 = vld [vmem:[%s1 + $0x250] sm:$0xff]
    %v2439 = vld [vmem:[%s1 + $0x258] sm:$0xff]
    %v2440 = vld [vmem:[%s1 + $0x260] sm:$0xff]
    %v2441 = vld [vmem:[%s1 + $0x268] sm:$0xff]
    %v2442 = vld [vmem:[%s1 + $0x270] sm:$0xff]
    %v2443 = vld [vmem:[%s1 + $0x278] sm:$0xff]
    %v2444 = vstv %s2427
    %v2445 = vmul.f32 %v2444, %v2428
    %v2446 = vmul.f32 %v2444, %v2429
    %v2447 = vmul.f32 %v2444, %v2430
    %v2448 = vmul.f32 %v2444, %v2431
    %v2449 = vmul.f32 %v2444, %v2432
    %v2450 = vmul.f32 %v2444, %v2433
    %v2451 = vmul.f32 %v2444, %v2434
    %v2452 = vmul.f32 %v2444, %v2435
    %v2453 = vmul.f32 %v2444, %v2436
    %v2454 = vmul.f32 %v2444, %v2437
    %v2455 = vmul.f32 %v2444, %v2438
    %v2456 = vmul.f32 %v2444, %v2439
    %v2457 = vmul.f32 %v2444, %v2440
    %v2458 = vmul.f32 %v2444, %v2441
    %v2459 = vmul.f32 %v2444, %v2442
    %v2460 = vmul.f32 %v2444, %v2443
    %s2461 = sld [smem:[#allocation4 + $0xc]]
    %v2462 = vstv %s2461
    %v2463 = vmul.f32 %v2462, %v813
    %v2464 = vmul.f32 %v2462, %v814
    %v2465 = vmul.f32 %v2462, %v815
    %v2466 = vmul.f32 %v2462, %v816
    %v2467 = vmul.f32 %v2462, %v817
    %v2468 = vmul.f32 %v2462, %v818
    %v2469 = vmul.f32 %v2462, %v819
    %v2470 = vmul.f32 %v2462, %v820
    %v2471 = vmul.f32 %v2462, %v821
    %v2472 = vmul.f32 %v2462, %v822
    %v2473 = vmul.f32 %v2462, %v823
    %v2474 = vmul.f32 %v2462, %v824
    %v2475 = vmul.f32 %v2462, %v825
    %v2476 = vmul.f32 %v2462, %v826
    %v2477 = vmul.f32 %v2462, %v827
    %v2478 = vmul.f32 %v2462, %v828
    %v2479 = vadd.f32 %v2445, %v2463
    %v2480 = vadd.f32 %v2446, %v2464
    %v2481 = vadd.f32 %v2447, %v2465
    %v2482 = vadd.f32 %v2448, %v2466
    %v2483 = vadd.f32 %v2449, %v2467
    %v2484 = vadd.f32 %v2450, %v2468
    %v2485 = vadd.f32 %v2451, %v2469
    %v2486 = vadd.f32 %v2452, %v2470
    %v2487 = vadd.f32 %v2453, %v2471
    %v2488 = vadd.f32 %v2454, %v2472
    %v2489 = vadd.f32 %v2455, %v2473
    %v2490 = vadd.f32 %v2456, %v2474
    %v2491 = vadd.f32 %v2457, %v2475
    %v2492 = vadd.f32 %v2458, %v2476
    %v2493 = vadd.f32 %v2459, %v2477
    %v2494 = vadd.f32 %v2460, %v2478
    %s2495 = sld [smem:[#allocation4 + $0x10]]
    %v2496 = vld [vmem:[%s4] ss:$2 sm:$0xff]
    %2497 = vst [vmem:[#allocation2] sm:$0xff] %v2496
    %s2498 = scalar_lea.vmem %s4, 32
    %v2499 = vld [vmem:[%s2498] ss:$2 sm:$0xff]
    %2500 = vst [vmem:[#allocation2 + $0x8] sm:$0xff] %v2499
    %s2501 = scalar_lea.vmem %s4, 64
    %v2502 = vld [vmem:[%s2501] ss:$2 sm:$0xff]
    %2503 = vst [vmem:[#allocation2 + $0x10] sm:$0xff] %v2502
    %s2504 = scalar_lea.vmem %s4, 96
    %v2505 = vld [vmem:[%s2504] ss:$2 sm:$0xff]
    %2506 = vst [vmem:[#allocation2 + $0x18] sm:$0xff] %v2505
    %s2507 = scalar_lea.vmem %s4, 128
    %v2508 = vld [vmem:[%s2507] ss:$2 sm:$0xff]
    %2509 = vst [vmem:[#allocation2 + $0x20] sm:$0xff] %v2508
    %s2510 = scalar_lea.vmem %s4, 160
    %v2511 = vld [vmem:[%s2510] ss:$2 sm:$0xff]
    %2512 = vst [vmem:[#allocation2 + $0x28] sm:$0xff] %v2511
    %s2513 = scalar_lea.vmem %s4, 192
    %v2514 = vld [vmem:[%s2513] ss:$2 sm:$0xff]
    %2515 = vst [vmem:[#allocation2 + $0x30] sm:$0xff] %v2514
    %s2516 = scalar_lea.vmem %s4, 224
    %v2517 = vld [vmem:[%s2516] ss:$2 sm:$0xff]
    %2518 = vst [vmem:[#allocation2 + $0x38] sm:$0xff] %v2517
    %s2519 = scalar_lea.vmem %s4, 256
    %v2520 = vld [vmem:[%s2519] ss:$2 sm:$0xff]
    %2521 = vst [vmem:[#allocation2 + $0x40] sm:$0xff] %v2520
    %s2522 = scalar_lea.vmem %s4, 288
    %v2523 = vld [vmem:[%s2522] ss:$2 sm:$0xff]
    %2524 = vst [vmem:[#allocation2 + $0x48] sm:$0xff] %v2523
    %s2525 = scalar_lea.vmem %s4, 320
    %v2526 = vld [vmem:[%s2525] ss:$2 sm:$0xff]
    %2527 = vst [vmem:[#allocation2 + $0x50] sm:$0xff] %v2526
    %s2528 = scalar_lea.vmem %s4, 352
    %v2529 = vld [vmem:[%s2528] ss:$2 sm:$0xff]
    %2530 = vst [vmem:[#allocation2 + $0x58] sm:$0xff] %v2529
    %s2531 = scalar_lea.vmem %s4, 384
    %v2532 = vld [vmem:[%s2531] ss:$2 sm:$0xff]
    %2533 = vst [vmem:[#allocation2 + $0x60] sm:$0xff] %v2532
    %s2534 = scalar_lea.vmem %s4, 416
    %v2535 = vld [vmem:[%s2534] ss:$2 sm:$0xff]
    %2536 = vst [vmem:[#allocation2 + $0x68] sm:$0xff] %v2535
    %s2537 = scalar_lea.vmem %s4, 448
    %v2538 = vld [vmem:[%s2537] ss:$2 sm:$0xff]
    %2539 = vst [vmem:[#allocation2 + $0x70] sm:$0xff] %v2538
    %s2540 = scalar_lea.vmem %s4, 480
    %v2541 = vld [vmem:[%s2540] ss:$2 sm:$0xff]
    %2542 = vst [vmem:[#allocation2 + $0x78] sm:$0xff] %v2541
    %v2543 = vld [vmem:[#allocation2] sm:$0xff]
    %v2544 = vld [vmem:[#allocation2 + $0x8] sm:$0xff]
    %v2545 = vld [vmem:[#allocation2 + $0x10] sm:$0xff]
    %v2546 = vld [vmem:[#allocation2 + $0x18] sm:$0xff]
    %v2547 = vld [vmem:[#allocation2 + $0x20] sm:$0xff]
    %v2548 = vld [vmem:[#allocation2 + $0x28] sm:$0xff]
    %v2549 = vld [vmem:[#allocation2 + $0x30] sm:$0xff]
    %v2550 = vld [vmem:[#allocation2 + $0x38] sm:$0xff]
    %v2551 = vld [vmem:[#allocation2 + $0x40] sm:$0xff]
    %v2552 = vld [vmem:[#allocation2 + $0x48] sm:$0xff]
    %v2553 = vld [vmem:[#allocation2 + $0x50] sm:$0xff]
    %v2554 = vld [vmem:[#allocation2 + $0x58] sm:$0xff]
    %v2555 = vld [vmem:[#allocation2 + $0x60] sm:$0xff]
    %v2556 = vld [vmem:[#allocation2 + $0x68] sm:$0xff]
    %v2557 = vld [vmem:[#allocation2 + $0x70] sm:$0xff]
    %v2558 = vld [vmem:[#allocation2 + $0x78] sm:$0xff]
    %v2559 = vstv %s2495
    %v2560 = vmul.f32 %v2559, %v2543
    %v2561 = vmul.f32 %v2559, %v2544
    %v2562 = vmul.f32 %v2559, %v2545
    %v2563 = vmul.f32 %v2559, %v2546
    %v2564 = vmul.f32 %v2559, %v2547
    %v2565 = vmul.f32 %v2559, %v2548
    %v2566 = vmul.f32 %v2559, %v2549
    %v2567 = vmul.f32 %v2559, %v2550
    %v2568 = vmul.f32 %v2559, %v2551
    %v2569 = vmul.f32 %v2559, %v2552
    %v2570 = vmul.f32 %v2559, %v2553
    %v2571 = vmul.f32 %v2559, %v2554
    %v2572 = vmul.f32 %v2559, %v2555
    %v2573 = vmul.f32 %v2559, %v2556
    %v2574 = vmul.f32 %v2559, %v2557
    %v2575 = vmul.f32 %v2559, %v2558
    %v2576 = vadd.f32 %v2479, %v2560
    %v2577 = vadd.f32 %v2480, %v2561
    %v2578 = vadd.f32 %v2481, %v2562
    %v2579 = vadd.f32 %v2482, %v2563
    %v2580 = vadd.f32 %v2483, %v2564
    %v2581 = vadd.f32 %v2484, %v2565
    %v2582 = vadd.f32 %v2485, %v2566
    %v2583 = vadd.f32 %v2486, %v2567
    %v2584 = vadd.f32 %v2487, %v2568
    %v2585 = vadd.f32 %v2488, %v2569
    %v2586 = vadd.f32 %v2489, %v2570
    %v2587 = vadd.f32 %v2490, %v2571
    %v2588 = vadd.f32 %v2491, %v2572
    %v2589 = vadd.f32 %v2492, %v2573
    %v2590 = vadd.f32 %v2493, %v2574
    %v2591 = vadd.f32 %v2494, %v2575
    %v2592 = vpack.c.bf16 %v2577, %v2576
    %v2593 = vpack.c.bf16 %v2579, %v2578
    %v2594 = vpack.c.bf16 %v2581, %v2580
    %v2595 = vpack.c.bf16 %v2583, %v2582
    %v2596 = vpack.c.bf16 %v2585, %v2584
    %v2597 = vpack.c.bf16 %v2587, %v2586
    %v2598 = vpack.c.bf16 %v2589, %v2588
    %v2599 = vpack.c.bf16 %v2591, %v2590
    %s2600 = scalar_lea.vmem %s2, 256
    %v2601 = vld [vmem:[%s2600] sm:$0xf]
    %v2602 = vld [vmem:[%s2600 + $0x4] sm:$0xf]
    %v2603 = vld [vmem:[%s2600 + $0x8] sm:$0xf]
    %v2604 = vld [vmem:[%s2600 + $0xc] sm:$0xf]
    %v2605 = vld [vmem:[%s2600 + $0x10] sm:$0xf]
    %v2606 = vld [vmem:[%s2600 + $0x14] sm:$0xf]
    %v2607 = vld [vmem:[%s2600 + $0x18] sm:$0xf]
    %v2608 = vld [vmem:[%s2600 + $0x1c] sm:$0xf]
    %v2609 = vld [vmem:[%s2600 + $0x20] sm:$0xf]
    %v2610 = vld [vmem:[%s2600 + $0x24] sm:$0xf]
    %v2611 = vld [vmem:[%s2600 + $0x28] sm:$0xf]
    %v2612 = vld [vmem:[%s2600 + $0x2c] sm:$0xf]
    %v2613 = vld [vmem:[%s2600 + $0x30] sm:$0xf]
    %v2614 = vld [vmem:[%s2600 + $0x34] sm:$0xf]
    %v2615 = vld [vmem:[%s2600 + $0x38] sm:$0xf]
    %v2616 = vld [vmem:[%s2600 + $0x3c] sm:$0xf]
    %v2633 = vunpack.c.l.b16 %v2601
    %v2634 = vunpack.c.l.b16 %v2602
    %v2635 = vunpack.c.l.b16 %v2603
    %v2636 = vunpack.c.l.b16 %v2604
    %v2637 = vunpack.c.l.b16 %v2605
    %v2638 = vunpack.c.l.b16 %v2606
    %v2639 = vunpack.c.l.b16 %v2607
    %v2640 = vunpack.c.l.b16 %v2608
    %v2641 = vunpack.c.l.b16 %v2609
    %v2642 = vunpack.c.l.b16 %v2610
    %v2643 = vunpack.c.l.b16 %v2611
    %v2644 = vunpack.c.l.b16 %v2612
    %v2645 = vunpack.c.l.b16 %v2613
    %v2646 = vunpack.c.l.b16 %v2614
    %v2647 = vunpack.c.l.b16 %v2615
    %v2648 = vunpack.c.l.b16 %v2616
    %v2649 = vpack.c.b16 %v2634, %v2633
    %v2650 = vpack.c.b16 %v2636, %v2635
    %v2651 = vpack.c.b16 %v2638, %v2637
    %v2652 = vpack.c.b16 %v2640, %v2639
    %v2653 = vpack.c.b16 %v2642, %v2641
    %v2654 = vpack.c.b16 %v2644, %v2643
    %v2655 = vpack.c.b16 %v2646, %v2645
    %v2656 = vpack.c.b16 %v2648, %v2647
    %2665 = vmatpush.bf16.msra.mxu0 %v2656
    %2666 = vmatpush.bf16.msra.mxu0 %v2655
    %2667 = vmatpush.bf16.msra.mxu0 %v2654
    %2668 = vmatpush.bf16.msra.mxu0 %v2653
    %2669 = vmatpush.bf16.msra.mxu0 %v2652
    %2670 = vmatpush.bf16.msra.mxu0 %v2651
    %2671 = vmatpush.bf16.msra.mxu0 %v2650
    %2672 = vmatpush.bf16.msra.mxu0 %v2649
    %2673 = vmatmul.bf16.gmra.mxu0 %v2592
    %v2674 = vpop.f32.mrf.mxu0
    %v2675 = vadd.f32 0.0, %v2674
    %v2676 = vpop.f32.mrf.mxu0
    %v2677 = vadd.f32 0.0, %v2676
    %2678 = vmatmul.bf16.gmra.mxu0 %v2593
    %v2679 = vpop.f32.mrf.mxu0
    %v2680 = vadd.f32 0.0, %v2679
    %v2681 = vpop.f32.mrf.mxu0
    %v2682 = vadd.f32 0.0, %v2681
    %2683 = vmatmul.bf16.gmra.mxu0 %v2594
    %v2684 = vpop.f32.mrf.mxu0
    %v2685 = vadd.f32 0.0, %v2684
    %v2686 = vpop.f32.mrf.mxu0
    %v2687 = vadd.f32 0.0, %v2686
    %2688 = vmatmul.bf16.gmra.mxu0 %v2595
    %v2689 = vpop.f32.mrf.mxu0
    %v2690 = vadd.f32 0.0, %v2689
    %v2691 = vpop.f32.mrf.mxu0
    %v2692 = vadd.f32 0.0, %v2691
    %2693 = vmatmul.bf16.gmra.mxu0 %v2596
    %v2694 = vpop.f32.mrf.mxu0
    %v2695 = vadd.f32 0.0, %v2694
    %v2696 = vpop.f32.mrf.mxu0
    %v2697 = vadd.f32 0.0, %v2696
    %2698 = vmatmul.bf16.gmra.mxu0 %v2597
    %v2699 = vpop.f32.mrf.mxu0
    %v2700 = vadd.f32 0.0, %v2699
    %v2701 = vpop.f32.mrf.mxu0
    %v2702 = vadd.f32 0.0, %v2701
    %2703 = vmatmul.bf16.gmra.mxu0 %v2598
    %v2704 = vpop.f32.mrf.mxu0
    %v2705 = vadd.f32 0.0, %v2704
    %v2706 = vpop.f32.mrf.mxu0
    %v2707 = vadd.f32 0.0, %v2706
    %2708 = vmatmul.bf16.gmra.mxu0 %v2599
    %v2709 = vpop.f32.mrf.mxu0
    %v2710 = vadd.f32 0.0, %v2709
    %v2711 = vpop.f32.mrf.mxu0
    %v2712 = vadd.f32 0.0, %v2711
    %2713 = vdwg.mxu0
    %v2714 = vadd.f32 %v2675, %v2677
    %v2715 = vadd.f32 %v2714, %v2680
    %v2716 = vadd.f32 %v2715, %v2682
    %v2717 = vadd.f32 %v2716, %v2685
    %v2718 = vadd.f32 %v2717, %v2687
    %v2719 = vadd.f32 %v2718, %v2690
    %v2720 = vadd.f32 %v2719, %v2692
    %v2721 = vadd.f32 %v2720, %v2695
    %v2722 = vadd.f32 %v2721, %v2697
    %v2723 = vadd.f32 %v2722, %v2700
    %v2724 = vadd.f32 %v2723, %v2702
    %v2725 = vadd.f32 %v2724, %v2705
    %v2726 = vadd.f32 %v2725, %v2707
    %v2727 = vadd.f32 %v2726, %v2710
    %v2728 = vadd.f32 %v2727, %v2712
    %v2729 = vrot.slane %v2728, 4
    %v2730 = vadd.f32 %v2728, %v2729
    %v2731 = vrot.slane %v2730, 2
    %v2732 = vadd.f32 %v2730, %v2731
    %v2733 = vrot.slane %v2732, 1
    %v2734 = vadd.f32 %v2732, %v2733
    %v2735 = vmul.f32 %v2734, 0.0078125
    %v2736 = vmul.f32 %v2675, %v2675
    %v2737 = vmul.f32 %v2677, %v2677
    %v2738 = vmul.f32 %v2680, %v2680
    %v2739 = vmul.f32 %v2682, %v2682
    %v2740 = vmul.f32 %v2685, %v2685
    %v2741 = vmul.f32 %v2687, %v2687
    %v2742 = vmul.f32 %v2690, %v2690
    %v2743 = vmul.f32 %v2692, %v2692
    %v2744 = vmul.f32 %v2695, %v2695
    %v2745 = vmul.f32 %v2697, %v2697
    %v2746 = vmul.f32 %v2700, %v2700
    %v2747 = vmul.f32 %v2702, %v2702
    %v2748 = vmul.f32 %v2705, %v2705
    %v2749 = vmul.f32 %v2707, %v2707
    %v2750 = vmul.f32 %v2710, %v2710
    %v2751 = vmul.f32 %v2712, %v2712
    %v2752 = vadd.f32 %v2736, %v2737
    %v2753 = vadd.f32 %v2752, %v2738
    %v2754 = vadd.f32 %v2753, %v2739
    %v2755 = vadd.f32 %v2754, %v2740
    %v2756 = vadd.f32 %v2755, %v2741
    %v2757 = vadd.f32 %v2756, %v2742
    %v2758 = vadd.f32 %v2757, %v2743
    %v2759 = vadd.f32 %v2758, %v2744
    %v2760 = vadd.f32 %v2759, %v2745
    %v2761 = vadd.f32 %v2760, %v2746
    %v2762 = vadd.f32 %v2761, %v2747
    %v2763 = vadd.f32 %v2762, %v2748
    %v2764 = vadd.f32 %v2763, %v2749
    %v2765 = vadd.f32 %v2764, %v2750
    %v2766 = vadd.f32 %v2765, %v2751
    %v2767 = vrot.slane %v2766, 4
    %v2768 = vadd.f32 %v2766, %v2767
    %v2769 = vrot.slane %v2768, 2
    %v2770 = vadd.f32 %v2768, %v2769
    %v2771 = vrot.slane %v2770, 1
    %v2772 = vadd.f32 %v2770, %v2771
    %v2773 = vmul.f32 %v2772, 0.0078125
    %v2774 = vmul.f32 %v2735, %v2735
    %v2775 = vsub.f32 %v2773, %v2774
    %v2776 = vld [vmem:[%s3 + $0x8] sm:$0x1]
    %v2777 = vadd.f32 %v2775, 4e-05
    %v2778 = vrsqrt.pop %v2777
    %v2779 = vmul.f32 %v2778, %v2777
    %v2780 = vmul.f32 %v2779, %v2778
    %v2781 = vmul.f32 0.5, %v2780
    %v2782 = vsub.f32 1.5, %v2781
    %v2783 = vmul.f32 %v2778, %v2782
    %vm2784 = vweird.f32 %v2777
    %vm2785 = vweird.f32 %v2778
    %vm2786 = vmor %vm2784, %vm2785
    %v2787 = vsel %vm2786, %v2778, %v2783
    %v2788 = vmul.f32 %v2776, %v2787
    %v2789 = vld [vmem:[%s3 + $0x9] sm:$0x1]
    %v2790 = vmul.f32 %v2735, %v2788
    %v2791 = vsub.f32 %v2789, %v2790
    %v2792 = vperm.slane %v2788, 0
    %v2793 = vmul.f32 %v2675, %v2792
    %v2794 = vmul.f32 %v2677, %v2792
    %v2795 = vmul.f32 %v2680, %v2792
    %v2796 = vmul.f32 %v2682, %v2792
    %v2797 = vmul.f32 %v2685, %v2792
    %v2798 = vmul.f32 %v2687, %v2792
    %v2799 = vmul.f32 %v2690, %v2792
    %v2800 = vmul.f32 %v2692, %v2792
    %v2801 = vmul.f32 %v2695, %v2792
    %v2802 = vmul.f32 %v2697, %v2792
    %v2803 = vmul.f32 %v2700, %v2792
    %v2804 = vmul.f32 %v2702, %v2792
    %v2805 = vmul.f32 %v2705, %v2792
    %v2806 = vmul.f32 %v2707, %v2792
    %v2807 = vmul.f32 %v2710, %v2792
    %v2808 = vmul.f32 %v2712, %v2792
    %v2809 = vperm.slane %v2791, 0
    %v2810 = vadd.f32 %v2793, %v2809
    %v2811 = vadd.f32 %v2794, %v2809
    %v2812 = vadd.f32 %v2795, %v2809
    %v2813 = vadd.f32 %v2796, %v2809
    %v2814 = vadd.f32 %v2797, %v2809
    %v2815 = vadd.f32 %v2798, %v2809
    %v2816 = vadd.f32 %v2799, %v2809
    %v2817 = vadd.f32 %v2800, %v2809
    %v2818 = vadd.f32 %v2801, %v2809
    %v2819 = vadd.f32 %v2802, %v2809
    %v2820 = vadd.f32 %v2803, %v2809
    %v2821 = vadd.f32 %v2804, %v2809
    %v2822 = vadd.f32 %v2805, %v2809
    %v2823 = vadd.f32 %v2806, %v2809
    %v2824 = vadd.f32 %v2807, %v2809
    %v2825 = vadd.f32 %v2808, %v2809
    %v2826 = vmax.f32 %v2810, 0.0
    %v2827 = vmax.f32 %v2811, 0.0
    %v2828 = vmax.f32 %v2812, 0.0
    %v2829 = vmax.f32 %v2813, 0.0
    %v2830 = vmax.f32 %v2814, 0.0
    %v2831 = vmax.f32 %v2815, 0.0
    %v2832 = vmax.f32 %v2816, 0.0
    %v2833 = vmax.f32 %v2817, 0.0
    %v2834 = vmax.f32 %v2818, 0.0
    %v2835 = vmax.f32 %v2819, 0.0
    %v2836 = vmax.f32 %v2820, 0.0
    %v2837 = vmax.f32 %v2821, 0.0
    %v2838 = vmax.f32 %v2822, 0.0
    %v2839 = vmax.f32 %v2823, 0.0
    %v2840 = vmax.f32 %v2824, 0.0
    %v2841 = vmax.f32 %v2825, 0.0
    %2842 = vst [vmem:[%s4 + $0x200] sm:$0xff] %v2826
    %2843 = vst [vmem:[%s4 + $0x208] sm:$0xff] %v2827
    %2844 = vst [vmem:[%s4 + $0x210] sm:$0xff] %v2828
    %2845 = vst [vmem:[%s4 + $0x218] sm:$0xff] %v2829
    %2846 = vst [vmem:[%s4 + $0x220] sm:$0xff] %v2830
    %2847 = vst [vmem:[%s4 + $0x228] sm:$0xff] %v2831
    %2848 = vst [vmem:[%s4 + $0x230] sm:$0xff] %v2832
    %2849 = vst [vmem:[%s4 + $0x238] sm:$0xff] %v2833
    %2850 = vst [vmem:[%s4 + $0x240] sm:$0xff] %v2834
    %2851 = vst [vmem:[%s4 + $0x248] sm:$0xff] %v2835
    %2852 = vst [vmem:[%s4 + $0x250] sm:$0xff] %v2836
    %2853 = vst [vmem:[%s4 + $0x258] sm:$0xff] %v2837
    %2854 = vst [vmem:[%s4 + $0x260] sm:$0xff] %v2838
    %2855 = vst [vmem:[%s4 + $0x268] sm:$0xff] %v2839
    %2856 = vst [vmem:[%s4 + $0x270] sm:$0xff] %v2840
    %2857 = vst [vmem:[%s4 + $0x278] sm:$0xff] %v2841
    %s2858 = sld [smem:[#allocation4 + $0x9]]
    %v2859 = vld [vmem:[%s1 + $0x280] sm:$0xff]
    %v2860 = vld [vmem:[%s1 + $0x288] sm:$0xff]
    %v2861 = vld [vmem:[%s1 + $0x290] sm:$0xff]
    %v2862 = vld [vmem:[%s1 + $0x298] sm:$0xff]
    %v2863 = vstv %s2858
    %v2864 = vmul.f32 %v2863, %v2859
    %v2865 = vmul.f32 %v2863, %v2860
    %v2866 = vmul.f32 %v2863, %v2861
    %v2867 = vmul.f32 %v2863, %v2862
    %s2868 = sld [smem:[#allocation4 + $0xd]]
    %v2869 = vstv %s2868
    %v2870 = vmul.f32 %v2869, %v359
    %v2871 = vmul.f32 %v2869, %v360
    %v2872 = vmul.f32 %v2869, %v361
    %v2873 = vmul.f32 %v2869, %v362
    %v2874 = vadd.f32 %v2864, %v2870
    %v2875 = vadd.f32 %v2865, %v2871
    %v2876 = vadd.f32 %v2866, %v2872
    %v2877 = vadd.f32 %v2867, %v2873
    %s2878 = sld [smem:[#allocation4 + $0x11]]
    %s2879 = scalar_lea.vmem %s4, 512
    %v2880 = vld [vmem:[%s2879] ss:$2 sm:$0xf]
    %2881 = vst [vmem:[#allocation2] sm:$0xf] %v2880
    %s2882 = scalar_lea.vmem %s4, 528
    %v2883 = vld [vmem:[%s2882] ss:$2 sm:$0xf]
    %2884 = vst [vmem:[#allocation2 + $0x4] sm:$0xf] %v2883
    %s2885 = scalar_lea.vmem %s4, 544
    %v2886 = vld [vmem:[%s2885] ss:$2 sm:$0xf]
    %2887 = vst [vmem:[#allocation2 + $0x8] sm:$0xf] %v2886
    %s2888 = scalar_lea.vmem %s4, 560
    %v2889 = vld [vmem:[%s2888] ss:$2 sm:$0xf]
    %2890 = vst [vmem:[#allocation2 + $0xc] sm:$0xf] %v2889
    %s2891 = scalar_lea.vmem %s4, 576
    %v2892 = vld [vmem:[%s2891] ss:$2 sm:$0xf]
    %2893 = vst [vmem:[#allocation2 + $0x10] sm:$0xf] %v2892
    %s2894 = scalar_lea.vmem %s4, 592
    %v2895 = vld [vmem:[%s2894] ss:$2 sm:$0xf]
    %2896 = vst [vmem:[#allocation2 + $0x14] sm:$0xf] %v2895
    %s2897 = scalar_lea.vmem %s4, 608
    %v2898 = vld [vmem:[%s2897] ss:$2 sm:$0xf]
    %2899 = vst [vmem:[#allocation2 + $0x18] sm:$0xf] %v2898
    %s2900 = scalar_lea.vmem %s4, 624
    %v2901 = vld [vmem:[%s2900] ss:$2 sm:$0xf]
    %2902 = vst [vmem:[#allocation2 + $0x1c] sm:$0xf] %v2901
    %v2903 = vld [vmem:[#allocation2] sm:$0xff]
    %v2904 = vld [vmem:[#allocation2 + $0x8] sm:$0xff]
    %v2905 = vld [vmem:[#allocation2 + $0x10] sm:$0xff]
    %v2906 = vld [vmem:[#allocation2 + $0x18] sm:$0xff]
    %v2907 = vstv %s2878
    %v2908 = vmul.f32 %v2907, %v2903
    %v2909 = vmul.f32 %v2907, %v2904
    %v2910 = vmul.f32 %v2907, %v2905
    %v2911 = vmul.f32 %v2907, %v2906
    %v2912 = vadd.f32 %v2874, %v2908
    %v2913 = vadd.f32 %v2875, %v2909
    %v2914 = vadd.f32 %v2876, %v2910
    %v2915 = vadd.f32 %v2877, %v2911
    %v2916 = vpack.c.bf16 %v2913, %v2912
    %v2917 = vpack.c.bf16 %v2915, %v2914
    %s2918 = scalar_lea.vmem %s2, 320
    %v2919 = vld [vmem:[%s2918] sm:$0xf]
    %v2920 = vld [vmem:[%s2918 + $0x4] sm:$0xf]
    %v2921 = vld [vmem:[%s2918 + $0x8] sm:$0xf]
    %v2922 = vld [vmem:[%s2918 + $0xc] sm:$0xf]
    %v2923 = vld [vmem:[%s2918 + $0x10] sm:$0xf]
    %v2924 = vld [vmem:[%s2918 + $0x14] sm:$0xf]
    %v2925 = vld [vmem:[%s2918 + $0x18] sm:$0xf]
    %v2926 = vld [vmem:[%s2918 + $0x1c] sm:$0xf]
    %v2927 = vld [vmem:[%s2918 + $0x20] sm:$0xf]
    %v2928 = vld [vmem:[%s2918 + $0x24] sm:$0xf]
    %v2929 = vld [vmem:[%s2918 + $0x28] sm:$0xf]
    %v2930 = vld [vmem:[%s2918 + $0x2c] sm:$0xf]
    %v2931 = vld [vmem:[%s2918 + $0x30] sm:$0xf]
    %v2932 = vld [vmem:[%s2918 + $0x34] sm:$0xf]
    %v2933 = vld [vmem:[%s2918 + $0x38] sm:$0xf]
    %v2934 = vld [vmem:[%s2918 + $0x3c] sm:$0xf]
    %v2951 = vunpack.c.l.b16 %v2919
    %v2952 = vunpack.c.l.b16 %v2920
    %v2953 = vunpack.c.l.b16 %v2921
    %v2954 = vunpack.c.l.b16 %v2922
    %v2955 = vunpack.c.l.b16 %v2923
    %v2956 = vunpack.c.l.b16 %v2924
    %v2957 = vunpack.c.l.b16 %v2925
    %v2958 = vunpack.c.l.b16 %v2926
    %v2959 = vunpack.c.l.b16 %v2927
    %v2960 = vunpack.c.l.b16 %v2928
    %v2961 = vunpack.c.l.b16 %v2929
    %v2962 = vunpack.c.l.b16 %v2930
    %v2963 = vunpack.c.l.b16 %v2931
    %v2964 = vunpack.c.l.b16 %v2932
    %v2965 = vunpack.c.l.b16 %v2933
    %v2966 = vunpack.c.l.b16 %v2934
    %v2967 = vpack.c.b16 %v2952, %v2951
    %v2968 = vpack.c.b16 %v2954, %v2953
    %v2969 = vpack.c.b16 %v2956, %v2955
    %v2970 = vpack.c.b16 %v2958, %v2957
    %v2971 = vpack.c.b16 %v2960, %v2959
    %v2972 = vpack.c.b16 %v2962, %v2961
    %v2973 = vpack.c.b16 %v2964, %v2963
    %v2974 = vpack.c.b16 %v2966, %v2965
    %2983 = vmatpush.bf16.msra.mxu0 %v2974
    %2984 = vmatpush.bf16.msra.mxu0 %v2973
    %2985 = vmatpush.bf16.msra.mxu0 %v2972
    %2986 = vmatpush.bf16.msra.mxu0 %v2971
    %2987 = vmatpush.bf16.msra.mxu0 %v2970
    %2988 = vmatpush.bf16.msra.mxu0 %v2969
    %2989 = vmatpush.bf16.msra.mxu0 %v2968
    %2990 = vmatpush.bf16.msra.mxu0 %v2967
    %2991 = vmatmul.bf16.gmra.mxu0 %v2916
    %v2992 = vpop.f32.mrf.mxu0
    %v2993 = vadd.f32 0.0, %v2992
    %v2994 = vpop.f32.mrf.mxu0
    %v2995 = vadd.f32 0.0, %v2994
    %2996 = vmatmul.bf16.gmra.mxu0 %v2917
    %v2997 = vpop.f32.mrf.mxu0
    %v2998 = vadd.f32 0.0, %v2997
    %v2999 = vpop.f32.mrf.mxu0
    %v3000 = vadd.f32 0.0, %v2999
    %3001 = vdwg.mxu0
    %v3002 = vadd.f32 %v2993, %v2995
    %v3003 = vadd.f32 %v3002, %v2998
    %v3004 = vadd.f32 %v3003, %v3000
    %v3005 = vrot.slane %v3004, 4
    %v3006 = vadd.f32 %v3004, %v3005
    %v3007 = vrot.slane %v3006, 2
    %v3008 = vadd.f32 %v3006, %v3007
    %v3009 = vrot.slane %v3008, 1
    %v3010 = vadd.f32 %v3008, %v3009
    %v3011 = vmul.f32 %v3010, 0.03125
    %v3012 = vmul.f32 %v2993, %v2993
    %v3013 = vmul.f32 %v2995, %v2995
    %v3014 = vmul.f32 %v2998, %v2998
    %v3015 = vmul.f32 %v3000, %v3000
    %v3016 = vadd.f32 %v3012, %v3013
    %v3017 = vadd.f32 %v3016, %v3014
    %v3018 = vadd.f32 %v3017, %v3015
    %v3019 = vrot.slane %v3018, 4
    %v3020 = vadd.f32 %v3018, %v3019
    %v3021 = vrot.slane %v3020, 2
    %v3022 = vadd.f32 %v3020, %v3021
    %v3023 = vrot.slane %v3022, 1
    %v3024 = vadd.f32 %v3022, %v3023
    %v3025 = vmul.f32 %v3024, 0.03125
    %v3026 = vmul.f32 %v3011, %v3011
    %v3027 = vsub.f32 %v3025, %v3026
    %v3028 = vld [vmem:[%s3 + $0xa] sm:$0x1]
    %v3029 = vadd.f32 %v3027, 4e-05
    %v3030 = vrsqrt.pop %v3029
    %v3031 = vmul.f32 %v3030, %v3029
    %v3032 = vmul.f32 %v3031, %v3030
    %v3033 = vmul.f32 0.5, %v3032
    %v3034 = vsub.f32 1.5, %v3033
    %v3035 = vmul.f32 %v3030, %v3034
    %vm3036 = vweird.f32 %v3029
    %vm3037 = vweird.f32 %v3030
    %vm3038 = vmor %vm3036, %vm3037
    %v3039 = vsel %vm3038, %v3030, %v3035
    %v3040 = vmul.f32 %v3028, %v3039
    %v3041 = vld [vmem:[%s3 + $0xb] sm:$0x1]
    %v3042 = vmul.f32 %v3011, %v3040
    %v3043 = vsub.f32 %v3041, %v3042
    %v3044 = vperm.slane %v3040, 0
    %v3045 = vmul.f32 %v2993, %v3044
    %v3046 = vmul.f32 %v2995, %v3044
    %v3047 = vmul.f32 %v2998, %v3044
    %v3048 = vmul.f32 %v3000, %v3044
    %v3049 = vperm.slane %v3043, 0
    %v3050 = vadd.f32 %v3045, %v3049
    %v3051 = vadd.f32 %v3046, %v3049
    %v3052 = vadd.f32 %v3047, %v3049
    %v3053 = vadd.f32 %v3048, %v3049
    %v3054 = vmax.f32 %v3050, 0.0
    %v3055 = vmax.f32 %v3051, 0.0
    %v3056 = vmax.f32 %v3052, 0.0
    %v3057 = vmax.f32 %v3053, 0.0
    %3058 = vst [vmem:[%s4 + $0x280] sm:$0xff] %v3054
    %3059 = vst [vmem:[%s4 + $0x288] sm:$0xff] %v3055
    %3060 = vst [vmem:[%s4 + $0x290] sm:$0xff] %v3056
    %3061 = vst [vmem:[%s4 + $0x298] sm:$0xff] %v3057
    %s3062 = sld [smem:[#allocation4 + $0xa]]
    %v3063 = vld [vmem:[%s1 + $0x2a0] sm:$0xff]
    %v3064 = vstv %s3062
    %v3065 = vmul.f32 %v3064, %v3063
    %s3066 = sld [smem:[#allocation4 + $0xe]]
    %v3067 = vstv %s3066
    %v3068 = vmul.f32 %v3067, %v163
    %v3069 = vadd.f32 %v3065, %v3068
    %s3070 = sld [smem:[#allocation4 + $0x12]]
    %s3071 = scalar_lea.vmem %s4, 640
    %v3072 = vld [vmem:[%s3071] ss:$2 sm:$0x3]
    %3073 = vst [vmem:[#allocation2] sm:$0x3] %v3072
    %s3074 = scalar_lea.vmem %s4, 648
    %v3075 = vld [vmem:[%s3074] ss:$2 sm:$0x3]
    %3076 = vst [vmem:[#allocation2 + $0x2] sm:$0x3] %v3075
    %s3077 = scalar_lea.vmem %s4, 656
    %v3078 = vld [vmem:[%s3077] ss:$2 sm:$0x3]
    %3079 = vst [vmem:[#allocation2 + $0x4] sm:$0x3] %v3078
    %s3080 = scalar_lea.vmem %s4, 664
    %v3081 = vld [vmem:[%s3080] ss:$2 sm:$0x3]
    %3082 = vst [vmem:[#allocation2 + $0x6] sm:$0x3] %v3081
    %v3083 = vld [vmem:[#allocation2] sm:$0xff]
    %v3084 = vstv %s3070
    %v3085 = vmul.f32 %v3084, %v3083
    %v3086 = vadd.f32 %v3069, %v3085
    %v3087 = vpack.c.bf16 %v3086, %v3086
    %s3088 = scalar_lea.vmem %s2, 384
    %v3089 = vld [vmem:[%s3088] sm:$0xf]
    %v3090 = vld [vmem:[%s3088 + $0x4] sm:$0xf]
    %v3091 = vld [vmem:[%s3088 + $0x8] sm:$0xf]
    %v3092 = vld [vmem:[%s3088 + $0xc] sm:$0xf]
    %v3093 = vld [vmem:[%s3088 + $0x10] sm:$0xf]
    %v3094 = vld [vmem:[%s3088 + $0x14] sm:$0xf]
    %v3095 = vld [vmem:[%s3088 + $0x18] sm:$0xf]
    %v3096 = vld [vmem:[%s3088 + $0x1c] sm:$0xf]
    %v3097 = vld [vmem:[%s3088 + $0x20] sm:$0xf]
    %v3098 = vld [vmem:[%s3088 + $0x24] sm:$0xf]
    %v3099 = vld [vmem:[%s3088 + $0x28] sm:$0xf]
    %v3100 = vld [vmem:[%s3088 + $0x2c] sm:$0xf]
    %v3101 = vld [vmem:[%s3088 + $0x30] sm:$0xf]
    %v3102 = vld [vmem:[%s3088 + $0x34] sm:$0xf]
    %v3103 = vld [vmem:[%s3088 + $0x38] sm:$0xf]
    %v3104 = vld [vmem:[%s3088 + $0x3c] sm:$0xf]
    %v3121 = vunpack.c.l.b16 %v3089
    %v3122 = vunpack.c.l.b16 %v3090
    %v3123 = vunpack.c.l.b16 %v3091
    %v3124 = vunpack.c.l.b16 %v3092
    %v3125 = vunpack.c.l.b16 %v3093
    %v3126 = vunpack.c.l.b16 %v3094
    %v3127 = vunpack.c.l.b16 %v3095
    %v3128 = vunpack.c.l.b16 %v3096
    %v3129 = vunpack.c.l.b16 %v3097
    %v3130 = vunpack.c.l.b16 %v3098
    %v3131 = vunpack.c.l.b16 %v3099
    %v3132 = vunpack.c.l.b16 %v3100
    %v3133 = vunpack.c.l.b16 %v3101
    %v3134 = vunpack.c.l.b16 %v3102
    %v3135 = vunpack.c.l.b16 %v3103
    %v3136 = vunpack.c.l.b16 %v3104
    %v3137 = vpack.c.b16 %v3122, %v3121
    %v3138 = vpack.c.b16 %v3124, %v3123
    %v3139 = vpack.c.b16 %v3126, %v3125
    %v3140 = vpack.c.b16 %v3128, %v3127
    %v3141 = vpack.c.b16 %v3130, %v3129
    %v3142 = vpack.c.b16 %v3132, %v3131
    %v3143 = vpack.c.b16 %v3134, %v3133
    %v3144 = vpack.c.b16 %v3136, %v3135
    %3153 = vmatpush.bf16.msra.mxu0 %v3144
    %3154 = vmatpush.bf16.msra.mxu0 %v3143
    %3155 = vmatpush.bf16.msra.mxu0 %v3142
    %3156 = vmatpush.bf16.msra.mxu0 %v3141
    %3157 = vmatpush.bf16.msra.mxu0 %v3140
    %3158 = vmatpush.bf16.msra.mxu0 %v3139
    %3159 = vmatpush.bf16.msra.mxu0 %v3138
    %3160 = vmatpush.bf16.msra.mxu0 %v3137
    %3161 = vmatmul.bf16.gmra.mxu0 %v3087
    %v3162 = vpop.f32.mrf.mxu0
    %v3163 = vadd.f32 0.0, %v3162
    %v3164 = vpop.f32.mrf.mxu0
    %3165 = vdwg.mxu0
    %v3166 = vrot.slane %v3163, 4
    %v3167 = vadd.f32 %v3163, %v3166
    %v3168 = vrot.slane %v3167, 2
    %v3169 = vadd.f32 %v3167, %v3168
    %v3170 = vrot.slane %v3169, 1
    %v3171 = vadd.f32 %v3169, %v3170
    %v3172 = vmul.f32 %v3171, 0.125
    %v3173 = vmul.f32 %v3163, %v3163
    %v3174 = vrot.slane %v3173, 4
    %v3175 = vadd.f32 %v3173, %v3174
    %v3176 = vrot.slane %v3175, 2
    %v3177 = vadd.f32 %v3175, %v3176
    %v3178 = vrot.slane %v3177, 1
    %v3179 = vadd.f32 %v3177, %v3178
    %v3180 = vmul.f32 %v3179, 0.125
    %v3181 = vmul.f32 %v3172, %v3172
    %v3182 = vsub.f32 %v3180, %v3181
    %v3183 = vld [vmem:[%s3 + $0xc] sm:$0x1]
    %v3184 = vadd.f32 %v3182, 4e-05
    %v3185 = vrsqrt.pop %v3184
    %v3186 = vmul.f32 %v3185, %v3184
    %v3187 = vmul.f32 %v3186, %v3185
    %v3188 = vmul.f32 0.5, %v3187
    %v3189 = vsub.f32 1.5, %v3188
    %v3190 = vmul.f32 %v3185, %v3189
    %vm3191 = vweird.f32 %v3184
    %vm3192 = vweird.f32 %v3185
    %vm3193 = vmor %vm3191, %vm3192
    %v3194 = vsel %vm3193, %v3185, %v3190
    %v3195 = vmul.f32 %v3183, %v3194
    %v3196 = vld [vmem:[%s3 + $0xd] sm:$0x1]
    %v3197 = vmul.f32 %v3172, %v3195
    %v3198 = vsub.f32 %v3196, %v3197
    %v3199 = vperm.slane %v3195, 0
    %v3200 = vmul.f32 %v3163, %v3199
    %v3201 = vperm.slane %v3198, 0
    %v3202 = vadd.f32 %v3200, %v3201
    %v3203 = vmax.f32 %v3202, 0.0
    %3204 = vst [vmem:[%s4 + $0x2a0] sm:$0xff] %v3203
    %s3205 = sld [smem:[#allocation4 + $0xb]]
    %v3206 = vld [vmem:[%s1 + $0x2a8] sm:$0x3]
    %v3207 = vstv %s3205
    %v3208 = vmul.f32 %v3207, %v3206
    %s3209 = sld [smem:[#allocation4 + $0xf]]
    %v3210 = vstv %s3209
    %v3211 = vmul.f32 %v3210, %v30
    %v3212 = vadd.f32 %v3208, %v3211
    %s3213 = sld [smem:[#allocation4 + $0x13]]
    %s3214 = scalar_lea.vmem %s4, 672
    %v3215 = vld [vmem:[%s3214] ss:$2 sm:$0x1]
    %3216 = vst [vmem:[#allocation2] sm:$0x1] %v3215
    %s3217 = scalar_lea.vmem %s4, 676
    %v3218 = vld [vmem:[%s3217] ss:$2 sm:$0x1]
    %3219 = vst [vmem:[#allocation2 + $0x1] sm:$0x1] %v3218
    %v3220 = vld [vmem:[#allocation2] sm:$0x3]
    %v3221 = vstv %s3213
    %v3222 = vmul.f32 %v3221, %v3220
    %v3223 = vadd.f32 %v3212, %v3222
    %v3224 = vpack.c.bf16 %v3223, %v3223
    %s3225 = scalar_lea.vmem %s2, 448
    %v3226 = vld [vmem:[%s3225] sm:$0xf]
    %v3227 = vld [vmem:[%s3225 + $0x4] sm:$0xf]
    %v3228 = vld [vmem:[%s3225 + $0x8] sm:$0xf]
    %v3229 = vld [vmem:[%s3225 + $0xc] sm:$0xf]
    %v3230 = vld [vmem:[%s3225 + $0x10] sm:$0xf]
    %v3231 = vld [vmem:[%s3225 + $0x14] sm:$0xf]
    %v3232 = vld [vmem:[%s3225 + $0x18] sm:$0xf]
    %v3233 = vld [vmem:[%s3225 + $0x1c] sm:$0xf]
    %v3234 = vld [vmem:[%s3225 + $0x20] sm:$0xf]
    %v3235 = vld [vmem:[%s3225 + $0x24] sm:$0xf]
    %v3236 = vld [vmem:[%s3225 + $0x28] sm:$0xf]
    %v3237 = vld [vmem:[%s3225 + $0x2c] sm:$0xf]
    %v3238 = vld [vmem:[%s3225 + $0x30] sm:$0xf]
    %v3239 = vld [vmem:[%s3225 + $0x34] sm:$0xf]
    %v3240 = vld [vmem:[%s3225 + $0x38] sm:$0xf]
    %v3241 = vld [vmem:[%s3225 + $0x3c] sm:$0xf]
    %v3258 = vunpack.c.l.b16 %v3226
    %v3259 = vunpack.c.l.b16 %v3227
    %v3260 = vunpack.c.l.b16 %v3228
    %v3261 = vunpack.c.l.b16 %v3229
    %v3262 = vunpack.c.l.b16 %v3230
    %v3263 = vunpack.c.l.b16 %v3231
    %v3264 = vunpack.c.l.b16 %v3232
    %v3265 = vunpack.c.l.b16 %v3233
    %v3266 = vunpack.c.l.b16 %v3234
    %v3267 = vunpack.c.l.b16 %v3235
    %v3268 = vunpack.c.l.b16 %v3236
    %v3269 = vunpack.c.l.b16 %v3237
    %v3270 = vunpack.c.l.b16 %v3238
    %v3271 = vunpack.c.l.b16 %v3239
    %v3272 = vunpack.c.l.b16 %v3240
    %v3273 = vunpack.c.l.b16 %v3241
    %v3274 = vpack.c.b16 %v3259, %v3258
    %v3275 = vpack.c.b16 %v3261, %v3260
    %v3276 = vpack.c.b16 %v3263, %v3262
    %v3277 = vpack.c.b16 %v3265, %v3264
    %v3278 = vpack.c.b16 %v3267, %v3266
    %v3279 = vpack.c.b16 %v3269, %v3268
    %v3280 = vpack.c.b16 %v3271, %v3270
    %v3281 = vpack.c.b16 %v3273, %v3272
    %3290 = vmatpush.bf16.msra.mxu0 %v3281
    %3291 = vmatpush.bf16.msra.mxu0 %v3280
    %3292 = vmatpush.bf16.msra.mxu0 %v3279
    %3293 = vmatpush.bf16.msra.mxu0 %v3278
    %3294 = vmatpush.bf16.msra.mxu0 %v3277
    %3295 = vmatpush.bf16.msra.mxu0 %v3276
    %3296 = vmatpush.bf16.msra.mxu0 %v3275
    %3297 = vmatpush.bf16.msra.mxu0 %v3274
    %3298 = vmatmul.bf16.gmra.mxu0 %v3224
    %v3299 = vpop.f32.mrf.mxu0
    %v3300 = vadd.f32 0.0, %v3299
    %v3301 = vpop.f32.mrf.mxu0
    %3302 = vdwg.mxu0
    %vm3303 = vcmask 1041408
    %v3304 = vsel %vm3303, %v3300, 0.0
    %v3305 = vrot.slane %v3304, 4
    %v3306 = vadd.f32 %v3304, %v3305
    %v3307 = vrot.slane %v3306, 2
    %v3308 = vadd.f32 %v3306, %v3307
    %v3309 = vrot.slane %v3308, 1
    %v3310 = vadd.f32 %v3308, %v3309
    %v3311 = vmul.f32 %v3310, 0.5
    %v3312 = vmul.f32 %v3300, %v3300
    %v3313 = vsel %vm3303, %v3312, 0.0
    %v3314 = vrot.slane %v3313, 4
    %v3315 = vadd.f32 %v3313, %v3314
    %v3316 = vrot.slane %v3315, 2
    %v3317 = vadd.f32 %v3315, %v3316
    %v3318 = vrot.slane %v3317, 1
    %v3319 = vadd.f32 %v3317, %v3318
    %v3320 = vmul.f32 %v3319, 0.5
    %v3321 = vmul.f32 %v3311, %v3311
    %v3322 = vsub.f32 %v3320, %v3321
    %v3323 = vld [vmem:[%s3 + $0xe] sm:$0x1]
    %v3324 = vadd.f32 %v3322, 4e-05
    %v3325 = vrsqrt.pop %v3324
    %v3326 = vmul.f32 %v3325, %v3324
    %v3327 = vmul.f32 %v3326, %v3325
    %v3328 = vmul.f32 0.5, %v3327
    %v3329 = vsub.f32 1.5, %v3328
    %v3330 = vmul.f32 %v3325, %v3329
    %vm3331 = vweird.f32 %v3324
    %vm3332 = vweird.f32 %v3325
    %vm3333 = vmor %vm3331, %vm3332
    %v3334 = vsel %vm3333, %v3325, %v3330
    %v3335 = vmul.f32 %v3323, %v3334
    %v3336 = vld [vmem:[%s3 + $0xf] sm:$0x1]
    %v3337 = vmul.f32 %v3311, %v3335
    %v3338 = vsub.f32 %v3336, %v3337
    %v3339 = vperm.slane %v3335, 0
    %v3340 = vmul.f32 %v3300, %v3339
    %v3341 = vperm.slane %v3338, 0
    %v3342 = vadd.f32 %v3340, %v3341
    %v3343 = vmax.f32 %v3342, 0.0
    %3344 = vst [vmem:[%s4 + $0x2a8] sm:$0x3] %v3343
    %3345 = vst [vmem:[%s4 + $0x2aa] sm:$0x3f] 0.0
    // Predicated region
    $region22: #{bifpn_forward.4} parent=1 // pred_check
      _
    $region23: #{bifpn_forward.4} parent=1 // pred_check_branch
      %3347 = sbr.rel (0) target = $region25
    $region24: #{bifpn_forward.4} parent=1 // pred_region
      _
    $region25: #{bifpn_forward.4} parent=1 // pred_fallthru
      _
    // Predicated region
    $region26: #{bifpn_forward.4} parent=1 // pred_check
      _
    $region27: #{bifpn_forward.4} parent=1 // pred_check_branch
      %3349 = sbr.rel (0) target = $region29
    $region28: #{bifpn_forward.4} parent=1 // pred_region
      _
    $region29: #{bifpn_forward.4} parent=1 // pred_fallthru
      _
    %3350 = vsyncpa [#allocation5], 1

</llo_original>
